<compile_context>
chip_gen: v5e
topology: v5e:2x2
jax: 0.10.0
libtpu: 0.0.40
codegen_flags: <defaults>
</compile_context>

<pallas_src>
import functools

import jax
import jax.numpy as jnp
from jax.experimental import pallas as pl
from jax.experimental.pallas import tpu as pltpu

LEAKY_SLOPE = 0.01
BN_EPS = 1e-5
LANE = 128


def _round_up(x, m):
    return ((x + m - 1) // m) * m


def _leaky_relu(x):
    return jnp.where(x > 0, x, LEAKY_SLOPE * x)


def _bn_train(x2d, gamma, beta):
    # Training-mode BatchNorm over the (N*H*W) row axis, biased variance, two-pass (stable).
    inv_m = 1.0 / x2d.shape[0]
    mean = jnp.sum(x2d, axis=0, keepdims=True) * inv_m
    xc = x2d - mean
    var = jnp.sum(xc * xc, axis=0, keepdims=True) * inv_m
    scale = jax.lax.rsqrt(var + BN_EPS) * gamma          # EUP rsqrt, keep off the VPU
    return xc * scale + beta


def res_block_kernel(xpad_ref, w1_ref, b1_ref, g1_ref, be1_ref,
                     w2_ref, b2_ref, g2_ref, be2_ref,
                     ws_ref, bs_ref, gs_ref, bes_ref,
                     out_ref, p_ref, hpad_ref, sres_ref,
                     *, cout, mxu_dtype):
    N, Hp, Wp, Ci = xpad_ref.shape          # Ci = REAL input channels (no lane padding)
    H, W = Hp - 2, Wp - 2
    Kp = p_ref.shape[-1]                    # total K padded to a lane multiple
    Cp = out_ref.shape[-1]                  # lane-padded output channels
    M = N * H * W

    def mm(w_ref):
        # One fused MXU matmul over the (aliased) patch buffer; f32 accumulation.
        p2d = p_ref[...].reshape(M, Kp)
        return jnp.dot(p2d.astype(mxu_dtype), w_ref[...].astype(mxu_dtype),
                       preferred_element_type=jnp.float32)

    # Zero the patch buffer once: covers the K-padding tail columns for BOTH convs and the
    # shortcut matmul (avoids uninitialized-VMEM NaN * 0 = NaN through the zero weight rows).
    p_ref[...] = jnp.zeros_like(p_ref)

    # ---- im2col for conv1: tap-major, REAL input channels (K_real = 9*Ci) ----
    for t in range(9):
        dy, dx = divmod(t, 3)
        p_ref[:, :, :, t * Ci:(t + 1) * Ci] = xpad_ref[:, dy:dy + H, dx:dx + W, :]

    # ---- conv1: one MXU matmul (K = Kp), then BN + LeakyReLU ----
    h = _leaky_relu(_bn_train(mm(w1_ref) + b1_ref[...], g1_ref[...], be1_ref[...]))

    # ---- stage hidden activations with a 1-px zero halo: one dense zero + one dense interior
    #      store (ends h's live range before the shortcut matmul) ----
    hpad_ref[...] = jnp.zeros_like(hpad_ref)
    hpad_ref[:, 1:H + 1, 1:W + 1, :] = h.reshape(N, H, W, Cp)

    # ---- projection shortcut: 1x1 conv + BN.  ws_ref has the 1x1 weight embedded at the
    #      center-tap rows of the conv1 K layout, so it reuses p_ref lane-dense. ----
    sres_ref[...] = _bn_train(mm(ws_ref) + bs_ref[...], gs_ref[...], bes_ref[...])

    # ---- im2col for conv2 (reuses p_ref; REAL hidden channels, K_real = 9*cout) ----
    for t in range(9):
        dy, dx = divmod(t, 3)
        p_ref[:, :, :, t * cout:(t + 1) * cout] = hpad_ref[:, dy:dy + H, dx:dx + W, :cout]

    # ---- conv2: one MXU matmul + BN, add shortcut, LeakyReLU, lane-dense store ----
    o = _bn_train(mm(w2_ref) + b2_ref[...], g2_ref[...], be2_ref[...])
    y = _leaky_relu(o + sres_ref[...])
    out_ref[...] = y.reshape(N, H, W, Cp).astype(out_ref.dtype)


def res_block_pallas(x_nchw, params, *, mxu_dtype=jnp.float32):
    N, Cin, H, W = x_nchw.shape
    Cout = params["w1"].shape[0]
    Cpo = _round_up(Cout, LANE)                 # lane-dense output / accumulator width
    Kp = _round_up(9 * max(Cin, Cout), LANE)    # shared, compactly-packed im2col K

    # NHWC + 1-px spatial halo; channels are kept at their REAL count (no 128-lane padding).
    x = jnp.transpose(x_nchw, (0, 2, 3, 1)).astype(jnp.float32)
    xpad = jnp.pad(x, ((0, 0), (1, 1), (1, 1), (0, 0)))

    def conv3_w(w):
        # OIHW (co, ci, 3, 3) -> (Kp, Cpo); rows are tap-major / channel-minor to match the
        # im2col column layout built in the kernel; the K tail and Cout tail are zero.
        co, ci = w.shape[0], w.shape[1]
        wt = jnp.transpose(w, (2, 3, 1, 0)).astype(jnp.float32).reshape(9 * ci, co)
        return jnp.pad(wt, ((0, Kp - 9 * ci), (0, Cpo - co)))

    w1 = conv3_w(params["w1"])
    w2 = conv3_w(params["w2"])
    # 1x1 shortcut weight embedded at the conv1 center-tap rows (tap index 4) of a (Kp, Cpo).
    ws2d = jnp.transpose(params["ws"][:, :, 0, 0], (1, 0)).astype(jnp.float32)   # (Cin, Cout)
    wsk = jnp.pad(ws2d, ((4 * Cin, Kp - 5 * Cin), (0, Cpo - Cout)))

    vec = lambda v: jnp.pad(v.astype(jnp.float32).reshape(1, -1),
                            ((0, 0), (0, Cpo - Cout)))

    M = N * H * W
    scratch_shapes = [
        pltpu.VMEM((N, H, W, Kp), jnp.float32),             # shared im2col patches (conv1 & 2)
        pltpu.VMEM((N, H + 2, W + 2, Cpo), jnp.float32),    # hidden activations + halo
        pltpu.VMEM((M, Cpo), jnp.float32),                  # BN'd shortcut result
    ]

    # Explicit scoped-VMEM limit from the actual resident footprint (+headroom); v5e defaults
    # to only 16 MiB scoped even though 128 MiB is physically available.
    nbytes = 4 * (xpad.size
                  + 3 * Kp * Cpo + 9 * Cpo
                  + M * Cpo                                  # output
                  + M * Kp + N * (H + 2) * (W + 2) * Cpo + M * Cpo)
    vmem_limit = int(min(96 << 20, max(32 << 20, 3 * nbytes)))

    vmem = pl.BlockSpec(memory_space=pltpu.MemorySpace.VMEM)
    out = pl.pallas_call(
        functools.partial(res_block_kernel, cout=Cout, mxu_dtype=mxu_dtype),
        out_shape=jax.ShapeDtypeStruct((N, H, W, Cpo), jnp.float32),
        in_specs=[vmem] * 13,
        out_specs=vmem,
        scratch_shapes=scratch_shapes,
        compiler_params=pltpu.CompilerParams(vmem_limit_bytes=vmem_limit),
    )(xpad,
      w1, vec(params["b1"]), vec(params["g1"]), vec(params["be1"]),
      w2, vec(params["b2"]), vec(params["g2"]), vec(params["be2"]),
      wsk, vec(params["bs"]), vec(params["gs"]), vec(params["bes"]))

    return jnp.transpose(out[..., :Cout], (0, 3, 1, 2))      # back to NCHW


# ----------------------- pure-JAX reference (for verification) -----------------------
def res_block_ref(x, p):
    dn = ("NCHW", "OIHW", "NCHW")

    def conv(x, w, b, pad):
        y = jax.lax.conv_general_dilated(x, w, (1, 1), [(pad, pad), (pad, pad)],
                                         dimension_numbers=dn)
        return y + b[None, :, None, None]

    def bn(x, g, be):
        mean = jnp.mean(x, axis=(0, 2, 3), keepdims=True)
        var = jnp.mean((x - mean) ** 2, axis=(0, 2, 3), keepdims=True)
        return (x - mean) / jnp.sqrt(var + BN_EPS) * g[None, :, None, None] \
               + be[None, :, None, None]

    lrelu = lambda v: jnp.where(v > 0, v, LEAKY_SLOPE * v)
    h = lrelu(bn(conv(x, p["w1"], p["b1"], 1), p["g1"], p["be1"]))
    o = bn(conv(h, p["w2"], p["b2"], 1), p["g2"], p["be2"])
    r = bn(conv(x, p["ws"], p["bs"], 0), p["gs"], p["bes"])
    return lrelu(o + r)


if __name__ == "__main__":
    N, Cin, Cout, H, W = 2, 4, 8, 16, 16
    key = jax.random.PRNGKey(0)
    kx, k1, k2, k3, kb1, kb2, kb3 = jax.random.split(key, 7)

    x = jax.random.normal(kx, (N, Cin, H, W), jnp.float32)

    params = {
        "w1": 0.1 * jax.random.normal(k1, (Cout, Cin, 3, 3), jnp.float32),
        "b1": 0.1 * jax.random.normal(kb1, (Cout,), jnp.float32),
        "g1": jnp.ones((Cout,), jnp.float32),
        "be1": jnp.zeros((Cout,), jnp.float32),
        "w2": 0.1 * jax.random.normal(k2, (Cout, Cout, 3, 3), jnp.float32),
        "b2": 0.1 * jax.random.normal(kb2, (Cout,), jnp.float32),
        "g2": jnp.ones((Cout,), jnp.float32),
        "be2": jnp.zeros((Cout,), jnp.float32),
        "ws": 0.1 * jax.random.normal(k3, (Cout, Cin, 1, 1), jnp.float32),
        "bs": 0.1 * jax.random.normal(kb3, (Cout,), jnp.float32),
        "gs": jnp.ones((Cout,), jnp.float32),
        "bes": jnp.zeros((Cout,), jnp.float32),
    }

    ref = jax.block_until_ready(res_block_ref(x, params))

    # Exact (f32-operand) path: must match the reference to 1e-4.
    out = jax.block_until_ready(res_block_pallas(x, params, mxu_dtype=jnp.float32))
    assert out.shape == (N, Cout, H, W), out.shape
    assert jnp.allclose(out, ref, atol=1e-4, rtol=1e-4), \
        float(jnp.max(jnp.abs(out - ref)))

    # bf16-operand MXU path (recommended on v6e/v7x): f32 accumulation, loose sanity check.
    out_bf16 = jax.block_until_ready(res_block_pallas(x, params, mxu_dtype=jnp.bfloat16))
    rel = float(jnp.linalg.norm(out_bf16 - ref) / jnp.linalg.norm(ref))
    assert rel < 0.05, rel

    print("KERNEL_OK")
</pallas_src>

<mosaic_0001>
module attributes {stable_mosaic.version = 11 : i64} {
  func.func @res_block_kernel(%arg0: memref<2x18x18x4xf32, #tpu.memory_space<vmem>>, %arg1: memref<128x128xf32, #tpu.memory_space<vmem>>, %arg2: memref<1x128xf32, #tpu.memory_space<vmem>>, %arg3: memref<1x128xf32, #tpu.memory_space<vmem>>, %arg4: memref<1x128xf32, #tpu.memory_space<vmem>>, %arg5: memref<128x128xf32, #tpu.memory_space<vmem>>, %arg6: memref<1x128xf32, #tpu.memory_space<vmem>>, %arg7: memref<1x128xf32, #tpu.memory_space<vmem>>, %arg8: memref<1x128xf32, #tpu.memory_space<vmem>>, %arg9: memref<128x128xf32, #tpu.memory_space<vmem>>, %arg10: memref<1x128xf32, #tpu.memory_space<vmem>>, %arg11: memref<1x128xf32, #tpu.memory_space<vmem>>, %arg12: memref<1x128xf32, #tpu.memory_space<vmem>>, %arg13: memref<2x16x16x128xf32, #tpu.memory_space<vmem>>, %arg14: memref<2x16x16x128xf32, #tpu.memory_space<vmem>>, %arg15: memref<2x18x18x128xf32, #tpu.memory_space<vmem>>, %arg16: memref<512x128xf32, #tpu.memory_space<vmem>>) attributes {dimension_semantics = [], scalar_prefetch = 0 : i64, scratch_operands = 3 : i64, tpu.core_type = #tpu.core_type<tc>} {
    %cst = arith.constant 0.000000e+00 : f32
    %0 = vector.broadcast %cst : f32 to vector<2x16x16x128xf32>
    %c0 = arith.constant 0 : index
    %c0_0 = arith.constant 0 : index
    %c0_1 = arith.constant 0 : index
    %c0_2 = arith.constant 0 : index
    %1 = vector.load %arg14[%c0, %c0_0, %c0_1, %c0_2] : memref<2x16x16x128xf32, #tpu.memory_space<vmem>>, vector<2x16x16x128xf32>
    tpu.vector_store %arg14[%c0, %c0_0, %c0_1, %c0_2], %0 {strides = array<i32>} : memref<2x16x16x128xf32, #tpu.memory_space<vmem>>, vector<2x16x16x128xf32>,
    %c0_3 = arith.constant 0 : index
    %c0_4 = arith.constant 0 : index
    %c0_5 = arith.constant 0 : index
    %c0_6 = arith.constant 0 : index
    %2 = vector.load %arg0[%c0_3, %c0_4, %c0_5, %c0_6] : memref<2x18x18x4xf32, #tpu.memory_space<vmem>>, vector<2x16x16x4xf32>
    %c0_7 = arith.constant 0 : index
    %c0_8 = arith.constant 0 : index
    %c0_9 = arith.constant 0 : index
    %c0_10 = arith.constant 0 : index
    %3 = vector.load %arg14[%c0_7, %c0_8, %c0_9, %c0_10] : memref<2x16x16x128xf32, #tpu.memory_space<vmem>>, vector<2x16x16x4xf32>
    tpu.vector_store %arg14[%c0_7, %c0_8, %c0_9, %c0_10], %2 {strides = array<i32>} : memref<2x16x16x128xf32, #tpu.memory_space<vmem>>, vector<2x16x16x4xf32>,
    %c0_11 = arith.constant 0 : index
    %c0_12 = arith.constant 0 : index
    %c1 = arith.constant 1 : index
    %c0_13 = arith.constant 0 : index
    %4 = vector.load %arg0[%c0_11, %c0_12, %c1, %c0_13] : memref<2x18x18x4xf32, #tpu.memory_space<vmem>>, vector<2x16x16x4xf32>
    %c0_14 = arith.constant 0 : index
    %c0_15 = arith.constant 0 : index
    %c0_16 = arith.constant 0 : index
    %c4 = arith.constant 4 : index
    %5 = vector.load %arg14[%c0_14, %c0_15, %c0_16, %c4] : memref<2x16x16x128xf32, #tpu.memory_space<vmem>>, vector<2x16x16x4xf32>
    tpu.vector_store %arg14[%c0_14, %c0_15, %c0_16, %c4], %4 {strides = array<i32>} : memref<2x16x16x128xf32, #tpu.memory_space<vmem>>, vector<2x16x16x4xf32>,
    %c0_17 = arith.constant 0 : index
    %c0_18 = arith.constant 0 : index
    %c2 = arith.constant 2 : index
    %c0_19 = arith.constant 0 : index
    %6 = vector.load %arg0[%c0_17, %c0_18, %c2, %c0_19] : memref<2x18x18x4xf32, #tpu.memory_space<vmem>>, vector<2x16x16x4xf32>
    %c0_20 = arith.constant 0 : index
    %c0_21 = arith.constant 0 : index
    %c0_22 = arith.constant 0 : index
    %c8 = arith.constant 8 : index
    %7 = vector.load %arg14[%c0_20, %c0_21, %c0_22, %c8] : memref<2x16x16x128xf32, #tpu.memory_space<vmem>>, vector<2x16x16x4xf32>
    tpu.vector_store %arg14[%c0_20, %c0_21, %c0_22, %c8], %6 {strides = array<i32>} : memref<2x16x16x128xf32, #tpu.memory_space<vmem>>, vector<2x16x16x4xf32>,
    %c0_23 = arith.constant 0 : index
    %c1_24 = arith.constant 1 : index
    %c0_25 = arith.constant 0 : index
    %c0_26 = arith.constant 0 : index
    %8 = vector.load %arg0[%c0_23, %c1_24, %c0_25, %c0_26] : memref<2x18x18x4xf32, #tpu.memory_space<vmem>>, vector<2x16x16x4xf32>
    %c0_27 = arith.constant 0 : index
    %c0_28 = arith.constant 0 : index
    %c0_29 = arith.constant 0 : index
    %c12 = arith.constant 12 : index
    %9 = vector.load %arg14[%c0_27, %c0_28, %c0_29, %c12] : memref<2x16x16x128xf32, #tpu.memory_space<vmem>>, vector<2x16x16x4xf32>
    tpu.vector_store %arg14[%c0_27, %c0_28, %c0_29, %c12], %8 {strides = array<i32>} : memref<2x16x16x128xf32, #tpu.memory_space<vmem>>, vector<2x16x16x4xf32>,
    %c0_30 = arith.constant 0 : index
    %c1_31 = arith.constant 1 : index
    %c1_32 = arith.constant 1 : index
    %c0_33 = arith.constant 0 : index
    %10 = vector.load %arg0[%c0_30, %c1_31, %c1_32, %c0_33] : memref<2x18x18x4xf32, #tpu.memory_space<vmem>>, vector<2x16x16x4xf32>
    %c0_34 = arith.constant 0 : index
    %c0_35 = arith.constant 0 : index
    %c0_36 = arith.constant 0 : index
    %c16 = arith.constant 16 : index
    %11 = vector.load %arg14[%c0_34, %c0_35, %c0_36, %c16] : memref<2x16x16x128xf32, #tpu.memory_space<vmem>>, vector<2x16x16x4xf32>
    tpu.vector_store %arg14[%c0_34, %c0_35, %c0_36, %c16], %10 {strides = array<i32>} : memref<2x16x16x128xf32, #tpu.memory_space<vmem>>, vector<2x16x16x4xf32>,
    %c0_37 = arith.constant 0 : index
    %c1_38 = arith.constant 1 : index
    %c2_39 = arith.constant 2 : index
    %c0_40 = arith.constant 0 : index
    %12 = vector.load %arg0[%c0_37, %c1_38, %c2_39, %c0_40] : memref<2x18x18x4xf32, #tpu.memory_space<vmem>>, vector<2x16x16x4xf32>
    %c0_41 = arith.constant 0 : index
    %c0_42 = arith.constant 0 : index
    %c0_43 = arith.constant 0 : index
    %c20 = arith.constant 20 : index
    %13 = vector.load %arg14[%c0_41, %c0_42, %c0_43, %c20] : memref<2x16x16x128xf32, #tpu.memory_space<vmem>>, vector<2x16x16x4xf32>
    tpu.vector_store %arg14[%c0_41, %c0_42, %c0_43, %c20], %12 {strides = array<i32>} : memref<2x16x16x128xf32, #tpu.memory_space<vmem>>, vector<2x16x16x4xf32>,
    %c0_44 = arith.constant 0 : index
    %c2_45 = arith.constant 2 : index
    %c0_46 = arith.constant 0 : index
    %c0_47 = arith.constant 0 : index
    %14 = vector.load %arg0[%c0_44, %c2_45, %c0_46, %c0_47] : memref<2x18x18x4xf32, #tpu.memory_space<vmem>>, vector<2x16x16x4xf32>
    %c0_48 = arith.constant 0 : index
    %c0_49 = arith.constant 0 : index
    %c0_50 = arith.constant 0 : index
    %c24 = arith.constant 24 : index
    %15 = vector.load %arg14[%c0_48, %c0_49, %c0_50, %c24] : memref<2x16x16x128xf32, #tpu.memory_space<vmem>>, vector<2x16x16x4xf32>
    tpu.vector_store %arg14[%c0_48, %c0_49, %c0_50, %c24], %14 {strides = array<i32>} : memref<2x16x16x128xf32, #tpu.memory_space<vmem>>, vector<2x16x16x4xf32>,
    %c0_51 = arith.constant 0 : index
    %c2_52 = arith.constant 2 : index
    %c1_53 = arith.constant 1 : index
    %c0_54 = arith.constant 0 : index
    %16 = vector.load %arg0[%c0_51, %c2_52, %c1_53, %c0_54] : memref<2x18x18x4xf32, #tpu.memory_space<vmem>>, vector<2x16x16x4xf32>
    %c0_55 = arith.constant 0 : index
    %c0_56 = arith.constant 0 : index
    %c0_57 = arith.constant 0 : index
    %c28 = arith.constant 28 : index
    %17 = vector.load %arg14[%c0_55, %c0_56, %c0_57, %c28] : memref<2x16x16x128xf32, #tpu.memory_space<vmem>>, vector<2x16x16x4xf32>
    tpu.vector_store %arg14[%c0_55, %c0_56, %c0_57, %c28], %16 {strides = array<i32>} : memref<2x16x16x128xf32, #tpu.memory_space<vmem>>, vector<2x16x16x4xf32>,
    %c0_58 = arith.constant 0 : index
    %c2_59 = arith.constant 2 : index
    %c2_60 = arith.constant 2 : index
    %c0_61 = arith.constant 0 : index
    %18 = vector.load %arg0[%c0_58, %c2_59, %c2_60, %c0_61] : memref<2x18x18x4xf32, #tpu.memory_space<vmem>>, vector<2x16x16x4xf32>
    %c0_62 = arith.constant 0 : index
    %c0_63 = arith.constant 0 : index
    %c0_64 = arith.constant 0 : index
    %c32 = arith.constant 32 : index
    %19 = vector.load %arg14[%c0_62, %c0_63, %c0_64, %c32] : memref<2x16x16x128xf32, #tpu.memory_space<vmem>>, vector<2x16x16x4xf32>
    tpu.vector_store %arg14[%c0_62, %c0_63, %c0_64, %c32], %18 {strides = array<i32>} : memref<2x16x16x128xf32, #tpu.memory_space<vmem>>, vector<2x16x16x4xf32>,
    %c0_65 = arith.constant 0 : index
    %c0_66 = arith.constant 0 : index
    %c0_67 = arith.constant 0 : index
    %c0_68 = arith.constant 0 : index
    %20 = vector.load %arg14[%c0_65, %c0_66, %c0_67, %c0_68] : memref<2x16x16x128xf32, #tpu.memory_space<vmem>>, vector<2x16x16x128xf32>
    %21 = vector.shape_cast %20 : vector<2x16x16x128xf32> to vector<512x128xf32>
    %c0_69 = arith.constant 0 : index
    %c0_70 = arith.constant 0 : index
    %22 = vector.load %arg1[%c0_69, %c0_70] : memref<128x128xf32, #tpu.memory_space<vmem>>, vector<128x128xf32>
    %cst_71 = arith.constant dense<0.000000e+00> : vector<512x128xf32>
    %23 = tpu.matmul %21, %22, %cst_71 {dimension_numbers = #tpu.dot_dimension_numbers<[1], [0], [0], [1], [0, 0, 1, 1], [], []>} : vector<512x128xf32>, vector<128x128xf32>, vector<512x128xf32> -> vector<512x128xf32>
    %c0_72 = arith.constant 0 : index
    %c0_73 = arith.constant 0 : index
    %24 = vector.load %arg2[%c0_72, %c0_73] : memref<1x128xf32, #tpu.memory_space<vmem>>, vector<1x128xf32>
    %25 = vector.broadcast %24 : vector<1x128xf32> to vector<512x128xf32>
    %26 = arith.addf %23, %25 : vector<512x128xf32>
    %c0_74 = arith.constant 0 : index
    %c0_75 = arith.constant 0 : index
    %27 = vector.load %arg3[%c0_74, %c0_75] : memref<1x128xf32, #tpu.memory_space<vmem>>, vector<1x128xf32>
    %c0_76 = arith.constant 0 : index
    %c0_77 = arith.constant 0 : index
    %28 = vector.load %arg4[%c0_76, %c0_77] : memref<1x128xf32, #tpu.memory_space<vmem>>, vector<1x128xf32>
    %cst_78 = arith.constant dense<0.000000e+00> : vector<128xf32>
    %29 = vector.multi_reduction <add>, %26, %cst_78 [0] : vector<512x128xf32> to vector<128xf32>
    %30 = vector.shape_cast %29 : vector<128xf32> to vector<1x128xf32>
    %cst_79 = arith.constant 0.001953125 : f32
    %31 = vector.broadcast %cst_79 : f32 to vector<1x128xf32>
    %32 = arith.mulf %30, %31 : vector<1x128xf32>
    %33 = vector.broadcast %32 : vector<1x128xf32> to vector<512x128xf32>
    %34 = arith.subf %26, %33 : vector<512x128xf32>
    %35 = arith.mulf %34, %34 : vector<512x128xf32>
    %cst_80 = arith.constant dense<0.000000e+00> : vector<128xf32>
    %36 = vector.multi_reduction <add>, %35, %cst_80 [0] : vector<512x128xf32> to vector<128xf32>
    %37 = vector.shape_cast %36 : vector<128xf32> to vector<1x128xf32>
    %cst_81 = arith.constant 0.001953125 : f32
    %38 = vector.broadcast %cst_81 : f32 to vector<1x128xf32>
    %39 = arith.mulf %37, %38 : vector<1x128xf32>
    %cst_82 = arith.constant 9.99999974E-6 : f32
    %40 = vector.broadcast %cst_82 : f32 to vector<1x128xf32>
    %41 = arith.addf %39, %40 : vector<1x128xf32>
    %42 = math.rsqrt %41 : vector<1x128xf32>
    %43 = arith.mulf %42, %27 : vector<1x128xf32>
    %44 = vector.broadcast %43 : vector<1x128xf32> to vector<512x128xf32>
    %45 = arith.mulf %34, %44 : vector<512x128xf32>
    %46 = vector.broadcast %28 : vector<1x128xf32> to vector<512x128xf32>
    %47 = arith.addf %45, %46 : vector<512x128xf32>
    %cst_83 = arith.constant 0.000000e+00 : f32
    %48 = vector.broadcast %cst_83 : f32 to vector<512x128xf32>
    %49 = arith.cmpf ogt, %47, %48 : vector<512x128xf32>
    %cst_84 = arith.constant 0.00999999977 : f32
    %50 = vector.broadcast %cst_84 : f32 to vector<512x128xf32>
    %51 = arith.mulf %50, %47 : vector<512x128xf32>
    %52 = arith.select %49, %47, %51 : vector<512x128xi1>, vector<512x128xf32>
    %cst_85 = arith.constant 0.000000e+00 : f32
    %53 = vector.broadcast %cst_85 : f32 to vector<2x18x18x128xf32>
    %c0_86 = arith.constant 0 : index
    %c0_87 = arith.constant 0 : index
    %c0_88 = arith.constant 0 : index
    %c0_89 = arith.constant 0 : index
    %54 = vector.load %arg15[%c0_86, %c0_87, %c0_88, %c0_89] : memref<2x18x18x128xf32, #tpu.memory_space<vmem>>, vector<2x18x18x128xf32>
    tpu.vector_store %arg15[%c0_86, %c0_87, %c0_88, %c0_89], %53 {strides = array<i32>} : memref<2x18x18x128xf32, #tpu.memory_space<vmem>>, vector<2x18x18x128xf32>,
    %55 = vector.shape_cast %52 : vector<512x128xf32> to vector<2x16x16x128xf32>
    %c0_90 = arith.constant 0 : index
    %c1_91 = arith.constant 1 : index
    %c1_92 = arith.constant 1 : index
    %c0_93 = arith.constant 0 : index
    %56 = vector.load %arg15[%c0_90, %c1_91, %c1_92, %c0_93] : memref<2x18x18x128xf32, #tpu.memory_space<vmem>>, vector<2x16x16x128xf32>
    tpu.vector_store %arg15[%c0_90, %c1_91, %c1_92, %c0_93], %55 {strides = array<i32>} : memref<2x18x18x128xf32, #tpu.memory_space<vmem>>, vector<2x16x16x128xf32>,
    %c0_94 = arith.constant 0 : index
    %c0_95 = arith.constant 0 : index
    %c0_96 = arith.constant 0 : index
    %c0_97 = arith.constant 0 : index
    %57 = vector.load %arg14[%c0_94, %c0_95, %c0_96, %c0_97] : memref<2x16x16x128xf32, #tpu.memory_space<vmem>>, vector<2x16x16x128xf32>
    %58 = vector.shape_cast %57 : vector<2x16x16x128xf32> to vector<512x128xf32>
    %c0_98 = arith.constant 0 : index
    %c0_99 = arith.constant 0 : index
    %59 = vector.load %arg9[%c0_98, %c0_99] : memref<128x128xf32, #tpu.memory_space<vmem>>, vector<128x128xf32>
    %cst_100 = arith.constant dense<0.000000e+00> : vector<512x128xf32>
    %60 = tpu.matmul %58, %59, %cst_100 {dimension_numbers = #tpu.dot_dimension_numbers<[1], [0], [0], [1], [0, 0, 1, 1], [], []>} : vector<512x128xf32>, vector<128x128xf32>, vector<512x128xf32> -> vector<512x128xf32>
    %c0_101 = arith.constant 0 : index
    %c0_102 = arith.constant 0 : index
    %61 = vector.load %arg10[%c0_101, %c0_102] : memref<1x128xf32, #tpu.memory_space<vmem>>, vector<1x128xf32>
    %62 = vector.broadcast %61 : vector<1x128xf32> to vector<512x128xf32>
    %63 = arith.addf %60, %62 : vector<512x128xf32>
    %c0_103 = arith.constant 0 : index
    %c0_104 = arith.constant 0 : index
    %64 = vector.load %arg11[%c0_103, %c0_104] : memref<1x128xf32, #tpu.memory_space<vmem>>, vector<1x128xf32>
    %c0_105 = arith.constant 0 : index
    %c0_106 = arith.constant 0 : index
    %65 = vector.load %arg12[%c0_105, %c0_106] : memref<1x128xf32, #tpu.memory_space<vmem>>, vector<1x128xf32>
    %cst_107 = arith.constant dense<0.000000e+00> : vector<128xf32>
    %66 = vector.multi_reduction <add>, %63, %cst_107 [0] : vector<512x128xf32> to vector<128xf32>
    %67 = vector.shape_cast %66 : vector<128xf32> to vector<1x128xf32>
    %cst_108 = arith.constant 0.001953125 : f32
    %68 = vector.broadcast %cst_108 : f32 to vector<1x128xf32>
    %69 = arith.mulf %67, %68 : vector<1x128xf32>
    %70 = vector.broadcast %69 : vector<1x128xf32> to vector<512x128xf32>
    %71 = arith.subf %63, %70 : vector<512x128xf32>
    %72 = arith.mulf %71, %71 : vector<512x128xf32>
    %cst_109 = arith.constant dense<0.000000e+00> : vector<128xf32>
    %73 = vector.multi_reduction <add>, %72, %cst_109 [0] : vector<512x128xf32> to vector<128xf32>
    %74 = vector.shape_cast %73 : vector<128xf32> to vector<1x128xf32>
    %cst_110 = arith.constant 0.001953125 : f32
    %75 = vector.broadcast %cst_110 : f32 to vector<1x128xf32>
    %76 = arith.mulf %74, %75 : vector<1x128xf32>
    %cst_111 = arith.constant 9.99999974E-6 : f32
    %77 = vector.broadcast %cst_111 : f32 to vector<1x128xf32>
    %78 = arith.addf %76, %77 : vector<1x128xf32>
    %79 = math.rsqrt %78 : vector<1x128xf32>
    %80 = arith.mulf %79, %64 : vector<1x128xf32>
    %81 = vector.broadcast %80 : vector<1x128xf32> to vector<512x128xf32>
    %82 = arith.mulf %71, %81 : vector<512x128xf32>
    %83 = vector.broadcast %65 : vector<1x128xf32> to vector<512x128xf32>
    %84 = arith.addf %82, %83 : vector<512x128xf32>
    %c0_112 = arith.constant 0 : index
    %c0_113 = arith.constant 0 : index
    %85 = vector.load %arg16[%c0_112, %c0_113] : memref<512x128xf32, #tpu.memory_space<vmem>>, vector<512x128xf32>
    tpu.vector_store %arg16[%c0_112, %c0_113], %84 {strides = array<i32>} : memref<512x128xf32, #tpu.memory_space<vmem>>, vector<512x128xf32>,
    %c0_114 = arith.constant 0 : index
    %c0_115 = arith.constant 0 : index
    %c0_116 = arith.constant 0 : index
    %c0_117 = arith.constant 0 : index
    %86 = vector.load %arg15[%c0_114, %c0_115, %c0_116, %c0_117] : memref<2x18x18x128xf32, #tpu.memory_space<vmem>>, vector<2x16x16x8xf32>
    %c0_118 = arith.constant 0 : index
    %c0_119 = arith.constant 0 : index
    %c0_120 = arith.constant 0 : index
    %c0_121 = arith.constant 0 : index
    %87 = vector.load %arg14[%c0_118, %c0_119, %c0_120, %c0_121] : memref<2x16x16x128xf32, #tpu.memory_space<vmem>>, vector<2x16x16x8xf32>
    tpu.vector_store %arg14[%c0_118, %c0_119, %c0_120, %c0_121], %86 {strides = array<i32>} : memref<2x16x16x128xf32, #tpu.memory_space<vmem>>, vector<2x16x16x8xf32>,
    %c0_122 = arith.constant 0 : index
    %c0_123 = arith.constant 0 : index
    %c1_124 = arith.constant 1 : index
    %c0_125 = arith.constant 0 : index
    %88 = vector.load %arg15[%c0_122, %c0_123, %c1_124, %c0_125] : memref<2x18x18x128xf32, #tpu.memory_space<vmem>>, vector<2x16x16x8xf32>
    %c0_126 = arith.constant 0 : index
    %c0_127 = arith.constant 0 : index
    %c0_128 = arith.constant 0 : index
    %c8_129 = arith.constant 8 : index
    %89 = vector.load %arg14[%c0_126, %c0_127, %c0_128, %c8_129] : memref<2x16x16x128xf32, #tpu.memory_space<vmem>>, vector<2x16x16x8xf32>
    tpu.vector_store %arg14[%c0_126, %c0_127, %c0_128, %c8_129], %88 {strides = array<i32>} : memref<2x16x16x128xf32, #tpu.memory_space<vmem>>, vector<2x16x16x8xf32>,
    %c0_130 = arith.constant 0 : index
    %c0_131 = arith.constant 0 : index
    %c2_132 = arith.constant 2 : index
    %c0_133 = arith.constant 0 : index
    %90 = vector.load %arg15[%c0_130, %c0_131, %c2_132, %c0_133] : memref<2x18x18x128xf32, #tpu.memory_space<vmem>>, vector<2x16x16x8xf32>
    %c0_134 = arith.constant 0 : index
    %c0_135 = arith.constant 0 : index
    %c0_136 = arith.constant 0 : index
    %c16_137 = arith.constant 16 : index
    %91 = vector.load %arg14[%c0_134, %c0_135, %c0_136, %c16_137] : memref<2x16x16x128xf32, #tpu.memory_space<vmem>>, vector<2x16x16x8xf32>
    tpu.vector_store %arg14[%c0_134, %c0_135, %c0_136, %c16_137], %90 {strides = array<i32>} : memref<2x16x16x128xf32, #tpu.memory_space<vmem>>, vector<2x16x16x8xf32>,
    %c0_138 = arith.constant 0 : index
    %c1_139 = arith.constant 1 : index
    %c0_140 = arith.constant 0 : index
    %c0_141 = arith.constant 0 : index
    %92 = vector.load %arg15[%c0_138, %c1_139, %c0_140, %c0_141] : memref<2x18x18x128xf32, #tpu.memory_space<vmem>>, vector<2x16x16x8xf32>
    %c0_142 = arith.constant 0 : index
    %c0_143 = arith.constant 0 : index
    %c0_144 = arith.constant 0 : index
    %c24_145 = arith.constant 24 : index
    %93 = vector.load %arg14[%c0_142, %c0_143, %c0_144, %c24_145] : memref<2x16x16x128xf32, #tpu.memory_space<vmem>>, vector<2x16x16x8xf32>
    tpu.vector_store %arg14[%c0_142, %c0_143, %c0_144, %c24_145], %92 {strides = array<i32>} : memref<2x16x16x128xf32, #tpu.memory_space<vmem>>, vector<2x16x16x8xf32>,
    %c0_146 = arith.constant 0 : index
    %c1_147 = arith.constant 1 : index
    %c1_148 = arith.constant 1 : index
    %c0_149 = arith.constant 0 : index
    %94 = vector.load %arg15[%c0_146, %c1_147, %c1_148, %c0_149] : memref<2x18x18x128xf32, #tpu.memory_space<vmem>>, vector<2x16x16x8xf32>
    %c0_150 = arith.constant 0 : index
    %c0_151 = arith.constant 0 : index
    %c0_152 = arith.constant 0 : index
    %c32_153 = arith.constant 32 : index
    %95 = vector.load %arg14[%c0_150, %c0_151, %c0_152, %c32_153] : memref<2x16x16x128xf32, #tpu.memory_space<vmem>>, vector<2x16x16x8xf32>
    tpu.vector_store %arg14[%c0_150, %c0_151, %c0_152, %c32_153], %94 {strides = array<i32>} : memref<2x16x16x128xf32, #tpu.memory_space<vmem>>, vector<2x16x16x8xf32>,
    %c0_154 = arith.constant 0 : index
    %c1_155 = arith.constant 1 : index
    %c2_156 = arith.constant 2 : index
    %c0_157 = arith.constant 0 : index
    %96 = vector.load %arg15[%c0_154, %c1_155, %c2_156, %c0_157] : memref<2x18x18x128xf32, #tpu.memory_space<vmem>>, vector<2x16x16x8xf32>
    %c0_158 = arith.constant 0 : index
    %c0_159 = arith.constant 0 : index
    %c0_160 = arith.constant 0 : index
    %c40 = arith.constant 40 : index
    %97 = vector.load %arg14[%c0_158, %c0_159, %c0_160, %c40] : memref<2x16x16x128xf32, #tpu.memory_space<vmem>>, vector<2x16x16x8xf32>
    tpu.vector_store %arg14[%c0_158, %c0_159, %c0_160, %c40], %96 {strides = array<i32>} : memref<2x16x16x128xf32, #tpu.memory_space<vmem>>, vector<2x16x16x8xf32>,
    %c0_161 = arith.constant 0 : index
    %c2_162 = arith.constant 2 : index
    %c0_163 = arith.constant 0 : index
    %c0_164 = arith.constant 0 : index
    %98 = vector.load %arg15[%c0_161, %c2_162, %c0_163, %c0_164] : memref<2x18x18x128xf32, #tpu.memory_space<vmem>>, vector<2x16x16x8xf32>
    %c0_165 = arith.constant 0 : index
    %c0_166 = arith.constant 0 : index
    %c0_167 = arith.constant 0 : index
    %c48 = arith.constant 48 : index
    %99 = vector.load %arg14[%c0_165, %c0_166, %c0_167, %c48] : memref<2x16x16x128xf32, #tpu.memory_space<vmem>>, vector<2x16x16x8xf32>
    tpu.vector_store %arg14[%c0_165, %c0_166, %c0_167, %c48], %98 {strides = array<i32>} : memref<2x16x16x128xf32, #tpu.memory_space<vmem>>, vector<2x16x16x8xf32>,
    %c0_168 = arith.constant 0 : index
    %c2_169 = arith.constant 2 : index
    %c1_170 = arith.constant 1 : index
    %c0_171 = arith.constant 0 : index
    %100 = vector.load %arg15[%c0_168, %c2_169, %c1_170, %c0_171] : memref<2x18x18x128xf32, #tpu.memory_space<vmem>>, vector<2x16x16x8xf32>
    %c0_172 = arith.constant 0 : index
    %c0_173 = arith.constant 0 : index
    %c0_174 = arith.constant 0 : index
    %c56 = arith.constant 56 : index
    %101 = vector.load %arg14[%c0_172, %c0_173, %c0_174, %c56] : memref<2x16x16x128xf32, #tpu.memory_space<vmem>>, vector<2x16x16x8xf32>
    tpu.vector_store %arg14[%c0_172, %c0_173, %c0_174, %c56], %100 {strides = array<i32>} : memref<2x16x16x128xf32, #tpu.memory_space<vmem>>, vector<2x16x16x8xf32>,
    %c0_175 = arith.constant 0 : index
    %c2_176 = arith.constant 2 : index
    %c2_177 = arith.constant 2 : index
    %c0_178 = arith.constant 0 : index
    %102 = vector.load %arg15[%c0_175, %c2_176, %c2_177, %c0_178] : memref<2x18x18x128xf32, #tpu.memory_space<vmem>>, vector<2x16x16x8xf32>
    %c0_179 = arith.constant 0 : index
    %c0_180 = arith.constant 0 : index
    %c0_181 = arith.constant 0 : index
    %c64 = arith.constant 64 : index
    %103 = vector.load %arg14[%c0_179, %c0_180, %c0_181, %c64] : memref<2x16x16x128xf32, #tpu.memory_space<vmem>>, vector<2x16x16x8xf32>
    tpu.vector_store %arg14[%c0_179, %c0_180, %c0_181, %c64], %102 {strides = array<i32>} : memref<2x16x16x128xf32, #tpu.memory_space<vmem>>, vector<2x16x16x8xf32>,
    %c0_182 = arith.constant 0 : index
    %c0_183 = arith.constant 0 : index
    %c0_184 = arith.constant 0 : index
    %c0_185 = arith.constant 0 : index
    %104 = vector.load %arg14[%c0_182, %c0_183, %c0_184, %c0_185] : memref<2x16x16x128xf32, #tpu.memory_space<vmem>>, vector<2x16x16x128xf32>
    %105 = vector.shape_cast %104 : vector<2x16x16x128xf32> to vector<512x128xf32>
    %c0_186 = arith.constant 0 : index
    %c0_187 = arith.constant 0 : index
    %106 = vector.load %arg5[%c0_186, %c0_187] : memref<128x128xf32, #tpu.memory_space<vmem>>, vector<128x128xf32>
    %cst_188 = arith.constant dense<0.000000e+00> : vector<512x128xf32>
    %107 = tpu.matmul %105, %106, %cst_188 {dimension_numbers = #tpu.dot_dimension_numbers<[1], [0], [0], [1], [0, 0, 1, 1], [], []>} : vector<512x128xf32>, vector<128x128xf32>, vector<512x128xf32> -> vector<512x128xf32>
    %c0_189 = arith.constant 0 : index
    %c0_190 = arith.constant 0 : index
    %108 = vector.load %arg6[%c0_189, %c0_190] : memref<1x128xf32, #tpu.memory_space<vmem>>, vector<1x128xf32>
    %109 = vector.broadcast %108 : vector<1x128xf32> to vector<512x128xf32>
    %110 = arith.addf %107, %109 : vector<512x128xf32>
    %c0_191 = arith.constant 0 : index
    %c0_192 = arith.constant 0 : index
    %111 = vector.load %arg7[%c0_191, %c0_192] : memref<1x128xf32, #tpu.memory_space<vmem>>, vector<1x128xf32>
    %c0_193 = arith.constant 0 : index
    %c0_194 = arith.constant 0 : index
    %112 = vector.load %arg8[%c0_193, %c0_194] : memref<1x128xf32, #tpu.memory_space<vmem>>, vector<1x128xf32>
    %cst_195 = arith.constant dense<0.000000e+00> : vector<128xf32>
    %113 = vector.multi_reduction <add>, %110, %cst_195 [0] : vector<512x128xf32> to vector<128xf32>
    %114 = vector.shape_cast %113 : vector<128xf32> to vector<1x128xf32>
    %cst_196 = arith.constant 0.001953125 : f32
    %115 = vector.broadcast %cst_196 : f32 to vector<1x128xf32>
    %116 = arith.mulf %114, %115 : vector<1x128xf32>
    %117 = vector.broadcast %116 : vector<1x128xf32> to vector<512x128xf32>
    %118 = arith.subf %110, %117 : vector<512x128xf32>
    %119 = arith.mulf %118, %118 : vector<512x128xf32>
    %cst_197 = arith.constant dense<0.000000e+00> : vector<128xf32>
    %120 = vector.multi_reduction <add>, %119, %cst_197 [0] : vector<512x128xf32> to vector<128xf32>
    %121 = vector.shape_cast %120 : vector<128xf32> to vector<1x128xf32>
    %cst_198 = arith.constant 0.001953125 : f32
    %122 = vector.broadcast %cst_198 : f32 to vector<1x128xf32>
    %123 = arith.mulf %121, %122 : vector<1x128xf32>
    %cst_199 = arith.constant 9.99999974E-6 : f32
    %124 = vector.broadcast %cst_199 : f32 to vector<1x128xf32>
    %125 = arith.addf %123, %124 : vector<1x128xf32>
    %126 = math.rsqrt %125 : vector<1x128xf32>
    %127 = arith.mulf %126, %111 : vector<1x128xf32>
    %128 = vector.broadcast %127 : vector<1x128xf32> to vector<512x128xf32>
    %129 = arith.mulf %118, %128 : vector<512x128xf32>
    %130 = vector.broadcast %112 : vector<1x128xf32> to vector<512x128xf32>
    %131 = arith.addf %129, %130 : vector<512x128xf32>
    %c0_200 = arith.constant 0 : index
    %c0_201 = arith.constant 0 : index
    %132 = vector.load %arg16[%c0_200, %c0_201] : memref<512x128xf32, #tpu.memory_space<vmem>>, vector<512x128xf32>
    %133 = arith.addf %131, %132 : vector<512x128xf32>
    %cst_202 = arith.constant 0.000000e+00 : f32
    %134 = vector.broadcast %cst_202 : f32 to vector<512x128xf32>
    %135 = arith.cmpf ogt, %133, %134 : vector<512x128xf32>
    %cst_203 = arith.constant 0.00999999977 : f32
    %136 = vector.broadcast %cst_203 : f32 to vector<512x128xf32>
    %137 = arith.mulf %136, %133 : vector<512x128xf32>
    %138 = arith.select %135, %133, %137 : vector<512x128xi1>, vector<512x128xf32>
    %139 = vector.shape_cast %138 : vector<512x128xf32> to vector<2x16x16x128xf32>
    %c0_204 = arith.constant 0 : index
    %c0_205 = arith.constant 0 : index
    %c0_206 = arith.constant 0 : index
    %c0_207 = arith.constant 0 : index
    %140 = vector.load %arg13[%c0_204, %c0_205, %c0_206, %c0_207] : memref<2x16x16x128xf32, #tpu.memory_space<vmem>>, vector<2x16x16x128xf32>
    tpu.vector_store %arg13[%c0_204, %c0_205, %c0_206, %c0_207], %139 {strides = array<i32>} : memref<2x16x16x128xf32, #tpu.memory_space<vmem>>, vector<2x16x16x128xf32>,
    return
  }
}

</mosaic_0001>

<llo_original>
// kernel: tpu_custom_call.1
$region0: #{tpu_custom_call.1}
  #allocation0 [shape = 'u32[]', space=smem, size = 0x4, offset = 0x4, fixed_abs, tag = 'smem constant byte address 0x4 - core index']
  #allocation1 [shape = 'u32[72,128]{1,0:T(1,128)}', space=vmem, size = 0x9000, scoped, tag = 'internal scratch']
  #allocation2 [shape = 'f32[2,16,16,128]{3,2,1,0:T(8,128)}', space=vmem, size = 0x40000, scoped, tag = 'scratch operand']
  #allocation3 [shape = 'f32[2,18,18,128]{3,2,1,0:T(8,128)}', space=vmem, size = 0x6c000, scoped, tag = 'scratch operand']
  #allocation4 [shape = 'f32[512,128]{1,0:T(8,128)}', space=vmem, size = 0x40000, scoped, tag = 'scratch operand']
  %s0 = inlined_call_operand.vmem [shape: f32[2,18,18,4], index: 0, kind: input, shape index: {}]
  %s1 = inlined_call_operand.vmem [shape: f32[128,128], index: 1, kind: input, shape index: {}]
  %s2 = inlined_call_operand.vmem [shape: f32[1,128], index: 2, kind: input, shape index: {}]
  %s3 = inlined_call_operand.vmem [shape: f32[1,128], index: 3, kind: input, shape index: {}]
  %s4 = inlined_call_operand.vmem [shape: f32[1,128], index: 4, kind: input, shape index: {}]
  %s5 = inlined_call_operand.vmem [shape: f32[128,128], index: 5, kind: input, shape index: {}]
  %s6 = inlined_call_operand.vmem [shape: f32[1,128], index: 6, kind: input, shape index: {}]
  %s7 = inlined_call_operand.vmem [shape: f32[1,128], index: 7, kind: input, shape index: {}]
  %s8 = inlined_call_operand.vmem [shape: f32[1,128], index: 8, kind: input, shape index: {}]
  %s9 = inlined_call_operand.vmem [shape: f32[128,128], index: 9, kind: input, shape index: {}]
  %s10 = inlined_call_operand.vmem [shape: f32[1,128], index: 10, kind: input, shape index: {}]
  %s11 = inlined_call_operand.vmem [shape: f32[1,128], index: 11, kind: input, shape index: {}]
  %s12 = inlined_call_operand.vmem [shape: f32[1,128], index: 12, kind: input, shape index: {}]
  %s13 = inlined_call_operand.hbm [shape: f32[2,16,16,128], index: 13, kind: output, shape index: {}]
  %s14 = sld [smem:[#allocation0]]
  $region62: #{tpu_custom_call.1} parent=0
    _
  %s16 = ssub.s32 1, %s14
  %s17 = scalar_select 0, %s16, %s14
  $region1: #{tpu_custom_call.1} parent=0
    #allocation5 [shape = 'u8[262144]{0}', space=vmem, size = 0x40000, scoped, tag = 'output window, operand 0, single buffered']
    #allocation6 [shape = 's32[1]{0}', space=sflag, size = 0x4, scoped, tag = 'scoped memory for tpu_custom_call.1']
    %18 = vsyncpa [#allocation6], 0
    // Predicated region
    $region2: #{tpu_custom_call.1} parent=1 // pred_check
      _
    $region3: #{tpu_custom_call.1} parent=1 // pred_check_branch
      %20 = sbr.rel (0) target = $region5
    $region4: #{tpu_custom_call.1} parent=1 // pred_region
      _
    $region5: #{tpu_custom_call.1} parent=1 // pred_fallthru
      _
    // Predicated region
    $region6: #{tpu_custom_call.1} parent=1 // pred_check
      _
    $region7: #{tpu_custom_call.1} parent=1 // pred_check_branch
      %22 = sbr.rel (0) target = $region9
    $region8: #{tpu_custom_call.1} parent=1 // pred_region
      _
    $region9: #{tpu_custom_call.1} parent=1 // pred_fallthru
      _
    // Predicated region
    $region10: #{tpu_custom_call.1} parent=1 // pred_check
      _
    $region11: #{tpu_custom_call.1} parent=1 // pred_check_branch
      %24 = sbr.rel (0) target = $region13
    $region12: #{tpu_custom_call.1} parent=1 // pred_region
      _
    $region13: #{tpu_custom_call.1} parent=1 // pred_fallthru
      _
    // Predicated region
    $region14: #{tpu_custom_call.1} parent=1 // pred_check
      _
    $region15: #{tpu_custom_call.1} parent=1 // pred_check_branch
      %26 = sbr.rel (0) target = $region17
    $region16: #{tpu_custom_call.1} parent=1 // pred_region
      _
    $region17: #{tpu_custom_call.1} parent=1 // pred_fallthru
      _
    // Predicated region
    $region18: #{tpu_custom_call.1} parent=1 // pred_check
      _
    $region19: #{tpu_custom_call.1} parent=1 // pred_check_branch
      %28 = sbr.rel (0) target = $region21
    $region20: #{tpu_custom_call.1} parent=1 // pred_region
      _
    $region21: #{tpu_custom_call.1} parent=1 // pred_fallthru
      _
    // Predicated region
    $region22: #{tpu_custom_call.1} parent=1 // pred_check
      _
    $region23: #{tpu_custom_call.1} parent=1 // pred_check_branch
      %30 = sbr.rel (0) target = $region25
    $region24: #{tpu_custom_call.1} parent=1 // pred_region
      _
    $region25: #{tpu_custom_call.1} parent=1 // pred_fallthru
      _
    // Predicated region
    $region26: #{tpu_custom_call.1} parent=1 // pred_check
      _
    $region27: #{tpu_custom_call.1} parent=1 // pred_check_branch
      %32 = sbr.rel (0) target = $region29
    $region28: #{tpu_custom_call.1} parent=1 // pred_region
      _
    $region29: #{tpu_custom_call.1} parent=1 // pred_fallthru
      _
    // Predicated region
    $region30: #{tpu_custom_call.1} parent=1 // pred_check
      _
    $region31: #{tpu_custom_call.1} parent=1 // pred_check_branch
      %34 = sbr.rel (0) target = $region33
    $region32: #{tpu_custom_call.1} parent=1 // pred_region
      _
    $region33: #{tpu_custom_call.1} parent=1 // pred_fallthru
      _
    // Predicated region
    $region34: #{tpu_custom_call.1} parent=1 // pred_check
      _
    $region35: #{tpu_custom_call.1} parent=1 // pred_check_branch
      %36 = sbr.rel (0) target = $region37
    $region36: #{tpu_custom_call.1} parent=1 // pred_region
      _
    $region37: #{tpu_custom_call.1} parent=1 // pred_fallthru
      _
    // Predicated region
    $region38: #{tpu_custom_call.1} parent=1 // pred_check
      _
    $region39: #{tpu_custom_call.1} parent=1 // pred_check_branch
      %38 = sbr.rel (0) target = $region41
    $region40: #{tpu_custom_call.1} parent=1 // pred_region
      _
    $region41: #{tpu_custom_call.1} parent=1 // pred_fallthru
      _
    // Predicated region
    $region42: #{tpu_custom_call.1} parent=1 // pred_check
      _
    $region43: #{tpu_custom_call.1} parent=1 // pred_check_branch
      %40 = sbr.rel (0) target = $region45
    $region44: #{tpu_custom_call.1} parent=1 // pred_region
      _
    $region45: #{tpu_custom_call.1} parent=1 // pred_fallthru
      _
    // Predicated region
    $region46: #{tpu_custom_call.1} parent=1 // pred_check
      _
    $region47: #{tpu_custom_call.1} parent=1 // pred_check_branch
      %42 = sbr.rel (0) target = $region49
    $region48: #{tpu_custom_call.1} parent=1 // pred_region
      _
    $region49: #{tpu_custom_call.1} parent=1 // pred_fallthru
      _
    // Predicated region
    $region50: #{tpu_custom_call.1} parent=1 // pred_check
      _
    $region51: #{tpu_custom_call.1} parent=1 // pred_check_branch
      %44 = sbr.rel (0) target = $region53
    $region52: #{tpu_custom_call.1} parent=1 // pred_region
      _
    $region53: #{tpu_custom_call.1} parent=1 // pred_fallthru
      _
    %45 = vst [vmem:[#allocation2] sm:$0xff] 0.0
    %46 = vst [vmem:[#allocation2 + $0x8] sm:$0xff] 0.0
    %47 = vst [vmem:[#allocation2 + $0x10] sm:$0xff] 0.0
    %48 = vst [vmem:[#allocation2 + $0x18] sm:$0xff] 0.0
    %49 = vst [vmem:[#allocation2 + $0x20] sm:$0xff] 0.0
    %50 = vst [vmem:[#allocation2 + $0x28] sm:$0xff] 0.0
    %51 = vst [vmem:[#allocation2 + $0x30] sm:$0xff] 0.0
    %52 = vst [vmem:[#allocation2 + $0x38] sm:$0xff] 0.0
    %53 = vst [vmem:[#allocation2 + $0x40] sm:$0xff] 0.0
    %54 = vst [vmem:[#allocation2 + $0x48] sm:$0xff] 0.0
    %55 = vst [vmem:[#allocation2 + $0x50] sm:$0xff] 0.0
    %56 = vst [vmem:[#allocation2 + $0x58] sm:$0xff] 0.0
    %57 = vst [vmem:[#allocation2 + $0x60] sm:$0xff] 0.0
    %58 = vst [vmem:[#allocation2 + $0x68] sm:$0xff] 0.0
    %59 = vst [vmem:[#allocation2 + $0x70] sm:$0xff] 0.0
    %60 = vst [vmem:[#allocation2 + $0x78] sm:$0xff] 0.0
    %61 = vst [vmem:[#allocation2 + $0x80] sm:$0xff] 0.0
    %62 = vst [vmem:[#allocation2 + $0x88] sm:$0xff] 0.0
    %63 = vst [vmem:[#allocation2 + $0x90] sm:$0xff] 0.0
    %64 = vst [vmem:[#allocation2 + $0x98] sm:$0xff] 0.0
    %65 = vst [vmem:[#allocation2 + $0xa0] sm:$0xff] 0.0
    %66 = vst [vmem:[#allocation2 + $0xa8] sm:$0xff] 0.0
    %67 = vst [vmem:[#allocation2 + $0xb0] sm:$0xff] 0.0
    %68 = vst [vmem:[#allocation2 + $0xb8] sm:$0xff] 0.0
    %69 = vst [vmem:[#allocation2 + $0xc0] sm:$0xff] 0.0
    %70 = vst [vmem:[#allocation2 + $0xc8] sm:$0xff] 0.0
    %71 = vst [vmem:[#allocation2 + $0xd0] sm:$0xff] 0.0
    %72 = vst [vmem:[#allocation2 + $0xd8] sm:$0xff] 0.0
    %73 = vst [vmem:[#allocation2 + $0xe0] sm:$0xff] 0.0
    %74 = vst [vmem:[#allocation2 + $0xe8] sm:$0xff] 0.0
    %75 = vst [vmem:[#allocation2 + $0xf0] sm:$0xff] 0.0
    %76 = vst [vmem:[#allocation2 + $0xf8] sm:$0xff] 0.0
    %77 = vst [vmem:[#allocation2 + $0x100] sm:$0xff] 0.0
    %78 = vst [vmem:[#allocation2 + $0x108] sm:$0xff] 0.0
    %79 = vst [vmem:[#allocation2 + $0x110] sm:$0xff] 0.0
    %80 = vst [vmem:[#allocation2 + $0x118] sm:$0xff] 0.0
    %81 = vst [vmem:[#allocation2 + $0x120] sm:$0xff] 0.0
    %82 = vst [vmem:[#allocation2 + $0x128] sm:$0xff] 0.0
    %83 = vst [vmem:[#allocation2 + $0x130] sm:$0xff] 0.0
    %84 = vst [vmem:[#allocation2 + $0x138] sm:$0xff] 0.0
    %85 = vst [vmem:[#allocation2 + $0x140] sm:$0xff] 0.0
    %86 = vst [vmem:[#allocation2 + $0x148] sm:$0xff] 0.0
    %87 = vst [vmem:[#allocation2 + $0x150] sm:$0xff] 0.0
    %88 = vst [vmem:[#allocation2 + $0x158] sm:$0xff] 0.0
    %89 = vst [vmem:[#allocation2 + $0x160] sm:$0xff] 0.0
    %90 = vst [vmem:[#allocation2 + $0x168] sm:$0xff] 0.0
    %91 = vst [vmem:[#allocation2 + $0x170] sm:$0xff] 0.0
    %92 = vst [vmem:[#allocation2 + $0x178] sm:$0xff] 0.0
    %93 = vst [vmem:[#allocation2 + $0x180] sm:$0xff] 0.0
    %94 = vst [vmem:[#allocation2 + $0x188] sm:$0xff] 0.0
    %95 = vst [vmem:[#allocation2 + $0x190] sm:$0xff] 0.0
    %96 = vst [vmem:[#allocation2 + $0x198] sm:$0xff] 0.0
    %97 = vst [vmem:[#allocation2 + $0x1a0] sm:$0xff] 0.0
    %98 = vst [vmem:[#allocation2 + $0x1a8] sm:$0xff] 0.0
    %99 = vst [vmem:[#allocation2 + $0x1b0] sm:$0xff] 0.0
    %100 = vst [vmem:[#allocation2 + $0x1b8] sm:$0xff] 0.0
    %101 = vst [vmem:[#allocation2 + $0x1c0] sm:$0xff] 0.0
    %102 = vst [vmem:[#allocation2 + $0x1c8] sm:$0xff] 0.0
    %103 = vst [vmem:[#allocation2 + $0x1d0] sm:$0xff] 0.0
    %104 = vst [vmem:[#allocation2 + $0x1d8] sm:$0xff] 0.0
    %105 = vst [vmem:[#allocation2 + $0x1e0] sm:$0xff] 0.0
    %106 = vst [vmem:[#allocation2 + $0x1e8] sm:$0xff] 0.0
    %107 = vst [vmem:[#allocation2 + $0x1f0] sm:$0xff] 0.0
    %108 = vst [vmem:[#allocation2 + $0x1f8] sm:$0xff] 0.0
    %v109 = vld [vmem:[%s0] sm:$0xff]
    %v110 = vld [vmem:[%s0 + $0x8] sm:$0xff]
    %v111 = vld [vmem:[%s0 + $0x18] sm:$0xff]
    %v112 = vld [vmem:[%s0 + $0x20] sm:$0xff]
    %v113 = vld [vmem:[%s0 + $0x30] sm:$0xff]
    %v114 = vld [vmem:[%s0 + $0x38] sm:$0xff]
    %v115 = vld [vmem:[%s0 + $0x48] sm:$0xff]
    %v116 = vld [vmem:[%s0 + $0x50] sm:$0xff]
    %v117 = vld [vmem:[%s0 + $0x60] sm:$0xff]
    %v118 = vld [vmem:[%s0 + $0x68] sm:$0xff]
    %v119 = vld [vmem:[%s0 + $0x78] sm:$0xff]
    %v120 = vld [vmem:[%s0 + $0x80] sm:$0xff]
    %v121 = vld [vmem:[%s0 + $0x90] sm:$0xff]
    %v122 = vld [vmem:[%s0 + $0x98] sm:$0xff]
    %v123 = vld [vmem:[%s0 + $0xa8] sm:$0xff]
    %v124 = vld [vmem:[%s0 + $0xb0] sm:$0xff]
    %v125 = vld [vmem:[%s0 + $0xc0] sm:$0xff]
    %v126 = vld [vmem:[%s0 + $0xc8] sm:$0xff]
    %v127 = vld [vmem:[%s0 + $0xd8] sm:$0xff]
    %v128 = vld [vmem:[%s0 + $0xe0] sm:$0xff]
    %v129 = vld [vmem:[%s0 + $0xf0] sm:$0xff]
    %v130 = vld [vmem:[%s0 + $0xf8] sm:$0xff]
    %v131 = vld [vmem:[%s0 + $0x108] sm:$0xff]
    %v132 = vld [vmem:[%s0 + $0x110] sm:$0xff]
    %v133 = vld [vmem:[%s0 + $0x120] sm:$0xff]
    %v134 = vld [vmem:[%s0 + $0x128] sm:$0xff]
    %v135 = vld [vmem:[%s0 + $0x138] sm:$0xff]
    %v136 = vld [vmem:[%s0 + $0x140] sm:$0xff]
    %v137 = vld [vmem:[%s0 + $0x150] sm:$0xff]
    %v138 = vld [vmem:[%s0 + $0x158] sm:$0xff]
    %v139 = vld [vmem:[%s0 + $0x168] sm:$0xff]
    %v140 = vld [vmem:[%s0 + $0x170] sm:$0xff]
    %v141 = vld [vmem:[%s0 + $0x1b0] sm:$0xff]
    %v142 = vld [vmem:[%s0 + $0x1b8] sm:$0xff]
    %v143 = vld [vmem:[%s0 + $0x1c8] sm:$0xff]
    %v144 = vld [vmem:[%s0 + $0x1d0] sm:$0xff]
    %v145 = vld [vmem:[%s0 + $0x1e0] sm:$0xff]
    %v146 = vld [vmem:[%s0 + $0x1e8] sm:$0xff]
    %v147 = vld [vmem:[%s0 + $0x1f8] sm:$0xff]
    %v148 = vld [vmem:[%s0 + $0x200] sm:$0xff]
    %v149 = vld [vmem:[%s0 + $0x210] sm:$0xff]
    %v150 = vld [vmem:[%s0 + $0x218] sm:$0xff]
    %v151 = vld [vmem:[%s0 + $0x228] sm:$0xff]
    %v152 = vld [vmem:[%s0 + $0x230] sm:$0xff]
    %v153 = vld [vmem:[%s0 + $0x240] sm:$0xff]
    %v154 = vld [vmem:[%s0 + $0x248] sm:$0xff]
    %v155 = vld [vmem:[%s0 + $0x258] sm:$0xff]
    %v156 = vld [vmem:[%s0 + $0x260] sm:$0xff]
    %v157 = vld [vmem:[%s0 + $0x270] sm:$0xff]
    %v158 = vld [vmem:[%s0 + $0x278] sm:$0xff]
    %v159 = vld [vmem:[%s0 + $0x288] sm:$0xff]
    %v160 = vld [vmem:[%s0 + $0x290] sm:$0xff]
    %v161 = vld [vmem:[%s0 + $0x2a0] sm:$0xff]
    %v162 = vld [vmem:[%s0 + $0x2a8] sm:$0xff]
    %v163 = vld [vmem:[%s0 + $0x2b8] sm:$0xff]
    %v164 = vld [vmem:[%s0 + $0x2c0] sm:$0xff]
    %v165 = vld [vmem:[%s0 + $0x2d0] sm:$0xff]
    %v166 = vld [vmem:[%s0 + $0x2d8] sm:$0xff]
    %v167 = vld [vmem:[%s0 + $0x2e8] sm:$0xff]
    %v168 = vld [vmem:[%s0 + $0x2f0] sm:$0xff]
    %v169 = vld [vmem:[%s0 + $0x300] sm:$0xff]
    %v170 = vld [vmem:[%s0 + $0x308] sm:$0xff]
    %v171 = vld [vmem:[%s0 + $0x318] sm:$0xff]
    %v172 = vld [vmem:[%s0 + $0x320] sm:$0xff]
    %vm173 = vcmask 31744
    %174 = vst.msk [vmem:[#allocation2] sm:$0xff] %vm173, %v109
    %175 = vst.msk [vmem:[#allocation2 + $0x8] sm:$0xff] %vm173, %v110
    %176 = vst.msk [vmem:[#allocation2 + $0x10] sm:$0xff] %vm173, %v111
    %177 = vst.msk [vmem:[#allocation2 + $0x18] sm:$0xff] %vm173, %v112
    %178 = vst.msk [vmem:[#allocation2 + $0x20] sm:$0xff] %vm173, %v113
    %179 = vst.msk [vmem:[#allocation2 + $0x28] sm:$0xff] %vm173, %v114
    %180 = vst.msk [vmem:[#allocation2 + $0x30] sm:$0xff] %vm173, %v115
    %181 = vst.msk [vmem:[#allocation2 + $0x38] sm:$0xff] %vm173, %v116
    %182 = vst.msk [vmem:[#allocation2 + $0x40] sm:$0xff] %vm173, %v117
    %183 = vst.msk [vmem:[#allocation2 + $0x48] sm:$0xff] %vm173, %v118
    %184 = vst.msk [vmem:[#allocation2 + $0x50] sm:$0xff] %vm173, %v119
    %185 = vst.msk [vmem:[#allocation2 + $0x58] sm:$0xff] %vm173, %v120
    %186 = vst.msk [vmem:[#allocation2 + $0x60] sm:$0xff] %vm173, %v121
    %187 = vst.msk [vmem:[#allocation2 + $0x68] sm:$0xff] %vm173, %v122
    %188 = vst.msk [vmem:[#allocation2 + $0x70] sm:$0xff] %vm173, %v123
    %189 = vst.msk [vmem:[#allocation2 + $0x78] sm:$0xff] %vm173, %v124
    %190 = vst.msk [vmem:[#allocation2 + $0x80] sm:$0xff] %vm173, %v125
    %191 = vst.msk [vmem:[#allocation2 + $0x88] sm:$0xff] %vm173, %v126
    %192 = vst.msk [vmem:[#allocation2 + $0x90] sm:$0xff] %vm173, %v127
    %193 = vst.msk [vmem:[#allocation2 + $0x98] sm:$0xff] %vm173, %v128
    %194 = vst.msk [vmem:[#allocation2 + $0xa0] sm:$0xff] %vm173, %v129
    %195 = vst.msk [vmem:[#allocation2 + $0xa8] sm:$0xff] %vm173, %v130
    %196 = vst.msk [vmem:[#allocation2 + $0xb0] sm:$0xff] %vm173, %v131
    %197 = vst.msk [vmem:[#allocation2 + $0xb8] sm:$0xff] %vm173, %v132
    %198 = vst.msk [vmem:[#allocation2 + $0xc0] sm:$0xff] %vm173, %v133
    %199 = vst.msk [vmem:[#allocation2 + $0xc8] sm:$0xff] %vm173, %v134
    %200 = vst.msk [vmem:[#allocation2 + $0xd0] sm:$0xff] %vm173, %v135
    %201 = vst.msk [vmem:[#allocation2 + $0xd8] sm:$0xff] %vm173, %v136
    %202 = vst.msk [vmem:[#allocation2 + $0xe0] sm:$0xff] %vm173, %v137
    %203 = vst.msk [vmem:[#allocation2 + $0xe8] sm:$0xff] %vm173, %v138
    %204 = vst.msk [vmem:[#allocation2 + $0xf0] sm:$0xff] %vm173, %v139
    %205 = vst.msk [vmem:[#allocation2 + $0xf8] sm:$0xff] %vm173, %v140
    %206 = vst.msk [vmem:[#allocation2 + $0x100] sm:$0xff] %vm173, %v141
    %207 = vst.msk [vmem:[#allocation2 + $0x108] sm:$0xff] %vm173, %v142
    %208 = vst.msk [vmem:[#allocation2 + $0x110] sm:$0xff] %vm173, %v143
    %209 = vst.msk [vmem:[#allocation2 + $0x118] sm:$0xff] %vm173, %v144
    %210 = vst.msk [vmem:[#allocation2 + $0x120] sm:$0xff] %vm173, %v145
    %211 = vst.msk [vmem:[#allocation2 + $0x128] sm:$0xff] %vm173, %v146
    %212 = vst.msk [vmem:[#allocation2 + $0x130] sm:$0xff] %vm173, %v147
    %213 = vst.msk [vmem:[#allocation2 + $0x138] sm:$0xff] %vm173, %v148
    %214 = vst.msk [vmem:[#allocation2 + $0x140] sm:$0xff] %vm173, %v149
    %215 = vst.msk [vmem:[#allocation2 + $0x148] sm:$0xff] %vm173, %v150
    %216 = vst.msk [vmem:[#allocation2 + $0x150] sm:$0xff] %vm173, %v151
    %217 = vst.msk [vmem:[#allocation2 + $0x158] sm:$0xff] %vm173, %v152
    %218 = vst.msk [vmem:[#allocation2 + $0x160] sm:$0xff] %vm173, %v153
    %219 = vst.msk [vmem:[#allocation2 + $0x168] sm:$0xff] %vm173, %v154
    %220 = vst.msk [vmem:[#allocation2 + $0x170] sm:$0xff] %vm173, %v155
    %221 = vst.msk [vmem:[#allocation2 + $0x178] sm:$0xff] %vm173, %v156
    %222 = vst.msk [vmem:[#allocation2 + $0x180] sm:$0xff] %vm173, %v157
    %223 = vst.msk [vmem:[#allocation2 + $0x188] sm:$0xff] %vm173, %v158
    %224 = vst.msk [vmem:[#allocation2 + $0x190] sm:$0xff] %vm173, %v159
    %225 = vst.msk [vmem:[#allocation2 + $0x198] sm:$0xff] %vm173, %v160
    %226 = vst.msk [vmem:[#allocation2 + $0x1a0] sm:$0xff] %vm173, %v161
    %227 = vst.msk [vmem:[#allocation2 + $0x1a8] sm:$0xff] %vm173, %v162
    %228 = vst.msk [vmem:[#allocation2 + $0x1b0] sm:$0xff] %vm173, %v163
    %229 = vst.msk [vmem:[#allocation2 + $0x1b8] sm:$0xff] %vm173, %v164
    %230 = vst.msk [vmem:[#allocation2 + $0x1c0] sm:$0xff] %vm173, %v165
    %231 = vst.msk [vmem:[#allocation2 + $0x1c8] sm:$0xff] %vm173, %v166
    %232 = vst.msk [vmem:[#allocation2 + $0x1d0] sm:$0xff] %vm173, %v167
    %233 = vst.msk [vmem:[#allocation2 + $0x1d8] sm:$0xff] %vm173, %v168
    %234 = vst.msk [vmem:[#allocation2 + $0x1e0] sm:$0xff] %vm173, %v169
    %235 = vst.msk [vmem:[#allocation2 + $0x1e8] sm:$0xff] %vm173, %v170
    %236 = vst.msk [vmem:[#allocation2 + $0x1f0] sm:$0xff] %vm173, %v171
    %237 = vst.msk [vmem:[#allocation2 + $0x1f8] sm:$0xff] %vm173, %v172
    %v238 = vld [vmem:[%s0 + $0x1] sm:$0xff]
    %v239 = vld [vmem:[%s0 + $0x9] sm:$0xff]
    %v240 = vld [vmem:[%s0 + $0x19] sm:$0xff]
    %v241 = vld [vmem:[%s0 + $0x21] sm:$0xff]
    %v242 = vld [vmem:[%s0 + $0x31] sm:$0xff]
    %v243 = vld [vmem:[%s0 + $0x39] sm:$0xff]
    %v244 = vld [vmem:[%s0 + $0x49] sm:$0xff]
    %v245 = vld [vmem:[%s0 + $0x51] sm:$0xff]
    %v246 = vld [vmem:[%s0 + $0x61] sm:$0xff]
    %v247 = vld [vmem:[%s0 + $0x69] sm:$0xff]
    %v248 = vld [vmem:[%s0 + $0x79] sm:$0xff]
    %v249 = vld [vmem:[%s0 + $0x81] sm:$0xff]
    %v250 = vld [vmem:[%s0 + $0x91] sm:$0xff]
    %v251 = vld [vmem:[%s0 + $0x99] sm:$0xff]
    %v252 = vld [vmem:[%s0 + $0xa9] sm:$0xff]
    %v253 = vld [vmem:[%s0 + $0xb1] sm:$0xff]
    %v254 = vld [vmem:[%s0 + $0xc1] sm:$0xff]
    %v255 = vld [vmem:[%s0 + $0xc9] sm:$0xff]
    %v256 = vld [vmem:[%s0 + $0xd9] sm:$0xff]
    %v257 = vld [vmem:[%s0 + $0xe1] sm:$0xff]
    %v258 = vld [vmem:[%s0 + $0xf1] sm:$0xff]
    %v259 = vld [vmem:[%s0 + $0xf9] sm:$0xff]
    %v260 = vld [vmem:[%s0 + $0x109] sm:$0xff]
    %v261 = vld [vmem:[%s0 + $0x111] sm:$0xff]
    %v262 = vld [vmem:[%s0 + $0x121] sm:$0xff]
    %v263 = vld [vmem:[%s0 + $0x129] sm:$0xff]
    %v264 = vld [vmem:[%s0 + $0x139] sm:$0xff]
    %v265 = vld [vmem:[%s0 + $0x141] sm:$0xff]
    %v266 = vld [vmem:[%s0 + $0x151] sm:$0xff]
    %v267 = vld [vmem:[%s0 + $0x159] sm:$0xff]
    %v268 = vld [vmem:[%s0 + $0x169] sm:$0xff]
    %v269 = vld [vmem:[%s0 + $0x171] sm:$0xff]
    %v270 = vld [vmem:[%s0 + $0x1b1] sm:$0xff]
    %v271 = vld [vmem:[%s0 + $0x1b9] sm:$0xff]
    %v272 = vld [vmem:[%s0 + $0x1c9] sm:$0xff]
    %v273 = vld [vmem:[%s0 + $0x1d1] sm:$0xff]
    %v274 = vld [vmem:[%s0 + $0x1e1] sm:$0xff]
    %v275 = vld [vmem:[%s0 + $0x1e9] sm:$0xff]
    %v276 = vld [vmem:[%s0 + $0x1f9] sm:$0xff]
    %v277 = vld [vmem:[%s0 + $0x201] sm:$0xff]
    %v278 = vld [vmem:[%s0 + $0x211] sm:$0xff]
    %v279 = vld [vmem:[%s0 + $0x219] sm:$0xff]
    %v280 = vld [vmem:[%s0 + $0x229] sm:$0xff]
    %v281 = vld [vmem:[%s0 + $0x231] sm:$0xff]
    %v282 = vld [vmem:[%s0 + $0x241] sm:$0xff]
    %v283 = vld [vmem:[%s0 + $0x249] sm:$0xff]
    %v284 = vld [vmem:[%s0 + $0x259] sm:$0xff]
    %v285 = vld [vmem:[%s0 + $0x261] sm:$0xff]
    %v286 = vld [vmem:[%s0 + $0x271] sm:$0xff]
    %v287 = vld [vmem:[%s0 + $0x279] sm:$0xff]
    %v288 = vld [vmem:[%s0 + $0x289] sm:$0xff]
    %v289 = vld [vmem:[%s0 + $0x291] sm:$0xff]
    %v290 = vld [vmem:[%s0 + $0x2a1] sm:$0xff]
    %v291 = vld [vmem:[%s0 + $0x2a9] sm:$0xff]
    %v292 = vld [vmem:[%s0 + $0x2b9] sm:$0xff]
    %v293 = vld [vmem:[%s0 + $0x2c1] sm:$0xff]
    %v294 = vld [vmem:[%s0 + $0x2d1] sm:$0xff]
    %v295 = vld [vmem:[%s0 + $0x2d9] sm:$0xff]
    %v296 = vld [vmem:[%s0 + $0x2e9] sm:$0xff]
    %v297 = vld [vmem:[%s0 + $0x2f1] sm:$0xff]
    %v298 = vld [vmem:[%s0 + $0x301] sm:$0xff]
    %v299 = vld [vmem:[%s0 + $0x309] sm:$0xff]
    %v300 = vld [vmem:[%s0 + $0x319] sm:$0xff]
    %v301 = vld [vmem:[%s0 + $0x321] sm:$0xff]
    %366 = vrot.lane.b32.xlu0 %v238, 4
    %v367 = vpop.permute.xlu0 %366
    %368 = vrot.lane.b32.xlu0 %v239, 4
    %v369 = vpop.permute.xlu0 %368
    %370 = vrot.lane.b32.xlu0 %v240, 4
    %v371 = vpop.permute.xlu0 %370
    %372 = vrot.lane.b32.xlu0 %v241, 4
    %v373 = vpop.permute.xlu0 %372
    %374 = vrot.lane.b32.xlu0 %v242, 4
    %v375 = vpop.permute.xlu0 %374
    %376 = vrot.lane.b32.xlu0 %v243, 4
    %v377 = vpop.permute.xlu0 %376
    %378 = vrot.lane.b32.xlu0 %v244, 4
    %v379 = vpop.permute.xlu0 %378
    %380 = vrot.lane.b32.xlu0 %v245, 4
    %v381 = vpop.permute.xlu0 %380
    %382 = vrot.lane.b32.xlu0 %v246, 4
    %v383 = vpop.permute.xlu0 %382
    %384 = vrot.lane.b32.xlu0 %v247, 4
    %v385 = vpop.permute.xlu0 %384
    %386 = vrot.lane.b32.xlu0 %v248, 4
    %v387 = vpop.permute.xlu0 %386
    %388 = vrot.lane.b32.xlu0 %v249, 4
    %v389 = vpop.permute.xlu0 %388
    %390 = vrot.lane.b32.xlu0 %v250, 4
    %v391 = vpop.permute.xlu0 %390
    %392 = vrot.lane.b32.xlu0 %v251, 4
    %v393 = vpop.permute.xlu0 %392
    %394 = vrot.lane.b32.xlu0 %v252, 4
    %v395 = vpop.permute.xlu0 %394
    %396 = vrot.lane.b32.xlu0 %v253, 4
    %v397 = vpop.permute.xlu0 %396
    %398 = vrot.lane.b32.xlu0 %v254, 4
    %v399 = vpop.permute.xlu0 %398
    %400 = vrot.lane.b32.xlu0 %v255, 4
    %v401 = vpop.permute.xlu0 %400
    %402 = vrot.lane.b32.xlu0 %v256, 4
    %v403 = vpop.permute.xlu0 %402
    %404 = vrot.lane.b32.xlu0 %v257, 4
    %v405 = vpop.permute.xlu0 %404
    %406 = vrot.lane.b32.xlu0 %v258, 4
    %v407 = vpop.permute.xlu0 %406
    %408 = vrot.lane.b32.xlu0 %v259, 4
    %v409 = vpop.permute.xlu0 %408
    %410 = vrot.lane.b32.xlu0 %v260, 4
    %v411 = vpop.permute.xlu0 %410
    %412 = vrot.lane.b32.xlu0 %v261, 4
    %v413 = vpop.permute.xlu0 %412
    %414 = vrot.lane.b32.xlu0 %v262, 4
    %v415 = vpop.permute.xlu0 %414
    %416 = vrot.lane.b32.xlu0 %v263, 4
    %v417 = vpop.permute.xlu0 %416
    %418 = vrot.lane.b32.xlu0 %v264, 4
    %v419 = vpop.permute.xlu0 %418
    %420 = vrot.lane.b32.xlu0 %v265, 4
    %v421 = vpop.permute.xlu0 %420
    %422 = vrot.lane.b32.xlu0 %v266, 4
    %v423 = vpop.permute.xlu0 %422
    %424 = vrot.lane.b32.xlu0 %v267, 4
    %v425 = vpop.permute.xlu0 %424
    %426 = vrot.lane.b32.xlu0 %v268, 4
    %v427 = vpop.permute.xlu0 %426
    %428 = vrot.lane.b32.xlu0 %v269, 4
    %v429 = vpop.permute.xlu0 %428
    %430 = vrot.lane.b32.xlu0 %v270, 4
    %v431 = vpop.permute.xlu0 %430
    %432 = vrot.lane.b32.xlu0 %v271, 4
    %v433 = vpop.permute.xlu0 %432
    %434 = vrot.lane.b32.xlu0 %v272, 4
    %v435 = vpop.permute.xlu0 %434
    %436 = vrot.lane.b32.xlu0 %v273, 4
    %v437 = vpop.permute.xlu0 %436
    %438 = vrot.lane.b32.xlu0 %v274, 4
    %v439 = vpop.permute.xlu0 %438
    %440 = vrot.lane.b32.xlu0 %v275, 4
    %v441 = vpop.permute.xlu0 %440
    %442 = vrot.lane.b32.xlu0 %v276, 4
    %v443 = vpop.permute.xlu0 %442
    %444 = vrot.lane.b32.xlu0 %v277, 4
    %v445 = vpop.permute.xlu0 %444
    %446 = vrot.lane.b32.xlu0 %v278, 4
    %v447 = vpop.permute.xlu0 %446
    %448 = vrot.lane.b32.xlu0 %v279, 4
    %v449 = vpop.permute.xlu0 %448
    %450 = vrot.lane.b32.xlu0 %v280, 4
    %v451 = vpop.permute.xlu0 %450
    %452 = vrot.lane.b32.xlu0 %v281, 4
    %v453 = vpop.permute.xlu0 %452
    %454 = vrot.lane.b32.xlu0 %v282, 4
    %v455 = vpop.permute.xlu0 %454
    %456 = vrot.lane.b32.xlu0 %v283, 4
    %v457 = vpop.permute.xlu0 %456
    %458 = vrot.lane.b32.xlu0 %v284, 4
    %v459 = vpop.permute.xlu0 %458
    %460 = vrot.lane.b32.xlu0 %v285, 4
    %v461 = vpop.permute.xlu0 %460
    %462 = vrot.lane.b32.xlu0 %v286, 4
    %v463 = vpop.permute.xlu0 %462
    %464 = vrot.lane.b32.xlu0 %v287, 4
    %v465 = vpop.permute.xlu0 %464
    %466 = vrot.lane.b32.xlu0 %v288, 4
    %v467 = vpop.permute.xlu0 %466
    %468 = vrot.lane.b32.xlu0 %v289, 4
    %v469 = vpop.permute.xlu0 %468
    %470 = vrot.lane.b32.xlu0 %v290, 4
    %v471 = vpop.permute.xlu0 %470
    %472 = vrot.lane.b32.xlu0 %v291, 4
    %v473 = vpop.permute.xlu0 %472
    %474 = vrot.lane.b32.xlu0 %v292, 4
    %v475 = vpop.permute.xlu0 %474
    %476 = vrot.lane.b32.xlu0 %v293, 4
    %v477 = vpop.permute.xlu0 %476
    %478 = vrot.lane.b32.xlu0 %v294, 4
    %v479 = vpop.permute.xlu0 %478
    %480 = vrot.lane.b32.xlu0 %v295, 4
    %v481 = vpop.permute.xlu0 %480
    %482 = vrot.lane.b32.xlu0 %v296, 4
    %v483 = vpop.permute.xlu0 %482
    %484 = vrot.lane.b32.xlu0 %v297, 4
    %v485 = vpop.permute.xlu0 %484
    %486 = vrot.lane.b32.xlu0 %v298, 4
    %v487 = vpop.permute.xlu0 %486
    %488 = vrot.lane.b32.xlu0 %v299, 4
    %v489 = vpop.permute.xlu0 %488
    %490 = vrot.lane.b32.xlu0 %v300, 4
    %v491 = vpop.permute.xlu0 %490
    %492 = vrot.lane.b32.xlu0 %v301, 4
    %v493 = vpop.permute.xlu0 %492
    %vm558 = vcmask 64544
    %559 = vst.msk [vmem:[#allocation2] sm:$0xff] %vm558, %v367
    %560 = vst.msk [vmem:[#allocation2 + $0x8] sm:$0xff] %vm558, %v369
    %561 = vst.msk [vmem:[#allocation2 + $0x10] sm:$0xff] %vm558, %v371
    %562 = vst.msk [vmem:[#allocation2 + $0x18] sm:$0xff] %vm558, %v373
    %563 = vst.msk [vmem:[#allocation2 + $0x20] sm:$0xff] %vm558, %v375
    %564 = vst.msk [vmem:[#allocation2 + $0x28] sm:$0xff] %vm558, %v377
    %565 = vst.msk [vmem:[#allocation2 + $0x30] sm:$0xff] %vm558, %v379
    %566 = vst.msk [vmem:[#allocation2 + $0x38] sm:$0xff] %vm558, %v381
    %567 = vst.msk [vmem:[#allocation2 + $0x40] sm:$0xff] %vm558, %v383
    %568 = vst.msk [vmem:[#allocation2 + $0x48] sm:$0xff] %vm558, %v385
    %569 = vst.msk [vmem:[#allocation2 + $0x50] sm:$0xff] %vm558, %v387
    %570 = vst.msk [vmem:[#allocation2 + $0x58] sm:$0xff] %vm558, %v389
    %571 = vst.msk [vmem:[#allocation2 + $0x60] sm:$0xff] %vm558, %v391
    %572 = vst.msk [vmem:[#allocation2 + $0x68] sm:$0xff] %vm558, %v393
    %573 = vst.msk [vmem:[#allocation2 + $0x70] sm:$0xff] %vm558, %v395
    %574 = vst.msk [vmem:[#allocation2 + $0x78] sm:$0xff] %vm558, %v397
    %575 = vst.msk [vmem:[#allocation2 + $0x80] sm:$0xff] %vm558, %v399
    %576 = vst.msk [vmem:[#allocation2 + $0x88] sm:$0xff] %vm558, %v401
    %577 = vst.msk [vmem:[#allocation2 + $0x90] sm:$0xff] %vm558, %v403
    %578 = vst.msk [vmem:[#allocation2 + $0x98] sm:$0xff] %vm558, %v405
    %579 = vst.msk [vmem:[#allocation2 + $0xa0] sm:$0xff] %vm558, %v407
    %580 = vst.msk [vmem:[#allocation2 + $0xa8] sm:$0xff] %vm558, %v409
    %581 = vst.msk [vmem:[#allocation2 + $0xb0] sm:$0xff] %vm558, %v411
    %582 = vst.msk [vmem:[#allocation2 + $0xb8] sm:$0xff] %vm558, %v413
    %583 = vst.msk [vmem:[#allocation2 + $0xc0] sm:$0xff] %vm558, %v415
    %584 = vst.msk [vmem:[#allocation2 + $0xc8] sm:$0xff] %vm558, %v417
    %585 = vst.msk [vmem:[#allocation2 + $0xd0] sm:$0xff] %vm558, %v419
    %586 = vst.msk [vmem:[#allocation2 + $0xd8] sm:$0xff] %vm558, %v421
    %587 = vst.msk [vmem:[#allocation2 + $0xe0] sm:$0xff] %vm558, %v423
    %588 = vst.msk [vmem:[#allocation2 + $0xe8] sm:$0xff] %vm558, %v425
    %589 = vst.msk [vmem:[#allocation2 + $0xf0] sm:$0xff] %vm558, %v427
    %590 = vst.msk [vmem:[#allocation2 + $0xf8] sm:$0xff] %vm558, %v429
    %591 = vst.msk [vmem:[#allocation2 + $0x100] sm:$0xff] %vm558, %v431
    %592 = vst.msk [vmem:[#allocation2 + $0x108] sm:$0xff] %vm558, %v433
    %593 = vst.msk [vmem:[#allocation2 + $0x110] sm:$0xff] %vm558, %v435
    %594 = vst.msk [vmem:[#allocation2 + $0x118] sm:$0xff] %vm558, %v437
    %595 = vst.msk [vmem:[#allocation2 + $0x120] sm:$0xff] %vm558, %v439
    %596 = vst.msk [vmem:[#allocation2 + $0x128] sm:$0xff] %vm558, %v441
    %597 = vst.msk [vmem:[#allocation2 + $0x130] sm:$0xff] %vm558, %v443
    %598 = vst.msk [vmem:[#allocation2 + $0x138] sm:$0xff] %vm558, %v445
    %599 = vst.msk [vmem:[#allocation2 + $0x140] sm:$0xff] %vm558, %v447
    %600 = vst.msk [vmem:[#allocation2 + $0x148] sm:$0xff] %vm558, %v449
    %601 = vst.msk [vmem:[#allocation2 + $0x150] sm:$0xff] %vm558, %v451
    %602 = vst.msk [vmem:[#allocation2 + $0x158] sm:$0xff] %vm558, %v453
    %603 = vst.msk [vmem:[#allocation2 + $0x160] sm:$0xff] %vm558, %v455
    %604 = vst.msk [vmem:[#allocation2 + $0x168] sm:$0xff] %vm558, %v457
    %605 = vst.msk [vmem:[#allocation2 + $0x170] sm:$0xff] %vm558, %v459
    %606 = vst.msk [vmem:[#allocation2 + $0x178] sm:$0xff] %vm558, %v461
    %607 = vst.msk [vmem:[#allocation2 + $0x180] sm:$0xff] %vm558, %v463
    %608 = vst.msk [vmem:[#allocation2 + $0x188] sm:$0xff] %vm558, %v465
    %609 = vst.msk [vmem:[#allocation2 + $0x190] sm:$0xff] %vm558, %v467
    %610 = vst.msk [vmem:[#allocation2 + $0x198] sm:$0xff] %vm558, %v469
    %611 = vst.msk [vmem:[#allocation2 + $0x1a0] sm:$0xff] %vm558, %v471
    %612 = vst.msk [vmem:[#allocation2 + $0x1a8] sm:$0xff] %vm558, %v473
    %613 = vst.msk [vmem:[#allocation2 + $0x1b0] sm:$0xff] %vm558, %v475
    %614 = vst.msk [vmem:[#allocation2 + $0x1b8] sm:$0xff] %vm558, %v477
    %615 = vst.msk [vmem:[#allocation2 + $0x1c0] sm:$0xff] %vm558, %v479
    %616 = vst.msk [vmem:[#allocation2 + $0x1c8] sm:$0xff] %vm558, %v481
    %617 = vst.msk [vmem:[#allocation2 + $0x1d0] sm:$0xff] %vm558, %v483
    %618 = vst.msk [vmem:[#allocation2 + $0x1d8] sm:$0xff] %vm558, %v485
    %619 = vst.msk [vmem:[#allocation2 + $0x1e0] sm:$0xff] %vm558, %v487
    %620 = vst.msk [vmem:[#allocation2 + $0x1e8] sm:$0xff] %vm558, %v489
    %621 = vst.msk [vmem:[#allocation2 + $0x1f0] sm:$0xff] %vm558, %v491
    %622 = vst.msk [vmem:[#allocation2 + $0x1f8] sm:$0xff] %vm558, %v493
    %v623 = vld [vmem:[%s0 + $0x2] sm:$0xff]
    %v624 = vld [vmem:[%s0 + $0xa] sm:$0xff]
    %v625 = vld [vmem:[%s0 + $0x1a] sm:$0xff]
    %v626 = vld [vmem:[%s0 + $0x22] sm:$0xff]
    %v627 = vld [vmem:[%s0 + $0x32] sm:$0xff]
    %v628 = vld [vmem:[%s0 + $0x3a] sm:$0xff]
    %v629 = vld [vmem:[%s0 + $0x4a] sm:$0xff]
    %v630 = vld [vmem:[%s0 + $0x52] sm:$0xff]
    %v631 = vld [vmem:[%s0 + $0x62] sm:$0xff]
    %v632 = vld [vmem:[%s0 + $0x6a] sm:$0xff]
    %v633 = vld [vmem:[%s0 + $0x7a] sm:$0xff]
    %v634 = vld [vmem:[%s0 + $0x82] sm:$0xff]
    %v635 = vld [vmem:[%s0 + $0x92] sm:$0xff]
    %v636 = vld [vmem:[%s0 + $0x9a] sm:$0xff]
    %v637 = vld [vmem:[%s0 + $0xaa] sm:$0xff]
    %v638 = vld [vmem:[%s0 + $0xb2] sm:$0xff]
    %v639 = vld [vmem:[%s0 + $0xc2] sm:$0xff]
    %v640 = vld [vmem:[%s0 + $0xca] sm:$0xff]
    %v641 = vld [vmem:[%s0 + $0xda] sm:$0xff]
    %v642 = vld [vmem:[%s0 + $0xe2] sm:$0xff]
    %v643 = vld [vmem:[%s0 + $0xf2] sm:$0xff]
    %v644 = vld [vmem:[%s0 + $0xfa] sm:$0xff]
    %v645 = vld [vmem:[%s0 + $0x10a] sm:$0xff]
    %v646 = vld [vmem:[%s0 + $0x112] sm:$0xff]
    %v647 = vld [vmem:[%s0 + $0x122] sm:$0xff]
    %v648 = vld [vmem:[%s0 + $0x12a] sm:$0xff]
    %v649 = vld [vmem:[%s0 + $0x13a] sm:$0xff]
    %v650 = vld [vmem:[%s0 + $0x142] sm:$0xff]
    %v651 = vld [vmem:[%s0 + $0x152] sm:$0xff]
    %v652 = vld [vmem:[%s0 + $0x15a] sm:$0xff]
    %v653 = vld [vmem:[%s0 + $0x16a] sm:$0xff]
    %v654 = vld [vmem:[%s0 + $0x172] sm:$0xff]
    %v655 = vld [vmem:[%s0 + $0x1b2] sm:$0xff]
    %v656 = vld [vmem:[%s0 + $0x1ba] sm:$0xff]
    %v657 = vld [vmem:[%s0 + $0x1ca] sm:$0xff]
    %v658 = vld [vmem:[%s0 + $0x1d2] sm:$0xff]
    %v659 = vld [vmem:[%s0 + $0x1e2] sm:$0xff]
    %v660 = vld [vmem:[%s0 + $0x1ea] sm:$0xff]
    %v661 = vld [vmem:[%s0 + $0x1fa] sm:$0xff]
    %v662 = vld [vmem:[%s0 + $0x202] sm:$0xff]
    %v663 = vld [vmem:[%s0 + $0x212] sm:$0xff]
    %v664 = vld [vmem:[%s0 + $0x21a] sm:$0xff]
    %v665 = vld [vmem:[%s0 + $0x22a] sm:$0xff]
    %v666 = vld [vmem:[%s0 + $0x232] sm:$0xff]
    %v667 = vld [vmem:[%s0 + $0x242] sm:$0xff]
    %v668 = vld [vmem:[%s0 + $0x24a] sm:$0xff]
    %v669 = vld [vmem:[%s0 + $0x25a] sm:$0xff]
    %v670 = vld [vmem:[%s0 + $0x262] sm:$0xff]
    %v671 = vld [vmem:[%s0 + $0x272] sm:$0xff]
    %v672 = vld [vmem:[%s0 + $0x27a] sm:$0xff]
    %v673 = vld [vmem:[%s0 + $0x28a] sm:$0xff]
    %v674 = vld [vmem:[%s0 + $0x292] sm:$0xff]
    %v675 = vld [vmem:[%s0 + $0x2a2] sm:$0xff]
    %v676 = vld [vmem:[%s0 + $0x2aa] sm:$0xff]
    %v677 = vld [vmem:[%s0 + $0x2ba] sm:$0xff]
    %v678 = vld [vmem:[%s0 + $0x2c2] sm:$0xff]
    %v679 = vld [vmem:[%s0 + $0x2d2] sm:$0xff]
    %v680 = vld [vmem:[%s0 + $0x2da] sm:$0xff]
    %v681 = vld [vmem:[%s0 + $0x2ea] sm:$0xff]
    %v682 = vld [vmem:[%s0 + $0x2f2] sm:$0xff]
    %v683 = vld [vmem:[%s0 + $0x302] sm:$0xff]
    %v684 = vld [vmem:[%s0 + $0x30a] sm:$0xff]
    %v685 = vld [vmem:[%s0 + $0x31a] sm:$0xff]
    %v686 = vld [vmem:[%s0 + $0x322] sm:$0xff]
    %751 = vrot.lane.b32.xlu0 %v623, 8
    %v752 = vpop.permute.xlu0 %751
    %753 = vrot.lane.b32.xlu0 %v624, 8
    %v754 = vpop.permute.xlu0 %753
    %755 = vrot.lane.b32.xlu0 %v625, 8
    %v756 = vpop.permute.xlu0 %755
    %757 = vrot.lane.b32.xlu0 %v626, 8
    %v758 = vpop.permute.xlu0 %757
    %759 = vrot.lane.b32.xlu0 %v627, 8
    %v760 = vpop.permute.xlu0 %759
    %761 = vrot.lane.b32.xlu0 %v628, 8
    %v762 = vpop.permute.xlu0 %761
    %763 = vrot.lane.b32.xlu0 %v629, 8
    %v764 = vpop.permute.xlu0 %763
    %765 = vrot.lane.b32.xlu0 %v630, 8
    %v766 = vpop.permute.xlu0 %765
    %767 = vrot.lane.b32.xlu0 %v631, 8
    %v768 = vpop.permute.xlu0 %767
    %769 = vrot.lane.b32.xlu0 %v632, 8
    %v770 = vpop.permute.xlu0 %769
    %771 = vrot.lane.b32.xlu0 %v633, 8
    %v772 = vpop.permute.xlu0 %771
    %773 = vrot.lane.b32.xlu0 %v634, 8
    %v774 = vpop.permute.xlu0 %773
    %775 = vrot.lane.b32.xlu0 %v635, 8
    %v776 = vpop.permute.xlu0 %775
    %777 = vrot.lane.b32.xlu0 %v636, 8
    %v778 = vpop.permute.xlu0 %777
    %779 = vrot.lane.b32.xlu0 %v637, 8
    %v780 = vpop.permute.xlu0 %779
    %781 = vrot.lane.b32.xlu0 %v638, 8
    %v782 = vpop.permute.xlu0 %781
    %783 = vrot.lane.b32.xlu0 %v639, 8
    %v784 = vpop.permute.xlu0 %783
    %785 = vrot.lane.b32.xlu0 %v640, 8
    %v786 = vpop.permute.xlu0 %785
    %787 = vrot.lane.b32.xlu0 %v641, 8
    %v788 = vpop.permute.xlu0 %787
    %789 = vrot.lane.b32.xlu0 %v642, 8
    %v790 = vpop.permute.xlu0 %789
    %791 = vrot.lane.b32.xlu0 %v643, 8
    %v792 = vpop.permute.xlu0 %791
    %793 = vrot.lane.b32.xlu0 %v644, 8
    %v794 = vpop.permute.xlu0 %793
    %795 = vrot.lane.b32.xlu0 %v645, 8
    %v796 = vpop.permute.xlu0 %795
    %797 = vrot.lane.b32.xlu0 %v646, 8
    %v798 = vpop.permute.xlu0 %797
    %799 = vrot.lane.b32.xlu0 %v647, 8
    %v800 = vpop.permute.xlu0 %799
    %801 = vrot.lane.b32.xlu0 %v648, 8
    %v802 = vpop.permute.xlu0 %801
    %803 = vrot.lane.b32.xlu0 %v649, 8
    %v804 = vpop.permute.xlu0 %803
    %805 = vrot.lane.b32.xlu0 %v650, 8
    %v806 = vpop.permute.xlu0 %805
    %807 = vrot.lane.b32.xlu0 %v651, 8
    %v808 = vpop.permute.xlu0 %807
    %809 = vrot.lane.b32.xlu0 %v652, 8
    %v810 = vpop.permute.xlu0 %809
    %811 = vrot.lane.b32.xlu0 %v653, 8
    %v812 = vpop.permute.xlu0 %811
    %813 = vrot.lane.b32.xlu0 %v654, 8
    %v814 = vpop.permute.xlu0 %813
    %815 = vrot.lane.b32.xlu0 %v655, 8
    %v816 = vpop.permute.xlu0 %815
    %817 = vrot.lane.b32.xlu0 %v656, 8
    %v818 = vpop.permute.xlu0 %817
    %819 = vrot.lane.b32.xlu0 %v657, 8
    %v820 = vpop.permute.xlu0 %819
    %821 = vrot.lane.b32.xlu0 %v658, 8
    %v822 = vpop.permute.xlu0 %821
    %823 = vrot.lane.b32.xlu0 %v659, 8
    %v824 = vpop.permute.xlu0 %823
    %825 = vrot.lane.b32.xlu0 %v660, 8
    %v826 = vpop.permute.xlu0 %825
    %827 = vrot.lane.b32.xlu0 %v661, 8
    %v828 = vpop.permute.xlu0 %827
    %829 = vrot.lane.b32.xlu0 %v662, 8
    %v830 = vpop.permute.xlu0 %829
    %831 = vrot.lane.b32.xlu0 %v663, 8
    %v832 = vpop.permute.xlu0 %831
    %833 = vrot.lane.b32.xlu0 %v664, 8
    %v834 = vpop.permute.xlu0 %833
    %835 = vrot.lane.b32.xlu0 %v665, 8
    %v836 = vpop.permute.xlu0 %835
    %837 = vrot.lane.b32.xlu0 %v666, 8
    %v838 = vpop.permute.xlu0 %837
    %839 = vrot.lane.b32.xlu0 %v667, 8
    %v840 = vpop.permute.xlu0 %839
    %841 = vrot.lane.b32.xlu0 %v668, 8
    %v842 = vpop.permute.xlu0 %841
    %843 = vrot.lane.b32.xlu0 %v669, 8
    %v844 = vpop.permute.xlu0 %843
    %845 = vrot.lane.b32.xlu0 %v670, 8
    %v846 = vpop.permute.xlu0 %845
    %847 = vrot.lane.b32.xlu0 %v671, 8
    %v848 = vpop.permute.xlu0 %847
    %849 = vrot.lane.b32.xlu0 %v672, 8
    %v850 = vpop.permute.xlu0 %849
    %851 = vrot.lane.b32.xlu0 %v673, 8
    %v852 = vpop.permute.xlu0 %851
    %853 = vrot.lane.b32.xlu0 %v674, 8
    %v854 = vpop.permute.xlu0 %853
    %855 = vrot.lane.b32.xlu0 %v675, 8
    %v856 = vpop.permute.xlu0 %855
    %857 = vrot.lane.b32.xlu0 %v676, 8
    %v858 = vpop.permute.xlu0 %857
    %859 = vrot.lane.b32.xlu0 %v677, 8
    %v860 = vpop.permute.xlu0 %859
    %861 = vrot.lane.b32.xlu0 %v678, 8
    %v862 = vpop.permute.xlu0 %861
    %863 = vrot.lane.b32.xlu0 %v679, 8
    %v864 = vpop.permute.xlu0 %863
    %865 = vrot.lane.b32.xlu0 %v680, 8
    %v866 = vpop.permute.xlu0 %865
    %867 = vrot.lane.b32.xlu0 %v681, 8
    %v868 = vpop.permute.xlu0 %867
    %869 = vrot.lane.b32.xlu0 %v682, 8
    %v870 = vpop.permute.xlu0 %869
    %871 = vrot.lane.b32.xlu0 %v683, 8
    %v872 = vpop.permute.xlu0 %871
    %873 = vrot.lane.b32.xlu0 %v684, 8
    %v874 = vpop.permute.xlu0 %873
    %875 = vrot.lane.b32.xlu0 %v685, 8
    %v876 = vpop.permute.xlu0 %875
    %877 = vrot.lane.b32.xlu0 %v686, 8
    %v878 = vpop.permute.xlu0 %877
    %vm943 = vcmask 97344
    %944 = vst.msk [vmem:[#allocation2] sm:$0xff] %vm943, %v752
    %945 = vst.msk [vmem:[#allocation2 + $0x8] sm:$0xff] %vm943, %v754
    %946 = vst.msk [vmem:[#allocation2 + $0x10] sm:$0xff] %vm943, %v756
    %947 = vst.msk [vmem:[#allocation2 + $0x18] sm:$0xff] %vm943, %v758
    %948 = vst.msk [vmem:[#allocation2 + $0x20] sm:$0xff] %vm943, %v760
    %949 = vst.msk [vmem:[#allocation2 + $0x28] sm:$0xff] %vm943, %v762
    %950 = vst.msk [vmem:[#allocation2 + $0x30] sm:$0xff] %vm943, %v764
    %951 = vst.msk [vmem:[#allocation2 + $0x38] sm:$0xff] %vm943, %v766
    %952 = vst.msk [vmem:[#allocation2 + $0x40] sm:$0xff] %vm943, %v768
    %953 = vst.msk [vmem:[#allocation2 + $0x48] sm:$0xff] %vm943, %v770
    %954 = vst.msk [vmem:[#allocation2 + $0x50] sm:$0xff] %vm943, %v772
    %955 = vst.msk [vmem:[#allocation2 + $0x58] sm:$0xff] %vm943, %v774
    %956 = vst.msk [vmem:[#allocation2 + $0x60] sm:$0xff] %vm943, %v776
    %957 = vst.msk [vmem:[#allocation2 + $0x68] sm:$0xff] %vm943, %v778
    %958 = vst.msk [vmem:[#allocation2 + $0x70] sm:$0xff] %vm943, %v780
    %959 = vst.msk [vmem:[#allocation2 + $0x78] sm:$0xff] %vm943, %v782
    %960 = vst.msk [vmem:[#allocation2 + $0x80] sm:$0xff] %vm943, %v784
    %961 = vst.msk [vmem:[#allocation2 + $0x88] sm:$0xff] %vm943, %v786
    %962 = vst.msk [vmem:[#allocation2 + $0x90] sm:$0xff] %vm943, %v788
    %963 = vst.msk [vmem:[#allocation2 + $0x98] sm:$0xff] %vm943, %v790
    %964 = vst.msk [vmem:[#allocation2 + $0xa0] sm:$0xff] %vm943, %v792
    %965 = vst.msk [vmem:[#allocation2 + $0xa8] sm:$0xff] %vm943, %v794
    %966 = vst.msk [vmem:[#allocation2 + $0xb0] sm:$0xff] %vm943, %v796
    %967 = vst.msk [vmem:[#allocation2 + $0xb8] sm:$0xff] %vm943, %v798
    %968 = vst.msk [vmem:[#allocation2 + $0xc0] sm:$0xff] %vm943, %v800
    %969 = vst.msk [vmem:[#allocation2 + $0xc8] sm:$0xff] %vm943, %v802
    %970 = vst.msk [vmem:[#allocation2 + $0xd0] sm:$0xff] %vm943, %v804
    %971 = vst.msk [vmem:[#allocation2 + $0xd8] sm:$0xff] %vm943, %v806
    %972 = vst.msk [vmem:[#allocation2 + $0xe0] sm:$0xff] %vm943, %v808
    %973 = vst.msk [vmem:[#allocation2 + $0xe8] sm:$0xff] %vm943, %v810
    %974 = vst.msk [vmem:[#allocation2 + $0xf0] sm:$0xff] %vm943, %v812
    %975 = vst.msk [vmem:[#allocation2 + $0xf8] sm:$0xff] %vm943, %v814
    %976 = vst.msk [vmem:[#allocation2 + $0x100] sm:$0xff] %vm943, %v816
    %977 = vst.msk [vmem:[#allocation2 + $0x108] sm:$0xff] %vm943, %v818
    %978 = vst.msk [vmem:[#allocation2 + $0x110] sm:$0xff] %vm943, %v820
    %979 = vst.msk [vmem:[#allocation2 + $0x118] sm:$0xff] %vm943, %v822
    %980 = vst.msk [vmem:[#allocation2 + $0x120] sm:$0xff] %vm943, %v824
    %981 = vst.msk [vmem:[#allocation2 + $0x128] sm:$0xff] %vm943, %v826
    %982 = vst.msk [vmem:[#allocation2 + $0x130] sm:$0xff] %vm943, %v828
    %983 = vst.msk [vmem:[#allocation2 + $0x138] sm:$0xff] %vm943, %v830
    %984 = vst.msk [vmem:[#allocation2 + $0x140] sm:$0xff] %vm943, %v832
    %985 = vst.msk [vmem:[#allocation2 + $0x148] sm:$0xff] %vm943, %v834
    %986 = vst.msk [vmem:[#allocation2 + $0x150] sm:$0xff] %vm943, %v836
    %987 = vst.msk [vmem:[#allocation2 + $0x158] sm:$0xff] %vm943, %v838
    %988 = vst.msk [vmem:[#allocation2 + $0x160] sm:$0xff] %vm943, %v840
    %989 = vst.msk [vmem:[#allocation2 + $0x168] sm:$0xff] %vm943, %v842
    %990 = vst.msk [vmem:[#allocation2 + $0x170] sm:$0xff] %vm943, %v844
    %991 = vst.msk [vmem:[#allocation2 + $0x178] sm:$0xff] %vm943, %v846
    %992 = vst.msk [vmem:[#allocation2 + $0x180] sm:$0xff] %vm943, %v848
    %993 = vst.msk [vmem:[#allocation2 + $0x188] sm:$0xff] %vm943, %v850
    %994 = vst.msk [vmem:[#allocation2 + $0x190] sm:$0xff] %vm943, %v852
    %995 = vst.msk [vmem:[#allocation2 + $0x198] sm:$0xff] %vm943, %v854
    %996 = vst.msk [vmem:[#allocation2 + $0x1a0] sm:$0xff] %vm943, %v856
    %997 = vst.msk [vmem:[#allocation2 + $0x1a8] sm:$0xff] %vm943, %v858
    %998 = vst.msk [vmem:[#allocation2 + $0x1b0] sm:$0xff] %vm943, %v860
    %999 = vst.msk [vmem:[#allocation2 + $0x1b8] sm:$0xff] %vm943, %v862
    %1000 = vst.msk [vmem:[#allocation2 + $0x1c0] sm:$0xff] %vm943, %v864
    %1001 = vst.msk [vmem:[#allocation2 + $0x1c8] sm:$0xff] %vm943, %v866
    %1002 = vst.msk [vmem:[#allocation2 + $0x1d0] sm:$0xff] %vm943, %v868
    %1003 = vst.msk [vmem:[#allocation2 + $0x1d8] sm:$0xff] %vm943, %v870
    %1004 = vst.msk [vmem:[#allocation2 + $0x1e0] sm:$0xff] %vm943, %v872
    %1005 = vst.msk [vmem:[#allocation2 + $0x1e8] sm:$0xff] %vm943, %v874
    %1006 = vst.msk [vmem:[#allocation2 + $0x1f0] sm:$0xff] %vm943, %v876
    %1007 = vst.msk [vmem:[#allocation2 + $0x1f8] sm:$0xff] %vm943, %v878
    %s1008 = scalar_lea.vmem %s0, 24
    %v1009 = vld [vmem:[%s1008] sm:$0xff]
    %v1010 = vld [vmem:[%s1008 + $0x8] sm:$0xff]
    %v1011 = vld [vmem:[%s1008 + $0x18] sm:$0xff]
    %v1012 = vld [vmem:[%s1008 + $0x20] sm:$0xff]
    %v1013 = vld [vmem:[%s1008 + $0x30] sm:$0xff]
    %v1014 = vld [vmem:[%s1008 + $0x38] sm:$0xff]
    %v1015 = vld [vmem:[%s1008 + $0x48] sm:$0xff]
    %v1016 = vld [vmem:[%s1008 + $0x50] sm:$0xff]
    %v1017 = vld [vmem:[%s1008 + $0x60] sm:$0xff]
    %v1018 = vld [vmem:[%s1008 + $0x68] sm:$0xff]
    %v1019 = vld [vmem:[%s1008 + $0x78] sm:$0xff]
    %v1020 = vld [vmem:[%s1008 + $0x80] sm:$0xff]
    %v1021 = vld [vmem:[%s1008 + $0x90] sm:$0xff]
    %v1022 = vld [vmem:[%s1008 + $0x98] sm:$0xff]
    %v1023 = vld [vmem:[%s1008 + $0xa8] sm:$0xff]
    %v1024 = vld [vmem:[%s1008 + $0xb0] sm:$0xff]
    %v1025 = vld [vmem:[%s1008 + $0xc0] sm:$0xff]
    %v1026 = vld [vmem:[%s1008 + $0xc8] sm:$0xff]
    %v1027 = vld [vmem:[%s1008 + $0xd8] sm:$0xff]
    %v1028 = vld [vmem:[%s1008 + $0xe0] sm:$0xff]
    %v1029 = vld [vmem:[%s1008 + $0xf0] sm:$0xff]
    %v1030 = vld [vmem:[%s1008 + $0xf8] sm:$0xff]
    %v1031 = vld [vmem:[%s1008 + $0x108] sm:$0xff]
    %v1032 = vld [vmem:[%s1008 + $0x110] sm:$0xff]
    %v1033 = vld [vmem:[%s1008 + $0x120] sm:$0xff]
    %v1034 = vld [vmem:[%s1008 + $0x128] sm:$0xff]
    %v1035 = vld [vmem:[%s1008 + $0x138] sm:$0xff]
    %v1036 = vld [vmem:[%s1008 + $0x140] sm:$0xff]
    %v1037 = vld [vmem:[%s1008 + $0x150] sm:$0xff]
    %v1038 = vld [vmem:[%s1008 + $0x158] sm:$0xff]
    %v1039 = vld [vmem:[%s1008 + $0x168] sm:$0xff]
    %v1040 = vld [vmem:[%s1008 + $0x170] sm:$0xff]
    %v1041 = vld [vmem:[%s1008 + $0x1b0] sm:$0xff]
    %v1042 = vld [vmem:[%s1008 + $0x1b8] sm:$0xff]
    %v1043 = vld [vmem:[%s1008 + $0x1c8] sm:$0xff]
    %v1044 = vld [vmem:[%s1008 + $0x1d0] sm:$0xff]
    %v1045 = vld [vmem:[%s1008 + $0x1e0] sm:$0xff]
    %v1046 = vld [vmem:[%s1008 + $0x1e8] sm:$0xff]
    %v1047 = vld [vmem:[%s1008 + $0x1f8] sm:$0xff]
    %v1048 = vld [vmem:[%s1008 + $0x200] sm:$0xff]
    %v1049 = vld [vmem:[%s1008 + $0x210] sm:$0xff]
    %v1050 = vld [vmem:[%s1008 + $0x218] sm:$0xff]
    %v1051 = vld [vmem:[%s1008 + $0x228] sm:$0xff]
    %v1052 = vld [vmem:[%s1008 + $0x230] sm:$0xff]
    %v1053 = vld [vmem:[%s1008 + $0x240] sm:$0xff]
    %v1054 = vld [vmem:[%s1008 + $0x248] sm:$0xff]
    %v1055 = vld [vmem:[%s1008 + $0x258] sm:$0xff]
    %v1056 = vld [vmem:[%s1008 + $0x260] sm:$0xff]
    %v1057 = vld [vmem:[%s1008 + $0x270] sm:$0xff]
    %v1058 = vld [vmem:[%s1008 + $0x278] sm:$0xff]
    %v1059 = vld [vmem:[%s1008 + $0x288] sm:$0xff]
    %v1060 = vld [vmem:[%s1008 + $0x290] sm:$0xff]
    %v1061 = vld [vmem:[%s1008 + $0x2a0] sm:$0xff]
    %v1062 = vld [vmem:[%s1008 + $0x2a8] sm:$0xff]
    %v1063 = vld [vmem:[%s1008 + $0x2b8] sm:$0xff]
    %v1064 = vld [vmem:[%s1008 + $0x2c0] sm:$0xff]
    %v1065 = vld [vmem:[%s1008 + $0x2d0] sm:$0xff]
    %v1066 = vld [vmem:[%s1008 + $0x2d8] sm:$0xff]
    %v1067 = vld [vmem:[%s1008 + $0x2e8] sm:$0xff]
    %v1068 = vld [vmem:[%s1008 + $0x2f0] sm:$0xff]
    %v1069 = vld [vmem:[%s1008 + $0x300] sm:$0xff]
    %v1070 = vld [vmem:[%s1008 + $0x308] sm:$0xff]
    %v1071 = vld [vmem:[%s1008 + $0x318] sm:$0xff]
    %v1072 = vld [vmem:[%s1008 + $0x320] sm:$0xff]
    %1137 = vrot.lane.b32.xlu0 %v1009, 12
    %v1138 = vpop.permute.xlu0 %1137
    %1139 = vrot.lane.b32.xlu0 %v1010, 12
    %v1140 = vpop.permute.xlu0 %1139
    %1141 = vrot.lane.b32.xlu0 %v1011, 12
    %v1142 = vpop.permute.xlu0 %1141
    %1143 = vrot.lane.b32.xlu0 %v1012, 12
    %v1144 = vpop.permute.xlu0 %1143
    %1145 = vrot.lane.b32.xlu0 %v1013, 12
    %v1146 = vpop.permute.xlu0 %1145
    %1147 = vrot.lane.b32.xlu0 %v1014, 12
    %v1148 = vpop.permute.xlu0 %1147
    %1149 = vrot.lane.b32.xlu0 %v1015, 12
    %v1150 = vpop.permute.xlu0 %1149
    %1151 = vrot.lane.b32.xlu0 %v1016, 12
    %v1152 = vpop.permute.xlu0 %1151
    %1153 = vrot.lane.b32.xlu0 %v1017, 12
    %v1154 = vpop.permute.xlu0 %1153
    %1155 = vrot.lane.b32.xlu0 %v1018, 12
    %v1156 = vpop.permute.xlu0 %1155
    %1157 = vrot.lane.b32.xlu0 %v1019, 12
    %v1158 = vpop.permute.xlu0 %1157
    %1159 = vrot.lane.b32.xlu0 %v1020, 12
    %v1160 = vpop.permute.xlu0 %1159
    %1161 = vrot.lane.b32.xlu0 %v1021, 12
    %v1162 = vpop.permute.xlu0 %1161
    %1163 = vrot.lane.b32.xlu0 %v1022, 12
    %v1164 = vpop.permute.xlu0 %1163
    %1165 = vrot.lane.b32.xlu0 %v1023, 12
    %v1166 = vpop.permute.xlu0 %1165
    %1167 = vrot.lane.b32.xlu0 %v1024, 12
    %v1168 = vpop.permute.xlu0 %1167
    %1169 = vrot.lane.b32.xlu0 %v1025, 12
    %v1170 = vpop.permute.xlu0 %1169
    %1171 = vrot.lane.b32.xlu0 %v1026, 12
    %v1172 = vpop.permute.xlu0 %1171
    %1173 = vrot.lane.b32.xlu0 %v1027, 12
    %v1174 = vpop.permute.xlu0 %1173
    %1175 = vrot.lane.b32.xlu0 %v1028, 12
    %v1176 = vpop.permute.xlu0 %1175
    %1177 = vrot.lane.b32.xlu0 %v1029, 12
    %v1178 = vpop.permute.xlu0 %1177
    %1179 = vrot.lane.b32.xlu0 %v1030, 12
    %v1180 = vpop.permute.xlu0 %1179
    %1181 = vrot.lane.b32.xlu0 %v1031, 12
    %v1182 = vpop.permute.xlu0 %1181
    %1183 = vrot.lane.b32.xlu0 %v1032, 12
    %v1184 = vpop.permute.xlu0 %1183
    %1185 = vrot.lane.b32.xlu0 %v1033, 12
    %v1186 = vpop.permute.xlu0 %1185
    %1187 = vrot.lane.b32.xlu0 %v1034, 12
    %v1188 = vpop.permute.xlu0 %1187
    %1189 = vrot.lane.b32.xlu0 %v1035, 12
    %v1190 = vpop.permute.xlu0 %1189
    %1191 = vrot.lane.b32.xlu0 %v1036, 12
    %v1192 = vpop.permute.xlu0 %1191
    %1193 = vrot.lane.b32.xlu0 %v1037, 12
    %v1194 = vpop.permute.xlu0 %1193
    %1195 = vrot.lane.b32.xlu0 %v1038, 12
    %v1196 = vpop.permute.xlu0 %1195
    %1197 = vrot.lane.b32.xlu0 %v1039, 12
    %v1198 = vpop.permute.xlu0 %1197
    %1199 = vrot.lane.b32.xlu0 %v1040, 12
    %v1200 = vpop.permute.xlu0 %1199
    %1201 = vrot.lane.b32.xlu0 %v1041, 12
    %v1202 = vpop.permute.xlu0 %1201
    %1203 = vrot.lane.b32.xlu0 %v1042, 12
    %v1204 = vpop.permute.xlu0 %1203
    %1205 = vrot.lane.b32.xlu0 %v1043, 12
    %v1206 = vpop.permute.xlu0 %1205
    %1207 = vrot.lane.b32.xlu0 %v1044, 12
    %v1208 = vpop.permute.xlu0 %1207
    %1209 = vrot.lane.b32.xlu0 %v1045, 12
    %v1210 = vpop.permute.xlu0 %1209
    %1211 = vrot.lane.b32.xlu0 %v1046, 12
    %v1212 = vpop.permute.xlu0 %1211
    %1213 = vrot.lane.b32.xlu0 %v1047, 12
    %v1214 = vpop.permute.xlu0 %1213
    %1215 = vrot.lane.b32.xlu0 %v1048, 12
    %v1216 = vpop.permute.xlu0 %1215
    %1217 = vrot.lane.b32.xlu0 %v1049, 12
    %v1218 = vpop.permute.xlu0 %1217
    %1219 = vrot.lane.b32.xlu0 %v1050, 12
    %v1220 = vpop.permute.xlu0 %1219
    %1221 = vrot.lane.b32.xlu0 %v1051, 12
    %v1222 = vpop.permute.xlu0 %1221
    %1223 = vrot.lane.b32.xlu0 %v1052, 12
    %v1224 = vpop.permute.xlu0 %1223
    %1225 = vrot.lane.b32.xlu0 %v1053, 12
    %v1226 = vpop.permute.xlu0 %1225
    %1227 = vrot.lane.b32.xlu0 %v1054, 12
    %v1228 = vpop.permute.xlu0 %1227
    %1229 = vrot.lane.b32.xlu0 %v1055, 12
    %v1230 = vpop.permute.xlu0 %1229
    %1231 = vrot.lane.b32.xlu0 %v1056, 12
    %v1232 = vpop.permute.xlu0 %1231
    %1233 = vrot.lane.b32.xlu0 %v1057, 12
    %v1234 = vpop.permute.xlu0 %1233
    %1235 = vrot.lane.b32.xlu0 %v1058, 12
    %v1236 = vpop.permute.xlu0 %1235
    %1237 = vrot.lane.b32.xlu0 %v1059, 12
    %v1238 = vpop.permute.xlu0 %1237
    %1239 = vrot.lane.b32.xlu0 %v1060, 12
    %v1240 = vpop.permute.xlu0 %1239
    %1241 = vrot.lane.b32.xlu0 %v1061, 12
    %v1242 = vpop.permute.xlu0 %1241
    %1243 = vrot.lane.b32.xlu0 %v1062, 12
    %v1244 = vpop.permute.xlu0 %1243
    %1245 = vrot.lane.b32.xlu0 %v1063, 12
    %v1246 = vpop.permute.xlu0 %1245
    %1247 = vrot.lane.b32.xlu0 %v1064, 12
    %v1248 = vpop.permute.xlu0 %1247
    %1249 = vrot.lane.b32.xlu0 %v1065, 12
    %v1250 = vpop.permute.xlu0 %1249
    %1251 = vrot.lane.b32.xlu0 %v1066, 12
    %v1252 = vpop.permute.xlu0 %1251
    %1253 = vrot.lane.b32.xlu0 %v1067, 12
    %v1254 = vpop.permute.xlu0 %1253
    %1255 = vrot.lane.b32.xlu0 %v1068, 12
    %v1256 = vpop.permute.xlu0 %1255
    %1257 = vrot.lane.b32.xlu0 %v1069, 12
    %v1258 = vpop.permute.xlu0 %1257
    %1259 = vrot.lane.b32.xlu0 %v1070, 12
    %v1260 = vpop.permute.xlu0 %1259
    %1261 = vrot.lane.b32.xlu0 %v1071, 12
    %v1262 = vpop.permute.xlu0 %1261
    %1263 = vrot.lane.b32.xlu0 %v1072, 12
    %v1264 = vpop.permute.xlu0 %1263
    %vm1329 = vcmask 130144
    %1330 = vst.msk [vmem:[#allocation2] sm:$0xff] %vm1329, %v1138
    %1331 = vst.msk [vmem:[#allocation2 + $0x8] sm:$0xff] %vm1329, %v1140
    %1332 = vst.msk [vmem:[#allocation2 + $0x10] sm:$0xff] %vm1329, %v1142
    %1333 = vst.msk [vmem:[#allocation2 + $0x18] sm:$0xff] %vm1329, %v1144
    %1334 = vst.msk [vmem:[#allocation2 + $0x20] sm:$0xff] %vm1329, %v1146
    %1335 = vst.msk [vmem:[#allocation2 + $0x28] sm:$0xff] %vm1329, %v1148
    %1336 = vst.msk [vmem:[#allocation2 + $0x30] sm:$0xff] %vm1329, %v1150
    %1337 = vst.msk [vmem:[#allocation2 + $0x38] sm:$0xff] %vm1329, %v1152
    %1338 = vst.msk [vmem:[#allocation2 + $0x40] sm:$0xff] %vm1329, %v1154
    %1339 = vst.msk [vmem:[#allocation2 + $0x48] sm:$0xff] %vm1329, %v1156
    %1340 = vst.msk [vmem:[#allocation2 + $0x50] sm:$0xff] %vm1329, %v1158
    %1341 = vst.msk [vmem:[#allocation2 + $0x58] sm:$0xff] %vm1329, %v1160
    %1342 = vst.msk [vmem:[#allocation2 + $0x60] sm:$0xff] %vm1329, %v1162
    %1343 = vst.msk [vmem:[#allocation2 + $0x68] sm:$0xff] %vm1329, %v1164
    %1344 = vst.msk [vmem:[#allocation2 + $0x70] sm:$0xff] %vm1329, %v1166
    %1345 = vst.msk [vmem:[#allocation2 + $0x78] sm:$0xff] %vm1329, %v1168
    %1346 = vst.msk [vmem:[#allocation2 + $0x80] sm:$0xff] %vm1329, %v1170
    %1347 = vst.msk [vmem:[#allocation2 + $0x88] sm:$0xff] %vm1329, %v1172
    %1348 = vst.msk [vmem:[#allocation2 + $0x90] sm:$0xff] %vm1329, %v1174
    %1349 = vst.msk [vmem:[#allocation2 + $0x98] sm:$0xff] %vm1329, %v1176
    %1350 = vst.msk [vmem:[#allocation2 + $0xa0] sm:$0xff] %vm1329, %v1178
    %1351 = vst.msk [vmem:[#allocation2 + $0xa8] sm:$0xff] %vm1329, %v1180
    %1352 = vst.msk [vmem:[#allocation2 + $0xb0] sm:$0xff] %vm1329, %v1182
    %1353 = vst.msk [vmem:[#allocation2 + $0xb8] sm:$0xff] %vm1329, %v1184
    %1354 = vst.msk [vmem:[#allocation2 + $0xc0] sm:$0xff] %vm1329, %v1186
    %1355 = vst.msk [vmem:[#allocation2 + $0xc8] sm:$0xff] %vm1329, %v1188
    %1356 = vst.msk [vmem:[#allocation2 + $0xd0] sm:$0xff] %vm1329, %v1190
    %1357 = vst.msk [vmem:[#allocation2 + $0xd8] sm:$0xff] %vm1329, %v1192
    %1358 = vst.msk [vmem:[#allocation2 + $0xe0] sm:$0xff] %vm1329, %v1194
    %1359 = vst.msk [vmem:[#allocation2 + $0xe8] sm:$0xff] %vm1329, %v1196
    %1360 = vst.msk [vmem:[#allocation2 + $0xf0] sm:$0xff] %vm1329, %v1198
    %1361 = vst.msk [vmem:[#allocation2 + $0xf8] sm:$0xff] %vm1329, %v1200
    %1362 = vst.msk [vmem:[#allocation2 + $0x100] sm:$0xff] %vm1329, %v1202
    %1363 = vst.msk [vmem:[#allocation2 + $0x108] sm:$0xff] %vm1329, %v1204
    %1364 = vst.msk [vmem:[#allocation2 + $0x110] sm:$0xff] %vm1329, %v1206
    %1365 = vst.msk [vmem:[#allocation2 + $0x118] sm:$0xff] %vm1329, %v1208
    %1366 = vst.msk [vmem:[#allocation2 + $0x120] sm:$0xff] %vm1329, %v1210
    %1367 = vst.msk [vmem:[#allocation2 + $0x128] sm:$0xff] %vm1329, %v1212
    %1368 = vst.msk [vmem:[#allocation2 + $0x130] sm:$0xff] %vm1329, %v1214
    %1369 = vst.msk [vmem:[#allocation2 + $0x138] sm:$0xff] %vm1329, %v1216
    %1370 = vst.msk [vmem:[#allocation2 + $0x140] sm:$0xff] %vm1329, %v1218
    %1371 = vst.msk [vmem:[#allocation2 + $0x148] sm:$0xff] %vm1329, %v1220
    %1372 = vst.msk [vmem:[#allocation2 + $0x150] sm:$0xff] %vm1329, %v1222
    %1373 = vst.msk [vmem:[#allocation2 + $0x158] sm:$0xff] %vm1329, %v1224
    %1374 = vst.msk [vmem:[#allocation2 + $0x160] sm:$0xff] %vm1329, %v1226
    %1375 = vst.msk [vmem:[#allocation2 + $0x168] sm:$0xff] %vm1329, %v1228
    %1376 = vst.msk [vmem:[#allocation2 + $0x170] sm:$0xff] %vm1329, %v1230
    %1377 = vst.msk [vmem:[#allocation2 + $0x178] sm:$0xff] %vm1329, %v1232
    %1378 = vst.msk [vmem:[#allocation2 + $0x180] sm:$0xff] %vm1329, %v1234
    %1379 = vst.msk [vmem:[#allocation2 + $0x188] sm:$0xff] %vm1329, %v1236
    %1380 = vst.msk [vmem:[#allocation2 + $0x190] sm:$0xff] %vm1329, %v1238
    %1381 = vst.msk [vmem:[#allocation2 + $0x198] sm:$0xff] %vm1329, %v1240
    %1382 = vst.msk [vmem:[#allocation2 + $0x1a0] sm:$0xff] %vm1329, %v1242
    %1383 = vst.msk [vmem:[#allocation2 + $0x1a8] sm:$0xff] %vm1329, %v1244
    %1384 = vst.msk [vmem:[#allocation2 + $0x1b0] sm:$0xff] %vm1329, %v1246
    %1385 = vst.msk [vmem:[#allocation2 + $0x1b8] sm:$0xff] %vm1329, %v1248
    %1386 = vst.msk [vmem:[#allocation2 + $0x1c0] sm:$0xff] %vm1329, %v1250
    %1387 = vst.msk [vmem:[#allocation2 + $0x1c8] sm:$0xff] %vm1329, %v1252
    %1388 = vst.msk [vmem:[#allocation2 + $0x1d0] sm:$0xff] %vm1329, %v1254
    %1389 = vst.msk [vmem:[#allocation2 + $0x1d8] sm:$0xff] %vm1329, %v1256
    %1390 = vst.msk [vmem:[#allocation2 + $0x1e0] sm:$0xff] %vm1329, %v1258
    %1391 = vst.msk [vmem:[#allocation2 + $0x1e8] sm:$0xff] %vm1329, %v1260
    %1392 = vst.msk [vmem:[#allocation2 + $0x1f0] sm:$0xff] %vm1329, %v1262
    %1393 = vst.msk [vmem:[#allocation2 + $0x1f8] sm:$0xff] %vm1329, %v1264
    %v1394 = vld [vmem:[%s1008 + $0x1] sm:$0xff]
    %v1395 = vld [vmem:[%s1008 + $0x9] sm:$0xff]
    %v1396 = vld [vmem:[%s1008 + $0x19] sm:$0xff]
    %v1397 = vld [vmem:[%s1008 + $0x21] sm:$0xff]
    %v1398 = vld [vmem:[%s1008 + $0x31] sm:$0xff]
    %v1399 = vld [vmem:[%s1008 + $0x39] sm:$0xff]
    %v1400 = vld [vmem:[%s1008 + $0x49] sm:$0xff]
    %v1401 = vld [vmem:[%s1008 + $0x51] sm:$0xff]
    %v1402 = vld [vmem:[%s1008 + $0x61] sm:$0xff]
    %v1403 = vld [vmem:[%s1008 + $0x69] sm:$0xff]
    %v1404 = vld [vmem:[%s1008 + $0x79] sm:$0xff]
    %v1405 = vld [vmem:[%s1008 + $0x81] sm:$0xff]
    %v1406 = vld [vmem:[%s1008 + $0x91] sm:$0xff]
    %v1407 = vld [vmem:[%s1008 + $0x99] sm:$0xff]
    %v1408 = vld [vmem:[%s1008 + $0xa9] sm:$0xff]
    %v1409 = vld [vmem:[%s1008 + $0xb1] sm:$0xff]
    %v1410 = vld [vmem:[%s1008 + $0xc1] sm:$0xff]
    %v1411 = vld [vmem:[%s1008 + $0xc9] sm:$0xff]
    %v1412 = vld [vmem:[%s1008 + $0xd9] sm:$0xff]
    %v1413 = vld [vmem:[%s1008 + $0xe1] sm:$0xff]
    %v1414 = vld [vmem:[%s1008 + $0xf1] sm:$0xff]
    %v1415 = vld [vmem:[%s1008 + $0xf9] sm:$0xff]
    %v1416 = vld [vmem:[%s1008 + $0x109] sm:$0xff]
    %v1417 = vld [vmem:[%s1008 + $0x111] sm:$0xff]
    %v1418 = vld [vmem:[%s1008 + $0x121] sm:$0xff]
    %v1419 = vld [vmem:[%s1008 + $0x129] sm:$0xff]
    %v1420 = vld [vmem:[%s1008 + $0x139] sm:$0xff]
    %v1421 = vld [vmem:[%s1008 + $0x141] sm:$0xff]
    %v1422 = vld [vmem:[%s1008 + $0x151] sm:$0xff]
    %v1423 = vld [vmem:[%s1008 + $0x159] sm:$0xff]
    %v1424 = vld [vmem:[%s1008 + $0x169] sm:$0xff]
    %v1425 = vld [vmem:[%s1008 + $0x171] sm:$0xff]
    %v1426 = vld [vmem:[%s1008 + $0x1b1] sm:$0xff]
    %v1427 = vld [vmem:[%s1008 + $0x1b9] sm:$0xff]
    %v1428 = vld [vmem:[%s1008 + $0x1c9] sm:$0xff]
    %v1429 = vld [vmem:[%s1008 + $0x1d1] sm:$0xff]
    %v1430 = vld [vmem:[%s1008 + $0x1e1] sm:$0xff]
    %v1431 = vld [vmem:[%s1008 + $0x1e9] sm:$0xff]
    %v1432 = vld [vmem:[%s1008 + $0x1f9] sm:$0xff]
    %v1433 = vld [vmem:[%s1008 + $0x201] sm:$0xff]
    %v1434 = vld [vmem:[%s1008 + $0x211] sm:$0xff]
    %v1435 = vld [vmem:[%s1008 + $0x219] sm:$0xff]
    %v1436 = vld [vmem:[%s1008 + $0x229] sm:$0xff]
    %v1437 = vld [vmem:[%s1008 + $0x231] sm:$0xff]
    %v1438 = vld [vmem:[%s1008 + $0x241] sm:$0xff]
    %v1439 = vld [vmem:[%s1008 + $0x249] sm:$0xff]
    %v1440 = vld [vmem:[%s1008 + $0x259] sm:$0xff]
    %v1441 = vld [vmem:[%s1008 + $0x261] sm:$0xff]
    %v1442 = vld [vmem:[%s1008 + $0x271] sm:$0xff]
    %v1443 = vld [vmem:[%s1008 + $0x279] sm:$0xff]
    %v1444 = vld [vmem:[%s1008 + $0x289] sm:$0xff]
    %v1445 = vld [vmem:[%s1008 + $0x291] sm:$0xff]
    %v1446 = vld [vmem:[%s1008 + $0x2a1] sm:$0xff]
    %v1447 = vld [vmem:[%s1008 + $0x2a9] sm:$0xff]
    %v1448 = vld [vmem:[%s1008 + $0x2b9] sm:$0xff]
    %v1449 = vld [vmem:[%s1008 + $0x2c1] sm:$0xff]
    %v1450 = vld [vmem:[%s1008 + $0x2d1] sm:$0xff]
    %v1451 = vld [vmem:[%s1008 + $0x2d9] sm:$0xff]
    %v1452 = vld [vmem:[%s1008 + $0x2e9] sm:$0xff]
    %v1453 = vld [vmem:[%s1008 + $0x2f1] sm:$0xff]
    %v1454 = vld [vmem:[%s1008 + $0x301] sm:$0xff]
    %v1455 = vld [vmem:[%s1008 + $0x309] sm:$0xff]
    %v1456 = vld [vmem:[%s1008 + $0x319] sm:$0xff]
    %v1457 = vld [vmem:[%s1008 + $0x321] sm:$0xff]
    %1522 = vrot.lane.b32.xlu0 %v1394, 16
    %v1523 = vpop.permute.xlu0 %1522
    %1524 = vrot.lane.b32.xlu0 %v1395, 16
    %v1525 = vpop.permute.xlu0 %1524
    %1526 = vrot.lane.b32.xlu0 %v1396, 16
    %v1527 = vpop.permute.xlu0 %1526
    %1528 = vrot.lane.b32.xlu0 %v1397, 16
    %v1529 = vpop.permute.xlu0 %1528
    %1530 = vrot.lane.b32.xlu0 %v1398, 16
    %v1531 = vpop.permute.xlu0 %1530
    %1532 = vrot.lane.b32.xlu0 %v1399, 16
    %v1533 = vpop.permute.xlu0 %1532
    %1534 = vrot.lane.b32.xlu0 %v1400, 16
    %v1535 = vpop.permute.xlu0 %1534
    %1536 = vrot.lane.b32.xlu0 %v1401, 16
    %v1537 = vpop.permute.xlu0 %1536
    %1538 = vrot.lane.b32.xlu0 %v1402, 16
    %v1539 = vpop.permute.xlu0 %1538
    %1540 = vrot.lane.b32.xlu0 %v1403, 16
    %v1541 = vpop.permute.xlu0 %1540
    %1542 = vrot.lane.b32.xlu0 %v1404, 16
    %v1543 = vpop.permute.xlu0 %1542
    %1544 = vrot.lane.b32.xlu0 %v1405, 16
    %v1545 = vpop.permute.xlu0 %1544
    %1546 = vrot.lane.b32.xlu0 %v1406, 16
    %v1547 = vpop.permute.xlu0 %1546
    %1548 = vrot.lane.b32.xlu0 %v1407, 16
    %v1549 = vpop.permute.xlu0 %1548
    %1550 = vrot.lane.b32.xlu0 %v1408, 16
    %v1551 = vpop.permute.xlu0 %1550
    %1552 = vrot.lane.b32.xlu0 %v1409, 16
    %v1553 = vpop.permute.xlu0 %1552
    %1554 = vrot.lane.b32.xlu0 %v1410, 16
    %v1555 = vpop.permute.xlu0 %1554
    %1556 = vrot.lane.b32.xlu0 %v1411, 16
    %v1557 = vpop.permute.xlu0 %1556
    %1558 = vrot.lane.b32.xlu0 %v1412, 16
    %v1559 = vpop.permute.xlu0 %1558
    %1560 = vrot.lane.b32.xlu0 %v1413, 16
    %v1561 = vpop.permute.xlu0 %1560
    %1562 = vrot.lane.b32.xlu0 %v1414, 16
    %v1563 = vpop.permute.xlu0 %1562
    %1564 = vrot.lane.b32.xlu0 %v1415, 16
    %v1565 = vpop.permute.xlu0 %1564
    %1566 = vrot.lane.b32.xlu0 %v1416, 16
    %v1567 = vpop.permute.xlu0 %1566
    %1568 = vrot.lane.b32.xlu0 %v1417, 16
    %v1569 = vpop.permute.xlu0 %1568
    %1570 = vrot.lane.b32.xlu0 %v1418, 16
    %v1571 = vpop.permute.xlu0 %1570
    %1572 = vrot.lane.b32.xlu0 %v1419, 16
    %v1573 = vpop.permute.xlu0 %1572
    %1574 = vrot.lane.b32.xlu0 %v1420, 16
    %v1575 = vpop.permute.xlu0 %1574
    %1576 = vrot.lane.b32.xlu0 %v1421, 16
    %v1577 = vpop.permute.xlu0 %1576
    %1578 = vrot.lane.b32.xlu0 %v1422, 16
    %v1579 = vpop.permute.xlu0 %1578
    %1580 = vrot.lane.b32.xlu0 %v1423, 16
    %v1581 = vpop.permute.xlu0 %1580
    %1582 = vrot.lane.b32.xlu0 %v1424, 16
    %v1583 = vpop.permute.xlu0 %1582
    %1584 = vrot.lane.b32.xlu0 %v1425, 16
    %v1585 = vpop.permute.xlu0 %1584
    %1586 = vrot.lane.b32.xlu0 %v1426, 16
    %v1587 = vpop.permute.xlu0 %1586
    %1588 = vrot.lane.b32.xlu0 %v1427, 16
    %v1589 = vpop.permute.xlu0 %1588
    %1590 = vrot.lane.b32.xlu0 %v1428, 16
    %v1591 = vpop.permute.xlu0 %1590
    %1592 = vrot.lane.b32.xlu0 %v1429, 16
    %v1593 = vpop.permute.xlu0 %1592
    %1594 = vrot.lane.b32.xlu0 %v1430, 16
    %v1595 = vpop.permute.xlu0 %1594
    %1596 = vrot.lane.b32.xlu0 %v1431, 16
    %v1597 = vpop.permute.xlu0 %1596
    %1598 = vrot.lane.b32.xlu0 %v1432, 16
    %v1599 = vpop.permute.xlu0 %1598
    %1600 = vrot.lane.b32.xlu0 %v1433, 16
    %v1601 = vpop.permute.xlu0 %1600
    %1602 = vrot.lane.b32.xlu0 %v1434, 16
    %v1603 = vpop.permute.xlu0 %1602
    %1604 = vrot.lane.b32.xlu0 %v1435, 16
    %v1605 = vpop.permute.xlu0 %1604
    %1606 = vrot.lane.b32.xlu0 %v1436, 16
    %v1607 = vpop.permute.xlu0 %1606
    %1608 = vrot.lane.b32.xlu0 %v1437, 16
    %v1609 = vpop.permute.xlu0 %1608
    %1610 = vrot.lane.b32.xlu0 %v1438, 16
    %v1611 = vpop.permute.xlu0 %1610
    %1612 = vrot.lane.b32.xlu0 %v1439, 16
    %v1613 = vpop.permute.xlu0 %1612
    %1614 = vrot.lane.b32.xlu0 %v1440, 16
    %v1615 = vpop.permute.xlu0 %1614
    %1616 = vrot.lane.b32.xlu0 %v1441, 16
    %v1617 = vpop.permute.xlu0 %1616
    %1618 = vrot.lane.b32.xlu0 %v1442, 16
    %v1619 = vpop.permute.xlu0 %1618
    %1620 = vrot.lane.b32.xlu0 %v1443, 16
    %v1621 = vpop.permute.xlu0 %1620
    %1622 = vrot.lane.b32.xlu0 %v1444, 16
    %v1623 = vpop.permute.xlu0 %1622
    %1624 = vrot.lane.b32.xlu0 %v1445, 16
    %v1625 = vpop.permute.xlu0 %1624
    %1626 = vrot.lane.b32.xlu0 %v1446, 16
    %v1627 = vpop.permute.xlu0 %1626
    %1628 = vrot.lane.b32.xlu0 %v1447, 16
    %v1629 = vpop.permute.xlu0 %1628
    %1630 = vrot.lane.b32.xlu0 %v1448, 16
    %v1631 = vpop.permute.xlu0 %1630
    %1632 = vrot.lane.b32.xlu0 %v1449, 16
    %v1633 = vpop.permute.xlu0 %1632
    %1634 = vrot.lane.b32.xlu0 %v1450, 16
    %v1635 = vpop.permute.xlu0 %1634
    %1636 = vrot.lane.b32.xlu0 %v1451, 16
    %v1637 = vpop.permute.xlu0 %1636
    %1638 = vrot.lane.b32.xlu0 %v1452, 16
    %v1639 = vpop.permute.xlu0 %1638
    %1640 = vrot.lane.b32.xlu0 %v1453, 16
    %v1641 = vpop.permute.xlu0 %1640
    %1642 = vrot.lane.b32.xlu0 %v1454, 16
    %v1643 = vpop.permute.xlu0 %1642
    %1644 = vrot.lane.b32.xlu0 %v1455, 16
    %v1645 = vpop.permute.xlu0 %1644
    %1646 = vrot.lane.b32.xlu0 %v1456, 16
    %v1647 = vpop.permute.xlu0 %1646
    %1648 = vrot.lane.b32.xlu0 %v1457, 16
    %v1649 = vpop.permute.xlu0 %1648
    %vm1714 = vcmask 162944
    %1715 = vst.msk [vmem:[#allocation2] sm:$0xff] %vm1714, %v1523
    %1716 = vst.msk [vmem:[#allocation2 + $0x8] sm:$0xff] %vm1714, %v1525
    %1717 = vst.msk [vmem:[#allocation2 + $0x10] sm:$0xff] %vm1714, %v1527
    %1718 = vst.msk [vmem:[#allocation2 + $0x18] sm:$0xff] %vm1714, %v1529
    %1719 = vst.msk [vmem:[#allocation2 + $0x20] sm:$0xff] %vm1714, %v1531
    %1720 = vst.msk [vmem:[#allocation2 + $0x28] sm:$0xff] %vm1714, %v1533
    %1721 = vst.msk [vmem:[#allocation2 + $0x30] sm:$0xff] %vm1714, %v1535
    %1722 = vst.msk [vmem:[#allocation2 + $0x38] sm:$0xff] %vm1714, %v1537
    %1723 = vst.msk [vmem:[#allocation2 + $0x40] sm:$0xff] %vm1714, %v1539
    %1724 = vst.msk [vmem:[#allocation2 + $0x48] sm:$0xff] %vm1714, %v1541
    %1725 = vst.msk [vmem:[#allocation2 + $0x50] sm:$0xff] %vm1714, %v1543
    %1726 = vst.msk [vmem:[#allocation2 + $0x58] sm:$0xff] %vm1714, %v1545
    %1727 = vst.msk [vmem:[#allocation2 + $0x60] sm:$0xff] %vm1714, %v1547
    %1728 = vst.msk [vmem:[#allocation2 + $0x68] sm:$0xff] %vm1714, %v1549
    %1729 = vst.msk [vmem:[#allocation2 + $0x70] sm:$0xff] %vm1714, %v1551
    %1730 = vst.msk [vmem:[#allocation2 + $0x78] sm:$0xff] %vm1714, %v1553
    %1731 = vst.msk [vmem:[#allocation2 + $0x80] sm:$0xff] %vm1714, %v1555
    %1732 = vst.msk [vmem:[#allocation2 + $0x88] sm:$0xff] %vm1714, %v1557
    %1733 = vst.msk [vmem:[#allocation2 + $0x90] sm:$0xff] %vm1714, %v1559
    %1734 = vst.msk [vmem:[#allocation2 + $0x98] sm:$0xff] %vm1714, %v1561
    %1735 = vst.msk [vmem:[#allocation2 + $0xa0] sm:$0xff] %vm1714, %v1563
    %1736 = vst.msk [vmem:[#allocation2 + $0xa8] sm:$0xff] %vm1714, %v1565
    %1737 = vst.msk [vmem:[#allocation2 + $0xb0] sm:$0xff] %vm1714, %v1567
    %1738 = vst.msk [vmem:[#allocation2 + $0xb8] sm:$0xff] %vm1714, %v1569
    %1739 = vst.msk [vmem:[#allocation2 + $0xc0] sm:$0xff] %vm1714, %v1571
    %1740 = vst.msk [vmem:[#allocation2 + $0xc8] sm:$0xff] %vm1714, %v1573
    %1741 = vst.msk [vmem:[#allocation2 + $0xd0] sm:$0xff] %vm1714, %v1575
    %1742 = vst.msk [vmem:[#allocation2 + $0xd8] sm:$0xff] %vm1714, %v1577
    %1743 = vst.msk [vmem:[#allocation2 + $0xe0] sm:$0xff] %vm1714, %v1579
    %1744 = vst.msk [vmem:[#allocation2 + $0xe8] sm:$0xff] %vm1714, %v1581
    %1745 = vst.msk [vmem:[#allocation2 + $0xf0] sm:$0xff] %vm1714, %v1583
    %1746 = vst.msk [vmem:[#allocation2 + $0xf8] sm:$0xff] %vm1714, %v1585
    %1747 = vst.msk [vmem:[#allocation2 + $0x100] sm:$0xff] %vm1714, %v1587
    %1748 = vst.msk [vmem:[#allocation2 + $0x108] sm:$0xff] %vm1714, %v1589
    %1749 = vst.msk [vmem:[#allocation2 + $0x110] sm:$0xff] %vm1714, %v1591
    %1750 = vst.msk [vmem:[#allocation2 + $0x118] sm:$0xff] %vm1714, %v1593
    %1751 = vst.msk [vmem:[#allocation2 + $0x120] sm:$0xff] %vm1714, %v1595
    %1752 = vst.msk [vmem:[#allocation2 + $0x128] sm:$0xff] %vm1714, %v1597
    %1753 = vst.msk [vmem:[#allocation2 + $0x130] sm:$0xff] %vm1714, %v1599
    %1754 = vst.msk [vmem:[#allocation2 + $0x138] sm:$0xff] %vm1714, %v1601
    %1755 = vst.msk [vmem:[#allocation2 + $0x140] sm:$0xff] %vm1714, %v1603
    %1756 = vst.msk [vmem:[#allocation2 + $0x148] sm:$0xff] %vm1714, %v1605
    %1757 = vst.msk [vmem:[#allocation2 + $0x150] sm:$0xff] %vm1714, %v1607
    %1758 = vst.msk [vmem:[#allocation2 + $0x158] sm:$0xff] %vm1714, %v1609
    %1759 = vst.msk [vmem:[#allocation2 + $0x160] sm:$0xff] %vm1714, %v1611
    %1760 = vst.msk [vmem:[#allocation2 + $0x168] sm:$0xff] %vm1714, %v1613
    %1761 = vst.msk [vmem:[#allocation2 + $0x170] sm:$0xff] %vm1714, %v1615
    %1762 = vst.msk [vmem:[#allocation2 + $0x178] sm:$0xff] %vm1714, %v1617
    %1763 = vst.msk [vmem:[#allocation2 + $0x180] sm:$0xff] %vm1714, %v1619
    %1764 = vst.msk [vmem:[#allocation2 + $0x188] sm:$0xff] %vm1714, %v1621
    %1765 = vst.msk [vmem:[#allocation2 + $0x190] sm:$0xff] %vm1714, %v1623
    %1766 = vst.msk [vmem:[#allocation2 + $0x198] sm:$0xff] %vm1714, %v1625
    %1767 = vst.msk [vmem:[#allocation2 + $0x1a0] sm:$0xff] %vm1714, %v1627
    %1768 = vst.msk [vmem:[#allocation2 + $0x1a8] sm:$0xff] %vm1714, %v1629
    %1769 = vst.msk [vmem:[#allocation2 + $0x1b0] sm:$0xff] %vm1714, %v1631
    %1770 = vst.msk [vmem:[#allocation2 + $0x1b8] sm:$0xff] %vm1714, %v1633
    %1771 = vst.msk [vmem:[#allocation2 + $0x1c0] sm:$0xff] %vm1714, %v1635
    %1772 = vst.msk [vmem:[#allocation2 + $0x1c8] sm:$0xff] %vm1714, %v1637
    %1773 = vst.msk [vmem:[#allocation2 + $0x1d0] sm:$0xff] %vm1714, %v1639
    %1774 = vst.msk [vmem:[#allocation2 + $0x1d8] sm:$0xff] %vm1714, %v1641
    %1775 = vst.msk [vmem:[#allocation2 + $0x1e0] sm:$0xff] %vm1714, %v1643
    %1776 = vst.msk [vmem:[#allocation2 + $0x1e8] sm:$0xff] %vm1714, %v1645
    %1777 = vst.msk [vmem:[#allocation2 + $0x1f0] sm:$0xff] %vm1714, %v1647
    %1778 = vst.msk [vmem:[#allocation2 + $0x1f8] sm:$0xff] %vm1714, %v1649
    %v1779 = vld [vmem:[%s1008 + $0x2] sm:$0xff]
    %v1780 = vld [vmem:[%s1008 + $0xa] sm:$0xff]
    %v1781 = vld [vmem:[%s1008 + $0x1a] sm:$0xff]
    %v1782 = vld [vmem:[%s1008 + $0x22] sm:$0xff]
    %v1783 = vld [vmem:[%s1008 + $0x32] sm:$0xff]
    %v1784 = vld [vmem:[%s1008 + $0x3a] sm:$0xff]
    %v1785 = vld [vmem:[%s1008 + $0x4a] sm:$0xff]
    %v1786 = vld [vmem:[%s1008 + $0x52] sm:$0xff]
    %v1787 = vld [vmem:[%s1008 + $0x62] sm:$0xff]
    %v1788 = vld [vmem:[%s1008 + $0x6a] sm:$0xff]
    %v1789 = vld [vmem:[%s1008 + $0x7a] sm:$0xff]
    %v1790 = vld [vmem:[%s1008 + $0x82] sm:$0xff]
    %v1791 = vld [vmem:[%s1008 + $0x92] sm:$0xff]
    %v1792 = vld [vmem:[%s1008 + $0x9a] sm:$0xff]
    %v1793 = vld [vmem:[%s1008 + $0xaa] sm:$0xff]
    %v1794 = vld [vmem:[%s1008 + $0xb2] sm:$0xff]
    %v1795 = vld [vmem:[%s1008 + $0xc2] sm:$0xff]
    %v1796 = vld [vmem:[%s1008 + $0xca] sm:$0xff]
    %v1797 = vld [vmem:[%s1008 + $0xda] sm:$0xff]
    %v1798 = vld [vmem:[%s1008 + $0xe2] sm:$0xff]
    %v1799 = vld [vmem:[%s1008 + $0xf2] sm:$0xff]
    %v1800 = vld [vmem:[%s1008 + $0xfa] sm:$0xff]
    %v1801 = vld [vmem:[%s1008 + $0x10a] sm:$0xff]
    %v1802 = vld [vmem:[%s1008 + $0x112] sm:$0xff]
    %v1803 = vld [vmem:[%s1008 + $0x122] sm:$0xff]
    %v1804 = vld [vmem:[%s1008 + $0x12a] sm:$0xff]
    %v1805 = vld [vmem:[%s1008 + $0x13a] sm:$0xff]
    %v1806 = vld [vmem:[%s1008 + $0x142] sm:$0xff]
    %v1807 = vld [vmem:[%s1008 + $0x152] sm:$0xff]
    %v1808 = vld [vmem:[%s1008 + $0x15a] sm:$0xff]
    %v1809 = vld [vmem:[%s1008 + $0x16a] sm:$0xff]
    %v1810 = vld [vmem:[%s1008 + $0x172] sm:$0xff]
    %v1811 = vld [vmem:[%s1008 + $0x1b2] sm:$0xff]
    %v1812 = vld [vmem:[%s1008 + $0x1ba] sm:$0xff]
    %v1813 = vld [vmem:[%s1008 + $0x1ca] sm:$0xff]
    %v1814 = vld [vmem:[%s1008 + $0x1d2] sm:$0xff]
    %v1815 = vld [vmem:[%s1008 + $0x1e2] sm:$0xff]
    %v1816 = vld [vmem:[%s1008 + $0x1ea] sm:$0xff]
    %v1817 = vld [vmem:[%s1008 + $0x1fa] sm:$0xff]
    %v1818 = vld [vmem:[%s1008 + $0x202] sm:$0xff]
    %v1819 = vld [vmem:[%s1008 + $0x212] sm:$0xff]
    %v1820 = vld [vmem:[%s1008 + $0x21a] sm:$0xff]
    %v1821 = vld [vmem:[%s1008 + $0x22a] sm:$0xff]
    %v1822 = vld [vmem:[%s1008 + $0x232] sm:$0xff]
    %v1823 = vld [vmem:[%s1008 + $0x242] sm:$0xff]
    %v1824 = vld [vmem:[%s1008 + $0x24a] sm:$0xff]
    %v1825 = vld [vmem:[%s1008 + $0x25a] sm:$0xff]
    %v1826 = vld [vmem:[%s1008 + $0x262] sm:$0xff]
    %v1827 = vld [vmem:[%s1008 + $0x272] sm:$0xff]
    %v1828 = vld [vmem:[%s1008 + $0x27a] sm:$0xff]
    %v1829 = vld [vmem:[%s1008 + $0x28a] sm:$0xff]
    %v1830 = vld [vmem:[%s1008 + $0x292] sm:$0xff]
    %v1831 = vld [vmem:[%s1008 + $0x2a2] sm:$0xff]
    %v1832 = vld [vmem:[%s1008 + $0x2aa] sm:$0xff]
    %v1833 = vld [vmem:[%s1008 + $0x2ba] sm:$0xff]
    %v1834 = vld [vmem:[%s1008 + $0x2c2] sm:$0xff]
    %v1835 = vld [vmem:[%s1008 + $0x2d2] sm:$0xff]
    %v1836 = vld [vmem:[%s1008 + $0x2da] sm:$0xff]
    %v1837 = vld [vmem:[%s1008 + $0x2ea] sm:$0xff]
    %v1838 = vld [vmem:[%s1008 + $0x2f2] sm:$0xff]
    %v1839 = vld [vmem:[%s1008 + $0x302] sm:$0xff]
    %v1840 = vld [vmem:[%s1008 + $0x30a] sm:$0xff]
    %v1841 = vld [vmem:[%s1008 + $0x31a] sm:$0xff]
    %v1842 = vld [vmem:[%s1008 + $0x322] sm:$0xff]
    %1907 = vrot.lane.b32.xlu0 %v1779, 20
    %v1908 = vpop.permute.xlu0 %1907
    %1909 = vrot.lane.b32.xlu0 %v1780, 20
    %v1910 = vpop.permute.xlu0 %1909
    %1911 = vrot.lane.b32.xlu0 %v1781, 20
    %v1912 = vpop.permute.xlu0 %1911
    %1913 = vrot.lane.b32.xlu0 %v1782, 20
    %v1914 = vpop.permute.xlu0 %1913
    %1915 = vrot.lane.b32.xlu0 %v1783, 20
    %v1916 = vpop.permute.xlu0 %1915
    %1917 = vrot.lane.b32.xlu0 %v1784, 20
    %v1918 = vpop.permute.xlu0 %1917
    %1919 = vrot.lane.b32.xlu0 %v1785, 20
    %v1920 = vpop.permute.xlu0 %1919
    %1921 = vrot.lane.b32.xlu0 %v1786, 20
    %v1922 = vpop.permute.xlu0 %1921
    %1923 = vrot.lane.b32.xlu0 %v1787, 20
    %v1924 = vpop.permute.xlu0 %1923
    %1925 = vrot.lane.b32.xlu0 %v1788, 20
    %v1926 = vpop.permute.xlu0 %1925
    %1927 = vrot.lane.b32.xlu0 %v1789, 20
    %v1928 = vpop.permute.xlu0 %1927
    %1929 = vrot.lane.b32.xlu0 %v1790, 20
    %v1930 = vpop.permute.xlu0 %1929
    %1931 = vrot.lane.b32.xlu0 %v1791, 20
    %v1932 = vpop.permute.xlu0 %1931
    %1933 = vrot.lane.b32.xlu0 %v1792, 20
    %v1934 = vpop.permute.xlu0 %1933
    %1935 = vrot.lane.b32.xlu0 %v1793, 20
    %v1936 = vpop.permute.xlu0 %1935
    %1937 = vrot.lane.b32.xlu0 %v1794, 20
    %v1938 = vpop.permute.xlu0 %1937
    %1939 = vrot.lane.b32.xlu0 %v1795, 20
    %v1940 = vpop.permute.xlu0 %1939
    %1941 = vrot.lane.b32.xlu0 %v1796, 20
    %v1942 = vpop.permute.xlu0 %1941
    %1943 = vrot.lane.b32.xlu0 %v1797, 20
    %v1944 = vpop.permute.xlu0 %1943
    %1945 = vrot.lane.b32.xlu0 %v1798, 20
    %v1946 = vpop.permute.xlu0 %1945
    %1947 = vrot.lane.b32.xlu0 %v1799, 20
    %v1948 = vpop.permute.xlu0 %1947
    %1949 = vrot.lane.b32.xlu0 %v1800, 20
    %v1950 = vpop.permute.xlu0 %1949
    %1951 = vrot.lane.b32.xlu0 %v1801, 20
    %v1952 = vpop.permute.xlu0 %1951
    %1953 = vrot.lane.b32.xlu0 %v1802, 20
    %v1954 = vpop.permute.xlu0 %1953
    %1955 = vrot.lane.b32.xlu0 %v1803, 20
    %v1956 = vpop.permute.xlu0 %1955
    %1957 = vrot.lane.b32.xlu0 %v1804, 20
    %v1958 = vpop.permute.xlu0 %1957
    %1959 = vrot.lane.b32.xlu0 %v1805, 20
    %v1960 = vpop.permute.xlu0 %1959
    %1961 = vrot.lane.b32.xlu0 %v1806, 20
    %v1962 = vpop.permute.xlu0 %1961
    %1963 = vrot.lane.b32.xlu0 %v1807, 20
    %v1964 = vpop.permute.xlu0 %1963
    %1965 = vrot.lane.b32.xlu0 %v1808, 20
    %v1966 = vpop.permute.xlu0 %1965
    %1967 = vrot.lane.b32.xlu0 %v1809, 20
    %v1968 = vpop.permute.xlu0 %1967
    %1969 = vrot.lane.b32.xlu0 %v1810, 20
    %v1970 = vpop.permute.xlu0 %1969
    %1971 = vrot.lane.b32.xlu0 %v1811, 20
    %v1972 = vpop.permute.xlu0 %1971
    %1973 = vrot.lane.b32.xlu0 %v1812, 20
    %v1974 = vpop.permute.xlu0 %1973
    %1975 = vrot.lane.b32.xlu0 %v1813, 20
    %v1976 = vpop.permute.xlu0 %1975
    %1977 = vrot.lane.b32.xlu0 %v1814, 20
    %v1978 = vpop.permute.xlu0 %1977
    %1979 = vrot.lane.b32.xlu0 %v1815, 20
    %v1980 = vpop.permute.xlu0 %1979
    %1981 = vrot.lane.b32.xlu0 %v1816, 20
    %v1982 = vpop.permute.xlu0 %1981
    %1983 = vrot.lane.b32.xlu0 %v1817, 20
    %v1984 = vpop.permute.xlu0 %1983
    %1985 = vrot.lane.b32.xlu0 %v1818, 20
    %v1986 = vpop.permute.xlu0 %1985
    %1987 = vrot.lane.b32.xlu0 %v1819, 20
    %v1988 = vpop.permute.xlu0 %1987
    %1989 = vrot.lane.b32.xlu0 %v1820, 20
    %v1990 = vpop.permute.xlu0 %1989
    %1991 = vrot.lane.b32.xlu0 %v1821, 20
    %v1992 = vpop.permute.xlu0 %1991
    %1993 = vrot.lane.b32.xlu0 %v1822, 20
    %v1994 = vpop.permute.xlu0 %1993
    %1995 = vrot.lane.b32.xlu0 %v1823, 20
    %v1996 = vpop.permute.xlu0 %1995
    %1997 = vrot.lane.b32.xlu0 %v1824, 20
    %v1998 = vpop.permute.xlu0 %1997
    %1999 = vrot.lane.b32.xlu0 %v1825, 20
    %v2000 = vpop.permute.xlu0 %1999
    %2001 = vrot.lane.b32.xlu0 %v1826, 20
    %v2002 = vpop.permute.xlu0 %2001
    %2003 = vrot.lane.b32.xlu0 %v1827, 20
    %v2004 = vpop.permute.xlu0 %2003
    %2005 = vrot.lane.b32.xlu0 %v1828, 20
    %v2006 = vpop.permute.xlu0 %2005
    %2007 = vrot.lane.b32.xlu0 %v1829, 20
    %v2008 = vpop.permute.xlu0 %2007
    %2009 = vrot.lane.b32.xlu0 %v1830, 20
    %v2010 = vpop.permute.xlu0 %2009
    %2011 = vrot.lane.b32.xlu0 %v1831, 20
    %v2012 = vpop.permute.xlu0 %2011
    %2013 = vrot.lane.b32.xlu0 %v1832, 20
    %v2014 = vpop.permute.xlu0 %2013
    %2015 = vrot.lane.b32.xlu0 %v1833, 20
    %v2016 = vpop.permute.xlu0 %2015
    %2017 = vrot.lane.b32.xlu0 %v1834, 20
    %v2018 = vpop.permute.xlu0 %2017
    %2019 = vrot.lane.b32.xlu0 %v1835, 20
    %v2020 = vpop.permute.xlu0 %2019
    %2021 = vrot.lane.b32.xlu0 %v1836, 20
    %v2022 = vpop.permute.xlu0 %2021
    %2023 = vrot.lane.b32.xlu0 %v1837, 20
    %v2024 = vpop.permute.xlu0 %2023
    %2025 = vrot.lane.b32.xlu0 %v1838, 20
    %v2026 = vpop.permute.xlu0 %2025
    %2027 = vrot.lane.b32.xlu0 %v1839, 20
    %v2028 = vpop.permute.xlu0 %2027
    %2029 = vrot.lane.b32.xlu0 %v1840, 20
    %v2030 = vpop.permute.xlu0 %2029
    %2031 = vrot.lane.b32.xlu0 %v1841, 20
    %v2032 = vpop.permute.xlu0 %2031
    %2033 = vrot.lane.b32.xlu0 %v1842, 20
    %v2034 = vpop.permute.xlu0 %2033
    %vm2099 = vcmask 195744
    %2100 = vst.msk [vmem:[#allocation2] sm:$0xff] %vm2099, %v1908
    %2101 = vst.msk [vmem:[#allocation2 + $0x8] sm:$0xff] %vm2099, %v1910
    %2102 = vst.msk [vmem:[#allocation2 + $0x10] sm:$0xff] %vm2099, %v1912
    %2103 = vst.msk [vmem:[#allocation2 + $0x18] sm:$0xff] %vm2099, %v1914
    %2104 = vst.msk [vmem:[#allocation2 + $0x20] sm:$0xff] %vm2099, %v1916
    %2105 = vst.msk [vmem:[#allocation2 + $0x28] sm:$0xff] %vm2099, %v1918
    %2106 = vst.msk [vmem:[#allocation2 + $0x30] sm:$0xff] %vm2099, %v1920
    %2107 = vst.msk [vmem:[#allocation2 + $0x38] sm:$0xff] %vm2099, %v1922
    %2108 = vst.msk [vmem:[#allocation2 + $0x40] sm:$0xff] %vm2099, %v1924
    %2109 = vst.msk [vmem:[#allocation2 + $0x48] sm:$0xff] %vm2099, %v1926
    %2110 = vst.msk [vmem:[#allocation2 + $0x50] sm:$0xff] %vm2099, %v1928
    %2111 = vst.msk [vmem:[#allocation2 + $0x58] sm:$0xff] %vm2099, %v1930
    %2112 = vst.msk [vmem:[#allocation2 + $0x60] sm:$0xff] %vm2099, %v1932
    %2113 = vst.msk [vmem:[#allocation2 + $0x68] sm:$0xff] %vm2099, %v1934
    %2114 = vst.msk [vmem:[#allocation2 + $0x70] sm:$0xff] %vm2099, %v1936
    %2115 = vst.msk [vmem:[#allocation2 + $0x78] sm:$0xff] %vm2099, %v1938
    %2116 = vst.msk [vmem:[#allocation2 + $0x80] sm:$0xff] %vm2099, %v1940
    %2117 = vst.msk [vmem:[#allocation2 + $0x88] sm:$0xff] %vm2099, %v1942
    %2118 = vst.msk [vmem:[#allocation2 + $0x90] sm:$0xff] %vm2099, %v1944
    %2119 = vst.msk [vmem:[#allocation2 + $0x98] sm:$0xff] %vm2099, %v1946
    %2120 = vst.msk [vmem:[#allocation2 + $0xa0] sm:$0xff] %vm2099, %v1948
    %2121 = vst.msk [vmem:[#allocation2 + $0xa8] sm:$0xff] %vm2099, %v1950
    %2122 = vst.msk [vmem:[#allocation2 + $0xb0] sm:$0xff] %vm2099, %v1952
    %2123 = vst.msk [vmem:[#allocation2 + $0xb8] sm:$0xff] %vm2099, %v1954
    %2124 = vst.msk [vmem:[#allocation2 + $0xc0] sm:$0xff] %vm2099, %v1956
    %2125 = vst.msk [vmem:[#allocation2 + $0xc8] sm:$0xff] %vm2099, %v1958
    %2126 = vst.msk [vmem:[#allocation2 + $0xd0] sm:$0xff] %vm2099, %v1960
    %2127 = vst.msk [vmem:[#allocation2 + $0xd8] sm:$0xff] %vm2099, %v1962
    %2128 = vst.msk [vmem:[#allocation2 + $0xe0] sm:$0xff] %vm2099, %v1964
    %2129 = vst.msk [vmem:[#allocation2 + $0xe8] sm:$0xff] %vm2099, %v1966
    %2130 = vst.msk [vmem:[#allocation2 + $0xf0] sm:$0xff] %vm2099, %v1968
    %2131 = vst.msk [vmem:[#allocation2 + $0xf8] sm:$0xff] %vm2099, %v1970
    %2132 = vst.msk [vmem:[#allocation2 + $0x100] sm:$0xff] %vm2099, %v1972
    %2133 = vst.msk [vmem:[#allocation2 + $0x108] sm:$0xff] %vm2099, %v1974
    %2134 = vst.msk [vmem:[#allocation2 + $0x110] sm:$0xff] %vm2099, %v1976
    %2135 = vst.msk [vmem:[#allocation2 + $0x118] sm:$0xff] %vm2099, %v1978
    %2136 = vst.msk [vmem:[#allocation2 + $0x120] sm:$0xff] %vm2099, %v1980
    %2137 = vst.msk [vmem:[#allocation2 + $0x128] sm:$0xff] %vm2099, %v1982
    %2138 = vst.msk [vmem:[#allocation2 + $0x130] sm:$0xff] %vm2099, %v1984
    %2139 = vst.msk [vmem:[#allocation2 + $0x138] sm:$0xff] %vm2099, %v1986
    %2140 = vst.msk [vmem:[#allocation2 + $0x140] sm:$0xff] %vm2099, %v1988
    %2141 = vst.msk [vmem:[#allocation2 + $0x148] sm:$0xff] %vm2099, %v1990
    %2142 = vst.msk [vmem:[#allocation2 + $0x150] sm:$0xff] %vm2099, %v1992
    %2143 = vst.msk [vmem:[#allocation2 + $0x158] sm:$0xff] %vm2099, %v1994
    %2144 = vst.msk [vmem:[#allocation2 + $0x160] sm:$0xff] %vm2099, %v1996
    %2145 = vst.msk [vmem:[#allocation2 + $0x168] sm:$0xff] %vm2099, %v1998
    %2146 = vst.msk [vmem:[#allocation2 + $0x170] sm:$0xff] %vm2099, %v2000
    %2147 = vst.msk [vmem:[#allocation2 + $0x178] sm:$0xff] %vm2099, %v2002
    %2148 = vst.msk [vmem:[#allocation2 + $0x180] sm:$0xff] %vm2099, %v2004
    %2149 = vst.msk [vmem:[#allocation2 + $0x188] sm:$0xff] %vm2099, %v2006
    %2150 = vst.msk [vmem:[#allocation2 + $0x190] sm:$0xff] %vm2099, %v2008
    %2151 = vst.msk [vmem:[#allocation2 + $0x198] sm:$0xff] %vm2099, %v2010
    %2152 = vst.msk [vmem:[#allocation2 + $0x1a0] sm:$0xff] %vm2099, %v2012
    %2153 = vst.msk [vmem:[#allocation2 + $0x1a8] sm:$0xff] %vm2099, %v2014
    %2154 = vst.msk [vmem:[#allocation2 + $0x1b0] sm:$0xff] %vm2099, %v2016
    %2155 = vst.msk [vmem:[#allocation2 + $0x1b8] sm:$0xff] %vm2099, %v2018
    %2156 = vst.msk [vmem:[#allocation2 + $0x1c0] sm:$0xff] %vm2099, %v2020
    %2157 = vst.msk [vmem:[#allocation2 + $0x1c8] sm:$0xff] %vm2099, %v2022
    %2158 = vst.msk [vmem:[#allocation2 + $0x1d0] sm:$0xff] %vm2099, %v2024
    %2159 = vst.msk [vmem:[#allocation2 + $0x1d8] sm:$0xff] %vm2099, %v2026
    %2160 = vst.msk [vmem:[#allocation2 + $0x1e0] sm:$0xff] %vm2099, %v2028
    %2161 = vst.msk [vmem:[#allocation2 + $0x1e8] sm:$0xff] %vm2099, %v2030
    %2162 = vst.msk [vmem:[#allocation2 + $0x1f0] sm:$0xff] %vm2099, %v2032
    %2163 = vst.msk [vmem:[#allocation2 + $0x1f8] sm:$0xff] %vm2099, %v2034
    %s2164 = scalar_lea.vmem %s0, 48
    %v2165 = vld [vmem:[%s2164] sm:$0xff]
    %v2166 = vld [vmem:[%s2164 + $0x8] sm:$0xff]
    %v2167 = vld [vmem:[%s2164 + $0x18] sm:$0xff]
    %v2168 = vld [vmem:[%s2164 + $0x20] sm:$0xff]
    %v2169 = vld [vmem:[%s2164 + $0x30] sm:$0xff]
    %v2170 = vld [vmem:[%s2164 + $0x38] sm:$0xff]
    %v2171 = vld [vmem:[%s2164 + $0x48] sm:$0xff]
    %v2172 = vld [vmem:[%s2164 + $0x50] sm:$0xff]
    %v2173 = vld [vmem:[%s2164 + $0x60] sm:$0xff]
    %v2174 = vld [vmem:[%s2164 + $0x68] sm:$0xff]
    %v2175 = vld [vmem:[%s2164 + $0x78] sm:$0xff]
    %v2176 = vld [vmem:[%s2164 + $0x80] sm:$0xff]
    %v2177 = vld [vmem:[%s2164 + $0x90] sm:$0xff]
    %v2178 = vld [vmem:[%s2164 + $0x98] sm:$0xff]
    %v2179 = vld [vmem:[%s2164 + $0xa8] sm:$0xff]
    %v2180 = vld [vmem:[%s2164 + $0xb0] sm:$0xff]
    %v2181 = vld [vmem:[%s2164 + $0xc0] sm:$0xff]
    %v2182 = vld [vmem:[%s2164 + $0xc8] sm:$0xff]
    %v2183 = vld [vmem:[%s2164 + $0xd8] sm:$0xff]
    %v2184 = vld [vmem:[%s2164 + $0xe0] sm:$0xff]
    %v2185 = vld [vmem:[%s2164 + $0xf0] sm:$0xff]
    %v2186 = vld [vmem:[%s2164 + $0xf8] sm:$0xff]
    %v2187 = vld [vmem:[%s2164 + $0x108] sm:$0xff]
    %v2188 = vld [vmem:[%s2164 + $0x110] sm:$0xff]
    %v2189 = vld [vmem:[%s2164 + $0x120] sm:$0xff]
    %v2190 = vld [vmem:[%s2164 + $0x128] sm:$0xff]
    %v2191 = vld [vmem:[%s2164 + $0x138] sm:$0xff]
    %v2192 = vld [vmem:[%s2164 + $0x140] sm:$0xff]
    %v2193 = vld [vmem:[%s2164 + $0x150] sm:$0xff]
    %v2194 = vld [vmem:[%s2164 + $0x158] sm:$0xff]
    %v2195 = vld [vmem:[%s2164 + $0x168] sm:$0xff]
    %v2196 = vld [vmem:[%s2164 + $0x170] sm:$0xff]
    %v2197 = vld [vmem:[%s2164 + $0x1b0] sm:$0xff]
    %v2198 = vld [vmem:[%s2164 + $0x1b8] sm:$0xff]
    %v2199 = vld [vmem:[%s2164 + $0x1c8] sm:$0xff]
    %v2200 = vld [vmem:[%s2164 + $0x1d0] sm:$0xff]
    %v2201 = vld [vmem:[%s2164 + $0x1e0] sm:$0xff]
    %v2202 = vld [vmem:[%s2164 + $0x1e8] sm:$0xff]
    %v2203 = vld [vmem:[%s2164 + $0x1f8] sm:$0xff]
    %v2204 = vld [vmem:[%s2164 + $0x200] sm:$0xff]
    %v2205 = vld [vmem:[%s2164 + $0x210] sm:$0xff]
    %v2206 = vld [vmem:[%s2164 + $0x218] sm:$0xff]
    %v2207 = vld [vmem:[%s2164 + $0x228] sm:$0xff]
    %v2208 = vld [vmem:[%s2164 + $0x230] sm:$0xff]
    %v2209 = vld [vmem:[%s2164 + $0x240] sm:$0xff]
    %v2210 = vld [vmem:[%s2164 + $0x248] sm:$0xff]
    %v2211 = vld [vmem:[%s2164 + $0x258] sm:$0xff]
    %v2212 = vld [vmem:[%s2164 + $0x260] sm:$0xff]
    %v2213 = vld [vmem:[%s2164 + $0x270] sm:$0xff]
    %v2214 = vld [vmem:[%s2164 + $0x278] sm:$0xff]
    %v2215 = vld [vmem:[%s2164 + $0x288] sm:$0xff]
    %v2216 = vld [vmem:[%s2164 + $0x290] sm:$0xff]
    %v2217 = vld [vmem:[%s2164 + $0x2a0] sm:$0xff]
    %v2218 = vld [vmem:[%s2164 + $0x2a8] sm:$0xff]
    %v2219 = vld [vmem:[%s2164 + $0x2b8] sm:$0xff]
    %v2220 = vld [vmem:[%s2164 + $0x2c0] sm:$0xff]
    %v2221 = vld [vmem:[%s2164 + $0x2d0] sm:$0xff]
    %v2222 = vld [vmem:[%s2164 + $0x2d8] sm:$0xff]
    %v2223 = vld [vmem:[%s2164 + $0x2e8] sm:$0xff]
    %v2224 = vld [vmem:[%s2164 + $0x2f0] sm:$0xff]
    %v2225 = vld [vmem:[%s2164 + $0x300] sm:$0xff]
    %v2226 = vld [vmem:[%s2164 + $0x308] sm:$0xff]
    %v2227 = vld [vmem:[%s2164 + $0x318] sm:$0xff]
    %v2228 = vld [vmem:[%s2164 + $0x320] sm:$0xff]
    %2293 = vrot.lane.b32.xlu0 %v2165, 24
    %v2294 = vpop.permute.xlu0 %2293
    %2295 = vrot.lane.b32.xlu0 %v2166, 24
    %v2296 = vpop.permute.xlu0 %2295
    %2297 = vrot.lane.b32.xlu0 %v2167, 24
    %v2298 = vpop.permute.xlu0 %2297
    %2299 = vrot.lane.b32.xlu0 %v2168, 24
    %v2300 = vpop.permute.xlu0 %2299
    %2301 = vrot.lane.b32.xlu0 %v2169, 24
    %v2302 = vpop.permute.xlu0 %2301
    %2303 = vrot.lane.b32.xlu0 %v2170, 24
    %v2304 = vpop.permute.xlu0 %2303
    %2305 = vrot.lane.b32.xlu0 %v2171, 24
    %v2306 = vpop.permute.xlu0 %2305
    %2307 = vrot.lane.b32.xlu0 %v2172, 24
    %v2308 = vpop.permute.xlu0 %2307
    %2309 = vrot.lane.b32.xlu0 %v2173, 24
    %v2310 = vpop.permute.xlu0 %2309
    %2311 = vrot.lane.b32.xlu0 %v2174, 24
    %v2312 = vpop.permute.xlu0 %2311
    %2313 = vrot.lane.b32.xlu0 %v2175, 24
    %v2314 = vpop.permute.xlu0 %2313
    %2315 = vrot.lane.b32.xlu0 %v2176, 24
    %v2316 = vpop.permute.xlu0 %2315
    %2317 = vrot.lane.b32.xlu0 %v2177, 24
    %v2318 = vpop.permute.xlu0 %2317
    %2319 = vrot.lane.b32.xlu0 %v2178, 24
    %v2320 = vpop.permute.xlu0 %2319
    %2321 = vrot.lane.b32.xlu0 %v2179, 24
    %v2322 = vpop.permute.xlu0 %2321
    %2323 = vrot.lane.b32.xlu0 %v2180, 24
    %v2324 = vpop.permute.xlu0 %2323
    %2325 = vrot.lane.b32.xlu0 %v2181, 24
    %v2326 = vpop.permute.xlu0 %2325
    %2327 = vrot.lane.b32.xlu0 %v2182, 24
    %v2328 = vpop.permute.xlu0 %2327
    %2329 = vrot.lane.b32.xlu0 %v2183, 24
    %v2330 = vpop.permute.xlu0 %2329
    %2331 = vrot.lane.b32.xlu0 %v2184, 24
    %v2332 = vpop.permute.xlu0 %2331
    %2333 = vrot.lane.b32.xlu0 %v2185, 24
    %v2334 = vpop.permute.xlu0 %2333
    %2335 = vrot.lane.b32.xlu0 %v2186, 24
    %v2336 = vpop.permute.xlu0 %2335
    %2337 = vrot.lane.b32.xlu0 %v2187, 24
    %v2338 = vpop.permute.xlu0 %2337
    %2339 = vrot.lane.b32.xlu0 %v2188, 24
    %v2340 = vpop.permute.xlu0 %2339
    %2341 = vrot.lane.b32.xlu0 %v2189, 24
    %v2342 = vpop.permute.xlu0 %2341
    %2343 = vrot.lane.b32.xlu0 %v2190, 24
    %v2344 = vpop.permute.xlu0 %2343
    %2345 = vrot.lane.b32.xlu0 %v2191, 24
    %v2346 = vpop.permute.xlu0 %2345
    %2347 = vrot.lane.b32.xlu0 %v2192, 24
    %v2348 = vpop.permute.xlu0 %2347
    %2349 = vrot.lane.b32.xlu0 %v2193, 24
    %v2350 = vpop.permute.xlu0 %2349
    %2351 = vrot.lane.b32.xlu0 %v2194, 24
    %v2352 = vpop.permute.xlu0 %2351
    %2353 = vrot.lane.b32.xlu0 %v2195, 24
    %v2354 = vpop.permute.xlu0 %2353
    %2355 = vrot.lane.b32.xlu0 %v2196, 24
    %v2356 = vpop.permute.xlu0 %2355
    %2357 = vrot.lane.b32.xlu0 %v2197, 24
    %v2358 = vpop.permute.xlu0 %2357
    %2359 = vrot.lane.b32.xlu0 %v2198, 24
    %v2360 = vpop.permute.xlu0 %2359
    %2361 = vrot.lane.b32.xlu0 %v2199, 24
    %v2362 = vpop.permute.xlu0 %2361
    %2363 = vrot.lane.b32.xlu0 %v2200, 24
    %v2364 = vpop.permute.xlu0 %2363
    %2365 = vrot.lane.b32.xlu0 %v2201, 24
    %v2366 = vpop.permute.xlu0 %2365
    %2367 = vrot.lane.b32.xlu0 %v2202, 24
    %v2368 = vpop.permute.xlu0 %2367
    %2369 = vrot.lane.b32.xlu0 %v2203, 24
    %v2370 = vpop.permute.xlu0 %2369
    %2371 = vrot.lane.b32.xlu0 %v2204, 24
    %v2372 = vpop.permute.xlu0 %2371
    %2373 = vrot.lane.b32.xlu0 %v2205, 24
    %v2374 = vpop.permute.xlu0 %2373
    %2375 = vrot.lane.b32.xlu0 %v2206, 24
    %v2376 = vpop.permute.xlu0 %2375
    %2377 = vrot.lane.b32.xlu0 %v2207, 24
    %v2378 = vpop.permute.xlu0 %2377
    %2379 = vrot.lane.b32.xlu0 %v2208, 24
    %v2380 = vpop.permute.xlu0 %2379
    %2381 = vrot.lane.b32.xlu0 %v2209, 24
    %v2382 = vpop.permute.xlu0 %2381
    %2383 = vrot.lane.b32.xlu0 %v2210, 24
    %v2384 = vpop.permute.xlu0 %2383
    %2385 = vrot.lane.b32.xlu0 %v2211, 24
    %v2386 = vpop.permute.xlu0 %2385
    %2387 = vrot.lane.b32.xlu0 %v2212, 24
    %v2388 = vpop.permute.xlu0 %2387
    %2389 = vrot.lane.b32.xlu0 %v2213, 24
    %v2390 = vpop.permute.xlu0 %2389
    %2391 = vrot.lane.b32.xlu0 %v2214, 24
    %v2392 = vpop.permute.xlu0 %2391
    %2393 = vrot.lane.b32.xlu0 %v2215, 24
    %v2394 = vpop.permute.xlu0 %2393
    %2395 = vrot.lane.b32.xlu0 %v2216, 24
    %v2396 = vpop.permute.xlu0 %2395
    %2397 = vrot.lane.b32.xlu0 %v2217, 24
    %v2398 = vpop.permute.xlu0 %2397
    %2399 = vrot.lane.b32.xlu0 %v2218, 24
    %v2400 = vpop.permute.xlu0 %2399
    %2401 = vrot.lane.b32.xlu0 %v2219, 24
    %v2402 = vpop.permute.xlu0 %2401
    %2403 = vrot.lane.b32.xlu0 %v2220, 24
    %v2404 = vpop.permute.xlu0 %2403
    %2405 = vrot.lane.b32.xlu0 %v2221, 24
    %v2406 = vpop.permute.xlu0 %2405
    %2407 = vrot.lane.b32.xlu0 %v2222, 24
    %v2408 = vpop.permute.xlu0 %2407
    %2409 = vrot.lane.b32.xlu0 %v2223, 24
    %v2410 = vpop.permute.xlu0 %2409
    %2411 = vrot.lane.b32.xlu0 %v2224, 24
    %v2412 = vpop.permute.xlu0 %2411
    %2413 = vrot.lane.b32.xlu0 %v2225, 24
    %v2414 = vpop.permute.xlu0 %2413
    %2415 = vrot.lane.b32.xlu0 %v2226, 24
    %v2416 = vpop.permute.xlu0 %2415
    %2417 = vrot.lane.b32.xlu0 %v2227, 24
    %v2418 = vpop.permute.xlu0 %2417
    %2419 = vrot.lane.b32.xlu0 %v2228, 24
    %v2420 = vpop.permute.xlu0 %2419
    %vm2485 = vcmask 228544
    %2486 = vst.msk [vmem:[#allocation2] sm:$0xff] %vm2485, %v2294
    %2487 = vst.msk [vmem:[#allocation2 + $0x8] sm:$0xff] %vm2485, %v2296
    %2488 = vst.msk [vmem:[#allocation2 + $0x10] sm:$0xff] %vm2485, %v2298
    %2489 = vst.msk [vmem:[#allocation2 + $0x18] sm:$0xff] %vm2485, %v2300
    %2490 = vst.msk [vmem:[#allocation2 + $0x20] sm:$0xff] %vm2485, %v2302
    %2491 = vst.msk [vmem:[#allocation2 + $0x28] sm:$0xff] %vm2485, %v2304
    %2492 = vst.msk [vmem:[#allocation2 + $0x30] sm:$0xff] %vm2485, %v2306
    %2493 = vst.msk [vmem:[#allocation2 + $0x38] sm:$0xff] %vm2485, %v2308
    %2494 = vst.msk [vmem:[#allocation2 + $0x40] sm:$0xff] %vm2485, %v2310
    %2495 = vst.msk [vmem:[#allocation2 + $0x48] sm:$0xff] %vm2485, %v2312
    %2496 = vst.msk [vmem:[#allocation2 + $0x50] sm:$0xff] %vm2485, %v2314
    %2497 = vst.msk [vmem:[#allocation2 + $0x58] sm:$0xff] %vm2485, %v2316
    %2498 = vst.msk [vmem:[#allocation2 + $0x60] sm:$0xff] %vm2485, %v2318
    %2499 = vst.msk [vmem:[#allocation2 + $0x68] sm:$0xff] %vm2485, %v2320
    %2500 = vst.msk [vmem:[#allocation2 + $0x70] sm:$0xff] %vm2485, %v2322
    %2501 = vst.msk [vmem:[#allocation2 + $0x78] sm:$0xff] %vm2485, %v2324
    %2502 = vst.msk [vmem:[#allocation2 + $0x80] sm:$0xff] %vm2485, %v2326
    %2503 = vst.msk [vmem:[#allocation2 + $0x88] sm:$0xff] %vm2485, %v2328
    %2504 = vst.msk [vmem:[#allocation2 + $0x90] sm:$0xff] %vm2485, %v2330
    %2505 = vst.msk [vmem:[#allocation2 + $0x98] sm:$0xff] %vm2485, %v2332
    %2506 = vst.msk [vmem:[#allocation2 + $0xa0] sm:$0xff] %vm2485, %v2334
    %2507 = vst.msk [vmem:[#allocation2 + $0xa8] sm:$0xff] %vm2485, %v2336
    %2508 = vst.msk [vmem:[#allocation2 + $0xb0] sm:$0xff] %vm2485, %v2338
    %2509 = vst.msk [vmem:[#allocation2 + $0xb8] sm:$0xff] %vm2485, %v2340
    %2510 = vst.msk [vmem:[#allocation2 + $0xc0] sm:$0xff] %vm2485, %v2342
    %2511 = vst.msk [vmem:[#allocation2 + $0xc8] sm:$0xff] %vm2485, %v2344
    %2512 = vst.msk [vmem:[#allocation2 + $0xd0] sm:$0xff] %vm2485, %v2346
    %2513 = vst.msk [vmem:[#allocation2 + $0xd8] sm:$0xff] %vm2485, %v2348
    %2514 = vst.msk [vmem:[#allocation2 + $0xe0] sm:$0xff] %vm2485, %v2350
    %2515 = vst.msk [vmem:[#allocation2 + $0xe8] sm:$0xff] %vm2485, %v2352
    %2516 = vst.msk [vmem:[#allocation2 + $0xf0] sm:$0xff] %vm2485, %v2354
    %2517 = vst.msk [vmem:[#allocation2 + $0xf8] sm:$0xff] %vm2485, %v2356
    %2518 = vst.msk [vmem:[#allocation2 + $0x100] sm:$0xff] %vm2485, %v2358
    %2519 = vst.msk [vmem:[#allocation2 + $0x108] sm:$0xff] %vm2485, %v2360
    %2520 = vst.msk [vmem:[#allocation2 + $0x110] sm:$0xff] %vm2485, %v2362
    %2521 = vst.msk [vmem:[#allocation2 + $0x118] sm:$0xff] %vm2485, %v2364
    %2522 = vst.msk [vmem:[#allocation2 + $0x120] sm:$0xff] %vm2485, %v2366
    %2523 = vst.msk [vmem:[#allocation2 + $0x128] sm:$0xff] %vm2485, %v2368
    %2524 = vst.msk [vmem:[#allocation2 + $0x130] sm:$0xff] %vm2485, %v2370
    %2525 = vst.msk [vmem:[#allocation2 + $0x138] sm:$0xff] %vm2485, %v2372
    %2526 = vst.msk [vmem:[#allocation2 + $0x140] sm:$0xff] %vm2485, %v2374
    %2527 = vst.msk [vmem:[#allocation2 + $0x148] sm:$0xff] %vm2485, %v2376
    %2528 = vst.msk [vmem:[#allocation2 + $0x150] sm:$0xff] %vm2485, %v2378
    %2529 = vst.msk [vmem:[#allocation2 + $0x158] sm:$0xff] %vm2485, %v2380
    %2530 = vst.msk [vmem:[#allocation2 + $0x160] sm:$0xff] %vm2485, %v2382
    %2531 = vst.msk [vmem:[#allocation2 + $0x168] sm:$0xff] %vm2485, %v2384
    %2532 = vst.msk [vmem:[#allocation2 + $0x170] sm:$0xff] %vm2485, %v2386
    %2533 = vst.msk [vmem:[#allocation2 + $0x178] sm:$0xff] %vm2485, %v2388
    %2534 = vst.msk [vmem:[#allocation2 + $0x180] sm:$0xff] %vm2485, %v2390
    %2535 = vst.msk [vmem:[#allocation2 + $0x188] sm:$0xff] %vm2485, %v2392
    %2536 = vst.msk [vmem:[#allocation2 + $0x190] sm:$0xff] %vm2485, %v2394
    %2537 = vst.msk [vmem:[#allocation2 + $0x198] sm:$0xff] %vm2485, %v2396
    %2538 = vst.msk [vmem:[#allocation2 + $0x1a0] sm:$0xff] %vm2485, %v2398
    %2539 = vst.msk [vmem:[#allocation2 + $0x1a8] sm:$0xff] %vm2485, %v2400
    %2540 = vst.msk [vmem:[#allocation2 + $0x1b0] sm:$0xff] %vm2485, %v2402
    %2541 = vst.msk [vmem:[#allocation2 + $0x1b8] sm:$0xff] %vm2485, %v2404
    %2542 = vst.msk [vmem:[#allocation2 + $0x1c0] sm:$0xff] %vm2485, %v2406
    %2543 = vst.msk [vmem:[#allocation2 + $0x1c8] sm:$0xff] %vm2485, %v2408
    %2544 = vst.msk [vmem:[#allocation2 + $0x1d0] sm:$0xff] %vm2485, %v2410
    %2545 = vst.msk [vmem:[#allocation2 + $0x1d8] sm:$0xff] %vm2485, %v2412
    %2546 = vst.msk [vmem:[#allocation2 + $0x1e0] sm:$0xff] %vm2485, %v2414
    %2547 = vst.msk [vmem:[#allocation2 + $0x1e8] sm:$0xff] %vm2485, %v2416
    %2548 = vst.msk [vmem:[#allocation2 + $0x1f0] sm:$0xff] %vm2485, %v2418
    %2549 = vst.msk [vmem:[#allocation2 + $0x1f8] sm:$0xff] %vm2485, %v2420
    %v2550 = vld [vmem:[%s2164 + $0x1] sm:$0xff]
    %v2551 = vld [vmem:[%s2164 + $0x9] sm:$0xff]
    %v2552 = vld [vmem:[%s2164 + $0x19] sm:$0xff]
    %v2553 = vld [vmem:[%s2164 + $0x21] sm:$0xff]
    %v2554 = vld [vmem:[%s2164 + $0x31] sm:$0xff]
    %v2555 = vld [vmem:[%s2164 + $0x39] sm:$0xff]
    %v2556 = vld [vmem:[%s2164 + $0x49] sm:$0xff]
    %v2557 = vld [vmem:[%s2164 + $0x51] sm:$0xff]
    %v2558 = vld [vmem:[%s2164 + $0x61] sm:$0xff]
    %v2559 = vld [vmem:[%s2164 + $0x69] sm:$0xff]
    %v2560 = vld [vmem:[%s2164 + $0x79] sm:$0xff]
    %v2561 = vld [vmem:[%s2164 + $0x81] sm:$0xff]
    %v2562 = vld [vmem:[%s2164 + $0x91] sm:$0xff]
    %v2563 = vld [vmem:[%s2164 + $0x99] sm:$0xff]
    %v2564 = vld [vmem:[%s2164 + $0xa9] sm:$0xff]
    %v2565 = vld [vmem:[%s2164 + $0xb1] sm:$0xff]
    %v2566 = vld [vmem:[%s2164 + $0xc1] sm:$0xff]
    %v2567 = vld [vmem:[%s2164 + $0xc9] sm:$0xff]
    %v2568 = vld [vmem:[%s2164 + $0xd9] sm:$0xff]
    %v2569 = vld [vmem:[%s2164 + $0xe1] sm:$0xff]
    %v2570 = vld [vmem:[%s2164 + $0xf1] sm:$0xff]
    %v2571 = vld [vmem:[%s2164 + $0xf9] sm:$0xff]
    %v2572 = vld [vmem:[%s2164 + $0x109] sm:$0xff]
    %v2573 = vld [vmem:[%s2164 + $0x111] sm:$0xff]
    %v2574 = vld [vmem:[%s2164 + $0x121] sm:$0xff]
    %v2575 = vld [vmem:[%s2164 + $0x129] sm:$0xff]
    %v2576 = vld [vmem:[%s2164 + $0x139] sm:$0xff]
    %v2577 = vld [vmem:[%s2164 + $0x141] sm:$0xff]
    %v2578 = vld [vmem:[%s2164 + $0x151] sm:$0xff]
    %v2579 = vld [vmem:[%s2164 + $0x159] sm:$0xff]
    %v2580 = vld [vmem:[%s2164 + $0x169] sm:$0xff]
    %v2581 = vld [vmem:[%s2164 + $0x171] sm:$0xff]
    %v2582 = vld [vmem:[%s2164 + $0x1b1] sm:$0xff]
    %v2583 = vld [vmem:[%s2164 + $0x1b9] sm:$0xff]
    %v2584 = vld [vmem:[%s2164 + $0x1c9] sm:$0xff]
    %v2585 = vld [vmem:[%s2164 + $0x1d1] sm:$0xff]
    %v2586 = vld [vmem:[%s2164 + $0x1e1] sm:$0xff]
    %v2587 = vld [vmem:[%s2164 + $0x1e9] sm:$0xff]
    %v2588 = vld [vmem:[%s2164 + $0x1f9] sm:$0xff]
    %v2589 = vld [vmem:[%s2164 + $0x201] sm:$0xff]
    %v2590 = vld [vmem:[%s2164 + $0x211] sm:$0xff]
    %v2591 = vld [vmem:[%s2164 + $0x219] sm:$0xff]
    %v2592 = vld [vmem:[%s2164 + $0x229] sm:$0xff]
    %v2593 = vld [vmem:[%s2164 + $0x231] sm:$0xff]
    %v2594 = vld [vmem:[%s2164 + $0x241] sm:$0xff]
    %v2595 = vld [vmem:[%s2164 + $0x249] sm:$0xff]
    %v2596 = vld [vmem:[%s2164 + $0x259] sm:$0xff]
    %v2597 = vld [vmem:[%s2164 + $0x261] sm:$0xff]
    %v2598 = vld [vmem:[%s2164 + $0x271] sm:$0xff]
    %v2599 = vld [vmem:[%s2164 + $0x279] sm:$0xff]
    %v2600 = vld [vmem:[%s2164 + $0x289] sm:$0xff]
    %v2601 = vld [vmem:[%s2164 + $0x291] sm:$0xff]
    %v2602 = vld [vmem:[%s2164 + $0x2a1] sm:$0xff]
    %v2603 = vld [vmem:[%s2164 + $0x2a9] sm:$0xff]
    %v2604 = vld [vmem:[%s2164 + $0x2b9] sm:$0xff]
    %v2605 = vld [vmem:[%s2164 + $0x2c1] sm:$0xff]
    %v2606 = vld [vmem:[%s2164 + $0x2d1] sm:$0xff]
    %v2607 = vld [vmem:[%s2164 + $0x2d9] sm:$0xff]
    %v2608 = vld [vmem:[%s2164 + $0x2e9] sm:$0xff]
    %v2609 = vld [vmem:[%s2164 + $0x2f1] sm:$0xff]
    %v2610 = vld [vmem:[%s2164 + $0x301] sm:$0xff]
    %v2611 = vld [vmem:[%s2164 + $0x309] sm:$0xff]
    %v2612 = vld [vmem:[%s2164 + $0x319] sm:$0xff]
    %v2613 = vld [vmem:[%s2164 + $0x321] sm:$0xff]
    %2678 = vrot.lane.b32.xlu0 %v2550, 28
    %v2679 = vpop.permute.xlu0 %2678
    %2680 = vrot.lane.b32.xlu0 %v2551, 28
    %v2681 = vpop.permute.xlu0 %2680
    %2682 = vrot.lane.b32.xlu0 %v2552, 28
    %v2683 = vpop.permute.xlu0 %2682
    %2684 = vrot.lane.b32.xlu0 %v2553, 28
    %v2685 = vpop.permute.xlu0 %2684
    %2686 = vrot.lane.b32.xlu0 %v2554, 28
    %v2687 = vpop.permute.xlu0 %2686
    %2688 = vrot.lane.b32.xlu0 %v2555, 28
    %v2689 = vpop.permute.xlu0 %2688
    %2690 = vrot.lane.b32.xlu0 %v2556, 28
    %v2691 = vpop.permute.xlu0 %2690
    %2692 = vrot.lane.b32.xlu0 %v2557, 28
    %v2693 = vpop.permute.xlu0 %2692
    %2694 = vrot.lane.b32.xlu0 %v2558, 28
    %v2695 = vpop.permute.xlu0 %2694
    %2696 = vrot.lane.b32.xlu0 %v2559, 28
    %v2697 = vpop.permute.xlu0 %2696
    %2698 = vrot.lane.b32.xlu0 %v2560, 28
    %v2699 = vpop.permute.xlu0 %2698
    %2700 = vrot.lane.b32.xlu0 %v2561, 28
    %v2701 = vpop.permute.xlu0 %2700
    %2702 = vrot.lane.b32.xlu0 %v2562, 28
    %v2703 = vpop.permute.xlu0 %2702
    %2704 = vrot.lane.b32.xlu0 %v2563, 28
    %v2705 = vpop.permute.xlu0 %2704
    %2706 = vrot.lane.b32.xlu0 %v2564, 28
    %v2707 = vpop.permute.xlu0 %2706
    %2708 = vrot.lane.b32.xlu0 %v2565, 28
    %v2709 = vpop.permute.xlu0 %2708
    %2710 = vrot.lane.b32.xlu0 %v2566, 28
    %v2711 = vpop.permute.xlu0 %2710
    %2712 = vrot.lane.b32.xlu0 %v2567, 28
    %v2713 = vpop.permute.xlu0 %2712
    %2714 = vrot.lane.b32.xlu0 %v2568, 28
    %v2715 = vpop.permute.xlu0 %2714
    %2716 = vrot.lane.b32.xlu0 %v2569, 28
    %v2717 = vpop.permute.xlu0 %2716
    %2718 = vrot.lane.b32.xlu0 %v2570, 28
    %v2719 = vpop.permute.xlu0 %2718
    %2720 = vrot.lane.b32.xlu0 %v2571, 28
    %v2721 = vpop.permute.xlu0 %2720
    %2722 = vrot.lane.b32.xlu0 %v2572, 28
    %v2723 = vpop.permute.xlu0 %2722
    %2724 = vrot.lane.b32.xlu0 %v2573, 28
    %v2725 = vpop.permute.xlu0 %2724
    %2726 = vrot.lane.b32.xlu0 %v2574, 28
    %v2727 = vpop.permute.xlu0 %2726
    %2728 = vrot.lane.b32.xlu0 %v2575, 28
    %v2729 = vpop.permute.xlu0 %2728
    %2730 = vrot.lane.b32.xlu0 %v2576, 28
    %v2731 = vpop.permute.xlu0 %2730
    %2732 = vrot.lane.b32.xlu0 %v2577, 28
    %v2733 = vpop.permute.xlu0 %2732
    %2734 = vrot.lane.b32.xlu0 %v2578, 28
    %v2735 = vpop.permute.xlu0 %2734
    %2736 = vrot.lane.b32.xlu0 %v2579, 28
    %v2737 = vpop.permute.xlu0 %2736
    %2738 = vrot.lane.b32.xlu0 %v2580, 28
    %v2739 = vpop.permute.xlu0 %2738
    %2740 = vrot.lane.b32.xlu0 %v2581, 28
    %v2741 = vpop.permute.xlu0 %2740
    %2742 = vrot.lane.b32.xlu0 %v2582, 28
    %v2743 = vpop.permute.xlu0 %2742
    %2744 = vrot.lane.b32.xlu0 %v2583, 28
    %v2745 = vpop.permute.xlu0 %2744
    %2746 = vrot.lane.b32.xlu0 %v2584, 28
    %v2747 = vpop.permute.xlu0 %2746
    %2748 = vrot.lane.b32.xlu0 %v2585, 28
    %v2749 = vpop.permute.xlu0 %2748
    %2750 = vrot.lane.b32.xlu0 %v2586, 28
    %v2751 = vpop.permute.xlu0 %2750
    %2752 = vrot.lane.b32.xlu0 %v2587, 28
    %v2753 = vpop.permute.xlu0 %2752
    %2754 = vrot.lane.b32.xlu0 %v2588, 28
    %v2755 = vpop.permute.xlu0 %2754
    %2756 = vrot.lane.b32.xlu0 %v2589, 28
    %v2757 = vpop.permute.xlu0 %2756
    %2758 = vrot.lane.b32.xlu0 %v2590, 28
    %v2759 = vpop.permute.xlu0 %2758
    %2760 = vrot.lane.b32.xlu0 %v2591, 28
    %v2761 = vpop.permute.xlu0 %2760
    %2762 = vrot.lane.b32.xlu0 %v2592, 28
    %v2763 = vpop.permute.xlu0 %2762
    %2764 = vrot.lane.b32.xlu0 %v2593, 28
    %v2765 = vpop.permute.xlu0 %2764
    %2766 = vrot.lane.b32.xlu0 %v2594, 28
    %v2767 = vpop.permute.xlu0 %2766
    %2768 = vrot.lane.b32.xlu0 %v2595, 28
    %v2769 = vpop.permute.xlu0 %2768
    %2770 = vrot.lane.b32.xlu0 %v2596, 28
    %v2771 = vpop.permute.xlu0 %2770
    %2772 = vrot.lane.b32.xlu0 %v2597, 28
    %v2773 = vpop.permute.xlu0 %2772
    %2774 = vrot.lane.b32.xlu0 %v2598, 28
    %v2775 = vpop.permute.xlu0 %2774
    %2776 = vrot.lane.b32.xlu0 %v2599, 28
    %v2777 = vpop.permute.xlu0 %2776
    %2778 = vrot.lane.b32.xlu0 %v2600, 28
    %v2779 = vpop.permute.xlu0 %2778
    %2780 = vrot.lane.b32.xlu0 %v2601, 28
    %v2781 = vpop.permute.xlu0 %2780
    %2782 = vrot.lane.b32.xlu0 %v2602, 28
    %v2783 = vpop.permute.xlu0 %2782
    %2784 = vrot.lane.b32.xlu0 %v2603, 28
    %v2785 = vpop.permute.xlu0 %2784
    %2786 = vrot.lane.b32.xlu0 %v2604, 28
    %v2787 = vpop.permute.xlu0 %2786
    %2788 = vrot.lane.b32.xlu0 %v2605, 28
    %v2789 = vpop.permute.xlu0 %2788
    %2790 = vrot.lane.b32.xlu0 %v2606, 28
    %v2791 = vpop.permute.xlu0 %2790
    %2792 = vrot.lane.b32.xlu0 %v2607, 28
    %v2793 = vpop.permute.xlu0 %2792
    %2794 = vrot.lane.b32.xlu0 %v2608, 28
    %v2795 = vpop.permute.xlu0 %2794
    %2796 = vrot.lane.b32.xlu0 %v2609, 28
    %v2797 = vpop.permute.xlu0 %2796
    %2798 = vrot.lane.b32.xlu0 %v2610, 28
    %v2799 = vpop.permute.xlu0 %2798
    %2800 = vrot.lane.b32.xlu0 %v2611, 28
    %v2801 = vpop.permute.xlu0 %2800
    %2802 = vrot.lane.b32.xlu0 %v2612, 28
    %v2803 = vpop.permute.xlu0 %2802
    %2804 = vrot.lane.b32.xlu0 %v2613, 28
    %v2805 = vpop.permute.xlu0 %2804
    %vm2870 = vcmask 261344
    %2871 = vst.msk [vmem:[#allocation2] sm:$0xff] %vm2870, %v2679
    %2872 = vst.msk [vmem:[#allocation2 + $0x8] sm:$0xff] %vm2870, %v2681
    %2873 = vst.msk [vmem:[#allocation2 + $0x10] sm:$0xff] %vm2870, %v2683
    %2874 = vst.msk [vmem:[#allocation2 + $0x18] sm:$0xff] %vm2870, %v2685
    %2875 = vst.msk [vmem:[#allocation2 + $0x20] sm:$0xff] %vm2870, %v2687
    %2876 = vst.msk [vmem:[#allocation2 + $0x28] sm:$0xff] %vm2870, %v2689
    %2877 = vst.msk [vmem:[#allocation2 + $0x30] sm:$0xff] %vm2870, %v2691
    %2878 = vst.msk [vmem:[#allocation2 + $0x38] sm:$0xff] %vm2870, %v2693
    %2879 = vst.msk [vmem:[#allocation2 + $0x40] sm:$0xff] %vm2870, %v2695
    %2880 = vst.msk [vmem:[#allocation2 + $0x48] sm:$0xff] %vm2870, %v2697
    %2881 = vst.msk [vmem:[#allocation2 + $0x50] sm:$0xff] %vm2870, %v2699
    %2882 = vst.msk [vmem:[#allocation2 + $0x58] sm:$0xff] %vm2870, %v2701
    %2883 = vst.msk [vmem:[#allocation2 + $0x60] sm:$0xff] %vm2870, %v2703
    %2884 = vst.msk [vmem:[#allocation2 + $0x68] sm:$0xff] %vm2870, %v2705
    %2885 = vst.msk [vmem:[#allocation2 + $0x70] sm:$0xff] %vm2870, %v2707
    %2886 = vst.msk [vmem:[#allocation2 + $0x78] sm:$0xff] %vm2870, %v2709
    %2887 = vst.msk [vmem:[#allocation2 + $0x80] sm:$0xff] %vm2870, %v2711
    %2888 = vst.msk [vmem:[#allocation2 + $0x88] sm:$0xff] %vm2870, %v2713
    %2889 = vst.msk [vmem:[#allocation2 + $0x90] sm:$0xff] %vm2870, %v2715
    %2890 = vst.msk [vmem:[#allocation2 + $0x98] sm:$0xff] %vm2870, %v2717
    %2891 = vst.msk [vmem:[#allocation2 + $0xa0] sm:$0xff] %vm2870, %v2719
    %2892 = vst.msk [vmem:[#allocation2 + $0xa8] sm:$0xff] %vm2870, %v2721
    %2893 = vst.msk [vmem:[#allocation2 + $0xb0] sm:$0xff] %vm2870, %v2723
    %2894 = vst.msk [vmem:[#allocation2 + $0xb8] sm:$0xff] %vm2870, %v2725
    %2895 = vst.msk [vmem:[#allocation2 + $0xc0] sm:$0xff] %vm2870, %v2727
    %2896 = vst.msk [vmem:[#allocation2 + $0xc8] sm:$0xff] %vm2870, %v2729
    %2897 = vst.msk [vmem:[#allocation2 + $0xd0] sm:$0xff] %vm2870, %v2731
    %2898 = vst.msk [vmem:[#allocation2 + $0xd8] sm:$0xff] %vm2870, %v2733
    %2899 = vst.msk [vmem:[#allocation2 + $0xe0] sm:$0xff] %vm2870, %v2735
    %2900 = vst.msk [vmem:[#allocation2 + $0xe8] sm:$0xff] %vm2870, %v2737
    %2901 = vst.msk [vmem:[#allocation2 + $0xf0] sm:$0xff] %vm2870, %v2739
    %2902 = vst.msk [vmem:[#allocation2 + $0xf8] sm:$0xff] %vm2870, %v2741
    %2903 = vst.msk [vmem:[#allocation2 + $0x100] sm:$0xff] %vm2870, %v2743
    %2904 = vst.msk [vmem:[#allocation2 + $0x108] sm:$0xff] %vm2870, %v2745
    %2905 = vst.msk [vmem:[#allocation2 + $0x110] sm:$0xff] %vm2870, %v2747
    %2906 = vst.msk [vmem:[#allocation2 + $0x118] sm:$0xff] %vm2870, %v2749
    %2907 = vst.msk [vmem:[#allocation2 + $0x120] sm:$0xff] %vm2870, %v2751
    %2908 = vst.msk [vmem:[#allocation2 + $0x128] sm:$0xff] %vm2870, %v2753
    %2909 = vst.msk [vmem:[#allocation2 + $0x130] sm:$0xff] %vm2870, %v2755
    %2910 = vst.msk [vmem:[#allocation2 + $0x138] sm:$0xff] %vm2870, %v2757
    %2911 = vst.msk [vmem:[#allocation2 + $0x140] sm:$0xff] %vm2870, %v2759
    %2912 = vst.msk [vmem:[#allocation2 + $0x148] sm:$0xff] %vm2870, %v2761
    %2913 = vst.msk [vmem:[#allocation2 + $0x150] sm:$0xff] %vm2870, %v2763
    %2914 = vst.msk [vmem:[#allocation2 + $0x158] sm:$0xff] %vm2870, %v2765
    %2915 = vst.msk [vmem:[#allocation2 + $0x160] sm:$0xff] %vm2870, %v2767
    %2916 = vst.msk [vmem:[#allocation2 + $0x168] sm:$0xff] %vm2870, %v2769
    %2917 = vst.msk [vmem:[#allocation2 + $0x170] sm:$0xff] %vm2870, %v2771
    %2918 = vst.msk [vmem:[#allocation2 + $0x178] sm:$0xff] %vm2870, %v2773
    %2919 = vst.msk [vmem:[#allocation2 + $0x180] sm:$0xff] %vm2870, %v2775
    %2920 = vst.msk [vmem:[#allocation2 + $0x188] sm:$0xff] %vm2870, %v2777
    %2921 = vst.msk [vmem:[#allocation2 + $0x190] sm:$0xff] %vm2870, %v2779
    %2922 = vst.msk [vmem:[#allocation2 + $0x198] sm:$0xff] %vm2870, %v2781
    %2923 = vst.msk [vmem:[#allocation2 + $0x1a0] sm:$0xff] %vm2870, %v2783
    %2924 = vst.msk [vmem:[#allocation2 + $0x1a8] sm:$0xff] %vm2870, %v2785
    %2925 = vst.msk [vmem:[#allocation2 + $0x1b0] sm:$0xff] %vm2870, %v2787
    %2926 = vst.msk [vmem:[#allocation2 + $0x1b8] sm:$0xff] %vm2870, %v2789
    %2927 = vst.msk [vmem:[#allocation2 + $0x1c0] sm:$0xff] %vm2870, %v2791
    %2928 = vst.msk [vmem:[#allocation2 + $0x1c8] sm:$0xff] %vm2870, %v2793
    %2929 = vst.msk [vmem:[#allocation2 + $0x1d0] sm:$0xff] %vm2870, %v2795
    %2930 = vst.msk [vmem:[#allocation2 + $0x1d8] sm:$0xff] %vm2870, %v2797
    %2931 = vst.msk [vmem:[#allocation2 + $0x1e0] sm:$0xff] %vm2870, %v2799
    %2932 = vst.msk [vmem:[#allocation2 + $0x1e8] sm:$0xff] %vm2870, %v2801
    %2933 = vst.msk [vmem:[#allocation2 + $0x1f0] sm:$0xff] %vm2870, %v2803
    %2934 = vst.msk [vmem:[#allocation2 + $0x1f8] sm:$0xff] %vm2870, %v2805
    %v2935 = vld [vmem:[%s2164 + $0x2] sm:$0xff]
    %v2936 = vld [vmem:[%s2164 + $0xa] sm:$0xff]
    %v2937 = vld [vmem:[%s2164 + $0x1a] sm:$0xff]
    %v2938 = vld [vmem:[%s2164 + $0x22] sm:$0xff]
    %v2939 = vld [vmem:[%s2164 + $0x32] sm:$0xff]
    %v2940 = vld [vmem:[%s2164 + $0x3a] sm:$0xff]
    %v2941 = vld [vmem:[%s2164 + $0x4a] sm:$0xff]
    %v2942 = vld [vmem:[%s2164 + $0x52] sm:$0xff]
    %v2943 = vld [vmem:[%s2164 + $0x62] sm:$0xff]
    %v2944 = vld [vmem:[%s2164 + $0x6a] sm:$0xff]
    %v2945 = vld [vmem:[%s2164 + $0x7a] sm:$0xff]
    %v2946 = vld [vmem:[%s2164 + $0x82] sm:$0xff]
    %v2947 = vld [vmem:[%s2164 + $0x92] sm:$0xff]
    %v2948 = vld [vmem:[%s2164 + $0x9a] sm:$0xff]
    %v2949 = vld [vmem:[%s2164 + $0xaa] sm:$0xff]
    %v2950 = vld [vmem:[%s2164 + $0xb2] sm:$0xff]
    %v2951 = vld [vmem:[%s2164 + $0xc2] sm:$0xff]
    %v2952 = vld [vmem:[%s2164 + $0xca] sm:$0xff]
    %v2953 = vld [vmem:[%s2164 + $0xda] sm:$0xff]
    %v2954 = vld [vmem:[%s2164 + $0xe2] sm:$0xff]
    %v2955 = vld [vmem:[%s2164 + $0xf2] sm:$0xff]
    %v2956 = vld [vmem:[%s2164 + $0xfa] sm:$0xff]
    %v2957 = vld [vmem:[%s2164 + $0x10a] sm:$0xff]
    %v2958 = vld [vmem:[%s2164 + $0x112] sm:$0xff]
    %v2959 = vld [vmem:[%s2164 + $0x122] sm:$0xff]
    %v2960 = vld [vmem:[%s2164 + $0x12a] sm:$0xff]
    %v2961 = vld [vmem:[%s2164 + $0x13a] sm:$0xff]
    %v2962 = vld [vmem:[%s2164 + $0x142] sm:$0xff]
    %v2963 = vld [vmem:[%s2164 + $0x152] sm:$0xff]
    %v2964 = vld [vmem:[%s2164 + $0x15a] sm:$0xff]
    %v2965 = vld [vmem:[%s2164 + $0x16a] sm:$0xff]
    %v2966 = vld [vmem:[%s2164 + $0x172] sm:$0xff]
    %v2967 = vld [vmem:[%s2164 + $0x1b2] sm:$0xff]
    %v2968 = vld [vmem:[%s2164 + $0x1ba] sm:$0xff]
    %v2969 = vld [vmem:[%s2164 + $0x1ca] sm:$0xff]
    %v2970 = vld [vmem:[%s2164 + $0x1d2] sm:$0xff]
    %v2971 = vld [vmem:[%s2164 + $0x1e2] sm:$0xff]
    %v2972 = vld [vmem:[%s2164 + $0x1ea] sm:$0xff]
    %v2973 = vld [vmem:[%s2164 + $0x1fa] sm:$0xff]
    %v2974 = vld [vmem:[%s2164 + $0x202] sm:$0xff]
    %v2975 = vld [vmem:[%s2164 + $0x212] sm:$0xff]
    %v2976 = vld [vmem:[%s2164 + $0x21a] sm:$0xff]
    %v2977 = vld [vmem:[%s2164 + $0x22a] sm:$0xff]
    %v2978 = vld [vmem:[%s2164 + $0x232] sm:$0xff]
    %v2979 = vld [vmem:[%s2164 + $0x242] sm:$0xff]
    %v2980 = vld [vmem:[%s2164 + $0x24a] sm:$0xff]
    %v2981 = vld [vmem:[%s2164 + $0x25a] sm:$0xff]
    %v2982 = vld [vmem:[%s2164 + $0x262] sm:$0xff]
    %v2983 = vld [vmem:[%s2164 + $0x272] sm:$0xff]
    %v2984 = vld [vmem:[%s2164 + $0x27a] sm:$0xff]
    %v2985 = vld [vmem:[%s2164 + $0x28a] sm:$0xff]
    %v2986 = vld [vmem:[%s2164 + $0x292] sm:$0xff]
    %v2987 = vld [vmem:[%s2164 + $0x2a2] sm:$0xff]
    %v2988 = vld [vmem:[%s2164 + $0x2aa] sm:$0xff]
    %v2989 = vld [vmem:[%s2164 + $0x2ba] sm:$0xff]
    %v2990 = vld [vmem:[%s2164 + $0x2c2] sm:$0xff]
    %v2991 = vld [vmem:[%s2164 + $0x2d2] sm:$0xff]
    %v2992 = vld [vmem:[%s2164 + $0x2da] sm:$0xff]
    %v2993 = vld [vmem:[%s2164 + $0x2ea] sm:$0xff]
    %v2994 = vld [vmem:[%s2164 + $0x2f2] sm:$0xff]
    %v2995 = vld [vmem:[%s2164 + $0x302] sm:$0xff]
    %v2996 = vld [vmem:[%s2164 + $0x30a] sm:$0xff]
    %v2997 = vld [vmem:[%s2164 + $0x31a] sm:$0xff]
    %v2998 = vld [vmem:[%s2164 + $0x322] sm:$0xff]
    %3063 = vrot.lane.b32.xlu0 %v2935, 32
    %v3064 = vpop.permute.xlu0 %3063
    %3065 = vrot.lane.b32.xlu0 %v2936, 32
    %v3066 = vpop.permute.xlu0 %3065
    %3067 = vrot.lane.b32.xlu0 %v2937, 32
    %v3068 = vpop.permute.xlu0 %3067
    %3069 = vrot.lane.b32.xlu0 %v2938, 32
    %v3070 = vpop.permute.xlu0 %3069
    %3071 = vrot.lane.b32.xlu0 %v2939, 32
    %v3072 = vpop.permute.xlu0 %3071
    %3073 = vrot.lane.b32.xlu0 %v2940, 32
    %v3074 = vpop.permute.xlu0 %3073
    %3075 = vrot.lane.b32.xlu0 %v2941, 32
    %v3076 = vpop.permute.xlu0 %3075
    %3077 = vrot.lane.b32.xlu0 %v2942, 32
    %v3078 = vpop.permute.xlu0 %3077
    %3079 = vrot.lane.b32.xlu0 %v2943, 32
    %v3080 = vpop.permute.xlu0 %3079
    %3081 = vrot.lane.b32.xlu0 %v2944, 32
    %v3082 = vpop.permute.xlu0 %3081
    %3083 = vrot.lane.b32.xlu0 %v2945, 32
    %v3084 = vpop.permute.xlu0 %3083
    %3085 = vrot.lane.b32.xlu0 %v2946, 32
    %v3086 = vpop.permute.xlu0 %3085
    %3087 = vrot.lane.b32.xlu0 %v2947, 32
    %v3088 = vpop.permute.xlu0 %3087
    %3089 = vrot.lane.b32.xlu0 %v2948, 32
    %v3090 = vpop.permute.xlu0 %3089
    %3091 = vrot.lane.b32.xlu0 %v2949, 32
    %v3092 = vpop.permute.xlu0 %3091
    %3093 = vrot.lane.b32.xlu0 %v2950, 32
    %v3094 = vpop.permute.xlu0 %3093
    %3095 = vrot.lane.b32.xlu0 %v2951, 32
    %v3096 = vpop.permute.xlu0 %3095
    %3097 = vrot.lane.b32.xlu0 %v2952, 32
    %v3098 = vpop.permute.xlu0 %3097
    %3099 = vrot.lane.b32.xlu0 %v2953, 32
    %v3100 = vpop.permute.xlu0 %3099
    %3101 = vrot.lane.b32.xlu0 %v2954, 32
    %v3102 = vpop.permute.xlu0 %3101
    %3103 = vrot.lane.b32.xlu0 %v2955, 32
    %v3104 = vpop.permute.xlu0 %3103
    %3105 = vrot.lane.b32.xlu0 %v2956, 32
    %v3106 = vpop.permute.xlu0 %3105
    %3107 = vrot.lane.b32.xlu0 %v2957, 32
    %v3108 = vpop.permute.xlu0 %3107
    %3109 = vrot.lane.b32.xlu0 %v2958, 32
    %v3110 = vpop.permute.xlu0 %3109
    %3111 = vrot.lane.b32.xlu0 %v2959, 32
    %v3112 = vpop.permute.xlu0 %3111
    %3113 = vrot.lane.b32.xlu0 %v2960, 32
    %v3114 = vpop.permute.xlu0 %3113
    %3115 = vrot.lane.b32.xlu0 %v2961, 32
    %v3116 = vpop.permute.xlu0 %3115
    %3117 = vrot.lane.b32.xlu0 %v2962, 32
    %v3118 = vpop.permute.xlu0 %3117
    %3119 = vrot.lane.b32.xlu0 %v2963, 32
    %v3120 = vpop.permute.xlu0 %3119
    %3121 = vrot.lane.b32.xlu0 %v2964, 32
    %v3122 = vpop.permute.xlu0 %3121
    %3123 = vrot.lane.b32.xlu0 %v2965, 32
    %v3124 = vpop.permute.xlu0 %3123
    %3125 = vrot.lane.b32.xlu0 %v2966, 32
    %v3126 = vpop.permute.xlu0 %3125
    %3127 = vrot.lane.b32.xlu0 %v2967, 32
    %v3128 = vpop.permute.xlu0 %3127
    %3129 = vrot.lane.b32.xlu0 %v2968, 32
    %v3130 = vpop.permute.xlu0 %3129
    %3131 = vrot.lane.b32.xlu0 %v2969, 32
    %v3132 = vpop.permute.xlu0 %3131
    %3133 = vrot.lane.b32.xlu0 %v2970, 32
    %v3134 = vpop.permute.xlu0 %3133
    %3135 = vrot.lane.b32.xlu0 %v2971, 32
    %v3136 = vpop.permute.xlu0 %3135
    %3137 = vrot.lane.b32.xlu0 %v2972, 32
    %v3138 = vpop.permute.xlu0 %3137
    %3139 = vrot.lane.b32.xlu0 %v2973, 32
    %v3140 = vpop.permute.xlu0 %3139
    %3141 = vrot.lane.b32.xlu0 %v2974, 32
    %v3142 = vpop.permute.xlu0 %3141
    %3143 = vrot.lane.b32.xlu0 %v2975, 32
    %v3144 = vpop.permute.xlu0 %3143
    %3145 = vrot.lane.b32.xlu0 %v2976, 32
    %v3146 = vpop.permute.xlu0 %3145
    %3147 = vrot.lane.b32.xlu0 %v2977, 32
    %v3148 = vpop.permute.xlu0 %3147
    %3149 = vrot.lane.b32.xlu0 %v2978, 32
    %v3150 = vpop.permute.xlu0 %3149
    %3151 = vrot.lane.b32.xlu0 %v2979, 32
    %v3152 = vpop.permute.xlu0 %3151
    %3153 = vrot.lane.b32.xlu0 %v2980, 32
    %v3154 = vpop.permute.xlu0 %3153
    %3155 = vrot.lane.b32.xlu0 %v2981, 32
    %v3156 = vpop.permute.xlu0 %3155
    %3157 = vrot.lane.b32.xlu0 %v2982, 32
    %v3158 = vpop.permute.xlu0 %3157
    %3159 = vrot.lane.b32.xlu0 %v2983, 32
    %v3160 = vpop.permute.xlu0 %3159
    %3161 = vrot.lane.b32.xlu0 %v2984, 32
    %v3162 = vpop.permute.xlu0 %3161
    %3163 = vrot.lane.b32.xlu0 %v2985, 32
    %v3164 = vpop.permute.xlu0 %3163
    %3165 = vrot.lane.b32.xlu0 %v2986, 32
    %v3166 = vpop.permute.xlu0 %3165
    %3167 = vrot.lane.b32.xlu0 %v2987, 32
    %v3168 = vpop.permute.xlu0 %3167
    %3169 = vrot.lane.b32.xlu0 %v2988, 32
    %v3170 = vpop.permute.xlu0 %3169
    %3171 = vrot.lane.b32.xlu0 %v2989, 32
    %v3172 = vpop.permute.xlu0 %3171
    %3173 = vrot.lane.b32.xlu0 %v2990, 32
    %v3174 = vpop.permute.xlu0 %3173
    %3175 = vrot.lane.b32.xlu0 %v2991, 32
    %v3176 = vpop.permute.xlu0 %3175
    %3177 = vrot.lane.b32.xlu0 %v2992, 32
    %v3178 = vpop.permute.xlu0 %3177
    %3179 = vrot.lane.b32.xlu0 %v2993, 32
    %v3180 = vpop.permute.xlu0 %3179
    %3181 = vrot.lane.b32.xlu0 %v2994, 32
    %v3182 = vpop.permute.xlu0 %3181
    %3183 = vrot.lane.b32.xlu0 %v2995, 32
    %v3184 = vpop.permute.xlu0 %3183
    %3185 = vrot.lane.b32.xlu0 %v2996, 32
    %v3186 = vpop.permute.xlu0 %3185
    %3187 = vrot.lane.b32.xlu0 %v2997, 32
    %v3188 = vpop.permute.xlu0 %3187
    %3189 = vrot.lane.b32.xlu0 %v2998, 32
    %v3190 = vpop.permute.xlu0 %3189
    %vm3255 = vcmask 294144
    %3256 = vst.msk [vmem:[#allocation2] sm:$0xff] %vm3255, %v3064
    %3257 = vst.msk [vmem:[#allocation2 + $0x8] sm:$0xff] %vm3255, %v3066
    %3258 = vst.msk [vmem:[#allocation2 + $0x10] sm:$0xff] %vm3255, %v3068
    %3259 = vst.msk [vmem:[#allocation2 + $0x18] sm:$0xff] %vm3255, %v3070
    %3260 = vst.msk [vmem:[#allocation2 + $0x20] sm:$0xff] %vm3255, %v3072
    %3261 = vst.msk [vmem:[#allocation2 + $0x28] sm:$0xff] %vm3255, %v3074
    %3262 = vst.msk [vmem:[#allocation2 + $0x30] sm:$0xff] %vm3255, %v3076
    %3263 = vst.msk [vmem:[#allocation2 + $0x38] sm:$0xff] %vm3255, %v3078
    %3264 = vst.msk [vmem:[#allocation2 + $0x40] sm:$0xff] %vm3255, %v3080
    %3265 = vst.msk [vmem:[#allocation2 + $0x48] sm:$0xff] %vm3255, %v3082
    %3266 = vst.msk [vmem:[#allocation2 + $0x50] sm:$0xff] %vm3255, %v3084
    %3267 = vst.msk [vmem:[#allocation2 + $0x58] sm:$0xff] %vm3255, %v3086
    %3268 = vst.msk [vmem:[#allocation2 + $0x60] sm:$0xff] %vm3255, %v3088
    %3269 = vst.msk [vmem:[#allocation2 + $0x68] sm:$0xff] %vm3255, %v3090
    %3270 = vst.msk [vmem:[#allocation2 + $0x70] sm:$0xff] %vm3255, %v3092
    %3271 = vst.msk [vmem:[#allocation2 + $0x78] sm:$0xff] %vm3255, %v3094
    %3272 = vst.msk [vmem:[#allocation2 + $0x80] sm:$0xff] %vm3255, %v3096
    %3273 = vst.msk [vmem:[#allocation2 + $0x88] sm:$0xff] %vm3255, %v3098
    %3274 = vst.msk [vmem:[#allocation2 + $0x90] sm:$0xff] %vm3255, %v3100
    %3275 = vst.msk [vmem:[#allocation2 + $0x98] sm:$0xff] %vm3255, %v3102
    %3276 = vst.msk [vmem:[#allocation2 + $0xa0] sm:$0xff] %vm3255, %v3104
    %3277 = vst.msk [vmem:[#allocation2 + $0xa8] sm:$0xff] %vm3255, %v3106
    %3278 = vst.msk [vmem:[#allocation2 + $0xb0] sm:$0xff] %vm3255, %v3108
    %3279 = vst.msk [vmem:[#allocation2 + $0xb8] sm:$0xff] %vm3255, %v3110
    %3280 = vst.msk [vmem:[#allocation2 + $0xc0] sm:$0xff] %vm3255, %v3112
    %3281 = vst.msk [vmem:[#allocation2 + $0xc8] sm:$0xff] %vm3255, %v3114
    %3282 = vst.msk [vmem:[#allocation2 + $0xd0] sm:$0xff] %vm3255, %v3116
    %3283 = vst.msk [vmem:[#allocation2 + $0xd8] sm:$0xff] %vm3255, %v3118
    %3284 = vst.msk [vmem:[#allocation2 + $0xe0] sm:$0xff] %vm3255, %v3120
    %3285 = vst.msk [vmem:[#allocation2 + $0xe8] sm:$0xff] %vm3255, %v3122
    %3286 = vst.msk [vmem:[#allocation2 + $0xf0] sm:$0xff] %vm3255, %v3124
    %3287 = vst.msk [vmem:[#allocation2 + $0xf8] sm:$0xff] %vm3255, %v3126
    %3288 = vst.msk [vmem:[#allocation2 + $0x100] sm:$0xff] %vm3255, %v3128
    %3289 = vst.msk [vmem:[#allocation2 + $0x108] sm:$0xff] %vm3255, %v3130
    %3290 = vst.msk [vmem:[#allocation2 + $0x110] sm:$0xff] %vm3255, %v3132
    %3291 = vst.msk [vmem:[#allocation2 + $0x118] sm:$0xff] %vm3255, %v3134
    %3292 = vst.msk [vmem:[#allocation2 + $0x120] sm:$0xff] %vm3255, %v3136
    %3293 = vst.msk [vmem:[#allocation2 + $0x128] sm:$0xff] %vm3255, %v3138
    %3294 = vst.msk [vmem:[#allocation2 + $0x130] sm:$0xff] %vm3255, %v3140
    %3295 = vst.msk [vmem:[#allocation2 + $0x138] sm:$0xff] %vm3255, %v3142
    %3296 = vst.msk [vmem:[#allocation2 + $0x140] sm:$0xff] %vm3255, %v3144
    %3297 = vst.msk [vmem:[#allocation2 + $0x148] sm:$0xff] %vm3255, %v3146
    %3298 = vst.msk [vmem:[#allocation2 + $0x150] sm:$0xff] %vm3255, %v3148
    %3299 = vst.msk [vmem:[#allocation2 + $0x158] sm:$0xff] %vm3255, %v3150
    %3300 = vst.msk [vmem:[#allocation2 + $0x160] sm:$0xff] %vm3255, %v3152
    %3301 = vst.msk [vmem:[#allocation2 + $0x168] sm:$0xff] %vm3255, %v3154
    %3302 = vst.msk [vmem:[#allocation2 + $0x170] sm:$0xff] %vm3255, %v3156
    %3303 = vst.msk [vmem:[#allocation2 + $0x178] sm:$0xff] %vm3255, %v3158
    %3304 = vst.msk [vmem:[#allocation2 + $0x180] sm:$0xff] %vm3255, %v3160
    %3305 = vst.msk [vmem:[#allocation2 + $0x188] sm:$0xff] %vm3255, %v3162
    %3306 = vst.msk [vmem:[#allocation2 + $0x190] sm:$0xff] %vm3255, %v3164
    %3307 = vst.msk [vmem:[#allocation2 + $0x198] sm:$0xff] %vm3255, %v3166
    %3308 = vst.msk [vmem:[#allocation2 + $0x1a0] sm:$0xff] %vm3255, %v3168
    %3309 = vst.msk [vmem:[#allocation2 + $0x1a8] sm:$0xff] %vm3255, %v3170
    %3310 = vst.msk [vmem:[#allocation2 + $0x1b0] sm:$0xff] %vm3255, %v3172
    %3311 = vst.msk [vmem:[#allocation2 + $0x1b8] sm:$0xff] %vm3255, %v3174
    %3312 = vst.msk [vmem:[#allocation2 + $0x1c0] sm:$0xff] %vm3255, %v3176
    %3313 = vst.msk [vmem:[#allocation2 + $0x1c8] sm:$0xff] %vm3255, %v3178
    %3314 = vst.msk [vmem:[#allocation2 + $0x1d0] sm:$0xff] %vm3255, %v3180
    %3315 = vst.msk [vmem:[#allocation2 + $0x1d8] sm:$0xff] %vm3255, %v3182
    %3316 = vst.msk [vmem:[#allocation2 + $0x1e0] sm:$0xff] %vm3255, %v3184
    %3317 = vst.msk [vmem:[#allocation2 + $0x1e8] sm:$0xff] %vm3255, %v3186
    %3318 = vst.msk [vmem:[#allocation2 + $0x1f0] sm:$0xff] %vm3255, %v3188
    %3319 = vst.msk [vmem:[#allocation2 + $0x1f8] sm:$0xff] %vm3255, %v3190
    %v3320 = vld [vmem:[#allocation2] sm:$0xff]
    %v3321 = vld [vmem:[#allocation2 + $0x8] sm:$0xff]
    %v3322 = vld [vmem:[#allocation2 + $0x10] sm:$0xff]
    %v3323 = vld [vmem:[#allocation2 + $0x18] sm:$0xff]
    %v3324 = vld [vmem:[#allocation2 + $0x20] sm:$0xff]
    %v3325 = vld [vmem:[#allocation2 + $0x28] sm:$0xff]
    %v3326 = vld [vmem:[#allocation2 + $0x30] sm:$0xff]
    %v3327 = vld [vmem:[#allocation2 + $0x38] sm:$0xff]
    %v3328 = vld [vmem:[#allocation2 + $0x40] sm:$0xff]
    %v3329 = vld [vmem:[#allocation2 + $0x48] sm:$0xff]
    %v3330 = vld [vmem:[#allocation2 + $0x50] sm:$0xff]
    %v3331 = vld [vmem:[#allocation2 + $0x58] sm:$0xff]
    %v3332 = vld [vmem:[#allocation2 + $0x60] sm:$0xff]
    %v3333 = vld [vmem:[#allocation2 + $0x68] sm:$0xff]
    %v3334 = vld [vmem:[#allocation2 + $0x70] sm:$0xff]
    %v3335 = vld [vmem:[#allocation2 + $0x78] sm:$0xff]
    %v3336 = vld [vmem:[#allocation2 + $0x80] sm:$0xff]
    %v3337 = vld [vmem:[#allocation2 + $0x88] sm:$0xff]
    %v3338 = vld [vmem:[#allocation2 + $0x90] sm:$0xff]
    %v3339 = vld [vmem:[#allocation2 + $0x98] sm:$0xff]
    %v3340 = vld [vmem:[#allocation2 + $0xa0] sm:$0xff]
    %v3341 = vld [vmem:[#allocation2 + $0xa8] sm:$0xff]
    %v3342 = vld [vmem:[#allocation2 + $0xb0] sm:$0xff]
    %v3343 = vld [vmem:[#allocation2 + $0xb8] sm:$0xff]
    %v3344 = vld [vmem:[#allocation2 + $0xc0] sm:$0xff]
    %v3345 = vld [vmem:[#allocation2 + $0xc8] sm:$0xff]
    %v3346 = vld [vmem:[#allocation2 + $0xd0] sm:$0xff]
    %v3347 = vld [vmem:[#allocation2 + $0xd8] sm:$0xff]
    %v3348 = vld [vmem:[#allocation2 + $0xe0] sm:$0xff]
    %v3349 = vld [vmem:[#allocation2 + $0xe8] sm:$0xff]
    %v3350 = vld [vmem:[#allocation2 + $0xf0] sm:$0xff]
    %v3351 = vld [vmem:[#allocation2 + $0xf8] sm:$0xff]
    %v3352 = vld [vmem:[#allocation2 + $0x100] sm:$0xff]
    %v3353 = vld [vmem:[#allocation2 + $0x108] sm:$0xff]
    %v3354 = vld [vmem:[#allocation2 + $0x110] sm:$0xff]
    %v3355 = vld [vmem:[#allocation2 + $0x118] sm:$0xff]
    %v3356 = vld [vmem:[#allocation2 + $0x120] sm:$0xff]
    %v3357 = vld [vmem:[#allocation2 + $0x128] sm:$0xff]
    %v3358 = vld [vmem:[#allocation2 + $0x130] sm:$0xff]
    %v3359 = vld [vmem:[#allocation2 + $0x138] sm:$0xff]
    %v3360 = vld [vmem:[#allocation2 + $0x140] sm:$0xff]
    %v3361 = vld [vmem:[#allocation2 + $0x148] sm:$0xff]
    %v3362 = vld [vmem:[#allocation2 + $0x150] sm:$0xff]
    %v3363 = vld [vmem:[#allocation2 + $0x158] sm:$0xff]
    %v3364 = vld [vmem:[#allocation2 + $0x160] sm:$0xff]
    %v3365 = vld [vmem:[#allocation2 + $0x168] sm:$0xff]
    %v3366 = vld [vmem:[#allocation2 + $0x170] sm:$0xff]
    %v3367 = vld [vmem:[#allocation2 + $0x178] sm:$0xff]
    %v3368 = vld [vmem:[#allocation2 + $0x180] sm:$0xff]
    %v3369 = vld [vmem:[#allocation2 + $0x188] sm:$0xff]
    %v3370 = vld [vmem:[#allocation2 + $0x190] sm:$0xff]
    %v3371 = vld [vmem:[#allocation2 + $0x198] sm:$0xff]
    %v3372 = vld [vmem:[#allocation2 + $0x1a0] sm:$0xff]
    %v3373 = vld [vmem:[#allocation2 + $0x1a8] sm:$0xff]
    %v3374 = vld [vmem:[#allocation2 + $0x1b0] sm:$0xff]
    %v3375 = vld [vmem:[#allocation2 + $0x1b8] sm:$0xff]
    %v3376 = vld [vmem:[#allocation2 + $0x1c0] sm:$0xff]
    %v3377 = vld [vmem:[#allocation2 + $0x1c8] sm:$0xff]
    %v3378 = vld [vmem:[#allocation2 + $0x1d0] sm:$0xff]
    %v3379 = vld [vmem:[#allocation2 + $0x1d8] sm:$0xff]
    %v3380 = vld [vmem:[#allocation2 + $0x1e0] sm:$0xff]
    %v3381 = vld [vmem:[#allocation2 + $0x1e8] sm:$0xff]
    %v3382 = vld [vmem:[#allocation2 + $0x1f0] sm:$0xff]
    %v3383 = vld [vmem:[#allocation2 + $0x1f8] sm:$0xff]
    %v3384 = vld [vmem:[%s1] sm:$0xff]
    %v3385 = vld [vmem:[%s1 + $0x8] sm:$0xff]
    %v3386 = vld [vmem:[%s1 + $0x10] sm:$0xff]
    %v3387 = vld [vmem:[%s1 + $0x18] sm:$0xff]
    %v3388 = vld [vmem:[%s1 + $0x20] sm:$0xff]
    %v3389 = vld [vmem:[%s1 + $0x28] sm:$0xff]
    %v3390 = vld [vmem:[%s1 + $0x30] sm:$0xff]
    %v3391 = vld [vmem:[%s1 + $0x38] sm:$0xff]
    %v3392 = vld [vmem:[%s1 + $0x40] sm:$0xff]
    %v3393 = vld [vmem:[%s1 + $0x48] sm:$0xff]
    %v3394 = vld [vmem:[%s1 + $0x50] sm:$0xff]
    %v3395 = vld [vmem:[%s1 + $0x58] sm:$0xff]
    %v3396 = vld [vmem:[%s1 + $0x60] sm:$0xff]
    %v3397 = vld [vmem:[%s1 + $0x68] sm:$0xff]
    %v3398 = vld [vmem:[%s1 + $0x70] sm:$0xff]
    %v3399 = vld [vmem:[%s1 + $0x78] sm:$0xff]
    %v3400 = vld [vmem:[%s2] sm:$0x1]
    %v3402 = vperm.slane %v3400, 0
    %3404 = vmatpush.msra.mxu0 %v3399
    %3405 = vmatpush.msra.mxu0 %v3398
    %3406 = vmatpush.msra.mxu0 %v3397
    %3407 = vmatpush.msra.mxu0 %v3396
    %3408 = vmatpush.msra.mxu0 %v3395
    %3409 = vmatpush.msra.mxu0 %v3394
    %3410 = vmatpush.msra.mxu0 %v3393
    %3411 = vmatpush.msra.mxu0 %v3392
    %3412 = vmatpush.msra.mxu0 %v3391
    %3413 = vmatpush.msra.mxu0 %v3390
    %3414 = vmatpush.msra.mxu0 %v3389
    %3415 = vmatpush.msra.mxu0 %v3388
    %3416 = vmatpush.msra.mxu0 %v3387
    %3417 = vmatpush.msra.mxu0 %v3386
    %3418 = vmatpush.msra.mxu0 %v3385
    %3419 = vmatpush.msra.mxu0 %v3384
    %3420 = vmatmul.f32.gmra.mxu0 %v3320
    %v3421 = vpop.f32.mrf.mxu0
    %v3422 = vadd.f32 %v3402, %v3421
    %3423 = vmatmul.f32.gmra.mxu0 %v3321
    %v3424 = vpop.f32.mrf.mxu0
    %v3425 = vadd.f32 %v3402, %v3424
    %3426 = vmatmul.f32.gmra.mxu0 %v3322
    %v3427 = vpop.f32.mrf.mxu0
    %v3428 = vadd.f32 %v3402, %v3427
    %3429 = vmatmul.f32.gmra.mxu0 %v3323
    %v3430 = vpop.f32.mrf.mxu0
    %v3431 = vadd.f32 %v3402, %v3430
    %3432 = vmatmul.f32.gmra.mxu0 %v3324
    %v3433 = vpop.f32.mrf.mxu0
    %v3434 = vadd.f32 %v3402, %v3433
    %3435 = vmatmul.f32.gmra.mxu0 %v3325
    %v3436 = vpop.f32.mrf.mxu0
    %v3437 = vadd.f32 %v3402, %v3436
    %3438 = vmatmul.f32.gmra.mxu0 %v3326
    %v3439 = vpop.f32.mrf.mxu0
    %v3440 = vadd.f32 %v3402, %v3439
    %3441 = vmatmul.f32.gmra.mxu0 %v3327
    %v3442 = vpop.f32.mrf.mxu0
    %v3443 = vadd.f32 %v3402, %v3442
    %3444 = vmatmul.f32.gmra.mxu0 %v3328
    %v3445 = vpop.f32.mrf.mxu0
    %v3446 = vadd.f32 %v3402, %v3445
    %3447 = vmatmul.f32.gmra.mxu0 %v3329
    %v3448 = vpop.f32.mrf.mxu0
    %v3449 = vadd.f32 %v3402, %v3448
    %3450 = vmatmul.f32.gmra.mxu0 %v3330
    %v3451 = vpop.f32.mrf.mxu0
    %v3452 = vadd.f32 %v3402, %v3451
    %3453 = vmatmul.f32.gmra.mxu0 %v3331
    %v3454 = vpop.f32.mrf.mxu0
    %v3455 = vadd.f32 %v3402, %v3454
    %3456 = vmatmul.f32.gmra.mxu0 %v3332
    %v3457 = vpop.f32.mrf.mxu0
    %v3458 = vadd.f32 %v3402, %v3457
    %3459 = vmatmul.f32.gmra.mxu0 %v3333
    %v3460 = vpop.f32.mrf.mxu0
    %v3461 = vadd.f32 %v3402, %v3460
    %3462 = vmatmul.f32.gmra.mxu0 %v3334
    %v3463 = vpop.f32.mrf.mxu0
    %v3464 = vadd.f32 %v3402, %v3463
    %3465 = vmatmul.f32.gmra.mxu0 %v3335
    %v3466 = vpop.f32.mrf.mxu0
    %v3467 = vadd.f32 %v3402, %v3466
    %3468 = vmatmul.f32.gmra.mxu0 %v3336
    %v3469 = vpop.f32.mrf.mxu0
    %v3470 = vadd.f32 %v3402, %v3469
    %3471 = vmatmul.f32.gmra.mxu0 %v3337
    %v3472 = vpop.f32.mrf.mxu0
    %v3473 = vadd.f32 %v3402, %v3472
    %3474 = vmatmul.f32.gmra.mxu0 %v3338
    %v3475 = vpop.f32.mrf.mxu0
    %v3476 = vadd.f32 %v3402, %v3475
    %3477 = vmatmul.f32.gmra.mxu0 %v3339
    %v3478 = vpop.f32.mrf.mxu0
    %v3479 = vadd.f32 %v3402, %v3478
    %3480 = vmatmul.f32.gmra.mxu0 %v3340
    %v3481 = vpop.f32.mrf.mxu0
    %v3482 = vadd.f32 %v3402, %v3481
    %3483 = vmatmul.f32.gmra.mxu0 %v3341
    %v3484 = vpop.f32.mrf.mxu0
    %v3485 = vadd.f32 %v3402, %v3484
    %3486 = vmatmul.f32.gmra.mxu0 %v3342
    %v3487 = vpop.f32.mrf.mxu0
    %v3488 = vadd.f32 %v3402, %v3487
    %3489 = vmatmul.f32.gmra.mxu0 %v3343
    %v3490 = vpop.f32.mrf.mxu0
    %v3491 = vadd.f32 %v3402, %v3490
    %3492 = vmatmul.f32.gmra.mxu0 %v3344
    %v3493 = vpop.f32.mrf.mxu0
    %v3494 = vadd.f32 %v3402, %v3493
    %3495 = vmatmul.f32.gmra.mxu0 %v3345
    %v3496 = vpop.f32.mrf.mxu0
    %v3497 = vadd.f32 %v3402, %v3496
    %3498 = vmatmul.f32.gmra.mxu0 %v3346
    %v3499 = vpop.f32.mrf.mxu0
    %v3500 = vadd.f32 %v3402, %v3499
    %3501 = vmatmul.f32.gmra.mxu0 %v3347
    %v3502 = vpop.f32.mrf.mxu0
    %v3503 = vadd.f32 %v3402, %v3502
    %3504 = vmatmul.f32.gmra.mxu0 %v3348
    %v3505 = vpop.f32.mrf.mxu0
    %v3506 = vadd.f32 %v3402, %v3505
    %3507 = vmatmul.f32.gmra.mxu0 %v3349
    %v3508 = vpop.f32.mrf.mxu0
    %v3509 = vadd.f32 %v3402, %v3508
    %3510 = vmatmul.f32.gmra.mxu0 %v3350
    %v3511 = vpop.f32.mrf.mxu0
    %v3512 = vadd.f32 %v3402, %v3511
    %3513 = vmatmul.f32.gmra.mxu0 %v3351
    %v3514 = vpop.f32.mrf.mxu0
    %v3515 = vadd.f32 %v3402, %v3514
    %3516 = vmatmul.f32.gmra.mxu0 %v3352
    %v3517 = vpop.f32.mrf.mxu0
    %v3518 = vadd.f32 %v3402, %v3517
    %3519 = vmatmul.f32.gmra.mxu0 %v3353
    %v3520 = vpop.f32.mrf.mxu0
    %v3521 = vadd.f32 %v3402, %v3520
    %3522 = vmatmul.f32.gmra.mxu0 %v3354
    %v3523 = vpop.f32.mrf.mxu0
    %v3524 = vadd.f32 %v3402, %v3523
    %3525 = vmatmul.f32.gmra.mxu0 %v3355
    %v3526 = vpop.f32.mrf.mxu0
    %v3527 = vadd.f32 %v3402, %v3526
    %3528 = vmatmul.f32.gmra.mxu0 %v3356
    %v3529 = vpop.f32.mrf.mxu0
    %v3530 = vadd.f32 %v3402, %v3529
    %3531 = vmatmul.f32.gmra.mxu0 %v3357
    %v3532 = vpop.f32.mrf.mxu0
    %v3533 = vadd.f32 %v3402, %v3532
    %3534 = vmatmul.f32.gmra.mxu0 %v3358
    %v3535 = vpop.f32.mrf.mxu0
    %v3536 = vadd.f32 %v3402, %v3535
    %3537 = vmatmul.f32.gmra.mxu0 %v3359
    %v3538 = vpop.f32.mrf.mxu0
    %v3539 = vadd.f32 %v3402, %v3538
    %3540 = vmatmul.f32.gmra.mxu0 %v3360
    %v3541 = vpop.f32.mrf.mxu0
    %v3542 = vadd.f32 %v3402, %v3541
    %3543 = vmatmul.f32.gmra.mxu0 %v3361
    %v3544 = vpop.f32.mrf.mxu0
    %v3545 = vadd.f32 %v3402, %v3544
    %3546 = vmatmul.f32.gmra.mxu0 %v3362
    %v3547 = vpop.f32.mrf.mxu0
    %v3548 = vadd.f32 %v3402, %v3547
    %3549 = vmatmul.f32.gmra.mxu0 %v3363
    %v3550 = vpop.f32.mrf.mxu0
    %v3551 = vadd.f32 %v3402, %v3550
    %3552 = vmatmul.f32.gmra.mxu0 %v3364
    %v3553 = vpop.f32.mrf.mxu0
    %v3554 = vadd.f32 %v3402, %v3553
    %3555 = vmatmul.f32.gmra.mxu0 %v3365
    %v3556 = vpop.f32.mrf.mxu0
    %v3557 = vadd.f32 %v3402, %v3556
    %3558 = vmatmul.f32.gmra.mxu0 %v3366
    %v3559 = vpop.f32.mrf.mxu0
    %v3560 = vadd.f32 %v3402, %v3559
    %3561 = vmatmul.f32.gmra.mxu0 %v3367
    %v3562 = vpop.f32.mrf.mxu0
    %v3563 = vadd.f32 %v3402, %v3562
    %3564 = vmatmul.f32.gmra.mxu0 %v3368
    %v3565 = vpop.f32.mrf.mxu0
    %v3566 = vadd.f32 %v3402, %v3565
    %3567 = vmatmul.f32.gmra.mxu0 %v3369
    %v3568 = vpop.f32.mrf.mxu0
    %v3569 = vadd.f32 %v3402, %v3568
    %3570 = vmatmul.f32.gmra.mxu0 %v3370
    %v3571 = vpop.f32.mrf.mxu0
    %v3572 = vadd.f32 %v3402, %v3571
    %3573 = vmatmul.f32.gmra.mxu0 %v3371
    %v3574 = vpop.f32.mrf.mxu0
    %v3575 = vadd.f32 %v3402, %v3574
    %3576 = vmatmul.f32.gmra.mxu0 %v3372
    %v3577 = vpop.f32.mrf.mxu0
    %v3578 = vadd.f32 %v3402, %v3577
    %3579 = vmatmul.f32.gmra.mxu0 %v3373
    %v3580 = vpop.f32.mrf.mxu0
    %v3581 = vadd.f32 %v3402, %v3580
    %3582 = vmatmul.f32.gmra.mxu0 %v3374
    %v3583 = vpop.f32.mrf.mxu0
    %v3584 = vadd.f32 %v3402, %v3583
    %3585 = vmatmul.f32.gmra.mxu0 %v3375
    %v3586 = vpop.f32.mrf.mxu0
    %v3587 = vadd.f32 %v3402, %v3586
    %3588 = vmatmul.f32.gmra.mxu0 %v3376
    %v3589 = vpop.f32.mrf.mxu0
    %v3590 = vadd.f32 %v3402, %v3589
    %3591 = vmatmul.f32.gmra.mxu0 %v3377
    %v3592 = vpop.f32.mrf.mxu0
    %v3593 = vadd.f32 %v3402, %v3592
    %3594 = vmatmul.f32.gmra.mxu0 %v3378
    %v3595 = vpop.f32.mrf.mxu0
    %v3596 = vadd.f32 %v3402, %v3595
    %3597 = vmatmul.f32.gmra.mxu0 %v3379
    %v3598 = vpop.f32.mrf.mxu0
    %v3599 = vadd.f32 %v3402, %v3598
    %3600 = vmatmul.f32.gmra.mxu0 %v3380
    %v3601 = vpop.f32.mrf.mxu0
    %v3602 = vadd.f32 %v3402, %v3601
    %3603 = vmatmul.f32.gmra.mxu0 %v3381
    %v3604 = vpop.f32.mrf.mxu0
    %v3605 = vadd.f32 %v3402, %v3604
    %3606 = vmatmul.f32.gmra.mxu0 %v3382
    %v3607 = vpop.f32.mrf.mxu0
    %v3608 = vadd.f32 %v3402, %v3607
    %3609 = vmatmul.f32.gmra.mxu0 %v3383
    %v3610 = vpop.f32.mrf.mxu0
    %v3611 = vadd.f32 %v3402, %v3610
    %3612 = vdwg.mxu0
    %v3613 = vld [vmem:[%s3] sm:$0x1]
    %v3614 = vld [vmem:[%s4] sm:$0x1]
    %v3615 = vadd.f32 %v3422, %v3425
    %v3616 = vadd.f32 %v3615, %v3428
    %v3617 = vadd.f32 %v3616, %v3431
    %v3618 = vadd.f32 %v3617, %v3434
    %v3619 = vadd.f32 %v3618, %v3437
    %v3620 = vadd.f32 %v3619, %v3440
    %v3621 = vadd.f32 %v3620, %v3443
    %v3622 = vadd.f32 %v3621, %v3446
    %v3623 = vadd.f32 %v3622, %v3449
    %v3624 = vadd.f32 %v3623, %v3452
    %v3625 = vadd.f32 %v3624, %v3455
    %v3626 = vadd.f32 %v3625, %v3458
    %v3627 = vadd.f32 %v3626, %v3461
    %v3628 = vadd.f32 %v3627, %v3464
    %v3629 = vadd.f32 %v3628, %v3467
    %v3630 = vadd.f32 %v3629, %v3470
    %v3631 = vadd.f32 %v3630, %v3473
    %v3632 = vadd.f32 %v3631, %v3476
    %v3633 = vadd.f32 %v3632, %v3479
    %v3634 = vadd.f32 %v3633, %v3482
    %v3635 = vadd.f32 %v3634, %v3485
    %v3636 = vadd.f32 %v3635, %v3488
    %v3637 = vadd.f32 %v3636, %v3491
    %v3638 = vadd.f32 %v3637, %v3494
    %v3639 = vadd.f32 %v3638, %v3497
    %v3640 = vadd.f32 %v3639, %v3500
    %v3641 = vadd.f32 %v3640, %v3503
    %v3642 = vadd.f32 %v3641, %v3506
    %v3643 = vadd.f32 %v3642, %v3509
    %v3644 = vadd.f32 %v3643, %v3512
    %v3645 = vadd.f32 %v3644, %v3515
    %v3646 = vadd.f32 %v3645, %v3518
    %v3647 = vadd.f32 %v3646, %v3521
    %v3648 = vadd.f32 %v3647, %v3524
    %v3649 = vadd.f32 %v3648, %v3527
    %v3650 = vadd.f32 %v3649, %v3530
    %v3651 = vadd.f32 %v3650, %v3533
    %v3652 = vadd.f32 %v3651, %v3536
    %v3653 = vadd.f32 %v3652, %v3539
    %v3654 = vadd.f32 %v3653, %v3542
    %v3655 = vadd.f32 %v3654, %v3545
    %v3656 = vadd.f32 %v3655, %v3548
    %v3657 = vadd.f32 %v3656, %v3551
    %v3658 = vadd.f32 %v3657, %v3554
    %v3659 = vadd.f32 %v3658, %v3557
    %v3660 = vadd.f32 %v3659, %v3560
    %v3661 = vadd.f32 %v3660, %v3563
    %v3662 = vadd.f32 %v3661, %v3566
    %v3663 = vadd.f32 %v3662, %v3569
    %v3664 = vadd.f32 %v3663, %v3572
    %v3665 = vadd.f32 %v3664, %v3575
    %v3666 = vadd.f32 %v3665, %v3578
    %v3667 = vadd.f32 %v3666, %v3581
    %v3668 = vadd.f32 %v3667, %v3584
    %v3669 = vadd.f32 %v3668, %v3587
    %v3670 = vadd.f32 %v3669, %v3590
    %v3671 = vadd.f32 %v3670, %v3593
    %v3672 = vadd.f32 %v3671, %v3596
    %v3673 = vadd.f32 %v3672, %v3599
    %v3674 = vadd.f32 %v3673, %v3602
    %v3675 = vadd.f32 %v3674, %v3605
    %v3676 = vadd.f32 %v3675, %v3608
    %v3677 = vadd.f32 %v3676, %v3611
    %v3678 = vrot.slane %v3677, 4
    %v3679 = vadd.f32 %v3677, %v3678
    %v3680 = vrot.slane %v3679, 2
    %v3681 = vadd.f32 %v3679, %v3680
    %v3682 = vrot.slane %v3681, 1
    %v3683 = vadd.f32 %v3681, %v3682
    %v3684 = vmul.f32 %v3683, 0.001953125
    %v3685 = vsub.f32 %v3422, %v3684
    %v3686 = vsub.f32 %v3425, %v3684
    %v3687 = vsub.f32 %v3428, %v3684
    %v3688 = vsub.f32 %v3431, %v3684
    %v3689 = vsub.f32 %v3434, %v3684
    %v3690 = vsub.f32 %v3437, %v3684
    %v3691 = vsub.f32 %v3440, %v3684
    %v3692 = vsub.f32 %v3443, %v3684
    %v3693 = vsub.f32 %v3446, %v3684
    %v3694 = vsub.f32 %v3449, %v3684
    %v3695 = vsub.f32 %v3452, %v3684
    %v3696 = vsub.f32 %v3455, %v3684
    %v3697 = vsub.f32 %v3458, %v3684
    %v3698 = vsub.f32 %v3461, %v3684
    %v3699 = vsub.f32 %v3464, %v3684
    %v3700 = vsub.f32 %v3467, %v3684
    %v3701 = vsub.f32 %v3470, %v3684
    %v3702 = vsub.f32 %v3473, %v3684
    %v3703 = vsub.f32 %v3476, %v3684
    %v3704 = vsub.f32 %v3479, %v3684
    %v3705 = vsub.f32 %v3482, %v3684
    %v3706 = vsub.f32 %v3485, %v3684
    %v3707 = vsub.f32 %v3488, %v3684
    %v3708 = vsub.f32 %v3491, %v3684
    %v3709 = vsub.f32 %v3494, %v3684
    %v3710 = vsub.f32 %v3497, %v3684
    %v3711 = vsub.f32 %v3500, %v3684
    %v3712 = vsub.f32 %v3503, %v3684
    %v3713 = vsub.f32 %v3506, %v3684
    %v3714 = vsub.f32 %v3509, %v3684
    %v3715 = vsub.f32 %v3512, %v3684
    %v3716 = vsub.f32 %v3515, %v3684
    %v3717 = vsub.f32 %v3518, %v3684
    %v3718 = vsub.f32 %v3521, %v3684
    %v3719 = vsub.f32 %v3524, %v3684
    %v3720 = vsub.f32 %v3527, %v3684
    %v3721 = vsub.f32 %v3530, %v3684
    %v3722 = vsub.f32 %v3533, %v3684
    %v3723 = vsub.f32 %v3536, %v3684
    %v3724 = vsub.f32 %v3539, %v3684
    %v3725 = vsub.f32 %v3542, %v3684
    %v3726 = vsub.f32 %v3545, %v3684
    %v3727 = vsub.f32 %v3548, %v3684
    %v3728 = vsub.f32 %v3551, %v3684
    %v3729 = vsub.f32 %v3554, %v3684
    %v3730 = vsub.f32 %v3557, %v3684
    %v3731 = vsub.f32 %v3560, %v3684
    %v3732 = vsub.f32 %v3563, %v3684
    %v3733 = vsub.f32 %v3566, %v3684
    %v3734 = vsub.f32 %v3569, %v3684
    %v3735 = vsub.f32 %v3572, %v3684
    %v3736 = vsub.f32 %v3575, %v3684
    %v3737 = vsub.f32 %v3578, %v3684
    %v3738 = vsub.f32 %v3581, %v3684
    %v3739 = vsub.f32 %v3584, %v3684
    %v3740 = vsub.f32 %v3587, %v3684
    %v3741 = vsub.f32 %v3590, %v3684
    %v3742 = vsub.f32 %v3593, %v3684
    %v3743 = vsub.f32 %v3596, %v3684
    %v3744 = vsub.f32 %v3599, %v3684
    %v3745 = vsub.f32 %v3602, %v3684
    %v3746 = vsub.f32 %v3605, %v3684
    %v3747 = vsub.f32 %v3608, %v3684
    %v3748 = vsub.f32 %v3611, %v3684
    %v3749 = vmul.f32 %v3685, %v3685
    %v3750 = vmul.f32 %v3686, %v3686
    %v3751 = vmul.f32 %v3687, %v3687
    %v3752 = vmul.f32 %v3688, %v3688
    %v3753 = vmul.f32 %v3689, %v3689
    %v3754 = vmul.f32 %v3690, %v3690
    %v3755 = vmul.f32 %v3691, %v3691
    %v3756 = vmul.f32 %v3692, %v3692
    %v3757 = vmul.f32 %v3693, %v3693
    %v3758 = vmul.f32 %v3694, %v3694
    %v3759 = vmul.f32 %v3695, %v3695
    %v3760 = vmul.f32 %v3696, %v3696
    %v3761 = vmul.f32 %v3697, %v3697
    %v3762 = vmul.f32 %v3698, %v3698
    %v3763 = vmul.f32 %v3699, %v3699
    %v3764 = vmul.f32 %v3700, %v3700
    %v3765 = vmul.f32 %v3701, %v3701
    %v3766 = vmul.f32 %v3702, %v3702
    %v3767 = vmul.f32 %v3703, %v3703
    %v3768 = vmul.f32 %v3704, %v3704
    %v3769 = vmul.f32 %v3705, %v3705
    %v3770 = vmul.f32 %v3706, %v3706
    %v3771 = vmul.f32 %v3707, %v3707
    %v3772 = vmul.f32 %v3708, %v3708
    %v3773 = vmul.f32 %v3709, %v3709
    %v3774 = vmul.f32 %v3710, %v3710
    %v3775 = vmul.f32 %v3711, %v3711
    %v3776 = vmul.f32 %v3712, %v3712
    %v3777 = vmul.f32 %v3713, %v3713
    %v3778 = vmul.f32 %v3714, %v3714
    %v3779 = vmul.f32 %v3715, %v3715
    %v3780 = vmul.f32 %v3716, %v3716
    %v3781 = vmul.f32 %v3717, %v3717
    %v3782 = vmul.f32 %v3718, %v3718
    %v3783 = vmul.f32 %v3719, %v3719
    %v3784 = vmul.f32 %v3720, %v3720
    %v3785 = vmul.f32 %v3721, %v3721
    %v3786 = vmul.f32 %v3722, %v3722
    %v3787 = vmul.f32 %v3723, %v3723
    %v3788 = vmul.f32 %v3724, %v3724
    %v3789 = vmul.f32 %v3725, %v3725
    %v3790 = vmul.f32 %v3726, %v3726
    %v3791 = vmul.f32 %v3727, %v3727
    %v3792 = vmul.f32 %v3728, %v3728
    %v3793 = vmul.f32 %v3729, %v3729
    %v3794 = vmul.f32 %v3730, %v3730
    %v3795 = vmul.f32 %v3731, %v3731
    %v3796 = vmul.f32 %v3732, %v3732
    %v3797 = vmul.f32 %v3733, %v3733
    %v3798 = vmul.f32 %v3734, %v3734
    %v3799 = vmul.f32 %v3735, %v3735
    %v3800 = vmul.f32 %v3736, %v3736
    %v3801 = vmul.f32 %v3737, %v3737
    %v3802 = vmul.f32 %v3738, %v3738
    %v3803 = vmul.f32 %v3739, %v3739
    %v3804 = vmul.f32 %v3740, %v3740
    %v3805 = vmul.f32 %v3741, %v3741
    %v3806 = vmul.f32 %v3742, %v3742
    %v3807 = vmul.f32 %v3743, %v3743
    %v3808 = vmul.f32 %v3744, %v3744
    %v3809 = vmul.f32 %v3745, %v3745
    %v3810 = vmul.f32 %v3746, %v3746
    %v3811 = vmul.f32 %v3747, %v3747
    %v3812 = vmul.f32 %v3748, %v3748
    %v3813 = vadd.f32 %v3749, %v3750
    %v3814 = vadd.f32 %v3813, %v3751
    %v3815 = vadd.f32 %v3814, %v3752
    %v3816 = vadd.f32 %v3815, %v3753
    %v3817 = vadd.f32 %v3816, %v3754
    %v3818 = vadd.f32 %v3817, %v3755
    %v3819 = vadd.f32 %v3818, %v3756
    %v3820 = vadd.f32 %v3819, %v3757
    %v3821 = vadd.f32 %v3820, %v3758
    %v3822 = vadd.f32 %v3821, %v3759
    %v3823 = vadd.f32 %v3822, %v3760
    %v3824 = vadd.f32 %v3823, %v3761
    %v3825 = vadd.f32 %v3824, %v3762
    %v3826 = vadd.f32 %v3825, %v3763
    %v3827 = vadd.f32 %v3826, %v3764
    %v3828 = vadd.f32 %v3827, %v3765
    %v3829 = vadd.f32 %v3828, %v3766
    %v3830 = vadd.f32 %v3829, %v3767
    %v3831 = vadd.f32 %v3830, %v3768
    %v3832 = vadd.f32 %v3831, %v3769
    %v3833 = vadd.f32 %v3832, %v3770
    %v3834 = vadd.f32 %v3833, %v3771
    %v3835 = vadd.f32 %v3834, %v3772
    %v3836 = vadd.f32 %v3835, %v3773
    %v3837 = vadd.f32 %v3836, %v3774
    %v3838 = vadd.f32 %v3837, %v3775
    %v3839 = vadd.f32 %v3838, %v3776
    %v3840 = vadd.f32 %v3839, %v3777
    %v3841 = vadd.f32 %v3840, %v3778
    %v3842 = vadd.f32 %v3841, %v3779
    %v3843 = vadd.f32 %v3842, %v3780
    %v3844 = vadd.f32 %v3843, %v3781
    %v3845 = vadd.f32 %v3844, %v3782
    %v3846 = vadd.f32 %v3845, %v3783
    %v3847 = vadd.f32 %v3846, %v3784
    %v3848 = vadd.f32 %v3847, %v3785
    %v3849 = vadd.f32 %v3848, %v3786
    %v3850 = vadd.f32 %v3849, %v3787
    %v3851 = vadd.f32 %v3850, %v3788
    %v3852 = vadd.f32 %v3851, %v3789
    %v3853 = vadd.f32 %v3852, %v3790
    %v3854 = vadd.f32 %v3853, %v3791
    %v3855 = vadd.f32 %v3854, %v3792
    %v3856 = vadd.f32 %v3855, %v3793
    %v3857 = vadd.f32 %v3856, %v3794
    %v3858 = vadd.f32 %v3857, %v3795
    %v3859 = vadd.f32 %v3858, %v3796
    %v3860 = vadd.f32 %v3859, %v3797
    %v3861 = vadd.f32 %v3860, %v3798
    %v3862 = vadd.f32 %v3861, %v3799
    %v3863 = vadd.f32 %v3862, %v3800
    %v3864 = vadd.f32 %v3863, %v3801
    %v3865 = vadd.f32 %v3864, %v3802
    %v3866 = vadd.f32 %v3865, %v3803
    %v3867 = vadd.f32 %v3866, %v3804
    %v3868 = vadd.f32 %v3867, %v3805
    %v3869 = vadd.f32 %v3868, %v3806
    %v3870 = vadd.f32 %v3869, %v3807
    %v3871 = vadd.f32 %v3870, %v3808
    %v3872 = vadd.f32 %v3871, %v3809
    %v3873 = vadd.f32 %v3872, %v3810
    %v3874 = vadd.f32 %v3873, %v3811
    %v3875 = vadd.f32 %v3874, %v3812
    %v3876 = vrot.slane %v3875, 4
    %v3877 = vadd.f32 %v3875, %v3876
    %v3878 = vrot.slane %v3877, 2
    %v3879 = vadd.f32 %v3877, %v3878
    %v3880 = vrot.slane %v3879, 1
    %v3881 = vadd.f32 %v3879, %v3880
    %v3882 = vmul.f32 %v3881, 0.001953125
    %v3883 = vadd.f32 %v3882, 1e-05
    %v3884 = vrsqrt.pop %v3883
    %v3885 = vmul.f32 %v3884, %v3883
    %v3886 = vmul.f32 %v3885, %v3884
    %v3887 = vmul.f32 0.5, %v3886
    %v3888 = vsub.f32 1.5, %v3887
    %v3889 = vmul.f32 %v3884, %v3888
    %vm3890 = vweird.f32 %v3883
    %vm3891 = vweird.f32 %v3884
    %vm3892 = vmor %vm3890, %vm3891
    %v3893 = vsel %vm3892, %v3884, %v3889
    %v3894 = vmul.f32 %v3893, %v3613
    %v3895 = vperm.slane %v3894, 0
    %v3896 = vmul.f32 %v3685, %v3895
    %v3897 = vmul.f32 %v3686, %v3895
    %v3898 = vmul.f32 %v3687, %v3895
    %v3899 = vmul.f32 %v3688, %v3895
    %v3900 = vmul.f32 %v3689, %v3895
    %v3901 = vmul.f32 %v3690, %v3895
    %v3902 = vmul.f32 %v3691, %v3895
    %v3903 = vmul.f32 %v3692, %v3895
    %v3904 = vmul.f32 %v3693, %v3895
    %v3905 = vmul.f32 %v3694, %v3895
    %v3906 = vmul.f32 %v3695, %v3895
    %v3907 = vmul.f32 %v3696, %v3895
    %v3908 = vmul.f32 %v3697, %v3895
    %v3909 = vmul.f32 %v3698, %v3895
    %v3910 = vmul.f32 %v3699, %v3895
    %v3911 = vmul.f32 %v3700, %v3895
    %v3912 = vmul.f32 %v3701, %v3895
    %v3913 = vmul.f32 %v3702, %v3895
    %v3914 = vmul.f32 %v3703, %v3895
    %v3915 = vmul.f32 %v3704, %v3895
    %v3916 = vmul.f32 %v3705, %v3895
    %v3917 = vmul.f32 %v3706, %v3895
    %v3918 = vmul.f32 %v3707, %v3895
    %v3919 = vmul.f32 %v3708, %v3895
    %v3920 = vmul.f32 %v3709, %v3895
    %v3921 = vmul.f32 %v3710, %v3895
    %v3922 = vmul.f32 %v3711, %v3895
    %v3923 = vmul.f32 %v3712, %v3895
    %v3924 = vmul.f32 %v3713, %v3895
    %v3925 = vmul.f32 %v3714, %v3895
    %v3926 = vmul.f32 %v3715, %v3895
    %v3927 = vmul.f32 %v3716, %v3895
    %v3928 = vmul.f32 %v3717, %v3895
    %v3929 = vmul.f32 %v3718, %v3895
    %v3930 = vmul.f32 %v3719, %v3895
    %v3931 = vmul.f32 %v3720, %v3895
    %v3932 = vmul.f32 %v3721, %v3895
    %v3933 = vmul.f32 %v3722, %v3895
    %v3934 = vmul.f32 %v3723, %v3895
    %v3935 = vmul.f32 %v3724, %v3895
    %v3936 = vmul.f32 %v3725, %v3895
    %v3937 = vmul.f32 %v3726, %v3895
    %v3938 = vmul.f32 %v3727, %v3895
    %v3939 = vmul.f32 %v3728, %v3895
    %v3940 = vmul.f32 %v3729, %v3895
    %v3941 = vmul.f32 %v3730, %v3895
    %v3942 = vmul.f32 %v3731, %v3895
    %v3943 = vmul.f32 %v3732, %v3895
    %v3944 = vmul.f32 %v3733, %v3895
    %v3945 = vmul.f32 %v3734, %v3895
    %v3946 = vmul.f32 %v3735, %v3895
    %v3947 = vmul.f32 %v3736, %v3895
    %v3948 = vmul.f32 %v3737, %v3895
    %v3949 = vmul.f32 %v3738, %v3895
    %v3950 = vmul.f32 %v3739, %v3895
    %v3951 = vmul.f32 %v3740, %v3895
    %v3952 = vmul.f32 %v3741, %v3895
    %v3953 = vmul.f32 %v3742, %v3895
    %v3954 = vmul.f32 %v3743, %v3895
    %v3955 = vmul.f32 %v3744, %v3895
    %v3956 = vmul.f32 %v3745, %v3895
    %v3957 = vmul.f32 %v3746, %v3895
    %v3958 = vmul.f32 %v3747, %v3895
    %v3959 = vmul.f32 %v3748, %v3895
    %v3961 = vperm.slane %v3614, 0
    %v3963 = vadd.f32 %v3896, %v3961
    %v3964 = vadd.f32 %v3897, %v3961
    %v3965 = vadd.f32 %v3898, %v3961
    %v3966 = vadd.f32 %v3899, %v3961
    %v3967 = vadd.f32 %v3900, %v3961
    %v3968 = vadd.f32 %v3901, %v3961
    %v3969 = vadd.f32 %v3902, %v3961
    %v3970 = vadd.f32 %v3903, %v3961
    %v3971 = vadd.f32 %v3904, %v3961
    %v3972 = vadd.f32 %v3905, %v3961
    %v3973 = vadd.f32 %v3906, %v3961
    %v3974 = vadd.f32 %v3907, %v3961
    %v3975 = vadd.f32 %v3908, %v3961
    %v3976 = vadd.f32 %v3909, %v3961
    %v3977 = vadd.f32 %v3910, %v3961
    %v3978 = vadd.f32 %v3911, %v3961
    %v3979 = vadd.f32 %v3912, %v3961
    %v3980 = vadd.f32 %v3913, %v3961
    %v3981 = vadd.f32 %v3914, %v3961
    %v3982 = vadd.f32 %v3915, %v3961
    %v3983 = vadd.f32 %v3916, %v3961
    %v3984 = vadd.f32 %v3917, %v3961
    %v3985 = vadd.f32 %v3918, %v3961
    %v3986 = vadd.f32 %v3919, %v3961
    %v3987 = vadd.f32 %v3920, %v3961
    %v3988 = vadd.f32 %v3921, %v3961
    %v3989 = vadd.f32 %v3922, %v3961
    %v3990 = vadd.f32 %v3923, %v3961
    %v3991 = vadd.f32 %v3924, %v3961
    %v3992 = vadd.f32 %v3925, %v3961
    %v3993 = vadd.f32 %v3926, %v3961
    %v3994 = vadd.f32 %v3927, %v3961
    %v3995 = vadd.f32 %v3928, %v3961
    %v3996 = vadd.f32 %v3929, %v3961
    %v3997 = vadd.f32 %v3930, %v3961
    %v3998 = vadd.f32 %v3931, %v3961
    %v3999 = vadd.f32 %v3932, %v3961
    %v4000 = vadd.f32 %v3933, %v3961
    %v4001 = vadd.f32 %v3934, %v3961
    %v4002 = vadd.f32 %v3935, %v3961
    %v4003 = vadd.f32 %v3936, %v3961
    %v4004 = vadd.f32 %v3937, %v3961
    %v4005 = vadd.f32 %v3938, %v3961
    %v4006 = vadd.f32 %v3939, %v3961
    %v4007 = vadd.f32 %v3940, %v3961
    %v4008 = vadd.f32 %v3941, %v3961
    %v4009 = vadd.f32 %v3942, %v3961
    %v4010 = vadd.f32 %v3943, %v3961
    %v4011 = vadd.f32 %v3944, %v3961
    %v4012 = vadd.f32 %v3945, %v3961
    %v4013 = vadd.f32 %v3946, %v3961
    %v4014 = vadd.f32 %v3947, %v3961
    %v4015 = vadd.f32 %v3948, %v3961
    %v4016 = vadd.f32 %v3949, %v3961
    %v4017 = vadd.f32 %v3950, %v3961
    %v4018 = vadd.f32 %v3951, %v3961
    %v4019 = vadd.f32 %v3952, %v3961
    %v4020 = vadd.f32 %v3953, %v3961
    %v4021 = vadd.f32 %v3954, %v3961
    %v4022 = vadd.f32 %v3955, %v3961
    %v4023 = vadd.f32 %v3956, %v3961
    %v4024 = vadd.f32 %v3957, %v3961
    %v4025 = vadd.f32 %v3958, %v3961
    %v4026 = vadd.f32 %v3959, %v3961
    %vm4027 = vcmp.gt.f32.partialorder %v3963, 0.0
    %vm4028 = vcmp.gt.f32.partialorder %v3964, 0.0
    %vm4029 = vcmp.gt.f32.partialorder %v3965, 0.0
    %vm4030 = vcmp.gt.f32.partialorder %v3966, 0.0
    %vm4031 = vcmp.gt.f32.partialorder %v3967, 0.0
    %vm4032 = vcmp.gt.f32.partialorder %v3968, 0.0
    %vm4033 = vcmp.gt.f32.partialorder %v3969, 0.0
    %vm4034 = vcmp.gt.f32.partialorder %v3970, 0.0
    %vm4035 = vcmp.gt.f32.partialorder %v3971, 0.0
    %vm4036 = vcmp.gt.f32.partialorder %v3972, 0.0
    %vm4037 = vcmp.gt.f32.partialorder %v3973, 0.0
    %vm4038 = vcmp.gt.f32.partialorder %v3974, 0.0
    %vm4039 = vcmp.gt.f32.partialorder %v3975, 0.0
    %vm4040 = vcmp.gt.f32.partialorder %v3976, 0.0
    %vm4041 = vcmp.gt.f32.partialorder %v3977, 0.0
    %vm4042 = vcmp.gt.f32.partialorder %v3978, 0.0
    %vm4043 = vcmp.gt.f32.partialorder %v3979, 0.0
    %vm4044 = vcmp.gt.f32.partialorder %v3980, 0.0
    %vm4045 = vcmp.gt.f32.partialorder %v3981, 0.0
    %vm4046 = vcmp.gt.f32.partialorder %v3982, 0.0
    %vm4047 = vcmp.gt.f32.partialorder %v3983, 0.0
    %vm4048 = vcmp.gt.f32.partialorder %v3984, 0.0
    %vm4049 = vcmp.gt.f32.partialorder %v3985, 0.0
    %vm4050 = vcmp.gt.f32.partialorder %v3986, 0.0
    %vm4051 = vcmp.gt.f32.partialorder %v3987, 0.0
    %vm4052 = vcmp.gt.f32.partialorder %v3988, 0.0
    %vm4053 = vcmp.gt.f32.partialorder %v3989, 0.0
    %vm4054 = vcmp.gt.f32.partialorder %v3990, 0.0
    %vm4055 = vcmp.gt.f32.partialorder %v3991, 0.0
    %vm4056 = vcmp.gt.f32.partialorder %v3992, 0.0
    %vm4057 = vcmp.gt.f32.partialorder %v3993, 0.0
    %vm4058 = vcmp.gt.f32.partialorder %v3994, 0.0
    %vm4059 = vcmp.gt.f32.partialorder %v3995, 0.0
    %vm4060 = vcmp.gt.f32.partialorder %v3996, 0.0
    %vm4061 = vcmp.gt.f32.partialorder %v3997, 0.0
    %vm4062 = vcmp.gt.f32.partialorder %v3998, 0.0
    %vm4063 = vcmp.gt.f32.partialorder %v3999, 0.0
    %vm4064 = vcmp.gt.f32.partialorder %v4000, 0.0
    %vm4065 = vcmp.gt.f32.partialorder %v4001, 0.0
    %vm4066 = vcmp.gt.f32.partialorder %v4002, 0.0
    %vm4067 = vcmp.gt.f32.partialorder %v4003, 0.0
    %vm4068 = vcmp.gt.f32.partialorder %v4004, 0.0
    %vm4069 = vcmp.gt.f32.partialorder %v4005, 0.0
    %vm4070 = vcmp.gt.f32.partialorder %v4006, 0.0
    %vm4071 = vcmp.gt.f32.partialorder %v4007, 0.0
    %vm4072 = vcmp.gt.f32.partialorder %v4008, 0.0
    %vm4073 = vcmp.gt.f32.partialorder %v4009, 0.0
    %vm4074 = vcmp.gt.f32.partialorder %v4010, 0.0
    %vm4075 = vcmp.gt.f32.partialorder %v4011, 0.0
    %vm4076 = vcmp.gt.f32.partialorder %v4012, 0.0
    %vm4077 = vcmp.gt.f32.partialorder %v4013, 0.0
    %vm4078 = vcmp.gt.f32.partialorder %v4014, 0.0
    %vm4079 = vcmp.gt.f32.partialorder %v4015, 0.0
    %vm4080 = vcmp.gt.f32.partialorder %v4016, 0.0
    %vm4081 = vcmp.gt.f32.partialorder %v4017, 0.0
    %vm4082 = vcmp.gt.f32.partialorder %v4018, 0.0
    %vm4083 = vcmp.gt.f32.partialorder %v4019, 0.0
    %vm4084 = vcmp.gt.f32.partialorder %v4020, 0.0
    %vm4085 = vcmp.gt.f32.partialorder %v4021, 0.0
    %vm4086 = vcmp.gt.f32.partialorder %v4022, 0.0
    %vm4087 = vcmp.gt.f32.partialorder %v4023, 0.0
    %vm4088 = vcmp.gt.f32.partialorder %v4024, 0.0
    %vm4089 = vcmp.gt.f32.partialorder %v4025, 0.0
    %vm4090 = vcmp.gt.f32.partialorder %v4026, 0.0
    %v4091 = vmul.f32 %v3963, 0.01
    %v4092 = vmul.f32 %v3964, 0.01
    %v4093 = vmul.f32 %v3965, 0.01
    %v4094 = vmul.f32 %v3966, 0.01
    %v4095 = vmul.f32 %v3967, 0.01
    %v4096 = vmul.f32 %v3968, 0.01
    %v4097 = vmul.f32 %v3969, 0.01
    %v4098 = vmul.f32 %v3970, 0.01
    %v4099 = vmul.f32 %v3971, 0.01
    %v4100 = vmul.f32 %v3972, 0.01
    %v4101 = vmul.f32 %v3973, 0.01
    %v4102 = vmul.f32 %v3974, 0.01
    %v4103 = vmul.f32 %v3975, 0.01
    %v4104 = vmul.f32 %v3976, 0.01
    %v4105 = vmul.f32 %v3977, 0.01
    %v4106 = vmul.f32 %v3978, 0.01
    %v4107 = vmul.f32 %v3979, 0.01
    %v4108 = vmul.f32 %v3980, 0.01
    %v4109 = vmul.f32 %v3981, 0.01
    %v4110 = vmul.f32 %v3982, 0.01
    %v4111 = vmul.f32 %v3983, 0.01
    %v4112 = vmul.f32 %v3984, 0.01
    %v4113 = vmul.f32 %v3985, 0.01
    %v4114 = vmul.f32 %v3986, 0.01
    %v4115 = vmul.f32 %v3987, 0.01
    %v4116 = vmul.f32 %v3988, 0.01
    %v4117 = vmul.f32 %v3989, 0.01
    %v4118 = vmul.f32 %v3990, 0.01
    %v4119 = vmul.f32 %v3991, 0.01
    %v4120 = vmul.f32 %v3992, 0.01
    %v4121 = vmul.f32 %v3993, 0.01
    %v4122 = vmul.f32 %v3994, 0.01
    %v4123 = vmul.f32 %v3995, 0.01
    %v4124 = vmul.f32 %v3996, 0.01
    %v4125 = vmul.f32 %v3997, 0.01
    %v4126 = vmul.f32 %v3998, 0.01
    %v4127 = vmul.f32 %v3999, 0.01
    %v4128 = vmul.f32 %v4000, 0.01
    %v4129 = vmul.f32 %v4001, 0.01
    %v4130 = vmul.f32 %v4002, 0.01
    %v4131 = vmul.f32 %v4003, 0.01
    %v4132 = vmul.f32 %v4004, 0.01
    %v4133 = vmul.f32 %v4005, 0.01
    %v4134 = vmul.f32 %v4006, 0.01
    %v4135 = vmul.f32 %v4007, 0.01
    %v4136 = vmul.f32 %v4008, 0.01
    %v4137 = vmul.f32 %v4009, 0.01
    %v4138 = vmul.f32 %v4010, 0.01
    %v4139 = vmul.f32 %v4011, 0.01
    %v4140 = vmul.f32 %v4012, 0.01
    %v4141 = vmul.f32 %v4013, 0.01
    %v4142 = vmul.f32 %v4014, 0.01
    %v4143 = vmul.f32 %v4015, 0.01
    %v4144 = vmul.f32 %v4016, 0.01
    %v4145 = vmul.f32 %v4017, 0.01
    %v4146 = vmul.f32 %v4018, 0.01
    %v4147 = vmul.f32 %v4019, 0.01
    %v4148 = vmul.f32 %v4020, 0.01
    %v4149 = vmul.f32 %v4021, 0.01
    %v4150 = vmul.f32 %v4022, 0.01
    %v4151 = vmul.f32 %v4023, 0.01
    %v4152 = vmul.f32 %v4024, 0.01
    %v4153 = vmul.f32 %v4025, 0.01
    %v4154 = vmul.f32 %v4026, 0.01
    %v4155 = vsel %vm4027, %v3963, %v4091
    %v4156 = vsel %vm4028, %v3964, %v4092
    %v4157 = vsel %vm4029, %v3965, %v4093
    %v4158 = vsel %vm4030, %v3966, %v4094
    %v4159 = vsel %vm4031, %v3967, %v4095
    %v4160 = vsel %vm4032, %v3968, %v4096
    %v4161 = vsel %vm4033, %v3969, %v4097
    %v4162 = vsel %vm4034, %v3970, %v4098
    %v4163 = vsel %vm4035, %v3971, %v4099
    %v4164 = vsel %vm4036, %v3972, %v4100
    %v4165 = vsel %vm4037, %v3973, %v4101
    %v4166 = vsel %vm4038, %v3974, %v4102
    %v4167 = vsel %vm4039, %v3975, %v4103
    %v4168 = vsel %vm4040, %v3976, %v4104
    %v4169 = vsel %vm4041, %v3977, %v4105
    %v4170 = vsel %vm4042, %v3978, %v4106
    %v4171 = vsel %vm4043, %v3979, %v4107
    %v4172 = vsel %vm4044, %v3980, %v4108
    %v4173 = vsel %vm4045, %v3981, %v4109
    %v4174 = vsel %vm4046, %v3982, %v4110
    %v4175 = vsel %vm4047, %v3983, %v4111
    %v4176 = vsel %vm4048, %v3984, %v4112
    %v4177 = vsel %vm4049, %v3985, %v4113
    %v4178 = vsel %vm4050, %v3986, %v4114
    %v4179 = vsel %vm4051, %v3987, %v4115
    %v4180 = vsel %vm4052, %v3988, %v4116
    %v4181 = vsel %vm4053, %v3989, %v4117
    %v4182 = vsel %vm4054, %v3990, %v4118
    %v4183 = vsel %vm4055, %v3991, %v4119
    %v4184 = vsel %vm4056, %v3992, %v4120
    %v4185 = vsel %vm4057, %v3993, %v4121
    %v4186 = vsel %vm4058, %v3994, %v4122
    %v4187 = vsel %vm4059, %v3995, %v4123
    %v4188 = vsel %vm4060, %v3996, %v4124
    %v4189 = vsel %vm4061, %v3997, %v4125
    %v4190 = vsel %vm4062, %v3998, %v4126
    %v4191 = vsel %vm4063, %v3999, %v4127
    %v4192 = vsel %vm4064, %v4000, %v4128
    %v4193 = vsel %vm4065, %v4001, %v4129
    %v4194 = vsel %vm4066, %v4002, %v4130
    %v4195 = vsel %vm4067, %v4003, %v4131
    %v4196 = vsel %vm4068, %v4004, %v4132
    %v4197 = vsel %vm4069, %v4005, %v4133
    %v4198 = vsel %vm4070, %v4006, %v4134
    %v4199 = vsel %vm4071, %v4007, %v4135
    %v4200 = vsel %vm4072, %v4008, %v4136
    %v4201 = vsel %vm4073, %v4009, %v4137
    %v4202 = vsel %vm4074, %v4010, %v4138
    %v4203 = vsel %vm4075, %v4011, %v4139
    %v4204 = vsel %vm4076, %v4012, %v4140
    %v4205 = vsel %vm4077, %v4013, %v4141
    %v4206 = vsel %vm4078, %v4014, %v4142
    %v4207 = vsel %vm4079, %v4015, %v4143
    %v4208 = vsel %vm4080, %v4016, %v4144
    %v4209 = vsel %vm4081, %v4017, %v4145
    %v4210 = vsel %vm4082, %v4018, %v4146
    %v4211 = vsel %vm4083, %v4019, %v4147
    %v4212 = vsel %vm4084, %v4020, %v4148
    %v4213 = vsel %vm4085, %v4021, %v4149
    %v4214 = vsel %vm4086, %v4022, %v4150
    %v4215 = vsel %vm4087, %v4023, %v4151
    %v4216 = vsel %vm4088, %v4024, %v4152
    %v4217 = vsel %vm4089, %v4025, %v4153
    %v4218 = vsel %vm4090, %v4026, %v4154
    %4219 = vst [vmem:[#allocation3] sm:$0xff] 0.0
    %4220 = vst [vmem:[#allocation3 + $0x8] sm:$0xff] 0.0
    %4221 = vst [vmem:[#allocation3 + $0x10] sm:$0x3] 0.0
    %4222 = vst [vmem:[#allocation3 + $0x18] sm:$0xff] 0.0
    %4223 = vst [vmem:[#allocation3 + $0x20] sm:$0xff] 0.0
    %4224 = vst [vmem:[#allocation3 + $0x28] sm:$0x3] 0.0
    %4225 = vst [vmem:[#allocation3 + $0x30] sm:$0xff] 0.0
    %4226 = vst [vmem:[#allocation3 + $0x38] sm:$0xff] 0.0
    %4227 = vst [vmem:[#allocation3 + $0x40] sm:$0x3] 0.0
    %4228 = vst [vmem:[#allocation3 + $0x48] sm:$0xff] 0.0
    %4229 = vst [vmem:[#allocation3 + $0x50] sm:$0xff] 0.0
    %4230 = vst [vmem:[#allocation3 + $0x58] sm:$0x3] 0.0
    %4231 = vst [vmem:[#allocation3 + $0x60] sm:$0xff] 0.0
    %4232 = vst [vmem:[#allocation3 + $0x68] sm:$0xff] 0.0
    %4233 = vst [vmem:[#allocation3 + $0x70] sm:$0x3] 0.0
    %4234 = vst [vmem:[#allocation3 + $0x78] sm:$0xff] 0.0
    %4235 = vst [vmem:[#allocation3 + $0x80] sm:$0xff] 0.0
    %4236 = vst [vmem:[#allocation3 + $0x88] sm:$0x3] 0.0
    %4237 = vst [vmem:[#allocation3 + $0x90] sm:$0xff] 0.0
    %4238 = vst [vmem:[#allocation3 + $0x98] sm:$0xff] 0.0
    %4239 = vst [vmem:[#allocation3 + $0xa0] sm:$0x3] 0.0
    %4240 = vst [vmem:[#allocation3 + $0xa8] sm:$0xff] 0.0
    %4241 = vst [vmem:[#allocation3 + $0xb0] sm:$0xff] 0.0
    %4242 = vst [vmem:[#allocation3 + $0xb8] sm:$0x3] 0.0
    %4243 = vst [vmem:[#allocation3 + $0xc0] sm:$0xff] 0.0
    %4244 = vst [vmem:[#allocation3 + $0xc8] sm:$0xff] 0.0
    %4245 = vst [vmem:[#allocation3 + $0xd0] sm:$0x3] 0.0
    %4246 = vst [vmem:[#allocation3 + $0xd8] sm:$0xff] 0.0
    %4247 = vst [vmem:[#allocation3 + $0xe0] sm:$0xff] 0.0
    %4248 = vst [vmem:[#allocation3 + $0xe8] sm:$0x3] 0.0
    %4249 = vst [vmem:[#allocation3 + $0xf0] sm:$0xff] 0.0
    %4250 = vst [vmem:[#allocation3 + $0xf8] sm:$0xff] 0.0
    %4251 = vst [vmem:[#allocation3 + $0x100] sm:$0x3] 0.0
    %4252 = vst [vmem:[#allocation3 + $0x108] sm:$0xff] 0.0
    %4253 = vst [vmem:[#allocation3 + $0x110] sm:$0xff] 0.0
    %4254 = vst [vmem:[#allocation3 + $0x118] sm:$0x3] 0.0
    %4255 = vst [vmem:[#allocation3 + $0x120] sm:$0xff] 0.0
    %4256 = vst [vmem:[#allocation3 + $0x128] sm:$0xff] 0.0
    %4257 = vst [vmem:[#allocation3 + $0x130] sm:$0x3] 0.0
    %4258 = vst [vmem:[#allocation3 + $0x138] sm:$0xff] 0.0
    %4259 = vst [vmem:[#allocation3 + $0x140] sm:$0xff] 0.0
    %4260 = vst [vmem:[#allocation3 + $0x148] sm:$0x3] 0.0
    %4261 = vst [vmem:[#allocation3 + $0x150] sm:$0xff] 0.0
    %4262 = vst [vmem:[#allocation3 + $0x158] sm:$0xff] 0.0
    %4263 = vst [vmem:[#allocation3 + $0x160] sm:$0x3] 0.0
    %4264 = vst [vmem:[#allocation3 + $0x168] sm:$0xff] 0.0
    %4265 = vst [vmem:[#allocation3 + $0x170] sm:$0xff] 0.0
    %4266 = vst [vmem:[#allocation3 + $0x178] sm:$0x3] 0.0
    %4267 = vst [vmem:[#allocation3 + $0x180] sm:$0xff] 0.0
    %4268 = vst [vmem:[#allocation3 + $0x188] sm:$0xff] 0.0
    %4269 = vst [vmem:[#allocation3 + $0x190] sm:$0x3] 0.0
    %4270 = vst [vmem:[#allocation3 + $0x198] sm:$0xff] 0.0
    %4271 = vst [vmem:[#allocation3 + $0x1a0] sm:$0xff] 0.0
    %4272 = vst [vmem:[#allocation3 + $0x1a8] sm:$0x3] 0.0
    %4273 = vst [vmem:[#allocation3 + $0x1b0] sm:$0xff] 0.0
    %4274 = vst [vmem:[#allocation3 + $0x1b8] sm:$0xff] 0.0
    %4275 = vst [vmem:[#allocation3 + $0x1c0] sm:$0x3] 0.0
    %4276 = vst [vmem:[#allocation3 + $0x1c8] sm:$0xff] 0.0
    %4277 = vst [vmem:[#allocation3 + $0x1d0] sm:$0xff] 0.0
    %4278 = vst [vmem:[#allocation3 + $0x1d8] sm:$0x3] 0.0
    %4279 = vst [vmem:[#allocation3 + $0x1e0] sm:$0xff] 0.0
    %4280 = vst [vmem:[#allocation3 + $0x1e8] sm:$0xff] 0.0
    %4281 = vst [vmem:[#allocation3 + $0x1f0] sm:$0x3] 0.0
    %4282 = vst [vmem:[#allocation3 + $0x1f8] sm:$0xff] 0.0
    %4283 = vst [vmem:[#allocation3 + $0x200] sm:$0xff] 0.0
    %4284 = vst [vmem:[#allocation3 + $0x208] sm:$0x3] 0.0
    %4285 = vst [vmem:[#allocation3 + $0x210] sm:$0xff] 0.0
    %4286 = vst [vmem:[#allocation3 + $0x218] sm:$0xff] 0.0
    %4287 = vst [vmem:[#allocation3 + $0x220] sm:$0x3] 0.0
    %4288 = vst [vmem:[#allocation3 + $0x228] sm:$0xff] 0.0
    %4289 = vst [vmem:[#allocation3 + $0x230] sm:$0xff] 0.0
    %4290 = vst [vmem:[#allocation3 + $0x238] sm:$0x3] 0.0
    %4291 = vst [vmem:[#allocation3 + $0x240] sm:$0xff] 0.0
    %4292 = vst [vmem:[#allocation3 + $0x248] sm:$0xff] 0.0
    %4293 = vst [vmem:[#allocation3 + $0x250] sm:$0x3] 0.0
    %4294 = vst [vmem:[#allocation3 + $0x258] sm:$0xff] 0.0
    %4295 = vst [vmem:[#allocation3 + $0x260] sm:$0xff] 0.0
    %4296 = vst [vmem:[#allocation3 + $0x268] sm:$0x3] 0.0
    %4297 = vst [vmem:[#allocation3 + $0x270] sm:$0xff] 0.0
    %4298 = vst [vmem:[#allocation3 + $0x278] sm:$0xff] 0.0
    %4299 = vst [vmem:[#allocation3 + $0x280] sm:$0x3] 0.0
    %4300 = vst [vmem:[#allocation3 + $0x288] sm:$0xff] 0.0
    %4301 = vst [vmem:[#allocation3 + $0x290] sm:$0xff] 0.0
    %4302 = vst [vmem:[#allocation3 + $0x298] sm:$0x3] 0.0
    %4303 = vst [vmem:[#allocation3 + $0x2a0] sm:$0xff] 0.0
    %4304 = vst [vmem:[#allocation3 + $0x2a8] sm:$0xff] 0.0
    %4305 = vst [vmem:[#allocation3 + $0x2b0] sm:$0x3] 0.0
    %4306 = vst [vmem:[#allocation3 + $0x2b8] sm:$0xff] 0.0
    %4307 = vst [vmem:[#allocation3 + $0x2c0] sm:$0xff] 0.0
    %4308 = vst [vmem:[#allocation3 + $0x2c8] sm:$0x3] 0.0
    %4309 = vst [vmem:[#allocation3 + $0x2d0] sm:$0xff] 0.0
    %4310 = vst [vmem:[#allocation3 + $0x2d8] sm:$0xff] 0.0
    %4311 = vst [vmem:[#allocation3 + $0x2e0] sm:$0x3] 0.0
    %4312 = vst [vmem:[#allocation3 + $0x2e8] sm:$0xff] 0.0
    %4313 = vst [vmem:[#allocation3 + $0x2f0] sm:$0xff] 0.0
    %4314 = vst [vmem:[#allocation3 + $0x2f8] sm:$0x3] 0.0
    %4315 = vst [vmem:[#allocation3 + $0x300] sm:$0xff] 0.0
    %4316 = vst [vmem:[#allocation3 + $0x308] sm:$0xff] 0.0
    %4317 = vst [vmem:[#allocation3 + $0x310] sm:$0x3] 0.0
    %4318 = vst [vmem:[#allocation3 + $0x318] sm:$0xff] 0.0
    %4319 = vst [vmem:[#allocation3 + $0x320] sm:$0xff] 0.0
    %4320 = vst [vmem:[#allocation3 + $0x328] sm:$0x3] 0.0
    %4321 = vst [vmem:[#allocation3 + $0x330] sm:$0xff] 0.0
    %4322 = vst [vmem:[#allocation3 + $0x338] sm:$0xff] 0.0
    %4323 = vst [vmem:[#allocation3 + $0x340] sm:$0x3] 0.0
    %4324 = vst [vmem:[#allocation3 + $0x348] sm:$0xff] 0.0
    %4325 = vst [vmem:[#allocation3 + $0x350] sm:$0xff] 0.0
    %4326 = vst [vmem:[#allocation3 + $0x358] sm:$0x3] 0.0
    %s4327 = scalar_lea.vmem [#allocation3], 24
    %4328 = vst [vmem:[%s4327 + $0x1] sm:$0xff] %v4155
    %4329 = vst [vmem:[%s4327 + $0x9] sm:$0xff] %v4156
    %4330 = vst [vmem:[%s4327 + $0x19] sm:$0xff] %v4157
    %4331 = vst [vmem:[%s4327 + $0x21] sm:$0xff] %v4158
    %4332 = vst [vmem:[%s4327 + $0x31] sm:$0xff] %v4159
    %4333 = vst [vmem:[%s4327 + $0x39] sm:$0xff] %v4160
    %4334 = vst [vmem:[%s4327 + $0x49] sm:$0xff] %v4161
    %4335 = vst [vmem:[%s4327 + $0x51] sm:$0xff] %v4162
    %4336 = vst [vmem:[%s4327 + $0x61] sm:$0xff] %v4163
    %4337 = vst [vmem:[%s4327 + $0x69] sm:$0xff] %v4164
    %4338 = vst [vmem:[%s4327 + $0x79] sm:$0xff] %v4165
    %4339 = vst [vmem:[%s4327 + $0x81] sm:$0xff] %v4166
    %4340 = vst [vmem:[%s4327 + $0x91] sm:$0xff] %v4167
    %4341 = vst [vmem:[%s4327 + $0x99] sm:$0xff] %v4168
    %4342 = vst [vmem:[%s4327 + $0xa9] sm:$0xff] %v4169
    %4343 = vst [vmem:[%s4327 + $0xb1] sm:$0xff] %v4170
    %4344 = vst [vmem:[%s4327 + $0xc1] sm:$0xff] %v4171
    %4345 = vst [vmem:[%s4327 + $0xc9] sm:$0xff] %v4172
    %4346 = vst [vmem:[%s4327 + $0xd9] sm:$0xff] %v4173
    %4347 = vst [vmem:[%s4327 + $0xe1] sm:$0xff] %v4174
    %4348 = vst [vmem:[%s4327 + $0xf1] sm:$0xff] %v4175
    %4349 = vst [vmem:[%s4327 + $0xf9] sm:$0xff] %v4176
    %4350 = vst [vmem:[%s4327 + $0x109] sm:$0xff] %v4177
    %4351 = vst [vmem:[%s4327 + $0x111] sm:$0xff] %v4178
    %4352 = vst [vmem:[%s4327 + $0x121] sm:$0xff] %v4179
    %4353 = vst [vmem:[%s4327 + $0x129] sm:$0xff] %v4180
    %4354 = vst [vmem:[%s4327 + $0x139] sm:$0xff] %v4181
    %4355 = vst [vmem:[%s4327 + $0x141] sm:$0xff] %v4182
    %4356 = vst [vmem:[%s4327 + $0x151] sm:$0xff] %v4183
    %4357 = vst [vmem:[%s4327 + $0x159] sm:$0xff] %v4184
    %4358 = vst [vmem:[%s4327 + $0x169] sm:$0xff] %v4185
    %4359 = vst [vmem:[%s4327 + $0x171] sm:$0xff] %v4186
    %4360 = vst [vmem:[%s4327 + $0x1b1] sm:$0xff] %v4187
    %4361 = vst [vmem:[%s4327 + $0x1b9] sm:$0xff] %v4188
    %4362 = vst [vmem:[%s4327 + $0x1c9] sm:$0xff] %v4189
    %4363 = vst [vmem:[%s4327 + $0x1d1] sm:$0xff] %v4190
    %4364 = vst [vmem:[%s4327 + $0x1e1] sm:$0xff] %v4191
    %4365 = vst [vmem:[%s4327 + $0x1e9] sm:$0xff] %v4192
    %4366 = vst [vmem:[%s4327 + $0x1f9] sm:$0xff] %v4193
    %4367 = vst [vmem:[%s4327 + $0x201] sm:$0xff] %v4194
    %4368 = vst [vmem:[%s4327 + $0x211] sm:$0xff] %v4195
    %4369 = vst [vmem:[%s4327 + $0x219] sm:$0xff] %v4196
    %4370 = vst [vmem:[%s4327 + $0x229] sm:$0xff] %v4197
    %4371 = vst [vmem:[%s4327 + $0x231] sm:$0xff] %v4198
    %4372 = vst [vmem:[%s4327 + $0x241] sm:$0xff] %v4199
    %4373 = vst [vmem:[%s4327 + $0x249] sm:$0xff] %v4200
    %4374 = vst [vmem:[%s4327 + $0x259] sm:$0xff] %v4201
    %4375 = vst [vmem:[%s4327 + $0x261] sm:$0xff] %v4202
    %4376 = vst [vmem:[%s4327 + $0x271] sm:$0xff] %v4203
    %4377 = vst [vmem:[%s4327 + $0x279] sm:$0xff] %v4204
    %4378 = vst [vmem:[%s4327 + $0x289] sm:$0xff] %v4205
    %4379 = vst [vmem:[%s4327 + $0x291] sm:$0xff] %v4206
    %4380 = vst [vmem:[%s4327 + $0x2a1] sm:$0xff] %v4207
    %4381 = vst [vmem:[%s4327 + $0x2a9] sm:$0xff] %v4208
    %4382 = vst [vmem:[%s4327 + $0x2b9] sm:$0xff] %v4209
    %4383 = vst [vmem:[%s4327 + $0x2c1] sm:$0xff] %v4210
    %4384 = vst [vmem:[%s4327 + $0x2d1] sm:$0xff] %v4211
    %4385 = vst [vmem:[%s4327 + $0x2d9] sm:$0xff] %v4212
    %4386 = vst [vmem:[%s4327 + $0x2e9] sm:$0xff] %v4213
    %4387 = vst [vmem:[%s4327 + $0x2f1] sm:$0xff] %v4214
    %4388 = vst [vmem:[%s4327 + $0x301] sm:$0xff] %v4215
    %4389 = vst [vmem:[%s4327 + $0x309] sm:$0xff] %v4216
    %4390 = vst [vmem:[%s4327 + $0x319] sm:$0xff] %v4217
    %4391 = vst [vmem:[%s4327 + $0x321] sm:$0xff] %v4218
    %v4392 = vld [vmem:[#allocation2] sm:$0xff]
    %v4393 = vld [vmem:[#allocation2 + $0x8] sm:$0xff]
    %v4394 = vld [vmem:[#allocation2 + $0x10] sm:$0xff]
    %v4395 = vld [vmem:[#allocation2 + $0x18] sm:$0xff]
    %v4396 = vld [vmem:[#allocation2 + $0x20] sm:$0xff]
    %v4397 = vld [vmem:[#allocation2 + $0x28] sm:$0xff]
    %v4398 = vld [vmem:[#allocation2 + $0x30] sm:$0xff]
    %v4399 = vld [vmem:[#allocation2 + $0x38] sm:$0xff]
    %v4400 = vld [vmem:[#allocation2 + $0x40] sm:$0xff]
    %v4401 = vld [vmem:[#allocation2 + $0x48] sm:$0xff]
    %v4402 = vld [vmem:[#allocation2 + $0x50] sm:$0xff]
    %v4403 = vld [vmem:[#allocation2 + $0x58] sm:$0xff]
    %v4404 = vld [vmem:[#allocation2 + $0x60] sm:$0xff]
    %v4405 = vld [vmem:[#allocation2 + $0x68] sm:$0xff]
    %v4406 = vld [vmem:[#allocation2 + $0x70] sm:$0xff]
    %v4407 = vld [vmem:[#allocation2 + $0x78] sm:$0xff]
    %v4408 = vld [vmem:[#allocation2 + $0x80] sm:$0xff]
    %v4409 = vld [vmem:[#allocation2 + $0x88] sm:$0xff]
    %v4410 = vld [vmem:[#allocation2 + $0x90] sm:$0xff]
    %v4411 = vld [vmem:[#allocation2 + $0x98] sm:$0xff]
    %v4412 = vld [vmem:[#allocation2 + $0xa0] sm:$0xff]
    %v4413 = vld [vmem:[#allocation2 + $0xa8] sm:$0xff]
    %v4414 = vld [vmem:[#allocation2 + $0xb0] sm:$0xff]
    %v4415 = vld [vmem:[#allocation2 + $0xb8] sm:$0xff]
    %v4416 = vld [vmem:[#allocation2 + $0xc0] sm:$0xff]
    %v4417 = vld [vmem:[#allocation2 + $0xc8] sm:$0xff]
    %v4418 = vld [vmem:[#allocation2 + $0xd0] sm:$0xff]
    %v4419 = vld [vmem:[#allocation2 + $0xd8] sm:$0xff]
    %v4420 = vld [vmem:[#allocation2 + $0xe0] sm:$0xff]
    %v4421 = vld [vmem:[#allocation2 + $0xe8] sm:$0xff]
    %v4422 = vld [vmem:[#allocation2 + $0xf0] sm:$0xff]
    %v4423 = vld [vmem:[#allocation2 + $0xf8] sm:$0xff]
    %v4424 = vld [vmem:[#allocation2 + $0x100] sm:$0xff]
    %v4425 = vld [vmem:[#allocation2 + $0x108] sm:$0xff]
    %v4426 = vld [vmem:[#allocation2 + $0x110] sm:$0xff]
    %v4427 = vld [vmem:[#allocation2 + $0x118] sm:$0xff]
    %v4428 = vld [vmem:[#allocation2 + $0x120] sm:$0xff]
    %v4429 = vld [vmem:[#allocation2 + $0x128] sm:$0xff]
    %v4430 = vld [vmem:[#allocation2 + $0x130] sm:$0xff]
    %v4431 = vld [vmem:[#allocation2 + $0x138] sm:$0xff]
    %v4432 = vld [vmem:[#allocation2 + $0x140] sm:$0xff]
    %v4433 = vld [vmem:[#allocation2 + $0x148] sm:$0xff]
    %v4434 = vld [vmem:[#allocation2 + $0x150] sm:$0xff]
    %v4435 = vld [vmem:[#allocation2 + $0x158] sm:$0xff]
    %v4436 = vld [vmem:[#allocation2 + $0x160] sm:$0xff]
    %v4437 = vld [vmem:[#allocation2 + $0x168] sm:$0xff]
    %v4438 = vld [vmem:[#allocation2 + $0x170] sm:$0xff]
    %v4439 = vld [vmem:[#allocation2 + $0x178] sm:$0xff]
    %v4440 = vld [vmem:[#allocation2 + $0x180] sm:$0xff]
    %v4441 = vld [vmem:[#allocation2 + $0x188] sm:$0xff]
    %v4442 = vld [vmem:[#allocation2 + $0x190] sm:$0xff]
    %v4443 = vld [vmem:[#allocation2 + $0x198] sm:$0xff]
    %v4444 = vld [vmem:[#allocation2 + $0x1a0] sm:$0xff]
    %v4445 = vld [vmem:[#allocation2 + $0x1a8] sm:$0xff]
    %v4446 = vld [vmem:[#allocation2 + $0x1b0] sm:$0xff]
    %v4447 = vld [vmem:[#allocation2 + $0x1b8] sm:$0xff]
    %v4448 = vld [vmem:[#allocation2 + $0x1c0] sm:$0xff]
    %v4449 = vld [vmem:[#allocation2 + $0x1c8] sm:$0xff]
    %v4450 = vld [vmem:[#allocation2 + $0x1d0] sm:$0xff]
    %v4451 = vld [vmem:[#allocation2 + $0x1d8] sm:$0xff]
    %v4452 = vld [vmem:[#allocation2 + $0x1e0] sm:$0xff]
    %v4453 = vld [vmem:[#allocation2 + $0x1e8] sm:$0xff]
    %v4454 = vld [vmem:[#allocation2 + $0x1f0] sm:$0xff]
    %v4455 = vld [vmem:[#allocation2 + $0x1f8] sm:$0xff]
    %v4456 = vld [vmem:[%s9] sm:$0xff]
    %v4457 = vld [vmem:[%s9 + $0x8] sm:$0xff]
    %v4458 = vld [vmem:[%s9 + $0x10] sm:$0xff]
    %v4459 = vld [vmem:[%s9 + $0x18] sm:$0xff]
    %v4460 = vld [vmem:[%s9 + $0x20] sm:$0xff]
    %v4461 = vld [vmem:[%s9 + $0x28] sm:$0xff]
    %v4462 = vld [vmem:[%s9 + $0x30] sm:$0xff]
    %v4463 = vld [vmem:[%s9 + $0x38] sm:$0xff]
    %v4464 = vld [vmem:[%s9 + $0x40] sm:$0xff]
    %v4465 = vld [vmem:[%s9 + $0x48] sm:$0xff]
    %v4466 = vld [vmem:[%s9 + $0x50] sm:$0xff]
    %v4467 = vld [vmem:[%s9 + $0x58] sm:$0xff]
    %v4468 = vld [vmem:[%s9 + $0x60] sm:$0xff]
    %v4469 = vld [vmem:[%s9 + $0x68] sm:$0xff]
    %v4470 = vld [vmem:[%s9 + $0x70] sm:$0xff]
    %v4471 = vld [vmem:[%s9 + $0x78] sm:$0xff]
    %v4472 = vld [vmem:[%s10] sm:$0x1]
    %v4474 = vperm.slane %v4472, 0
    %4476 = vmatpush.msra.mxu0 %v4471
    %4477 = vmatpush.msra.mxu0 %v4470
    %4478 = vmatpush.msra.mxu0 %v4469
    %4479 = vmatpush.msra.mxu0 %v4468
    %4480 = vmatpush.msra.mxu0 %v4467
    %4481 = vmatpush.msra.mxu0 %v4466
    %4482 = vmatpush.msra.mxu0 %v4465
    %4483 = vmatpush.msra.mxu0 %v4464
    %4484 = vmatpush.msra.mxu0 %v4463
    %4485 = vmatpush.msra.mxu0 %v4462
    %4486 = vmatpush.msra.mxu0 %v4461
    %4487 = vmatpush.msra.mxu0 %v4460
    %4488 = vmatpush.msra.mxu0 %v4459
    %4489 = vmatpush.msra.mxu0 %v4458
    %4490 = vmatpush.msra.mxu0 %v4457
    %4491 = vmatpush.msra.mxu0 %v4456
    %4492 = vmatmul.f32.gmra.mxu0 %v4392
    %v4493 = vpop.f32.mrf.mxu0
    %v4494 = vadd.f32 %v4474, %v4493
    %4495 = vmatmul.f32.gmra.mxu0 %v4393
    %v4496 = vpop.f32.mrf.mxu0
    %v4497 = vadd.f32 %v4474, %v4496
    %4498 = vmatmul.f32.gmra.mxu0 %v4394
    %v4499 = vpop.f32.mrf.mxu0
    %v4500 = vadd.f32 %v4474, %v4499
    %4501 = vmatmul.f32.gmra.mxu0 %v4395
    %v4502 = vpop.f32.mrf.mxu0
    %v4503 = vadd.f32 %v4474, %v4502
    %4504 = vmatmul.f32.gmra.mxu0 %v4396
    %v4505 = vpop.f32.mrf.mxu0
    %v4506 = vadd.f32 %v4474, %v4505
    %4507 = vmatmul.f32.gmra.mxu0 %v4397
    %v4508 = vpop.f32.mrf.mxu0
    %v4509 = vadd.f32 %v4474, %v4508
    %4510 = vmatmul.f32.gmra.mxu0 %v4398
    %v4511 = vpop.f32.mrf.mxu0
    %v4512 = vadd.f32 %v4474, %v4511
    %4513 = vmatmul.f32.gmra.mxu0 %v4399
    %v4514 = vpop.f32.mrf.mxu0
    %v4515 = vadd.f32 %v4474, %v4514
    %4516 = vmatmul.f32.gmra.mxu0 %v4400
    %v4517 = vpop.f32.mrf.mxu0
    %v4518 = vadd.f32 %v4474, %v4517
    %4519 = vmatmul.f32.gmra.mxu0 %v4401
    %v4520 = vpop.f32.mrf.mxu0
    %v4521 = vadd.f32 %v4474, %v4520
    %4522 = vmatmul.f32.gmra.mxu0 %v4402
    %v4523 = vpop.f32.mrf.mxu0
    %v4524 = vadd.f32 %v4474, %v4523
    %4525 = vmatmul.f32.gmra.mxu0 %v4403
    %v4526 = vpop.f32.mrf.mxu0
    %v4527 = vadd.f32 %v4474, %v4526
    %4528 = vmatmul.f32.gmra.mxu0 %v4404
    %v4529 = vpop.f32.mrf.mxu0
    %v4530 = vadd.f32 %v4474, %v4529
    %4531 = vmatmul.f32.gmra.mxu0 %v4405
    %v4532 = vpop.f32.mrf.mxu0
    %v4533 = vadd.f32 %v4474, %v4532
    %4534 = vmatmul.f32.gmra.mxu0 %v4406
    %v4535 = vpop.f32.mrf.mxu0
    %v4536 = vadd.f32 %v4474, %v4535
    %4537 = vmatmul.f32.gmra.mxu0 %v4407
    %v4538 = vpop.f32.mrf.mxu0
    %v4539 = vadd.f32 %v4474, %v4538
    %4540 = vmatmul.f32.gmra.mxu0 %v4408
    %v4541 = vpop.f32.mrf.mxu0
    %v4542 = vadd.f32 %v4474, %v4541
    %4543 = vmatmul.f32.gmra.mxu0 %v4409
    %v4544 = vpop.f32.mrf.mxu0
    %v4545 = vadd.f32 %v4474, %v4544
    %4546 = vmatmul.f32.gmra.mxu0 %v4410
    %v4547 = vpop.f32.mrf.mxu0
    %v4548 = vadd.f32 %v4474, %v4547
    %4549 = vmatmul.f32.gmra.mxu0 %v4411
    %v4550 = vpop.f32.mrf.mxu0
    %v4551 = vadd.f32 %v4474, %v4550
    %4552 = vmatmul.f32.gmra.mxu0 %v4412
    %v4553 = vpop.f32.mrf.mxu0
    %v4554 = vadd.f32 %v4474, %v4553
    %4555 = vmatmul.f32.gmra.mxu0 %v4413
    %v4556 = vpop.f32.mrf.mxu0
    %v4557 = vadd.f32 %v4474, %v4556
    %4558 = vmatmul.f32.gmra.mxu0 %v4414
    %v4559 = vpop.f32.mrf.mxu0
    %v4560 = vadd.f32 %v4474, %v4559
    %4561 = vmatmul.f32.gmra.mxu0 %v4415
    %v4562 = vpop.f32.mrf.mxu0
    %v4563 = vadd.f32 %v4474, %v4562
    %4564 = vmatmul.f32.gmra.mxu0 %v4416
    %v4565 = vpop.f32.mrf.mxu0
    %v4566 = vadd.f32 %v4474, %v4565
    %4567 = vmatmul.f32.gmra.mxu0 %v4417
    %v4568 = vpop.f32.mrf.mxu0
    %v4569 = vadd.f32 %v4474, %v4568
    %4570 = vmatmul.f32.gmra.mxu0 %v4418
    %v4571 = vpop.f32.mrf.mxu0
    %v4572 = vadd.f32 %v4474, %v4571
    %4573 = vmatmul.f32.gmra.mxu0 %v4419
    %v4574 = vpop.f32.mrf.mxu0
    %v4575 = vadd.f32 %v4474, %v4574
    %4576 = vmatmul.f32.gmra.mxu0 %v4420
    %v4577 = vpop.f32.mrf.mxu0
    %v4578 = vadd.f32 %v4474, %v4577
    %4579 = vmatmul.f32.gmra.mxu0 %v4421
    %v4580 = vpop.f32.mrf.mxu0
    %v4581 = vadd.f32 %v4474, %v4580
    %4582 = vmatmul.f32.gmra.mxu0 %v4422
    %v4583 = vpop.f32.mrf.mxu0
    %v4584 = vadd.f32 %v4474, %v4583
    %4585 = vmatmul.f32.gmra.mxu0 %v4423
    %v4586 = vpop.f32.mrf.mxu0
    %v4587 = vadd.f32 %v4474, %v4586
    %4588 = vmatmul.f32.gmra.mxu0 %v4424
    %v4589 = vpop.f32.mrf.mxu0
    %v4590 = vadd.f32 %v4474, %v4589
    %4591 = vmatmul.f32.gmra.mxu0 %v4425
    %v4592 = vpop.f32.mrf.mxu0
    %v4593 = vadd.f32 %v4474, %v4592
    %4594 = vmatmul.f32.gmra.mxu0 %v4426
    %v4595 = vpop.f32.mrf.mxu0
    %v4596 = vadd.f32 %v4474, %v4595
    %4597 = vmatmul.f32.gmra.mxu0 %v4427
    %v4598 = vpop.f32.mrf.mxu0
    %v4599 = vadd.f32 %v4474, %v4598
    %4600 = vmatmul.f32.gmra.mxu0 %v4428
    %v4601 = vpop.f32.mrf.mxu0
    %v4602 = vadd.f32 %v4474, %v4601
    %4603 = vmatmul.f32.gmra.mxu0 %v4429
    %v4604 = vpop.f32.mrf.mxu0
    %v4605 = vadd.f32 %v4474, %v4604
    %4606 = vmatmul.f32.gmra.mxu0 %v4430
    %v4607 = vpop.f32.mrf.mxu0
    %v4608 = vadd.f32 %v4474, %v4607
    %4609 = vmatmul.f32.gmra.mxu0 %v4431
    %v4610 = vpop.f32.mrf.mxu0
    %v4611 = vadd.f32 %v4474, %v4610
    %4612 = vmatmul.f32.gmra.mxu0 %v4432
    %v4613 = vpop.f32.mrf.mxu0
    %v4614 = vadd.f32 %v4474, %v4613
    %4615 = vmatmul.f32.gmra.mxu0 %v4433
    %v4616 = vpop.f32.mrf.mxu0
    %v4617 = vadd.f32 %v4474, %v4616
    %4618 = vmatmul.f32.gmra.mxu0 %v4434
    %v4619 = vpop.f32.mrf.mxu0
    %v4620 = vadd.f32 %v4474, %v4619
    %4621 = vmatmul.f32.gmra.mxu0 %v4435
    %v4622 = vpop.f32.mrf.mxu0
    %v4623 = vadd.f32 %v4474, %v4622
    %4624 = vmatmul.f32.gmra.mxu0 %v4436
    %v4625 = vpop.f32.mrf.mxu0
    %v4626 = vadd.f32 %v4474, %v4625
    %4627 = vmatmul.f32.gmra.mxu0 %v4437
    %v4628 = vpop.f32.mrf.mxu0
    %v4629 = vadd.f32 %v4474, %v4628
    %4630 = vmatmul.f32.gmra.mxu0 %v4438
    %v4631 = vpop.f32.mrf.mxu0
    %v4632 = vadd.f32 %v4474, %v4631
    %4633 = vmatmul.f32.gmra.mxu0 %v4439
    %v4634 = vpop.f32.mrf.mxu0
    %v4635 = vadd.f32 %v4474, %v4634
    %4636 = vmatmul.f32.gmra.mxu0 %v4440
    %v4637 = vpop.f32.mrf.mxu0
    %v4638 = vadd.f32 %v4474, %v4637
    %4639 = vmatmul.f32.gmra.mxu0 %v4441
    %v4640 = vpop.f32.mrf.mxu0
    %v4641 = vadd.f32 %v4474, %v4640
    %4642 = vmatmul.f32.gmra.mxu0 %v4442
    %v4643 = vpop.f32.mrf.mxu0
    %v4644 = vadd.f32 %v4474, %v4643
    %4645 = vmatmul.f32.gmra.mxu0 %v4443
    %v4646 = vpop.f32.mrf.mxu0
    %v4647 = vadd.f32 %v4474, %v4646
    %4648 = vmatmul.f32.gmra.mxu0 %v4444
    %v4649 = vpop.f32.mrf.mxu0
    %v4650 = vadd.f32 %v4474, %v4649
    %4651 = vmatmul.f32.gmra.mxu0 %v4445
    %v4652 = vpop.f32.mrf.mxu0
    %v4653 = vadd.f32 %v4474, %v4652
    %4654 = vmatmul.f32.gmra.mxu0 %v4446
    %v4655 = vpop.f32.mrf.mxu0
    %v4656 = vadd.f32 %v4474, %v4655
    %4657 = vmatmul.f32.gmra.mxu0 %v4447
    %v4658 = vpop.f32.mrf.mxu0
    %v4659 = vadd.f32 %v4474, %v4658
    %4660 = vmatmul.f32.gmra.mxu0 %v4448
    %v4661 = vpop.f32.mrf.mxu0
    %v4662 = vadd.f32 %v4474, %v4661
    %4663 = vmatmul.f32.gmra.mxu0 %v4449
    %v4664 = vpop.f32.mrf.mxu0
    %v4665 = vadd.f32 %v4474, %v4664
    %4666 = vmatmul.f32.gmra.mxu0 %v4450
    %v4667 = vpop.f32.mrf.mxu0
    %v4668 = vadd.f32 %v4474, %v4667
    %4669 = vmatmul.f32.gmra.mxu0 %v4451
    %v4670 = vpop.f32.mrf.mxu0
    %v4671 = vadd.f32 %v4474, %v4670
    %4672 = vmatmul.f32.gmra.mxu0 %v4452
    %v4673 = vpop.f32.mrf.mxu0
    %v4674 = vadd.f32 %v4474, %v4673
    %4675 = vmatmul.f32.gmra.mxu0 %v4453
    %v4676 = vpop.f32.mrf.mxu0
    %v4677 = vadd.f32 %v4474, %v4676
    %4678 = vmatmul.f32.gmra.mxu0 %v4454
    %v4679 = vpop.f32.mrf.mxu0
    %v4680 = vadd.f32 %v4474, %v4679
    %4681 = vmatmul.f32.gmra.mxu0 %v4455
    %v4682 = vpop.f32.mrf.mxu0
    %v4683 = vadd.f32 %v4474, %v4682
    %4684 = vdwg.mxu0
    %v4685 = vld [vmem:[%s11] sm:$0x1]
    %v4686 = vld [vmem:[%s12] sm:$0x1]
    %v4687 = vadd.f32 %v4494, %v4497
    %v4688 = vadd.f32 %v4687, %v4500
    %v4689 = vadd.f32 %v4688, %v4503
    %v4690 = vadd.f32 %v4689, %v4506
    %v4691 = vadd.f32 %v4690, %v4509
    %v4692 = vadd.f32 %v4691, %v4512
    %v4693 = vadd.f32 %v4692, %v4515
    %v4694 = vadd.f32 %v4693, %v4518
    %v4695 = vadd.f32 %v4694, %v4521
    %v4696 = vadd.f32 %v4695, %v4524
    %v4697 = vadd.f32 %v4696, %v4527
    %v4698 = vadd.f32 %v4697, %v4530
    %v4699 = vadd.f32 %v4698, %v4533
    %v4700 = vadd.f32 %v4699, %v4536
    %v4701 = vadd.f32 %v4700, %v4539
    %v4702 = vadd.f32 %v4701, %v4542
    %v4703 = vadd.f32 %v4702, %v4545
    %v4704 = vadd.f32 %v4703, %v4548
    %v4705 = vadd.f32 %v4704, %v4551
    %v4706 = vadd.f32 %v4705, %v4554
    %v4707 = vadd.f32 %v4706, %v4557
    %v4708 = vadd.f32 %v4707, %v4560
    %v4709 = vadd.f32 %v4708, %v4563
    %v4710 = vadd.f32 %v4709, %v4566
    %v4711 = vadd.f32 %v4710, %v4569
    %v4712 = vadd.f32 %v4711, %v4572
    %v4713 = vadd.f32 %v4712, %v4575
    %v4714 = vadd.f32 %v4713, %v4578
    %v4715 = vadd.f32 %v4714, %v4581
    %v4716 = vadd.f32 %v4715, %v4584
    %v4717 = vadd.f32 %v4716, %v4587
    %v4718 = vadd.f32 %v4717, %v4590
    %v4719 = vadd.f32 %v4718, %v4593
    %v4720 = vadd.f32 %v4719, %v4596
    %v4721 = vadd.f32 %v4720, %v4599
    %v4722 = vadd.f32 %v4721, %v4602
    %v4723 = vadd.f32 %v4722, %v4605
    %v4724 = vadd.f32 %v4723, %v4608
    %v4725 = vadd.f32 %v4724, %v4611
    %v4726 = vadd.f32 %v4725, %v4614
    %v4727 = vadd.f32 %v4726, %v4617
    %v4728 = vadd.f32 %v4727, %v4620
    %v4729 = vadd.f32 %v4728, %v4623
    %v4730 = vadd.f32 %v4729, %v4626
    %v4731 = vadd.f32 %v4730, %v4629
    %v4732 = vadd.f32 %v4731, %v4632
    %v4733 = vadd.f32 %v4732, %v4635
    %v4734 = vadd.f32 %v4733, %v4638
    %v4735 = vadd.f32 %v4734, %v4641
    %v4736 = vadd.f32 %v4735, %v4644
    %v4737 = vadd.f32 %v4736, %v4647
    %v4738 = vadd.f32 %v4737, %v4650
    %v4739 = vadd.f32 %v4738, %v4653
    %v4740 = vadd.f32 %v4739, %v4656
    %v4741 = vadd.f32 %v4740, %v4659
    %v4742 = vadd.f32 %v4741, %v4662
    %v4743 = vadd.f32 %v4742, %v4665
    %v4744 = vadd.f32 %v4743, %v4668
    %v4745 = vadd.f32 %v4744, %v4671
    %v4746 = vadd.f32 %v4745, %v4674
    %v4747 = vadd.f32 %v4746, %v4677
    %v4748 = vadd.f32 %v4747, %v4680
    %v4749 = vadd.f32 %v4748, %v4683
    %v4750 = vrot.slane %v4749, 4
    %v4751 = vadd.f32 %v4749, %v4750
    %v4752 = vrot.slane %v4751, 2
    %v4753 = vadd.f32 %v4751, %v4752
    %v4754 = vrot.slane %v4753, 1
    %v4755 = vadd.f32 %v4753, %v4754
    %v4756 = vmul.f32 %v4755, 0.001953125
    %v4757 = vsub.f32 %v4494, %v4756
    %v4758 = vsub.f32 %v4497, %v4756
    %v4759 = vsub.f32 %v4500, %v4756
    %v4760 = vsub.f32 %v4503, %v4756
    %v4761 = vsub.f32 %v4506, %v4756
    %v4762 = vsub.f32 %v4509, %v4756
    %v4763 = vsub.f32 %v4512, %v4756
    %v4764 = vsub.f32 %v4515, %v4756
    %v4765 = vsub.f32 %v4518, %v4756
    %v4766 = vsub.f32 %v4521, %v4756
    %v4767 = vsub.f32 %v4524, %v4756
    %v4768 = vsub.f32 %v4527, %v4756
    %v4769 = vsub.f32 %v4530, %v4756
    %v4770 = vsub.f32 %v4533, %v4756
    %v4771 = vsub.f32 %v4536, %v4756
    %v4772 = vsub.f32 %v4539, %v4756
    %v4773 = vsub.f32 %v4542, %v4756
    %v4774 = vsub.f32 %v4545, %v4756
    %v4775 = vsub.f32 %v4548, %v4756
    %v4776 = vsub.f32 %v4551, %v4756
    %v4777 = vsub.f32 %v4554, %v4756
    %v4778 = vsub.f32 %v4557, %v4756
    %v4779 = vsub.f32 %v4560, %v4756
    %v4780 = vsub.f32 %v4563, %v4756
    %v4781 = vsub.f32 %v4566, %v4756
    %v4782 = vsub.f32 %v4569, %v4756
    %v4783 = vsub.f32 %v4572, %v4756
    %v4784 = vsub.f32 %v4575, %v4756
    %v4785 = vsub.f32 %v4578, %v4756
    %v4786 = vsub.f32 %v4581, %v4756
    %v4787 = vsub.f32 %v4584, %v4756
    %v4788 = vsub.f32 %v4587, %v4756
    %v4789 = vsub.f32 %v4590, %v4756
    %v4790 = vsub.f32 %v4593, %v4756
    %v4791 = vsub.f32 %v4596, %v4756
    %v4792 = vsub.f32 %v4599, %v4756
    %v4793 = vsub.f32 %v4602, %v4756
    %v4794 = vsub.f32 %v4605, %v4756
    %v4795 = vsub.f32 %v4608, %v4756
    %v4796 = vsub.f32 %v4611, %v4756
    %v4797 = vsub.f32 %v4614, %v4756
    %v4798 = vsub.f32 %v4617, %v4756
    %v4799 = vsub.f32 %v4620, %v4756
    %v4800 = vsub.f32 %v4623, %v4756
    %v4801 = vsub.f32 %v4626, %v4756
    %v4802 = vsub.f32 %v4629, %v4756
    %v4803 = vsub.f32 %v4632, %v4756
    %v4804 = vsub.f32 %v4635, %v4756
    %v4805 = vsub.f32 %v4638, %v4756
    %v4806 = vsub.f32 %v4641, %v4756
    %v4807 = vsub.f32 %v4644, %v4756
    %v4808 = vsub.f32 %v4647, %v4756
    %v4809 = vsub.f32 %v4650, %v4756
    %v4810 = vsub.f32 %v4653, %v4756
    %v4811 = vsub.f32 %v4656, %v4756
    %v4812 = vsub.f32 %v4659, %v4756
    %v4813 = vsub.f32 %v4662, %v4756
    %v4814 = vsub.f32 %v4665, %v4756
    %v4815 = vsub.f32 %v4668, %v4756
    %v4816 = vsub.f32 %v4671, %v4756
    %v4817 = vsub.f32 %v4674, %v4756
    %v4818 = vsub.f32 %v4677, %v4756
    %v4819 = vsub.f32 %v4680, %v4756
    %v4820 = vsub.f32 %v4683, %v4756
    %v4821 = vmul.f32 %v4757, %v4757
    %v4822 = vmul.f32 %v4758, %v4758
    %v4823 = vmul.f32 %v4759, %v4759
    %v4824 = vmul.f32 %v4760, %v4760
    %v4825 = vmul.f32 %v4761, %v4761
    %v4826 = vmul.f32 %v4762, %v4762
    %v4827 = vmul.f32 %v4763, %v4763
    %v4828 = vmul.f32 %v4764, %v4764
    %v4829 = vmul.f32 %v4765, %v4765
    %v4830 = vmul.f32 %v4766, %v4766
    %v4831 = vmul.f32 %v4767, %v4767
    %v4832 = vmul.f32 %v4768, %v4768
    %v4833 = vmul.f32 %v4769, %v4769
    %v4834 = vmul.f32 %v4770, %v4770
    %v4835 = vmul.f32 %v4771, %v4771
    %v4836 = vmul.f32 %v4772, %v4772
    %v4837 = vmul.f32 %v4773, %v4773
    %v4838 = vmul.f32 %v4774, %v4774
    %v4839 = vmul.f32 %v4775, %v4775
    %v4840 = vmul.f32 %v4776, %v4776
    %v4841 = vmul.f32 %v4777, %v4777
    %v4842 = vmul.f32 %v4778, %v4778
    %v4843 = vmul.f32 %v4779, %v4779
    %v4844 = vmul.f32 %v4780, %v4780
    %v4845 = vmul.f32 %v4781, %v4781
    %v4846 = vmul.f32 %v4782, %v4782
    %v4847 = vmul.f32 %v4783, %v4783
    %v4848 = vmul.f32 %v4784, %v4784
    %v4849 = vmul.f32 %v4785, %v4785
    %v4850 = vmul.f32 %v4786, %v4786
    %v4851 = vmul.f32 %v4787, %v4787
    %v4852 = vmul.f32 %v4788, %v4788
    %v4853 = vmul.f32 %v4789, %v4789
    %v4854 = vmul.f32 %v4790, %v4790
    %v4855 = vmul.f32 %v4791, %v4791
    %v4856 = vmul.f32 %v4792, %v4792
    %v4857 = vmul.f32 %v4793, %v4793
    %v4858 = vmul.f32 %v4794, %v4794
    %v4859 = vmul.f32 %v4795, %v4795
    %v4860 = vmul.f32 %v4796, %v4796
    %v4861 = vmul.f32 %v4797, %v4797
    %v4862 = vmul.f32 %v4798, %v4798
    %v4863 = vmul.f32 %v4799, %v4799
    %v4864 = vmul.f32 %v4800, %v4800
    %v4865 = vmul.f32 %v4801, %v4801
    %v4866 = vmul.f32 %v4802, %v4802
    %v4867 = vmul.f32 %v4803, %v4803
    %v4868 = vmul.f32 %v4804, %v4804
    %v4869 = vmul.f32 %v4805, %v4805
    %v4870 = vmul.f32 %v4806, %v4806
    %v4871 = vmul.f32 %v4807, %v4807
    %v4872 = vmul.f32 %v4808, %v4808
    %v4873 = vmul.f32 %v4809, %v4809
    %v4874 = vmul.f32 %v4810, %v4810
    %v4875 = vmul.f32 %v4811, %v4811
    %v4876 = vmul.f32 %v4812, %v4812
    %v4877 = vmul.f32 %v4813, %v4813
    %v4878 = vmul.f32 %v4814, %v4814
    %v4879 = vmul.f32 %v4815, %v4815
    %v4880 = vmul.f32 %v4816, %v4816
    %v4881 = vmul.f32 %v4817, %v4817
    %v4882 = vmul.f32 %v4818, %v4818
    %v4883 = vmul.f32 %v4819, %v4819
    %v4884 = vmul.f32 %v4820, %v4820
    %v4885 = vadd.f32 %v4821, %v4822
    %v4886 = vadd.f32 %v4885, %v4823
    %v4887 = vadd.f32 %v4886, %v4824
    %v4888 = vadd.f32 %v4887, %v4825
    %v4889 = vadd.f32 %v4888, %v4826
    %v4890 = vadd.f32 %v4889, %v4827
    %v4891 = vadd.f32 %v4890, %v4828
    %v4892 = vadd.f32 %v4891, %v4829
    %v4893 = vadd.f32 %v4892, %v4830
    %v4894 = vadd.f32 %v4893, %v4831
    %v4895 = vadd.f32 %v4894, %v4832
    %v4896 = vadd.f32 %v4895, %v4833
    %v4897 = vadd.f32 %v4896, %v4834
    %v4898 = vadd.f32 %v4897, %v4835
    %v4899 = vadd.f32 %v4898, %v4836
    %v4900 = vadd.f32 %v4899, %v4837
    %v4901 = vadd.f32 %v4900, %v4838
    %v4902 = vadd.f32 %v4901, %v4839
    %v4903 = vadd.f32 %v4902, %v4840
    %v4904 = vadd.f32 %v4903, %v4841
    %v4905 = vadd.f32 %v4904, %v4842
    %v4906 = vadd.f32 %v4905, %v4843
    %v4907 = vadd.f32 %v4906, %v4844
    %v4908 = vadd.f32 %v4907, %v4845
    %v4909 = vadd.f32 %v4908, %v4846
    %v4910 = vadd.f32 %v4909, %v4847
    %v4911 = vadd.f32 %v4910, %v4848
    %v4912 = vadd.f32 %v4911, %v4849
    %v4913 = vadd.f32 %v4912, %v4850
    %v4914 = vadd.f32 %v4913, %v4851
    %v4915 = vadd.f32 %v4914, %v4852
    %v4916 = vadd.f32 %v4915, %v4853
    %v4917 = vadd.f32 %v4916, %v4854
    %v4918 = vadd.f32 %v4917, %v4855
    %v4919 = vadd.f32 %v4918, %v4856
    %v4920 = vadd.f32 %v4919, %v4857
    %v4921 = vadd.f32 %v4920, %v4858
    %v4922 = vadd.f32 %v4921, %v4859
    %v4923 = vadd.f32 %v4922, %v4860
    %v4924 = vadd.f32 %v4923, %v4861
    %v4925 = vadd.f32 %v4924, %v4862
    %v4926 = vadd.f32 %v4925, %v4863
    %v4927 = vadd.f32 %v4926, %v4864
    %v4928 = vadd.f32 %v4927, %v4865
    %v4929 = vadd.f32 %v4928, %v4866
    %v4930 = vadd.f32 %v4929, %v4867
    %v4931 = vadd.f32 %v4930, %v4868
    %v4932 = vadd.f32 %v4931, %v4869
    %v4933 = vadd.f32 %v4932, %v4870
    %v4934 = vadd.f32 %v4933, %v4871
    %v4935 = vadd.f32 %v4934, %v4872
    %v4936 = vadd.f32 %v4935, %v4873
    %v4937 = vadd.f32 %v4936, %v4874
    %v4938 = vadd.f32 %v4937, %v4875
    %v4939 = vadd.f32 %v4938, %v4876
    %v4940 = vadd.f32 %v4939, %v4877
    %v4941 = vadd.f32 %v4940, %v4878
    %v4942 = vadd.f32 %v4941, %v4879
    %v4943 = vadd.f32 %v4942, %v4880
    %v4944 = vadd.f32 %v4943, %v4881
    %v4945 = vadd.f32 %v4944, %v4882
    %v4946 = vadd.f32 %v4945, %v4883
    %v4947 = vadd.f32 %v4946, %v4884
    %v4948 = vrot.slane %v4947, 4
    %v4949 = vadd.f32 %v4947, %v4948
    %v4950 = vrot.slane %v4949, 2
    %v4951 = vadd.f32 %v4949, %v4950
    %v4952 = vrot.slane %v4951, 1
    %v4953 = vadd.f32 %v4951, %v4952
    %v4954 = vmul.f32 %v4953, 0.001953125
    %v4955 = vadd.f32 %v4954, 1e-05
    %v4956 = vrsqrt.pop %v4955
    %v4957 = vmul.f32 %v4956, %v4955
    %v4958 = vmul.f32 %v4957, %v4956
    %v4959 = vmul.f32 0.5, %v4958
    %v4960 = vsub.f32 1.5, %v4959
    %v4961 = vmul.f32 %v4956, %v4960
    %vm4962 = vweird.f32 %v4955
    %vm4963 = vweird.f32 %v4956
    %vm4964 = vmor %vm4962, %vm4963
    %v4965 = vsel %vm4964, %v4956, %v4961
    %v4966 = vmul.f32 %v4965, %v4685
    %v4967 = vperm.slane %v4966, 0
    %v4968 = vmul.f32 %v4757, %v4967
    %v4969 = vmul.f32 %v4758, %v4967
    %v4970 = vmul.f32 %v4759, %v4967
    %v4971 = vmul.f32 %v4760, %v4967
    %v4972 = vmul.f32 %v4761, %v4967
    %v4973 = vmul.f32 %v4762, %v4967
    %v4974 = vmul.f32 %v4763, %v4967
    %v4975 = vmul.f32 %v4764, %v4967
    %v4976 = vmul.f32 %v4765, %v4967
    %v4977 = vmul.f32 %v4766, %v4967
    %v4978 = vmul.f32 %v4767, %v4967
    %v4979 = vmul.f32 %v4768, %v4967
    %v4980 = vmul.f32 %v4769, %v4967
    %v4981 = vmul.f32 %v4770, %v4967
    %v4982 = vmul.f32 %v4771, %v4967
    %v4983 = vmul.f32 %v4772, %v4967
    %v4984 = vmul.f32 %v4773, %v4967
    %v4985 = vmul.f32 %v4774, %v4967
    %v4986 = vmul.f32 %v4775, %v4967
    %v4987 = vmul.f32 %v4776, %v4967
    %v4988 = vmul.f32 %v4777, %v4967
    %v4989 = vmul.f32 %v4778, %v4967
    %v4990 = vmul.f32 %v4779, %v4967
    %v4991 = vmul.f32 %v4780, %v4967
    %v4992 = vmul.f32 %v4781, %v4967
    %v4993 = vmul.f32 %v4782, %v4967
    %v4994 = vmul.f32 %v4783, %v4967
    %v4995 = vmul.f32 %v4784, %v4967
    %v4996 = vmul.f32 %v4785, %v4967
    %v4997 = vmul.f32 %v4786, %v4967
    %v4998 = vmul.f32 %v4787, %v4967
    %v4999 = vmul.f32 %v4788, %v4967
    %v5000 = vmul.f32 %v4789, %v4967
    %v5001 = vmul.f32 %v4790, %v4967
    %v5002 = vmul.f32 %v4791, %v4967
    %v5003 = vmul.f32 %v4792, %v4967
    %v5004 = vmul.f32 %v4793, %v4967
    %v5005 = vmul.f32 %v4794, %v4967
    %v5006 = vmul.f32 %v4795, %v4967
    %v5007 = vmul.f32 %v4796, %v4967
    %v5008 = vmul.f32 %v4797, %v4967
    %v5009 = vmul.f32 %v4798, %v4967
    %v5010 = vmul.f32 %v4799, %v4967
    %v5011 = vmul.f32 %v4800, %v4967
    %v5012 = vmul.f32 %v4801, %v4967
    %v5013 = vmul.f32 %v4802, %v4967
    %v5014 = vmul.f32 %v4803, %v4967
    %v5015 = vmul.f32 %v4804, %v4967
    %v5016 = vmul.f32 %v4805, %v4967
    %v5017 = vmul.f32 %v4806, %v4967
    %v5018 = vmul.f32 %v4807, %v4967
    %v5019 = vmul.f32 %v4808, %v4967
    %v5020 = vmul.f32 %v4809, %v4967
    %v5021 = vmul.f32 %v4810, %v4967
    %v5022 = vmul.f32 %v4811, %v4967
    %v5023 = vmul.f32 %v4812, %v4967
    %v5024 = vmul.f32 %v4813, %v4967
    %v5025 = vmul.f32 %v4814, %v4967
    %v5026 = vmul.f32 %v4815, %v4967
    %v5027 = vmul.f32 %v4816, %v4967
    %v5028 = vmul.f32 %v4817, %v4967
    %v5029 = vmul.f32 %v4818, %v4967
    %v5030 = vmul.f32 %v4819, %v4967
    %v5031 = vmul.f32 %v4820, %v4967
    %v5033 = vperm.slane %v4686, 0
    %v5035 = vadd.f32 %v4968, %v5033
    %v5036 = vadd.f32 %v4969, %v5033
    %v5037 = vadd.f32 %v4970, %v5033
    %v5038 = vadd.f32 %v4971, %v5033
    %v5039 = vadd.f32 %v4972, %v5033
    %v5040 = vadd.f32 %v4973, %v5033
    %v5041 = vadd.f32 %v4974, %v5033
    %v5042 = vadd.f32 %v4975, %v5033
    %v5043 = vadd.f32 %v4976, %v5033
    %v5044 = vadd.f32 %v4977, %v5033
    %v5045 = vadd.f32 %v4978, %v5033
    %v5046 = vadd.f32 %v4979, %v5033
    %v5047 = vadd.f32 %v4980, %v5033
    %v5048 = vadd.f32 %v4981, %v5033
    %v5049 = vadd.f32 %v4982, %v5033
    %v5050 = vadd.f32 %v4983, %v5033
    %v5051 = vadd.f32 %v4984, %v5033
    %v5052 = vadd.f32 %v4985, %v5033
    %v5053 = vadd.f32 %v4986, %v5033
    %v5054 = vadd.f32 %v4987, %v5033
    %v5055 = vadd.f32 %v4988, %v5033
    %v5056 = vadd.f32 %v4989, %v5033
    %v5057 = vadd.f32 %v4990, %v5033
    %v5058 = vadd.f32 %v4991, %v5033
    %v5059 = vadd.f32 %v4992, %v5033
    %v5060 = vadd.f32 %v4993, %v5033
    %v5061 = vadd.f32 %v4994, %v5033
    %v5062 = vadd.f32 %v4995, %v5033
    %v5063 = vadd.f32 %v4996, %v5033
    %v5064 = vadd.f32 %v4997, %v5033
    %v5065 = vadd.f32 %v4998, %v5033
    %v5066 = vadd.f32 %v4999, %v5033
    %v5067 = vadd.f32 %v5000, %v5033
    %v5068 = vadd.f32 %v5001, %v5033
    %v5069 = vadd.f32 %v5002, %v5033
    %v5070 = vadd.f32 %v5003, %v5033
    %v5071 = vadd.f32 %v5004, %v5033
    %v5072 = vadd.f32 %v5005, %v5033
    %v5073 = vadd.f32 %v5006, %v5033
    %v5074 = vadd.f32 %v5007, %v5033
    %v5075 = vadd.f32 %v5008, %v5033
    %v5076 = vadd.f32 %v5009, %v5033
    %v5077 = vadd.f32 %v5010, %v5033
    %v5078 = vadd.f32 %v5011, %v5033
    %v5079 = vadd.f32 %v5012, %v5033
    %v5080 = vadd.f32 %v5013, %v5033
    %v5081 = vadd.f32 %v5014, %v5033
    %v5082 = vadd.f32 %v5015, %v5033
    %v5083 = vadd.f32 %v5016, %v5033
    %v5084 = vadd.f32 %v5017, %v5033
    %v5085 = vadd.f32 %v5018, %v5033
    %v5086 = vadd.f32 %v5019, %v5033
    %v5087 = vadd.f32 %v5020, %v5033
    %v5088 = vadd.f32 %v5021, %v5033
    %v5089 = vadd.f32 %v5022, %v5033
    %v5090 = vadd.f32 %v5023, %v5033
    %v5091 = vadd.f32 %v5024, %v5033
    %v5092 = vadd.f32 %v5025, %v5033
    %v5093 = vadd.f32 %v5026, %v5033
    %v5094 = vadd.f32 %v5027, %v5033
    %v5095 = vadd.f32 %v5028, %v5033
    %v5096 = vadd.f32 %v5029, %v5033
    %v5097 = vadd.f32 %v5030, %v5033
    %v5098 = vadd.f32 %v5031, %v5033
    %5099 = vst [vmem:[#allocation4] sm:$0xff] %v5035
    %5100 = vst [vmem:[#allocation4 + $0x8] sm:$0xff] %v5036
    %5101 = vst [vmem:[#allocation4 + $0x10] sm:$0xff] %v5037
    %5102 = vst [vmem:[#allocation4 + $0x18] sm:$0xff] %v5038
    %5103 = vst [vmem:[#allocation4 + $0x20] sm:$0xff] %v5039
    %5104 = vst [vmem:[#allocation4 + $0x28] sm:$0xff] %v5040
    %5105 = vst [vmem:[#allocation4 + $0x30] sm:$0xff] %v5041
    %5106 = vst [vmem:[#allocation4 + $0x38] sm:$0xff] %v5042
    %5107 = vst [vmem:[#allocation4 + $0x40] sm:$0xff] %v5043
    %5108 = vst [vmem:[#allocation4 + $0x48] sm:$0xff] %v5044
    %5109 = vst [vmem:[#allocation4 + $0x50] sm:$0xff] %v5045
    %5110 = vst [vmem:[#allocation4 + $0x58] sm:$0xff] %v5046
    %5111 = vst [vmem:[#allocation4 + $0x60] sm:$0xff] %v5047
    %5112 = vst [vmem:[#allocation4 + $0x68] sm:$0xff] %v5048
    %5113 = vst [vmem:[#allocation4 + $0x70] sm:$0xff] %v5049
    %5114 = vst [vmem:[#allocation4 + $0x78] sm:$0xff] %v5050
    %5115 = vst [vmem:[#allocation4 + $0x80] sm:$0xff] %v5051
    %5116 = vst [vmem:[#allocation4 + $0x88] sm:$0xff] %v5052
    %5117 = vst [vmem:[#allocation4 + $0x90] sm:$0xff] %v5053
    %5118 = vst [vmem:[#allocation4 + $0x98] sm:$0xff] %v5054
    %5119 = vst [vmem:[#allocation4 + $0xa0] sm:$0xff] %v5055
    %5120 = vst [vmem:[#allocation4 + $0xa8] sm:$0xff] %v5056
    %5121 = vst [vmem:[#allocation4 + $0xb0] sm:$0xff] %v5057
    %5122 = vst [vmem:[#allocation4 + $0xb8] sm:$0xff] %v5058
    %5123 = vst [vmem:[#allocation4 + $0xc0] sm:$0xff] %v5059
    %5124 = vst [vmem:[#allocation4 + $0xc8] sm:$0xff] %v5060
    %5125 = vst [vmem:[#allocation4 + $0xd0] sm:$0xff] %v5061
    %5126 = vst [vmem:[#allocation4 + $0xd8] sm:$0xff] %v5062
    %5127 = vst [vmem:[#allocation4 + $0xe0] sm:$0xff] %v5063
    %5128 = vst [vmem:[#allocation4 + $0xe8] sm:$0xff] %v5064
    %5129 = vst [vmem:[#allocation4 + $0xf0] sm:$0xff] %v5065
    %5130 = vst [vmem:[#allocation4 + $0xf8] sm:$0xff] %v5066
    %5131 = vst [vmem:[#allocation4 + $0x100] sm:$0xff] %v5067
    %5132 = vst [vmem:[#allocation4 + $0x108] sm:$0xff] %v5068
    %5133 = vst [vmem:[#allocation4 + $0x110] sm:$0xff] %v5069
    %5134 = vst [vmem:[#allocation4 + $0x118] sm:$0xff] %v5070
    %5135 = vst [vmem:[#allocation4 + $0x120] sm:$0xff] %v5071
    %5136 = vst [vmem:[#allocation4 + $0x128] sm:$0xff] %v5072
    %5137 = vst [vmem:[#allocation4 + $0x130] sm:$0xff] %v5073
    %5138 = vst [vmem:[#allocation4 + $0x138] sm:$0xff] %v5074
    %5139 = vst [vmem:[#allocation4 + $0x140] sm:$0xff] %v5075
    %5140 = vst [vmem:[#allocation4 + $0x148] sm:$0xff] %v5076
    %5141 = vst [vmem:[#allocation4 + $0x150] sm:$0xff] %v5077
    %5142 = vst [vmem:[#allocation4 + $0x158] sm:$0xff] %v5078
    %5143 = vst [vmem:[#allocation4 + $0x160] sm:$0xff] %v5079
    %5144 = vst [vmem:[#allocation4 + $0x168] sm:$0xff] %v5080
    %5145 = vst [vmem:[#allocation4 + $0x170] sm:$0xff] %v5081
    %5146 = vst [vmem:[#allocation4 + $0x178] sm:$0xff] %v5082
    %5147 = vst [vmem:[#allocation4 + $0x180] sm:$0xff] %v5083
    %5148 = vst [vmem:[#allocation4 + $0x188] sm:$0xff] %v5084
    %5149 = vst [vmem:[#allocation4 + $0x190] sm:$0xff] %v5085
    %5150 = vst [vmem:[#allocation4 + $0x198] sm:$0xff] %v5086
    %5151 = vst [vmem:[#allocation4 + $0x1a0] sm:$0xff] %v5087
    %5152 = vst [vmem:[#allocation4 + $0x1a8] sm:$0xff] %v5088
    %5153 = vst [vmem:[#allocation4 + $0x1b0] sm:$0xff] %v5089
    %5154 = vst [vmem:[#allocation4 + $0x1b8] sm:$0xff] %v5090
    %5155 = vst [vmem:[#allocation4 + $0x1c0] sm:$0xff] %v5091
    %5156 = vst [vmem:[#allocation4 + $0x1c8] sm:$0xff] %v5092
    %5157 = vst [vmem:[#allocation4 + $0x1d0] sm:$0xff] %v5093
    %5158 = vst [vmem:[#allocation4 + $0x1d8] sm:$0xff] %v5094
    %5159 = vst [vmem:[#allocation4 + $0x1e0] sm:$0xff] %v5095
    %5160 = vst [vmem:[#allocation4 + $0x1e8] sm:$0xff] %v5096
    %5161 = vst [vmem:[#allocation4 + $0x1f0] sm:$0xff] %v5097
    %5162 = vst [vmem:[#allocation4 + $0x1f8] sm:$0xff] %v5098
    %v5163 = vld [vmem:[#allocation3] sm:$0xff]
    %v5164 = vld [vmem:[#allocation3 + $0x8] sm:$0xff]
    %v5165 = vld [vmem:[#allocation3 + $0x18] sm:$0xff]
    %v5166 = vld [vmem:[#allocation3 + $0x20] sm:$0xff]
    %v5167 = vld [vmem:[#allocation3 + $0x30] sm:$0xff]
    %v5168 = vld [vmem:[#allocation3 + $0x38] sm:$0xff]
    %v5169 = vld [vmem:[#allocation3 + $0x48] sm:$0xff]
    %v5170 = vld [vmem:[#allocation3 + $0x50] sm:$0xff]
    %v5171 = vld [vmem:[#allocation3 + $0x60] sm:$0xff]
    %v5172 = vld [vmem:[#allocation3 + $0x68] sm:$0xff]
    %v5173 = vld [vmem:[#allocation3 + $0x78] sm:$0xff]
    %v5174 = vld [vmem:[#allocation3 + $0x80] sm:$0xff]
    %v5175 = vld [vmem:[#allocation3 + $0x90] sm:$0xff]
    %v5176 = vld [vmem:[#allocation3 + $0x98] sm:$0xff]
    %v5177 = vld [vmem:[#allocation3 + $0xa8] sm:$0xff]
    %v5178 = vld [vmem:[#allocation3 + $0xb0] sm:$0xff]
    %v5179 = vld [vmem:[#allocation3 + $0xc0] sm:$0xff]
    %v5180 = vld [vmem:[#allocation3 + $0xc8] sm:$0xff]
    %v5181 = vld [vmem:[#allocation3 + $0xd8] sm:$0xff]
    %v5182 = vld [vmem:[#allocation3 + $0xe0] sm:$0xff]
    %v5183 = vld [vmem:[#allocation3 + $0xf0] sm:$0xff]
    %v5184 = vld [vmem:[#allocation3 + $0xf8] sm:$0xff]
    %v5185 = vld [vmem:[#allocation3 + $0x108] sm:$0xff]
    %v5186 = vld [vmem:[#allocation3 + $0x110] sm:$0xff]
    %v5187 = vld [vmem:[#allocation3 + $0x120] sm:$0xff]
    %v5188 = vld [vmem:[#allocation3 + $0x128] sm:$0xff]
    %v5189 = vld [vmem:[#allocation3 + $0x138] sm:$0xff]
    %v5190 = vld [vmem:[#allocation3 + $0x140] sm:$0xff]
    %v5191 = vld [vmem:[#allocation3 + $0x150] sm:$0xff]
    %v5192 = vld [vmem:[#allocation3 + $0x158] sm:$0xff]
    %v5193 = vld [vmem:[#allocation3 + $0x168] sm:$0xff]
    %v5194 = vld [vmem:[#allocation3 + $0x170] sm:$0xff]
    %v5195 = vld [vmem:[#allocation3 + $0x1b0] sm:$0xff]
    %v5196 = vld [vmem:[#allocation3 + $0x1b8] sm:$0xff]
    %v5197 = vld [vmem:[#allocation3 + $0x1c8] sm:$0xff]
    %v5198 = vld [vmem:[#allocation3 + $0x1d0] sm:$0xff]
    %v5199 = vld [vmem:[#allocation3 + $0x1e0] sm:$0xff]
    %v5200 = vld [vmem:[#allocation3 + $0x1e8] sm:$0xff]
    %v5201 = vld [vmem:[#allocation3 + $0x1f8] sm:$0xff]
    %v5202 = vld [vmem:[#allocation3 + $0x200] sm:$0xff]
    %v5203 = vld [vmem:[#allocation3 + $0x210] sm:$0xff]
    %v5204 = vld [vmem:[#allocation3 + $0x218] sm:$0xff]
    %v5205 = vld [vmem:[#allocation3 + $0x228] sm:$0xff]
    %v5206 = vld [vmem:[#allocation3 + $0x230] sm:$0xff]
    %v5207 = vld [vmem:[#allocation3 + $0x240] sm:$0xff]
    %v5208 = vld [vmem:[#allocation3 + $0x248] sm:$0xff]
    %v5209 = vld [vmem:[#allocation3 + $0x258] sm:$0xff]
    %v5210 = vld [vmem:[#allocation3 + $0x260] sm:$0xff]
    %v5211 = vld [vmem:[#allocation3 + $0x270] sm:$0xff]
    %v5212 = vld [vmem:[#allocation3 + $0x278] sm:$0xff]
    %v5213 = vld [vmem:[#allocation3 + $0x288] sm:$0xff]
    %v5214 = vld [vmem:[#allocation3 + $0x290] sm:$0xff]
    %v5215 = vld [vmem:[#allocation3 + $0x2a0] sm:$0xff]
    %v5216 = vld [vmem:[#allocation3 + $0x2a8] sm:$0xff]
    %v5217 = vld [vmem:[#allocation3 + $0x2b8] sm:$0xff]
    %v5218 = vld [vmem:[#allocation3 + $0x2c0] sm:$0xff]
    %v5219 = vld [vmem:[#allocation3 + $0x2d0] sm:$0xff]
    %v5220 = vld [vmem:[#allocation3 + $0x2d8] sm:$0xff]
    %v5221 = vld [vmem:[#allocation3 + $0x2e8] sm:$0xff]
    %v5222 = vld [vmem:[#allocation3 + $0x2f0] sm:$0xff]
    %v5223 = vld [vmem:[#allocation3 + $0x300] sm:$0xff]
    %v5224 = vld [vmem:[#allocation3 + $0x308] sm:$0xff]
    %v5225 = vld [vmem:[#allocation3 + $0x318] sm:$0xff]
    %v5226 = vld [vmem:[#allocation3 + $0x320] sm:$0xff]
    %vm5227 = vcmask 64512
    %5228 = vst.msk [vmem:[#allocation2] sm:$0xff] %vm5227, %v5163
    %5229 = vst.msk [vmem:[#allocation2 + $0x8] sm:$0xff] %vm5227, %v5164
    %5230 = vst.msk [vmem:[#allocation2 + $0x10] sm:$0xff] %vm5227, %v5165
    %5231 = vst.msk [vmem:[#allocation2 + $0x18] sm:$0xff] %vm5227, %v5166
    %5232 = vst.msk [vmem:[#allocation2 + $0x20] sm:$0xff] %vm5227, %v5167
    %5233 = vst.msk [vmem:[#allocation2 + $0x28] sm:$0xff] %vm5227, %v5168
    %5234 = vst.msk [vmem:[#allocation2 + $0x30] sm:$0xff] %vm5227, %v5169
    %5235 = vst.msk [vmem:[#allocation2 + $0x38] sm:$0xff] %vm5227, %v5170
    %5236 = vst.msk [vmem:[#allocation2 + $0x40] sm:$0xff] %vm5227, %v5171
    %5237 = vst.msk [vmem:[#allocation2 + $0x48] sm:$0xff] %vm5227, %v5172
    %5238 = vst.msk [vmem:[#allocation2 + $0x50] sm:$0xff] %vm5227, %v5173
    %5239 = vst.msk [vmem:[#allocation2 + $0x58] sm:$0xff] %vm5227, %v5174
    %5240 = vst.msk [vmem:[#allocation2 + $0x60] sm:$0xff] %vm5227, %v5175
    %5241 = vst.msk [vmem:[#allocation2 + $0x68] sm:$0xff] %vm5227, %v5176
    %5242 = vst.msk [vmem:[#allocation2 + $0x70] sm:$0xff] %vm5227, %v5177
    %5243 = vst.msk [vmem:[#allocation2 + $0x78] sm:$0xff] %vm5227, %v5178
    %5244 = vst.msk [vmem:[#allocation2 + $0x80] sm:$0xff] %vm5227, %v5179
    %5245 = vst.msk [vmem:[#allocation2 + $0x88] sm:$0xff] %vm5227, %v5180
    %5246 = vst.msk [vmem:[#allocation2 + $0x90] sm:$0xff] %vm5227, %v5181
    %5247 = vst.msk [vmem:[#allocation2 + $0x98] sm:$0xff] %vm5227, %v5182
    %5248 = vst.msk [vmem:[#allocation2 + $0xa0] sm:$0xff] %vm5227, %v5183
    %5249 = vst.msk [vmem:[#allocation2 + $0xa8] sm:$0xff] %vm5227, %v5184
    %5250 = vst.msk [vmem:[#allocation2 + $0xb0] sm:$0xff] %vm5227, %v5185
    %5251 = vst.msk [vmem:[#allocation2 + $0xb8] sm:$0xff] %vm5227, %v5186
    %5252 = vst.msk [vmem:[#allocation2 + $0xc0] sm:$0xff] %vm5227, %v5187
    %5253 = vst.msk [vmem:[#allocation2 + $0xc8] sm:$0xff] %vm5227, %v5188
    %5254 = vst.msk [vmem:[#allocation2 + $0xd0] sm:$0xff] %vm5227, %v5189
    %5255 = vst.msk [vmem:[#allocation2 + $0xd8] sm:$0xff] %vm5227, %v5190
    %5256 = vst.msk [vmem:[#allocation2 + $0xe0] sm:$0xff] %vm5227, %v5191
    %5257 = vst.msk [vmem:[#allocation2 + $0xe8] sm:$0xff] %vm5227, %v5192
    %5258 = vst.msk [vmem:[#allocation2 + $0xf0] sm:$0xff] %vm5227, %v5193
    %5259 = vst.msk [vmem:[#allocation2 + $0xf8] sm:$0xff] %vm5227, %v5194
    %5260 = vst.msk [vmem:[#allocation2 + $0x100] sm:$0xff] %vm5227, %v5195
    %5261 = vst.msk [vmem:[#allocation2 + $0x108] sm:$0xff] %vm5227, %v5196
    %5262 = vst.msk [vmem:[#allocation2 + $0x110] sm:$0xff] %vm5227, %v5197
    %5263 = vst.msk [vmem:[#allocation2 + $0x118] sm:$0xff] %vm5227, %v5198
    %5264 = vst.msk [vmem:[#allocation2 + $0x120] sm:$0xff] %vm5227, %v5199
    %5265 = vst.msk [vmem:[#allocation2 + $0x128] sm:$0xff] %vm5227, %v5200
    %5266 = vst.msk [vmem:[#allocation2 + $0x130] sm:$0xff] %vm5227, %v5201
    %5267 = vst.msk [vmem:[#allocation2 + $0x138] sm:$0xff] %vm5227, %v5202
    %5268 = vst.msk [vmem:[#allocation2 + $0x140] sm:$0xff] %vm5227, %v5203
    %5269 = vst.msk [vmem:[#allocation2 + $0x148] sm:$0xff] %vm5227, %v5204
    %5270 = vst.msk [vmem:[#allocation2 + $0x150] sm:$0xff] %vm5227, %v5205
    %5271 = vst.msk [vmem:[#allocation2 + $0x158] sm:$0xff] %vm5227, %v5206
    %5272 = vst.msk [vmem:[#allocation2 + $0x160] sm:$0xff] %vm5227, %v5207
    %5273 = vst.msk [vmem:[#allocation2 + $0x168] sm:$0xff] %vm5227, %v5208
    %5274 = vst.msk [vmem:[#allocation2 + $0x170] sm:$0xff] %vm5227, %v5209
    %5275 = vst.msk [vmem:[#allocation2 + $0x178] sm:$0xff] %vm5227, %v5210
    %5276 = vst.msk [vmem:[#allocation2 + $0x180] sm:$0xff] %vm5227, %v5211
    %5277 = vst.msk [vmem:[#allocation2 + $0x188] sm:$0xff] %vm5227, %v5212
    %5278 = vst.msk [vmem:[#allocation2 + $0x190] sm:$0xff] %vm5227, %v5213
    %5279 = vst.msk [vmem:[#allocation2 + $0x198] sm:$0xff] %vm5227, %v5214
    %5280 = vst.msk [vmem:[#allocation2 + $0x1a0] sm:$0xff] %vm5227, %v5215
    %5281 = vst.msk [vmem:[#allocation2 + $0x1a8] sm:$0xff] %vm5227, %v5216
    %5282 = vst.msk [vmem:[#allocation2 + $0x1b0] sm:$0xff] %vm5227, %v5217
    %5283 = vst.msk [vmem:[#allocation2 + $0x1b8] sm:$0xff] %vm5227, %v5218
    %5284 = vst.msk [vmem:[#allocation2 + $0x1c0] sm:$0xff] %vm5227, %v5219
    %5285 = vst.msk [vmem:[#allocation2 + $0x1c8] sm:$0xff] %vm5227, %v5220
    %5286 = vst.msk [vmem:[#allocation2 + $0x1d0] sm:$0xff] %vm5227, %v5221
    %5287 = vst.msk [vmem:[#allocation2 + $0x1d8] sm:$0xff] %vm5227, %v5222
    %5288 = vst.msk [vmem:[#allocation2 + $0x1e0] sm:$0xff] %vm5227, %v5223
    %5289 = vst.msk [vmem:[#allocation2 + $0x1e8] sm:$0xff] %vm5227, %v5224
    %5290 = vst.msk [vmem:[#allocation2 + $0x1f0] sm:$0xff] %vm5227, %v5225
    %5291 = vst.msk [vmem:[#allocation2 + $0x1f8] sm:$0xff] %vm5227, %v5226
    %v5292 = vld [vmem:[#allocation3 + $0x1] sm:$0xff]
    %v5293 = vld [vmem:[#allocation3 + $0x9] sm:$0xff]
    %v5294 = vld [vmem:[#allocation3 + $0x19] sm:$0xff]
    %v5295 = vld [vmem:[#allocation3 + $0x21] sm:$0xff]
    %v5296 = vld [vmem:[#allocation3 + $0x31] sm:$0xff]
    %v5297 = vld [vmem:[#allocation3 + $0x39] sm:$0xff]
    %v5298 = vld [vmem:[#allocation3 + $0x49] sm:$0xff]
    %v5299 = vld [vmem:[#allocation3 + $0x51] sm:$0xff]
    %v5300 = vld [vmem:[#allocation3 + $0x61] sm:$0xff]
    %v5301 = vld [vmem:[#allocation3 + $0x69] sm:$0xff]
    %v5302 = vld [vmem:[#allocation3 + $0x79] sm:$0xff]
    %v5303 = vld [vmem:[#allocation3 + $0x81] sm:$0xff]
    %v5304 = vld [vmem:[#allocation3 + $0x91] sm:$0xff]
    %v5305 = vld [vmem:[#allocation3 + $0x99] sm:$0xff]
    %v5306 = vld [vmem:[#allocation3 + $0xa9] sm:$0xff]
    %v5307 = vld [vmem:[#allocation3 + $0xb1] sm:$0xff]
    %v5308 = vld [vmem:[#allocation3 + $0xc1] sm:$0xff]
    %v5309 = vld [vmem:[#allocation3 + $0xc9] sm:$0xff]
    %v5310 = vld [vmem:[#allocation3 + $0xd9] sm:$0xff]
    %v5311 = vld [vmem:[#allocation3 + $0xe1] sm:$0xff]
    %v5312 = vld [vmem:[#allocation3 + $0xf1] sm:$0xff]
    %v5313 = vld [vmem:[#allocation3 + $0xf9] sm:$0xff]
    %v5314 = vld [vmem:[#allocation3 + $0x109] sm:$0xff]
    %v5315 = vld [vmem:[#allocation3 + $0x111] sm:$0xff]
    %v5316 = vld [vmem:[#allocation3 + $0x121] sm:$0xff]
    %v5317 = vld [vmem:[#allocation3 + $0x129] sm:$0xff]
    %v5318 = vld [vmem:[#allocation3 + $0x139] sm:$0xff]
    %v5319 = vld [vmem:[#allocation3 + $0x141] sm:$0xff]
    %v5320 = vld [vmem:[#allocation3 + $0x151] sm:$0xff]
    %v5321 = vld [vmem:[#allocation3 + $0x159] sm:$0xff]
    %v5322 = vld [vmem:[#allocation3 + $0x169] sm:$0xff]
    %v5323 = vld [vmem:[#allocation3 + $0x171] sm:$0xff]
    %v5324 = vld [vmem:[#allocation3 + $0x1b1] sm:$0xff]
    %v5325 = vld [vmem:[#allocation3 + $0x1b9] sm:$0xff]
    %v5326 = vld [vmem:[#allocation3 + $0x1c9] sm:$0xff]
    %v5327 = vld [vmem:[#allocation3 + $0x1d1] sm:$0xff]
    %v5328 = vld [vmem:[#allocation3 + $0x1e1] sm:$0xff]
    %v5329 = vld [vmem:[#allocation3 + $0x1e9] sm:$0xff]
    %v5330 = vld [vmem:[#allocation3 + $0x1f9] sm:$0xff]
    %v5331 = vld [vmem:[#allocation3 + $0x201] sm:$0xff]
    %v5332 = vld [vmem:[#allocation3 + $0x211] sm:$0xff]
    %v5333 = vld [vmem:[#allocation3 + $0x219] sm:$0xff]
    %v5334 = vld [vmem:[#allocation3 + $0x229] sm:$0xff]
    %v5335 = vld [vmem:[#allocation3 + $0x231] sm:$0xff]
    %v5336 = vld [vmem:[#allocation3 + $0x241] sm:$0xff]
    %v5337 = vld [vmem:[#allocation3 + $0x249] sm:$0xff]
    %v5338 = vld [vmem:[#allocation3 + $0x259] sm:$0xff]
    %v5339 = vld [vmem:[#allocation3 + $0x261] sm:$0xff]
    %v5340 = vld [vmem:[#allocation3 + $0x271] sm:$0xff]
    %v5341 = vld [vmem:[#allocation3 + $0x279] sm:$0xff]
    %v5342 = vld [vmem:[#allocation3 + $0x289] sm:$0xff]
    %v5343 = vld [vmem:[#allocation3 + $0x291] sm:$0xff]
    %v5344 = vld [vmem:[#allocation3 + $0x2a1] sm:$0xff]
    %v5345 = vld [vmem:[#allocation3 + $0x2a9] sm:$0xff]
    %v5346 = vld [vmem:[#allocation3 + $0x2b9] sm:$0xff]
    %v5347 = vld [vmem:[#allocation3 + $0x2c1] sm:$0xff]
    %v5348 = vld [vmem:[#allocation3 + $0x2d1] sm:$0xff]
    %v5349 = vld [vmem:[#allocation3 + $0x2d9] sm:$0xff]
    %v5350 = vld [vmem:[#allocation3 + $0x2e9] sm:$0xff]
    %v5351 = vld [vmem:[#allocation3 + $0x2f1] sm:$0xff]
    %v5352 = vld [vmem:[#allocation3 + $0x301] sm:$0xff]
    %v5353 = vld [vmem:[#allocation3 + $0x309] sm:$0xff]
    %v5354 = vld [vmem:[#allocation3 + $0x319] sm:$0xff]
    %v5355 = vld [vmem:[#allocation3 + $0x321] sm:$0xff]
    %5420 = vrot.lane.b32.xlu0 %v5292, 8
    %v5421 = vpop.permute.xlu0 %5420
    %5422 = vrot.lane.b32.xlu0 %v5293, 8
    %v5423 = vpop.permute.xlu0 %5422
    %5424 = vrot.lane.b32.xlu0 %v5294, 8
    %v5425 = vpop.permute.xlu0 %5424
    %5426 = vrot.lane.b32.xlu0 %v5295, 8
    %v5427 = vpop.permute.xlu0 %5426
    %5428 = vrot.lane.b32.xlu0 %v5296, 8
    %v5429 = vpop.permute.xlu0 %5428
    %5430 = vrot.lane.b32.xlu0 %v5297, 8
    %v5431 = vpop.permute.xlu0 %5430
    %5432 = vrot.lane.b32.xlu0 %v5298, 8
    %v5433 = vpop.permute.xlu0 %5432
    %5434 = vrot.lane.b32.xlu0 %v5299, 8
    %v5435 = vpop.permute.xlu0 %5434
    %5436 = vrot.lane.b32.xlu0 %v5300, 8
    %v5437 = vpop.permute.xlu0 %5436
    %5438 = vrot.lane.b32.xlu0 %v5301, 8
    %v5439 = vpop.permute.xlu0 %5438
    %5440 = vrot.lane.b32.xlu0 %v5302, 8
    %v5441 = vpop.permute.xlu0 %5440
    %5442 = vrot.lane.b32.xlu0 %v5303, 8
    %v5443 = vpop.permute.xlu0 %5442
    %5444 = vrot.lane.b32.xlu0 %v5304, 8
    %v5445 = vpop.permute.xlu0 %5444
    %5446 = vrot.lane.b32.xlu0 %v5305, 8
    %v5447 = vpop.permute.xlu0 %5446
    %5448 = vrot.lane.b32.xlu0 %v5306, 8
    %v5449 = vpop.permute.xlu0 %5448
    %5450 = vrot.lane.b32.xlu0 %v5307, 8
    %v5451 = vpop.permute.xlu0 %5450
    %5452 = vrot.lane.b32.xlu0 %v5308, 8
    %v5453 = vpop.permute.xlu0 %5452
    %5454 = vrot.lane.b32.xlu0 %v5309, 8
    %v5455 = vpop.permute.xlu0 %5454
    %5456 = vrot.lane.b32.xlu0 %v5310, 8
    %v5457 = vpop.permute.xlu0 %5456
    %5458 = vrot.lane.b32.xlu0 %v5311, 8
    %v5459 = vpop.permute.xlu0 %5458
    %5460 = vrot.lane.b32.xlu0 %v5312, 8
    %v5461 = vpop.permute.xlu0 %5460
    %5462 = vrot.lane.b32.xlu0 %v5313, 8
    %v5463 = vpop.permute.xlu0 %5462
    %5464 = vrot.lane.b32.xlu0 %v5314, 8
    %v5465 = vpop.permute.xlu0 %5464
    %5466 = vrot.lane.b32.xlu0 %v5315, 8
    %v5467 = vpop.permute.xlu0 %5466
    %5468 = vrot.lane.b32.xlu0 %v5316, 8
    %v5469 = vpop.permute.xlu0 %5468
    %5470 = vrot.lane.b32.xlu0 %v5317, 8
    %v5471 = vpop.permute.xlu0 %5470
    %5472 = vrot.lane.b32.xlu0 %v5318, 8
    %v5473 = vpop.permute.xlu0 %5472
    %5474 = vrot.lane.b32.xlu0 %v5319, 8
    %v5475 = vpop.permute.xlu0 %5474
    %5476 = vrot.lane.b32.xlu0 %v5320, 8
    %v5477 = vpop.permute.xlu0 %5476
    %5478 = vrot.lane.b32.xlu0 %v5321, 8
    %v5479 = vpop.permute.xlu0 %5478
    %5480 = vrot.lane.b32.xlu0 %v5322, 8
    %v5481 = vpop.permute.xlu0 %5480
    %5482 = vrot.lane.b32.xlu0 %v5323, 8
    %v5483 = vpop.permute.xlu0 %5482
    %5484 = vrot.lane.b32.xlu0 %v5324, 8
    %v5485 = vpop.permute.xlu0 %5484
    %5486 = vrot.lane.b32.xlu0 %v5325, 8
    %v5487 = vpop.permute.xlu0 %5486
    %5488 = vrot.lane.b32.xlu0 %v5326, 8
    %v5489 = vpop.permute.xlu0 %5488
    %5490 = vrot.lane.b32.xlu0 %v5327, 8
    %v5491 = vpop.permute.xlu0 %5490
    %5492 = vrot.lane.b32.xlu0 %v5328, 8
    %v5493 = vpop.permute.xlu0 %5492
    %5494 = vrot.lane.b32.xlu0 %v5329, 8
    %v5495 = vpop.permute.xlu0 %5494
    %5496 = vrot.lane.b32.xlu0 %v5330, 8
    %v5497 = vpop.permute.xlu0 %5496
    %5498 = vrot.lane.b32.xlu0 %v5331, 8
    %v5499 = vpop.permute.xlu0 %5498
    %5500 = vrot.lane.b32.xlu0 %v5332, 8
    %v5501 = vpop.permute.xlu0 %5500
    %5502 = vrot.lane.b32.xlu0 %v5333, 8
    %v5503 = vpop.permute.xlu0 %5502
    %5504 = vrot.lane.b32.xlu0 %v5334, 8
    %v5505 = vpop.permute.xlu0 %5504
    %5506 = vrot.lane.b32.xlu0 %v5335, 8
    %v5507 = vpop.permute.xlu0 %5506
    %5508 = vrot.lane.b32.xlu0 %v5336, 8
    %v5509 = vpop.permute.xlu0 %5508
    %5510 = vrot.lane.b32.xlu0 %v5337, 8
    %v5511 = vpop.permute.xlu0 %5510
    %5512 = vrot.lane.b32.xlu0 %v5338, 8
    %v5513 = vpop.permute.xlu0 %5512
    %5514 = vrot.lane.b32.xlu0 %v5339, 8
    %v5515 = vpop.permute.xlu0 %5514
    %5516 = vrot.lane.b32.xlu0 %v5340, 8
    %v5517 = vpop.permute.xlu0 %5516
    %5518 = vrot.lane.b32.xlu0 %v5341, 8
    %v5519 = vpop.permute.xlu0 %5518
    %5520 = vrot.lane.b32.xlu0 %v5342, 8
    %v5521 = vpop.permute.xlu0 %5520
    %5522 = vrot.lane.b32.xlu0 %v5343, 8
    %v5523 = vpop.permute.xlu0 %5522
    %5524 = vrot.lane.b32.xlu0 %v5344, 8
    %v5525 = vpop.permute.xlu0 %5524
    %5526 = vrot.lane.b32.xlu0 %v5345, 8
    %v5527 = vpop.permute.xlu0 %5526
    %5528 = vrot.lane.b32.xlu0 %v5346, 8
    %v5529 = vpop.permute.xlu0 %5528
    %5530 = vrot.lane.b32.xlu0 %v5347, 8
    %v5531 = vpop.permute.xlu0 %5530
    %5532 = vrot.lane.b32.xlu0 %v5348, 8
    %v5533 = vpop.permute.xlu0 %5532
    %5534 = vrot.lane.b32.xlu0 %v5349, 8
    %v5535 = vpop.permute.xlu0 %5534
    %5536 = vrot.lane.b32.xlu0 %v5350, 8
    %v5537 = vpop.permute.xlu0 %5536
    %5538 = vrot.lane.b32.xlu0 %v5351, 8
    %v5539 = vpop.permute.xlu0 %5538
    %5540 = vrot.lane.b32.xlu0 %v5352, 8
    %v5541 = vpop.permute.xlu0 %5540
    %5542 = vrot.lane.b32.xlu0 %v5353, 8
    %v5543 = vpop.permute.xlu0 %5542
    %5544 = vrot.lane.b32.xlu0 %v5354, 8
    %v5545 = vpop.permute.xlu0 %5544
    %5546 = vrot.lane.b32.xlu0 %v5355, 8
    %v5547 = vpop.permute.xlu0 %5546
    %vm5612 = vcmask 130112
    %5613 = vst.msk [vmem:[#allocation2] sm:$0xff] %vm5612, %v5421
    %5614 = vst.msk [vmem:[#allocation2 + $0x8] sm:$0xff] %vm5612, %v5423
    %5615 = vst.msk [vmem:[#allocation2 + $0x10] sm:$0xff] %vm5612, %v5425
    %5616 = vst.msk [vmem:[#allocation2 + $0x18] sm:$0xff] %vm5612, %v5427
    %5617 = vst.msk [vmem:[#allocation2 + $0x20] sm:$0xff] %vm5612, %v5429
    %5618 = vst.msk [vmem:[#allocation2 + $0x28] sm:$0xff] %vm5612, %v5431
    %5619 = vst.msk [vmem:[#allocation2 + $0x30] sm:$0xff] %vm5612, %v5433
    %5620 = vst.msk [vmem:[#allocation2 + $0x38] sm:$0xff] %vm5612, %v5435
    %5621 = vst.msk [vmem:[#allocation2 + $0x40] sm:$0xff] %vm5612, %v5437
    %5622 = vst.msk [vmem:[#allocation2 + $0x48] sm:$0xff] %vm5612, %v5439
    %5623 = vst.msk [vmem:[#allocation2 + $0x50] sm:$0xff] %vm5612, %v5441
    %5624 = vst.msk [vmem:[#allocation2 + $0x58] sm:$0xff] %vm5612, %v5443
    %5625 = vst.msk [vmem:[#allocation2 + $0x60] sm:$0xff] %vm5612, %v5445
    %5626 = vst.msk [vmem:[#allocation2 + $0x68] sm:$0xff] %vm5612, %v5447
    %5627 = vst.msk [vmem:[#allocation2 + $0x70] sm:$0xff] %vm5612, %v5449
    %5628 = vst.msk [vmem:[#allocation2 + $0x78] sm:$0xff] %vm5612, %v5451
    %5629 = vst.msk [vmem:[#allocation2 + $0x80] sm:$0xff] %vm5612, %v5453
    %5630 = vst.msk [vmem:[#allocation2 + $0x88] sm:$0xff] %vm5612, %v5455
    %5631 = vst.msk [vmem:[#allocation2 + $0x90] sm:$0xff] %vm5612, %v5457
    %5632 = vst.msk [vmem:[#allocation2 + $0x98] sm:$0xff] %vm5612, %v5459
    %5633 = vst.msk [vmem:[#allocation2 + $0xa0] sm:$0xff] %vm5612, %v5461
    %5634 = vst.msk [vmem:[#allocation2 + $0xa8] sm:$0xff] %vm5612, %v5463
    %5635 = vst.msk [vmem:[#allocation2 + $0xb0] sm:$0xff] %vm5612, %v5465
    %5636 = vst.msk [vmem:[#allocation2 + $0xb8] sm:$0xff] %vm5612, %v5467
    %5637 = vst.msk [vmem:[#allocation2 + $0xc0] sm:$0xff] %vm5612, %v5469
    %5638 = vst.msk [vmem:[#allocation2 + $0xc8] sm:$0xff] %vm5612, %v5471
    %5639 = vst.msk [vmem:[#allocation2 + $0xd0] sm:$0xff] %vm5612, %v5473
    %5640 = vst.msk [vmem:[#allocation2 + $0xd8] sm:$0xff] %vm5612, %v5475
    %5641 = vst.msk [vmem:[#allocation2 + $0xe0] sm:$0xff] %vm5612, %v5477
    %5642 = vst.msk [vmem:[#allocation2 + $0xe8] sm:$0xff] %vm5612, %v5479
    %5643 = vst.msk [vmem:[#allocation2 + $0xf0] sm:$0xff] %vm5612, %v5481
    %5644 = vst.msk [vmem:[#allocation2 + $0xf8] sm:$0xff] %vm5612, %v5483
    %5645 = vst.msk [vmem:[#allocation2 + $0x100] sm:$0xff] %vm5612, %v5485
    %5646 = vst.msk [vmem:[#allocation2 + $0x108] sm:$0xff] %vm5612, %v5487
    %5647 = vst.msk [vmem:[#allocation2 + $0x110] sm:$0xff] %vm5612, %v5489
    %5648 = vst.msk [vmem:[#allocation2 + $0x118] sm:$0xff] %vm5612, %v5491
    %5649 = vst.msk [vmem:[#allocation2 + $0x120] sm:$0xff] %vm5612, %v5493
    %5650 = vst.msk [vmem:[#allocation2 + $0x128] sm:$0xff] %vm5612, %v5495
    %5651 = vst.msk [vmem:[#allocation2 + $0x130] sm:$0xff] %vm5612, %v5497
    %5652 = vst.msk [vmem:[#allocation2 + $0x138] sm:$0xff] %vm5612, %v5499
    %5653 = vst.msk [vmem:[#allocation2 + $0x140] sm:$0xff] %vm5612, %v5501
    %5654 = vst.msk [vmem:[#allocation2 + $0x148] sm:$0xff] %vm5612, %v5503
    %5655 = vst.msk [vmem:[#allocation2 + $0x150] sm:$0xff] %vm5612, %v5505
    %5656 = vst.msk [vmem:[#allocation2 + $0x158] sm:$0xff] %vm5612, %v5507
    %5657 = vst.msk [vmem:[#allocation2 + $0x160] sm:$0xff] %vm5612, %v5509
    %5658 = vst.msk [vmem:[#allocation2 + $0x168] sm:$0xff] %vm5612, %v5511
    %5659 = vst.msk [vmem:[#allocation2 + $0x170] sm:$0xff] %vm5612, %v5513
    %5660 = vst.msk [vmem:[#allocation2 + $0x178] sm:$0xff] %vm5612, %v5515
    %5661 = vst.msk [vmem:[#allocation2 + $0x180] sm:$0xff] %vm5612, %v5517
    %5662 = vst.msk [vmem:[#allocation2 + $0x188] sm:$0xff] %vm5612, %v5519
    %5663 = vst.msk [vmem:[#allocation2 + $0x190] sm:$0xff] %vm5612, %v5521
    %5664 = vst.msk [vmem:[#allocation2 + $0x198] sm:$0xff] %vm5612, %v5523
    %5665 = vst.msk [vmem:[#allocation2 + $0x1a0] sm:$0xff] %vm5612, %v5525
    %5666 = vst.msk [vmem:[#allocation2 + $0x1a8] sm:$0xff] %vm5612, %v5527
    %5667 = vst.msk [vmem:[#allocation2 + $0x1b0] sm:$0xff] %vm5612, %v5529
    %5668 = vst.msk [vmem:[#allocation2 + $0x1b8] sm:$0xff] %vm5612, %v5531
    %5669 = vst.msk [vmem:[#allocation2 + $0x1c0] sm:$0xff] %vm5612, %v5533
    %5670 = vst.msk [vmem:[#allocation2 + $0x1c8] sm:$0xff] %vm5612, %v5535
    %5671 = vst.msk [vmem:[#allocation2 + $0x1d0] sm:$0xff] %vm5612, %v5537
    %5672 = vst.msk [vmem:[#allocation2 + $0x1d8] sm:$0xff] %vm5612, %v5539
    %5673 = vst.msk [vmem:[#allocation2 + $0x1e0] sm:$0xff] %vm5612, %v5541
    %5674 = vst.msk [vmem:[#allocation2 + $0x1e8] sm:$0xff] %vm5612, %v5543
    %5675 = vst.msk [vmem:[#allocation2 + $0x1f0] sm:$0xff] %vm5612, %v5545
    %5676 = vst.msk [vmem:[#allocation2 + $0x1f8] sm:$0xff] %vm5612, %v5547
    %v5677 = vld [vmem:[#allocation3 + $0x2] sm:$0xff]
    %v5678 = vld [vmem:[#allocation3 + $0xa] sm:$0xff]
    %v5679 = vld [vmem:[#allocation3 + $0x1a] sm:$0xff]
    %v5680 = vld [vmem:[#allocation3 + $0x22] sm:$0xff]
    %v5681 = vld [vmem:[#allocation3 + $0x32] sm:$0xff]
    %v5682 = vld [vmem:[#allocation3 + $0x3a] sm:$0xff]
    %v5683 = vld [vmem:[#allocation3 + $0x4a] sm:$0xff]
    %v5684 = vld [vmem:[#allocation3 + $0x52] sm:$0xff]
    %v5685 = vld [vmem:[#allocation3 + $0x62] sm:$0xff]
    %v5686 = vld [vmem:[#allocation3 + $0x6a] sm:$0xff]
    %v5687 = vld [vmem:[#allocation3 + $0x7a] sm:$0xff]
    %v5688 = vld [vmem:[#allocation3 + $0x82] sm:$0xff]
    %v5689 = vld [vmem:[#allocation3 + $0x92] sm:$0xff]
    %v5690 = vld [vmem:[#allocation3 + $0x9a] sm:$0xff]
    %v5691 = vld [vmem:[#allocation3 + $0xaa] sm:$0xff]
    %v5692 = vld [vmem:[#allocation3 + $0xb2] sm:$0xff]
    %v5693 = vld [vmem:[#allocation3 + $0xc2] sm:$0xff]
    %v5694 = vld [vmem:[#allocation3 + $0xca] sm:$0xff]
    %v5695 = vld [vmem:[#allocation3 + $0xda] sm:$0xff]
    %v5696 = vld [vmem:[#allocation3 + $0xe2] sm:$0xff]
    %v5697 = vld [vmem:[#allocation3 + $0xf2] sm:$0xff]
    %v5698 = vld [vmem:[#allocation3 + $0xfa] sm:$0xff]
    %v5699 = vld [vmem:[#allocation3 + $0x10a] sm:$0xff]
    %v5700 = vld [vmem:[#allocation3 + $0x112] sm:$0xff]
    %v5701 = vld [vmem:[#allocation3 + $0x122] sm:$0xff]
    %v5702 = vld [vmem:[#allocation3 + $0x12a] sm:$0xff]
    %v5703 = vld [vmem:[#allocation3 + $0x13a] sm:$0xff]
    %v5704 = vld [vmem:[#allocation3 + $0x142] sm:$0xff]
    %v5705 = vld [vmem:[#allocation3 + $0x152] sm:$0xff]
    %v5706 = vld [vmem:[#allocation3 + $0x15a] sm:$0xff]
    %v5707 = vld [vmem:[#allocation3 + $0x16a] sm:$0xff]
    %v5708 = vld [vmem:[#allocation3 + $0x172] sm:$0xff]
    %v5709 = vld [vmem:[#allocation3 + $0x1b2] sm:$0xff]
    %v5710 = vld [vmem:[#allocation3 + $0x1ba] sm:$0xff]
    %v5711 = vld [vmem:[#allocation3 + $0x1ca] sm:$0xff]
    %v5712 = vld [vmem:[#allocation3 + $0x1d2] sm:$0xff]
    %v5713 = vld [vmem:[#allocation3 + $0x1e2] sm:$0xff]
    %v5714 = vld [vmem:[#allocation3 + $0x1ea] sm:$0xff]
    %v5715 = vld [vmem:[#allocation3 + $0x1fa] sm:$0xff]
    %v5716 = vld [vmem:[#allocation3 + $0x202] sm:$0xff]
    %v5717 = vld [vmem:[#allocation3 + $0x212] sm:$0xff]
    %v5718 = vld [vmem:[#allocation3 + $0x21a] sm:$0xff]
    %v5719 = vld [vmem:[#allocation3 + $0x22a] sm:$0xff]
    %v5720 = vld [vmem:[#allocation3 + $0x232] sm:$0xff]
    %v5721 = vld [vmem:[#allocation3 + $0x242] sm:$0xff]
    %v5722 = vld [vmem:[#allocation3 + $0x24a] sm:$0xff]
    %v5723 = vld [vmem:[#allocation3 + $0x25a] sm:$0xff]
    %v5724 = vld [vmem:[#allocation3 + $0x262] sm:$0xff]
    %v5725 = vld [vmem:[#allocation3 + $0x272] sm:$0xff]
    %v5726 = vld [vmem:[#allocation3 + $0x27a] sm:$0xff]
    %v5727 = vld [vmem:[#allocation3 + $0x28a] sm:$0xff]
    %v5728 = vld [vmem:[#allocation3 + $0x292] sm:$0xff]
    %v5729 = vld [vmem:[#allocation3 + $0x2a2] sm:$0xff]
    %v5730 = vld [vmem:[#allocation3 + $0x2aa] sm:$0xff]
    %v5731 = vld [vmem:[#allocation3 + $0x2ba] sm:$0xff]
    %v5732 = vld [vmem:[#allocation3 + $0x2c2] sm:$0xff]
    %v5733 = vld [vmem:[#allocation3 + $0x2d2] sm:$0xff]
    %v5734 = vld [vmem:[#allocation3 + $0x2da] sm:$0xff]
    %v5735 = vld [vmem:[#allocation3 + $0x2ea] sm:$0xff]
    %v5736 = vld [vmem:[#allocation3 + $0x2f2] sm:$0xff]
    %v5737 = vld [vmem:[#allocation3 + $0x302] sm:$0xff]
    %v5738 = vld [vmem:[#allocation3 + $0x30a] sm:$0xff]
    %v5739 = vld [vmem:[#allocation3 + $0x31a] sm:$0xff]
    %v5740 = vld [vmem:[#allocation3 + $0x322] sm:$0xff]
    %5805 = vrot.lane.b32.xlu0 %v5677, 16
    %v5806 = vpop.permute.xlu0 %5805
    %5807 = vrot.lane.b32.xlu0 %v5678, 16
    %v5808 = vpop.permute.xlu0 %5807
    %5809 = vrot.lane.b32.xlu0 %v5679, 16
    %v5810 = vpop.permute.xlu0 %5809
    %5811 = vrot.lane.b32.xlu0 %v5680, 16
    %v5812 = vpop.permute.xlu0 %5811
    %5813 = vrot.lane.b32.xlu0 %v5681, 16
    %v5814 = vpop.permute.xlu0 %5813
    %5815 = vrot.lane.b32.xlu0 %v5682, 16
    %v5816 = vpop.permute.xlu0 %5815
    %5817 = vrot.lane.b32.xlu0 %v5683, 16
    %v5818 = vpop.permute.xlu0 %5817
    %5819 = vrot.lane.b32.xlu0 %v5684, 16
    %v5820 = vpop.permute.xlu0 %5819
    %5821 = vrot.lane.b32.xlu0 %v5685, 16
    %v5822 = vpop.permute.xlu0 %5821
    %5823 = vrot.lane.b32.xlu0 %v5686, 16
    %v5824 = vpop.permute.xlu0 %5823
    %5825 = vrot.lane.b32.xlu0 %v5687, 16
    %v5826 = vpop.permute.xlu0 %5825
    %5827 = vrot.lane.b32.xlu0 %v5688, 16
    %v5828 = vpop.permute.xlu0 %5827
    %5829 = vrot.lane.b32.xlu0 %v5689, 16
    %v5830 = vpop.permute.xlu0 %5829
    %5831 = vrot.lane.b32.xlu0 %v5690, 16
    %v5832 = vpop.permute.xlu0 %5831
    %5833 = vrot.lane.b32.xlu0 %v5691, 16
    %v5834 = vpop.permute.xlu0 %5833
    %5835 = vrot.lane.b32.xlu0 %v5692, 16
    %v5836 = vpop.permute.xlu0 %5835
    %5837 = vrot.lane.b32.xlu0 %v5693, 16
    %v5838 = vpop.permute.xlu0 %5837
    %5839 = vrot.lane.b32.xlu0 %v5694, 16
    %v5840 = vpop.permute.xlu0 %5839
    %5841 = vrot.lane.b32.xlu0 %v5695, 16
    %v5842 = vpop.permute.xlu0 %5841
    %5843 = vrot.lane.b32.xlu0 %v5696, 16
    %v5844 = vpop.permute.xlu0 %5843
    %5845 = vrot.lane.b32.xlu0 %v5697, 16
    %v5846 = vpop.permute.xlu0 %5845
    %5847 = vrot.lane.b32.xlu0 %v5698, 16
    %v5848 = vpop.permute.xlu0 %5847
    %5849 = vrot.lane.b32.xlu0 %v5699, 16
    %v5850 = vpop.permute.xlu0 %5849
    %5851 = vrot.lane.b32.xlu0 %v5700, 16
    %v5852 = vpop.permute.xlu0 %5851
    %5853 = vrot.lane.b32.xlu0 %v5701, 16
    %v5854 = vpop.permute.xlu0 %5853
    %5855 = vrot.lane.b32.xlu0 %v5702, 16
    %v5856 = vpop.permute.xlu0 %5855
    %5857 = vrot.lane.b32.xlu0 %v5703, 16
    %v5858 = vpop.permute.xlu0 %5857
    %5859 = vrot.lane.b32.xlu0 %v5704, 16
    %v5860 = vpop.permute.xlu0 %5859
    %5861 = vrot.lane.b32.xlu0 %v5705, 16
    %v5862 = vpop.permute.xlu0 %5861
    %5863 = vrot.lane.b32.xlu0 %v5706, 16
    %v5864 = vpop.permute.xlu0 %5863
    %5865 = vrot.lane.b32.xlu0 %v5707, 16
    %v5866 = vpop.permute.xlu0 %5865
    %5867 = vrot.lane.b32.xlu0 %v5708, 16
    %v5868 = vpop.permute.xlu0 %5867
    %5869 = vrot.lane.b32.xlu0 %v5709, 16
    %v5870 = vpop.permute.xlu0 %5869
    %5871 = vrot.lane.b32.xlu0 %v5710, 16
    %v5872 = vpop.permute.xlu0 %5871
    %5873 = vrot.lane.b32.xlu0 %v5711, 16
    %v5874 = vpop.permute.xlu0 %5873
    %5875 = vrot.lane.b32.xlu0 %v5712, 16
    %v5876 = vpop.permute.xlu0 %5875
    %5877 = vrot.lane.b32.xlu0 %v5713, 16
    %v5878 = vpop.permute.xlu0 %5877
    %5879 = vrot.lane.b32.xlu0 %v5714, 16
    %v5880 = vpop.permute.xlu0 %5879
    %5881 = vrot.lane.b32.xlu0 %v5715, 16
    %v5882 = vpop.permute.xlu0 %5881
    %5883 = vrot.lane.b32.xlu0 %v5716, 16
    %v5884 = vpop.permute.xlu0 %5883
    %5885 = vrot.lane.b32.xlu0 %v5717, 16
    %v5886 = vpop.permute.xlu0 %5885
    %5887 = vrot.lane.b32.xlu0 %v5718, 16
    %v5888 = vpop.permute.xlu0 %5887
    %5889 = vrot.lane.b32.xlu0 %v5719, 16
    %v5890 = vpop.permute.xlu0 %5889
    %5891 = vrot.lane.b32.xlu0 %v5720, 16
    %v5892 = vpop.permute.xlu0 %5891
    %5893 = vrot.lane.b32.xlu0 %v5721, 16
    %v5894 = vpop.permute.xlu0 %5893
    %5895 = vrot.lane.b32.xlu0 %v5722, 16
    %v5896 = vpop.permute.xlu0 %5895
    %5897 = vrot.lane.b32.xlu0 %v5723, 16
    %v5898 = vpop.permute.xlu0 %5897
    %5899 = vrot.lane.b32.xlu0 %v5724, 16
    %v5900 = vpop.permute.xlu0 %5899
    %5901 = vrot.lane.b32.xlu0 %v5725, 16
    %v5902 = vpop.permute.xlu0 %5901
    %5903 = vrot.lane.b32.xlu0 %v5726, 16
    %v5904 = vpop.permute.xlu0 %5903
    %5905 = vrot.lane.b32.xlu0 %v5727, 16
    %v5906 = vpop.permute.xlu0 %5905
    %5907 = vrot.lane.b32.xlu0 %v5728, 16
    %v5908 = vpop.permute.xlu0 %5907
    %5909 = vrot.lane.b32.xlu0 %v5729, 16
    %v5910 = vpop.permute.xlu0 %5909
    %5911 = vrot.lane.b32.xlu0 %v5730, 16
    %v5912 = vpop.permute.xlu0 %5911
    %5913 = vrot.lane.b32.xlu0 %v5731, 16
    %v5914 = vpop.permute.xlu0 %5913
    %5915 = vrot.lane.b32.xlu0 %v5732, 16
    %v5916 = vpop.permute.xlu0 %5915
    %5917 = vrot.lane.b32.xlu0 %v5733, 16
    %v5918 = vpop.permute.xlu0 %5917
    %5919 = vrot.lane.b32.xlu0 %v5734, 16
    %v5920 = vpop.permute.xlu0 %5919
    %5921 = vrot.lane.b32.xlu0 %v5735, 16
    %v5922 = vpop.permute.xlu0 %5921
    %5923 = vrot.lane.b32.xlu0 %v5736, 16
    %v5924 = vpop.permute.xlu0 %5923
    %5925 = vrot.lane.b32.xlu0 %v5737, 16
    %v5926 = vpop.permute.xlu0 %5925
    %5927 = vrot.lane.b32.xlu0 %v5738, 16
    %v5928 = vpop.permute.xlu0 %5927
    %5929 = vrot.lane.b32.xlu0 %v5739, 16
    %v5930 = vpop.permute.xlu0 %5929
    %5931 = vrot.lane.b32.xlu0 %v5740, 16
    %v5932 = vpop.permute.xlu0 %5931
    %vm5997 = vcmask 195712
    %5998 = vst.msk [vmem:[#allocation2] sm:$0xff] %vm5997, %v5806
    %5999 = vst.msk [vmem:[#allocation2 + $0x8] sm:$0xff] %vm5997, %v5808
    %6000 = vst.msk [vmem:[#allocation2 + $0x10] sm:$0xff] %vm5997, %v5810
    %6001 = vst.msk [vmem:[#allocation2 + $0x18] sm:$0xff] %vm5997, %v5812
    %6002 = vst.msk [vmem:[#allocation2 + $0x20] sm:$0xff] %vm5997, %v5814
    %6003 = vst.msk [vmem:[#allocation2 + $0x28] sm:$0xff] %vm5997, %v5816
    %6004 = vst.msk [vmem:[#allocation2 + $0x30] sm:$0xff] %vm5997, %v5818
    %6005 = vst.msk [vmem:[#allocation2 + $0x38] sm:$0xff] %vm5997, %v5820
    %6006 = vst.msk [vmem:[#allocation2 + $0x40] sm:$0xff] %vm5997, %v5822
    %6007 = vst.msk [vmem:[#allocation2 + $0x48] sm:$0xff] %vm5997, %v5824
    %6008 = vst.msk [vmem:[#allocation2 + $0x50] sm:$0xff] %vm5997, %v5826
    %6009 = vst.msk [vmem:[#allocation2 + $0x58] sm:$0xff] %vm5997, %v5828
    %6010 = vst.msk [vmem:[#allocation2 + $0x60] sm:$0xff] %vm5997, %v5830
    %6011 = vst.msk [vmem:[#allocation2 + $0x68] sm:$0xff] %vm5997, %v5832
    %6012 = vst.msk [vmem:[#allocation2 + $0x70] sm:$0xff] %vm5997, %v5834
    %6013 = vst.msk [vmem:[#allocation2 + $0x78] sm:$0xff] %vm5997, %v5836
    %6014 = vst.msk [vmem:[#allocation2 + $0x80] sm:$0xff] %vm5997, %v5838
    %6015 = vst.msk [vmem:[#allocation2 + $0x88] sm:$0xff] %vm5997, %v5840
    %6016 = vst.msk [vmem:[#allocation2 + $0x90] sm:$0xff] %vm5997, %v5842
    %6017 = vst.msk [vmem:[#allocation2 + $0x98] sm:$0xff] %vm5997, %v5844
    %6018 = vst.msk [vmem:[#allocation2 + $0xa0] sm:$0xff] %vm5997, %v5846
    %6019 = vst.msk [vmem:[#allocation2 + $0xa8] sm:$0xff] %vm5997, %v5848
    %6020 = vst.msk [vmem:[#allocation2 + $0xb0] sm:$0xff] %vm5997, %v5850
    %6021 = vst.msk [vmem:[#allocation2 + $0xb8] sm:$0xff] %vm5997, %v5852
    %6022 = vst.msk [vmem:[#allocation2 + $0xc0] sm:$0xff] %vm5997, %v5854
    %6023 = vst.msk [vmem:[#allocation2 + $0xc8] sm:$0xff] %vm5997, %v5856
    %6024 = vst.msk [vmem:[#allocation2 + $0xd0] sm:$0xff] %vm5997, %v5858
    %6025 = vst.msk [vmem:[#allocation2 + $0xd8] sm:$0xff] %vm5997, %v5860
    %6026 = vst.msk [vmem:[#allocation2 + $0xe0] sm:$0xff] %vm5997, %v5862
    %6027 = vst.msk [vmem:[#allocation2 + $0xe8] sm:$0xff] %vm5997, %v5864
    %6028 = vst.msk [vmem:[#allocation2 + $0xf0] sm:$0xff] %vm5997, %v5866
    %6029 = vst.msk [vmem:[#allocation2 + $0xf8] sm:$0xff] %vm5997, %v5868
    %6030 = vst.msk [vmem:[#allocation2 + $0x100] sm:$0xff] %vm5997, %v5870
    %6031 = vst.msk [vmem:[#allocation2 + $0x108] sm:$0xff] %vm5997, %v5872
    %6032 = vst.msk [vmem:[#allocation2 + $0x110] sm:$0xff] %vm5997, %v5874
    %6033 = vst.msk [vmem:[#allocation2 + $0x118] sm:$0xff] %vm5997, %v5876
    %6034 = vst.msk [vmem:[#allocation2 + $0x120] sm:$0xff] %vm5997, %v5878
    %6035 = vst.msk [vmem:[#allocation2 + $0x128] sm:$0xff] %vm5997, %v5880
    %6036 = vst.msk [vmem:[#allocation2 + $0x130] sm:$0xff] %vm5997, %v5882
    %6037 = vst.msk [vmem:[#allocation2 + $0x138] sm:$0xff] %vm5997, %v5884
    %6038 = vst.msk [vmem:[#allocation2 + $0x140] sm:$0xff] %vm5997, %v5886
    %6039 = vst.msk [vmem:[#allocation2 + $0x148] sm:$0xff] %vm5997, %v5888
    %6040 = vst.msk [vmem:[#allocation2 + $0x150] sm:$0xff] %vm5997, %v5890
    %6041 = vst.msk [vmem:[#allocation2 + $0x158] sm:$0xff] %vm5997, %v5892
    %6042 = vst.msk [vmem:[#allocation2 + $0x160] sm:$0xff] %vm5997, %v5894
    %6043 = vst.msk [vmem:[#allocation2 + $0x168] sm:$0xff] %vm5997, %v5896
    %6044 = vst.msk [vmem:[#allocation2 + $0x170] sm:$0xff] %vm5997, %v5898
    %6045 = vst.msk [vmem:[#allocation2 + $0x178] sm:$0xff] %vm5997, %v5900
    %6046 = vst.msk [vmem:[#allocation2 + $0x180] sm:$0xff] %vm5997, %v5902
    %6047 = vst.msk [vmem:[#allocation2 + $0x188] sm:$0xff] %vm5997, %v5904
    %6048 = vst.msk [vmem:[#allocation2 + $0x190] sm:$0xff] %vm5997, %v5906
    %6049 = vst.msk [vmem:[#allocation2 + $0x198] sm:$0xff] %vm5997, %v5908
    %6050 = vst.msk [vmem:[#allocation2 + $0x1a0] sm:$0xff] %vm5997, %v5910
    %6051 = vst.msk [vmem:[#allocation2 + $0x1a8] sm:$0xff] %vm5997, %v5912
    %6052 = vst.msk [vmem:[#allocation2 + $0x1b0] sm:$0xff] %vm5997, %v5914
    %6053 = vst.msk [vmem:[#allocation2 + $0x1b8] sm:$0xff] %vm5997, %v5916
    %6054 = vst.msk [vmem:[#allocation2 + $0x1c0] sm:$0xff] %vm5997, %v5918
    %6055 = vst.msk [vmem:[#allocation2 + $0x1c8] sm:$0xff] %vm5997, %v5920
    %6056 = vst.msk [vmem:[#allocation2 + $0x1d0] sm:$0xff] %vm5997, %v5922
    %6057 = vst.msk [vmem:[#allocation2 + $0x1d8] sm:$0xff] %vm5997, %v5924
    %6058 = vst.msk [vmem:[#allocation2 + $0x1e0] sm:$0xff] %vm5997, %v5926
    %6059 = vst.msk [vmem:[#allocation2 + $0x1e8] sm:$0xff] %vm5997, %v5928
    %6060 = vst.msk [vmem:[#allocation2 + $0x1f0] sm:$0xff] %vm5997, %v5930
    %6061 = vst.msk [vmem:[#allocation2 + $0x1f8] sm:$0xff] %vm5997, %v5932
    %v6062 = vld [vmem:[%s4327] sm:$0xff]
    %v6063 = vld [vmem:[%s4327 + $0x8] sm:$0xff]
    %v6064 = vld [vmem:[%s4327 + $0x18] sm:$0xff]
    %v6065 = vld [vmem:[%s4327 + $0x20] sm:$0xff]
    %v6066 = vld [vmem:[%s4327 + $0x30] sm:$0xff]
    %v6067 = vld [vmem:[%s4327 + $0x38] sm:$0xff]
    %v6068 = vld [vmem:[%s4327 + $0x48] sm:$0xff]
    %v6069 = vld [vmem:[%s4327 + $0x50] sm:$0xff]
    %v6070 = vld [vmem:[%s4327 + $0x60] sm:$0xff]
    %v6071 = vld [vmem:[%s4327 + $0x68] sm:$0xff]
    %v6072 = vld [vmem:[%s4327 + $0x78] sm:$0xff]
    %v6073 = vld [vmem:[%s4327 + $0x80] sm:$0xff]
    %v6074 = vld [vmem:[%s4327 + $0x90] sm:$0xff]
    %v6075 = vld [vmem:[%s4327 + $0x98] sm:$0xff]
    %v6076 = vld [vmem:[%s4327 + $0xa8] sm:$0xff]
    %v6077 = vld [vmem:[%s4327 + $0xb0] sm:$0xff]
    %v6078 = vld [vmem:[%s4327 + $0xc0] sm:$0xff]
    %v6079 = vld [vmem:[%s4327 + $0xc8] sm:$0xff]
    %v6080 = vld [vmem:[%s4327 + $0xd8] sm:$0xff]
    %v6081 = vld [vmem:[%s4327 + $0xe0] sm:$0xff]
    %v6082 = vld [vmem:[%s4327 + $0xf0] sm:$0xff]
    %v6083 = vld [vmem:[%s4327 + $0xf8] sm:$0xff]
    %v6084 = vld [vmem:[%s4327 + $0x108] sm:$0xff]
    %v6085 = vld [vmem:[%s4327 + $0x110] sm:$0xff]
    %v6086 = vld [vmem:[%s4327 + $0x120] sm:$0xff]
    %v6087 = vld [vmem:[%s4327 + $0x128] sm:$0xff]
    %v6088 = vld [vmem:[%s4327 + $0x138] sm:$0xff]
    %v6089 = vld [vmem:[%s4327 + $0x140] sm:$0xff]
    %v6090 = vld [vmem:[%s4327 + $0x150] sm:$0xff]
    %v6091 = vld [vmem:[%s4327 + $0x158] sm:$0xff]
    %v6092 = vld [vmem:[%s4327 + $0x168] sm:$0xff]
    %v6093 = vld [vmem:[%s4327 + $0x170] sm:$0xff]
    %v6094 = vld [vmem:[%s4327 + $0x1b0] sm:$0xff]
    %v6095 = vld [vmem:[%s4327 + $0x1b8] sm:$0xff]
    %v6096 = vld [vmem:[%s4327 + $0x1c8] sm:$0xff]
    %v6097 = vld [vmem:[%s4327 + $0x1d0] sm:$0xff]
    %v6098 = vld [vmem:[%s4327 + $0x1e0] sm:$0xff]
    %v6099 = vld [vmem:[%s4327 + $0x1e8] sm:$0xff]
    %v6100 = vld [vmem:[%s4327 + $0x1f8] sm:$0xff]
    %v6101 = vld [vmem:[%s4327 + $0x200] sm:$0xff]
    %v6102 = vld [vmem:[%s4327 + $0x210] sm:$0xff]
    %v6103 = vld [vmem:[%s4327 + $0x218] sm:$0xff]
    %v6104 = vld [vmem:[%s4327 + $0x228] sm:$0xff]
    %v6105 = vld [vmem:[%s4327 + $0x230] sm:$0xff]
    %v6106 = vld [vmem:[%s4327 + $0x240] sm:$0xff]
    %v6107 = vld [vmem:[%s4327 + $0x248] sm:$0xff]
    %v6108 = vld [vmem:[%s4327 + $0x258] sm:$0xff]
    %v6109 = vld [vmem:[%s4327 + $0x260] sm:$0xff]
    %v6110 = vld [vmem:[%s4327 + $0x270] sm:$0xff]
    %v6111 = vld [vmem:[%s4327 + $0x278] sm:$0xff]
    %v6112 = vld [vmem:[%s4327 + $0x288] sm:$0xff]
    %v6113 = vld [vmem:[%s4327 + $0x290] sm:$0xff]
    %v6114 = vld [vmem:[%s4327 + $0x2a0] sm:$0xff]
    %v6115 = vld [vmem:[%s4327 + $0x2a8] sm:$0xff]
    %v6116 = vld [vmem:[%s4327 + $0x2b8] sm:$0xff]
    %v6117 = vld [vmem:[%s4327 + $0x2c0] sm:$0xff]
    %v6118 = vld [vmem:[%s4327 + $0x2d0] sm:$0xff]
    %v6119 = vld [vmem:[%s4327 + $0x2d8] sm:$0xff]
    %v6120 = vld [vmem:[%s4327 + $0x2e8] sm:$0xff]
    %v6121 = vld [vmem:[%s4327 + $0x2f0] sm:$0xff]
    %v6122 = vld [vmem:[%s4327 + $0x300] sm:$0xff]
    %v6123 = vld [vmem:[%s4327 + $0x308] sm:$0xff]
    %v6124 = vld [vmem:[%s4327 + $0x318] sm:$0xff]
    %v6125 = vld [vmem:[%s4327 + $0x320] sm:$0xff]
    %6190 = vrot.lane.b32.xlu0 %v6062, 24
    %v6191 = vpop.permute.xlu0 %6190
    %6192 = vrot.lane.b32.xlu0 %v6063, 24
    %v6193 = vpop.permute.xlu0 %6192
    %6194 = vrot.lane.b32.xlu0 %v6064, 24
    %v6195 = vpop.permute.xlu0 %6194
    %6196 = vrot.lane.b32.xlu0 %v6065, 24
    %v6197 = vpop.permute.xlu0 %6196
    %6198 = vrot.lane.b32.xlu0 %v6066, 24
    %v6199 = vpop.permute.xlu0 %6198
    %6200 = vrot.lane.b32.xlu0 %v6067, 24
    %v6201 = vpop.permute.xlu0 %6200
    %6202 = vrot.lane.b32.xlu0 %v6068, 24
    %v6203 = vpop.permute.xlu0 %6202
    %6204 = vrot.lane.b32.xlu0 %v6069, 24
    %v6205 = vpop.permute.xlu0 %6204
    %6206 = vrot.lane.b32.xlu0 %v6070, 24
    %v6207 = vpop.permute.xlu0 %6206
    %6208 = vrot.lane.b32.xlu0 %v6071, 24
    %v6209 = vpop.permute.xlu0 %6208
    %6210 = vrot.lane.b32.xlu0 %v6072, 24
    %v6211 = vpop.permute.xlu0 %6210
    %6212 = vrot.lane.b32.xlu0 %v6073, 24
    %v6213 = vpop.permute.xlu0 %6212
    %6214 = vrot.lane.b32.xlu0 %v6074, 24
    %v6215 = vpop.permute.xlu0 %6214
    %6216 = vrot.lane.b32.xlu0 %v6075, 24
    %v6217 = vpop.permute.xlu0 %6216
    %6218 = vrot.lane.b32.xlu0 %v6076, 24
    %v6219 = vpop.permute.xlu0 %6218
    %6220 = vrot.lane.b32.xlu0 %v6077, 24
    %v6221 = vpop.permute.xlu0 %6220
    %6222 = vrot.lane.b32.xlu0 %v6078, 24
    %v6223 = vpop.permute.xlu0 %6222
    %6224 = vrot.lane.b32.xlu0 %v6079, 24
    %v6225 = vpop.permute.xlu0 %6224
    %6226 = vrot.lane.b32.xlu0 %v6080, 24
    %v6227 = vpop.permute.xlu0 %6226
    %6228 = vrot.lane.b32.xlu0 %v6081, 24
    %v6229 = vpop.permute.xlu0 %6228
    %6230 = vrot.lane.b32.xlu0 %v6082, 24
    %v6231 = vpop.permute.xlu0 %6230
    %6232 = vrot.lane.b32.xlu0 %v6083, 24
    %v6233 = vpop.permute.xlu0 %6232
    %6234 = vrot.lane.b32.xlu0 %v6084, 24
    %v6235 = vpop.permute.xlu0 %6234
    %6236 = vrot.lane.b32.xlu0 %v6085, 24
    %v6237 = vpop.permute.xlu0 %6236
    %6238 = vrot.lane.b32.xlu0 %v6086, 24
    %v6239 = vpop.permute.xlu0 %6238
    %6240 = vrot.lane.b32.xlu0 %v6087, 24
    %v6241 = vpop.permute.xlu0 %6240
    %6242 = vrot.lane.b32.xlu0 %v6088, 24
    %v6243 = vpop.permute.xlu0 %6242
    %6244 = vrot.lane.b32.xlu0 %v6089, 24
    %v6245 = vpop.permute.xlu0 %6244
    %6246 = vrot.lane.b32.xlu0 %v6090, 24
    %v6247 = vpop.permute.xlu0 %6246
    %6248 = vrot.lane.b32.xlu0 %v6091, 24
    %v6249 = vpop.permute.xlu0 %6248
    %6250 = vrot.lane.b32.xlu0 %v6092, 24
    %v6251 = vpop.permute.xlu0 %6250
    %6252 = vrot.lane.b32.xlu0 %v6093, 24
    %v6253 = vpop.permute.xlu0 %6252
    %6254 = vrot.lane.b32.xlu0 %v6094, 24
    %v6255 = vpop.permute.xlu0 %6254
    %6256 = vrot.lane.b32.xlu0 %v6095, 24
    %v6257 = vpop.permute.xlu0 %6256
    %6258 = vrot.lane.b32.xlu0 %v6096, 24
    %v6259 = vpop.permute.xlu0 %6258
    %6260 = vrot.lane.b32.xlu0 %v6097, 24
    %v6261 = vpop.permute.xlu0 %6260
    %6262 = vrot.lane.b32.xlu0 %v6098, 24
    %v6263 = vpop.permute.xlu0 %6262
    %6264 = vrot.lane.b32.xlu0 %v6099, 24
    %v6265 = vpop.permute.xlu0 %6264
    %6266 = vrot.lane.b32.xlu0 %v6100, 24
    %v6267 = vpop.permute.xlu0 %6266
    %6268 = vrot.lane.b32.xlu0 %v6101, 24
    %v6269 = vpop.permute.xlu0 %6268
    %6270 = vrot.lane.b32.xlu0 %v6102, 24
    %v6271 = vpop.permute.xlu0 %6270
    %6272 = vrot.lane.b32.xlu0 %v6103, 24
    %v6273 = vpop.permute.xlu0 %6272
    %6274 = vrot.lane.b32.xlu0 %v6104, 24
    %v6275 = vpop.permute.xlu0 %6274
    %6276 = vrot.lane.b32.xlu0 %v6105, 24
    %v6277 = vpop.permute.xlu0 %6276
    %6278 = vrot.lane.b32.xlu0 %v6106, 24
    %v6279 = vpop.permute.xlu0 %6278
    %6280 = vrot.lane.b32.xlu0 %v6107, 24
    %v6281 = vpop.permute.xlu0 %6280
    %6282 = vrot.lane.b32.xlu0 %v6108, 24
    %v6283 = vpop.permute.xlu0 %6282
    %6284 = vrot.lane.b32.xlu0 %v6109, 24
    %v6285 = vpop.permute.xlu0 %6284
    %6286 = vrot.lane.b32.xlu0 %v6110, 24
    %v6287 = vpop.permute.xlu0 %6286
    %6288 = vrot.lane.b32.xlu0 %v6111, 24
    %v6289 = vpop.permute.xlu0 %6288
    %6290 = vrot.lane.b32.xlu0 %v6112, 24
    %v6291 = vpop.permute.xlu0 %6290
    %6292 = vrot.lane.b32.xlu0 %v6113, 24
    %v6293 = vpop.permute.xlu0 %6292
    %6294 = vrot.lane.b32.xlu0 %v6114, 24
    %v6295 = vpop.permute.xlu0 %6294
    %6296 = vrot.lane.b32.xlu0 %v6115, 24
    %v6297 = vpop.permute.xlu0 %6296
    %6298 = vrot.lane.b32.xlu0 %v6116, 24
    %v6299 = vpop.permute.xlu0 %6298
    %6300 = vrot.lane.b32.xlu0 %v6117, 24
    %v6301 = vpop.permute.xlu0 %6300
    %6302 = vrot.lane.b32.xlu0 %v6118, 24
    %v6303 = vpop.permute.xlu0 %6302
    %6304 = vrot.lane.b32.xlu0 %v6119, 24
    %v6305 = vpop.permute.xlu0 %6304
    %6306 = vrot.lane.b32.xlu0 %v6120, 24
    %v6307 = vpop.permute.xlu0 %6306
    %6308 = vrot.lane.b32.xlu0 %v6121, 24
    %v6309 = vpop.permute.xlu0 %6308
    %6310 = vrot.lane.b32.xlu0 %v6122, 24
    %v6311 = vpop.permute.xlu0 %6310
    %6312 = vrot.lane.b32.xlu0 %v6123, 24
    %v6313 = vpop.permute.xlu0 %6312
    %6314 = vrot.lane.b32.xlu0 %v6124, 24
    %v6315 = vpop.permute.xlu0 %6314
    %6316 = vrot.lane.b32.xlu0 %v6125, 24
    %v6317 = vpop.permute.xlu0 %6316
    %vm6382 = vcmask 261312
    %6383 = vst.msk [vmem:[#allocation2] sm:$0xff] %vm6382, %v6191
    %6384 = vst.msk [vmem:[#allocation2 + $0x8] sm:$0xff] %vm6382, %v6193
    %6385 = vst.msk [vmem:[#allocation2 + $0x10] sm:$0xff] %vm6382, %v6195
    %6386 = vst.msk [vmem:[#allocation2 + $0x18] sm:$0xff] %vm6382, %v6197
    %6387 = vst.msk [vmem:[#allocation2 + $0x20] sm:$0xff] %vm6382, %v6199
    %6388 = vst.msk [vmem:[#allocation2 + $0x28] sm:$0xff] %vm6382, %v6201
    %6389 = vst.msk [vmem:[#allocation2 + $0x30] sm:$0xff] %vm6382, %v6203
    %6390 = vst.msk [vmem:[#allocation2 + $0x38] sm:$0xff] %vm6382, %v6205
    %6391 = vst.msk [vmem:[#allocation2 + $0x40] sm:$0xff] %vm6382, %v6207
    %6392 = vst.msk [vmem:[#allocation2 + $0x48] sm:$0xff] %vm6382, %v6209
    %6393 = vst.msk [vmem:[#allocation2 + $0x50] sm:$0xff] %vm6382, %v6211
    %6394 = vst.msk [vmem:[#allocation2 + $0x58] sm:$0xff] %vm6382, %v6213
    %6395 = vst.msk [vmem:[#allocation2 + $0x60] sm:$0xff] %vm6382, %v6215
    %6396 = vst.msk [vmem:[#allocation2 + $0x68] sm:$0xff] %vm6382, %v6217
    %6397 = vst.msk [vmem:[#allocation2 + $0x70] sm:$0xff] %vm6382, %v6219
    %6398 = vst.msk [vmem:[#allocation2 + $0x78] sm:$0xff] %vm6382, %v6221
    %6399 = vst.msk [vmem:[#allocation2 + $0x80] sm:$0xff] %vm6382, %v6223
    %6400 = vst.msk [vmem:[#allocation2 + $0x88] sm:$0xff] %vm6382, %v6225
    %6401 = vst.msk [vmem:[#allocation2 + $0x90] sm:$0xff] %vm6382, %v6227
    %6402 = vst.msk [vmem:[#allocation2 + $0x98] sm:$0xff] %vm6382, %v6229
    %6403 = vst.msk [vmem:[#allocation2 + $0xa0] sm:$0xff] %vm6382, %v6231
    %6404 = vst.msk [vmem:[#allocation2 + $0xa8] sm:$0xff] %vm6382, %v6233
    %6405 = vst.msk [vmem:[#allocation2 + $0xb0] sm:$0xff] %vm6382, %v6235
    %6406 = vst.msk [vmem:[#allocation2 + $0xb8] sm:$0xff] %vm6382, %v6237
    %6407 = vst.msk [vmem:[#allocation2 + $0xc0] sm:$0xff] %vm6382, %v6239
    %6408 = vst.msk [vmem:[#allocation2 + $0xc8] sm:$0xff] %vm6382, %v6241
    %6409 = vst.msk [vmem:[#allocation2 + $0xd0] sm:$0xff] %vm6382, %v6243
    %6410 = vst.msk [vmem:[#allocation2 + $0xd8] sm:$0xff] %vm6382, %v6245
    %6411 = vst.msk [vmem:[#allocation2 + $0xe0] sm:$0xff] %vm6382, %v6247
    %6412 = vst.msk [vmem:[#allocation2 + $0xe8] sm:$0xff] %vm6382, %v6249
    %6413 = vst.msk [vmem:[#allocation2 + $0xf0] sm:$0xff] %vm6382, %v6251
    %6414 = vst.msk [vmem:[#allocation2 + $0xf8] sm:$0xff] %vm6382, %v6253
    %6415 = vst.msk [vmem:[#allocation2 + $0x100] sm:$0xff] %vm6382, %v6255
    %6416 = vst.msk [vmem:[#allocation2 + $0x108] sm:$0xff] %vm6382, %v6257
    %6417 = vst.msk [vmem:[#allocation2 + $0x110] sm:$0xff] %vm6382, %v6259
    %6418 = vst.msk [vmem:[#allocation2 + $0x118] sm:$0xff] %vm6382, %v6261
    %6419 = vst.msk [vmem:[#allocation2 + $0x120] sm:$0xff] %vm6382, %v6263
    %6420 = vst.msk [vmem:[#allocation2 + $0x128] sm:$0xff] %vm6382, %v6265
    %6421 = vst.msk [vmem:[#allocation2 + $0x130] sm:$0xff] %vm6382, %v6267
    %6422 = vst.msk [vmem:[#allocation2 + $0x138] sm:$0xff] %vm6382, %v6269
    %6423 = vst.msk [vmem:[#allocation2 + $0x140] sm:$0xff] %vm6382, %v6271
    %6424 = vst.msk [vmem:[#allocation2 + $0x148] sm:$0xff] %vm6382, %v6273
    %6425 = vst.msk [vmem:[#allocation2 + $0x150] sm:$0xff] %vm6382, %v6275
    %6426 = vst.msk [vmem:[#allocation2 + $0x158] sm:$0xff] %vm6382, %v6277
    %6427 = vst.msk [vmem:[#allocation2 + $0x160] sm:$0xff] %vm6382, %v6279
    %6428 = vst.msk [vmem:[#allocation2 + $0x168] sm:$0xff] %vm6382, %v6281
    %6429 = vst.msk [vmem:[#allocation2 + $0x170] sm:$0xff] %vm6382, %v6283
    %6430 = vst.msk [vmem:[#allocation2 + $0x178] sm:$0xff] %vm6382, %v6285
    %6431 = vst.msk [vmem:[#allocation2 + $0x180] sm:$0xff] %vm6382, %v6287
    %6432 = vst.msk [vmem:[#allocation2 + $0x188] sm:$0xff] %vm6382, %v6289
    %6433 = vst.msk [vmem:[#allocation2 + $0x190] sm:$0xff] %vm6382, %v6291
    %6434 = vst.msk [vmem:[#allocation2 + $0x198] sm:$0xff] %vm6382, %v6293
    %6435 = vst.msk [vmem:[#allocation2 + $0x1a0] sm:$0xff] %vm6382, %v6295
    %6436 = vst.msk [vmem:[#allocation2 + $0x1a8] sm:$0xff] %vm6382, %v6297
    %6437 = vst.msk [vmem:[#allocation2 + $0x1b0] sm:$0xff] %vm6382, %v6299
    %6438 = vst.msk [vmem:[#allocation2 + $0x1b8] sm:$0xff] %vm6382, %v6301
    %6439 = vst.msk [vmem:[#allocation2 + $0x1c0] sm:$0xff] %vm6382, %v6303
    %6440 = vst.msk [vmem:[#allocation2 + $0x1c8] sm:$0xff] %vm6382, %v6305
    %6441 = vst.msk [vmem:[#allocation2 + $0x1d0] sm:$0xff] %vm6382, %v6307
    %6442 = vst.msk [vmem:[#allocation2 + $0x1d8] sm:$0xff] %vm6382, %v6309
    %6443 = vst.msk [vmem:[#allocation2 + $0x1e0] sm:$0xff] %vm6382, %v6311
    %6444 = vst.msk [vmem:[#allocation2 + $0x1e8] sm:$0xff] %vm6382, %v6313
    %6445 = vst.msk [vmem:[#allocation2 + $0x1f0] sm:$0xff] %vm6382, %v6315
    %6446 = vst.msk [vmem:[#allocation2 + $0x1f8] sm:$0xff] %vm6382, %v6317
    %v6447 = vld [vmem:[%s4327 + $0x1] sm:$0xff]
    %v6448 = vld [vmem:[%s4327 + $0x9] sm:$0xff]
    %v6449 = vld [vmem:[%s4327 + $0x19] sm:$0xff]
    %v6450 = vld [vmem:[%s4327 + $0x21] sm:$0xff]
    %v6451 = vld [vmem:[%s4327 + $0x31] sm:$0xff]
    %v6452 = vld [vmem:[%s4327 + $0x39] sm:$0xff]
    %v6453 = vld [vmem:[%s4327 + $0x49] sm:$0xff]
    %v6454 = vld [vmem:[%s4327 + $0x51] sm:$0xff]
    %v6455 = vld [vmem:[%s4327 + $0x61] sm:$0xff]
    %v6456 = vld [vmem:[%s4327 + $0x69] sm:$0xff]
    %v6457 = vld [vmem:[%s4327 + $0x79] sm:$0xff]
    %v6458 = vld [vmem:[%s4327 + $0x81] sm:$0xff]
    %v6459 = vld [vmem:[%s4327 + $0x91] sm:$0xff]
    %v6460 = vld [vmem:[%s4327 + $0x99] sm:$0xff]
    %v6461 = vld [vmem:[%s4327 + $0xa9] sm:$0xff]
    %v6462 = vld [vmem:[%s4327 + $0xb1] sm:$0xff]
    %v6463 = vld [vmem:[%s4327 + $0xc1] sm:$0xff]
    %v6464 = vld [vmem:[%s4327 + $0xc9] sm:$0xff]
    %v6465 = vld [vmem:[%s4327 + $0xd9] sm:$0xff]
    %v6466 = vld [vmem:[%s4327 + $0xe1] sm:$0xff]
    %v6467 = vld [vmem:[%s4327 + $0xf1] sm:$0xff]
    %v6468 = vld [vmem:[%s4327 + $0xf9] sm:$0xff]
    %v6469 = vld [vmem:[%s4327 + $0x109] sm:$0xff]
    %v6470 = vld [vmem:[%s4327 + $0x111] sm:$0xff]
    %v6471 = vld [vmem:[%s4327 + $0x121] sm:$0xff]
    %v6472 = vld [vmem:[%s4327 + $0x129] sm:$0xff]
    %v6473 = vld [vmem:[%s4327 + $0x139] sm:$0xff]
    %v6474 = vld [vmem:[%s4327 + $0x141] sm:$0xff]
    %v6475 = vld [vmem:[%s4327 + $0x151] sm:$0xff]
    %v6476 = vld [vmem:[%s4327 + $0x159] sm:$0xff]
    %v6477 = vld [vmem:[%s4327 + $0x169] sm:$0xff]
    %v6478 = vld [vmem:[%s4327 + $0x171] sm:$0xff]
    %v6479 = vld [vmem:[%s4327 + $0x1b1] sm:$0xff]
    %v6480 = vld [vmem:[%s4327 + $0x1b9] sm:$0xff]
    %v6481 = vld [vmem:[%s4327 + $0x1c9] sm:$0xff]
    %v6482 = vld [vmem:[%s4327 + $0x1d1] sm:$0xff]
    %v6483 = vld [vmem:[%s4327 + $0x1e1] sm:$0xff]
    %v6484 = vld [vmem:[%s4327 + $0x1e9] sm:$0xff]
    %v6485 = vld [vmem:[%s4327 + $0x1f9] sm:$0xff]
    %v6486 = vld [vmem:[%s4327 + $0x201] sm:$0xff]
    %v6487 = vld [vmem:[%s4327 + $0x211] sm:$0xff]
    %v6488 = vld [vmem:[%s4327 + $0x219] sm:$0xff]
    %v6489 = vld [vmem:[%s4327 + $0x229] sm:$0xff]
    %v6490 = vld [vmem:[%s4327 + $0x231] sm:$0xff]
    %v6491 = vld [vmem:[%s4327 + $0x241] sm:$0xff]
    %v6492 = vld [vmem:[%s4327 + $0x249] sm:$0xff]
    %v6493 = vld [vmem:[%s4327 + $0x259] sm:$0xff]
    %v6494 = vld [vmem:[%s4327 + $0x261] sm:$0xff]
    %v6495 = vld [vmem:[%s4327 + $0x271] sm:$0xff]
    %v6496 = vld [vmem:[%s4327 + $0x279] sm:$0xff]
    %v6497 = vld [vmem:[%s4327 + $0x289] sm:$0xff]
    %v6498 = vld [vmem:[%s4327 + $0x291] sm:$0xff]
    %v6499 = vld [vmem:[%s4327 + $0x2a1] sm:$0xff]
    %v6500 = vld [vmem:[%s4327 + $0x2a9] sm:$0xff]
    %v6501 = vld [vmem:[%s4327 + $0x2b9] sm:$0xff]
    %v6502 = vld [vmem:[%s4327 + $0x2c1] sm:$0xff]
    %v6503 = vld [vmem:[%s4327 + $0x2d1] sm:$0xff]
    %v6504 = vld [vmem:[%s4327 + $0x2d9] sm:$0xff]
    %v6505 = vld [vmem:[%s4327 + $0x2e9] sm:$0xff]
    %v6506 = vld [vmem:[%s4327 + $0x2f1] sm:$0xff]
    %v6507 = vld [vmem:[%s4327 + $0x301] sm:$0xff]
    %v6508 = vld [vmem:[%s4327 + $0x309] sm:$0xff]
    %v6509 = vld [vmem:[%s4327 + $0x319] sm:$0xff]
    %v6510 = vld [vmem:[%s4327 + $0x321] sm:$0xff]
    %6575 = vrot.lane.b32.xlu0 %v6447, 32
    %v6576 = vpop.permute.xlu0 %6575
    %6577 = vrot.lane.b32.xlu0 %v6448, 32
    %v6578 = vpop.permute.xlu0 %6577
    %6579 = vrot.lane.b32.xlu0 %v6449, 32
    %v6580 = vpop.permute.xlu0 %6579
    %6581 = vrot.lane.b32.xlu0 %v6450, 32
    %v6582 = vpop.permute.xlu0 %6581
    %6583 = vrot.lane.b32.xlu0 %v6451, 32
    %v6584 = vpop.permute.xlu0 %6583
    %6585 = vrot.lane.b32.xlu0 %v6452, 32
    %v6586 = vpop.permute.xlu0 %6585
    %6587 = vrot.lane.b32.xlu0 %v6453, 32
    %v6588 = vpop.permute.xlu0 %6587
    %6589 = vrot.lane.b32.xlu0 %v6454, 32
    %v6590 = vpop.permute.xlu0 %6589
    %6591 = vrot.lane.b32.xlu0 %v6455, 32
    %v6592 = vpop.permute.xlu0 %6591
    %6593 = vrot.lane.b32.xlu0 %v6456, 32
    %v6594 = vpop.permute.xlu0 %6593
    %6595 = vrot.lane.b32.xlu0 %v6457, 32
    %v6596 = vpop.permute.xlu0 %6595
    %6597 = vrot.lane.b32.xlu0 %v6458, 32
    %v6598 = vpop.permute.xlu0 %6597
    %6599 = vrot.lane.b32.xlu0 %v6459, 32
    %v6600 = vpop.permute.xlu0 %6599
    %6601 = vrot.lane.b32.xlu0 %v6460, 32
    %v6602 = vpop.permute.xlu0 %6601
    %6603 = vrot.lane.b32.xlu0 %v6461, 32
    %v6604 = vpop.permute.xlu0 %6603
    %6605 = vrot.lane.b32.xlu0 %v6462, 32
    %v6606 = vpop.permute.xlu0 %6605
    %6607 = vrot.lane.b32.xlu0 %v6463, 32
    %v6608 = vpop.permute.xlu0 %6607
    %6609 = vrot.lane.b32.xlu0 %v6464, 32
    %v6610 = vpop.permute.xlu0 %6609
    %6611 = vrot.lane.b32.xlu0 %v6465, 32
    %v6612 = vpop.permute.xlu0 %6611
    %6613 = vrot.lane.b32.xlu0 %v6466, 32
    %v6614 = vpop.permute.xlu0 %6613
    %6615 = vrot.lane.b32.xlu0 %v6467, 32
    %v6616 = vpop.permute.xlu0 %6615
    %6617 = vrot.lane.b32.xlu0 %v6468, 32
    %v6618 = vpop.permute.xlu0 %6617
    %6619 = vrot.lane.b32.xlu0 %v6469, 32
    %v6620 = vpop.permute.xlu0 %6619
    %6621 = vrot.lane.b32.xlu0 %v6470, 32
    %v6622 = vpop.permute.xlu0 %6621
    %6623 = vrot.lane.b32.xlu0 %v6471, 32
    %v6624 = vpop.permute.xlu0 %6623
    %6625 = vrot.lane.b32.xlu0 %v6472, 32
    %v6626 = vpop.permute.xlu0 %6625
    %6627 = vrot.lane.b32.xlu0 %v6473, 32
    %v6628 = vpop.permute.xlu0 %6627
    %6629 = vrot.lane.b32.xlu0 %v6474, 32
    %v6630 = vpop.permute.xlu0 %6629
    %6631 = vrot.lane.b32.xlu0 %v6475, 32
    %v6632 = vpop.permute.xlu0 %6631
    %6633 = vrot.lane.b32.xlu0 %v6476, 32
    %v6634 = vpop.permute.xlu0 %6633
    %6635 = vrot.lane.b32.xlu0 %v6477, 32
    %v6636 = vpop.permute.xlu0 %6635
    %6637 = vrot.lane.b32.xlu0 %v6478, 32
    %v6638 = vpop.permute.xlu0 %6637
    %6639 = vrot.lane.b32.xlu0 %v6479, 32
    %v6640 = vpop.permute.xlu0 %6639
    %6641 = vrot.lane.b32.xlu0 %v6480, 32
    %v6642 = vpop.permute.xlu0 %6641
    %6643 = vrot.lane.b32.xlu0 %v6481, 32
    %v6644 = vpop.permute.xlu0 %6643
    %6645 = vrot.lane.b32.xlu0 %v6482, 32
    %v6646 = vpop.permute.xlu0 %6645
    %6647 = vrot.lane.b32.xlu0 %v6483, 32
    %v6648 = vpop.permute.xlu0 %6647
    %6649 = vrot.lane.b32.xlu0 %v6484, 32
    %v6650 = vpop.permute.xlu0 %6649
    %6651 = vrot.lane.b32.xlu0 %v6485, 32
    %v6652 = vpop.permute.xlu0 %6651
    %6653 = vrot.lane.b32.xlu0 %v6486, 32
    %v6654 = vpop.permute.xlu0 %6653
    %6655 = vrot.lane.b32.xlu0 %v6487, 32
    %v6656 = vpop.permute.xlu0 %6655
    %6657 = vrot.lane.b32.xlu0 %v6488, 32
    %v6658 = vpop.permute.xlu0 %6657
    %6659 = vrot.lane.b32.xlu0 %v6489, 32
    %v6660 = vpop.permute.xlu0 %6659
    %6661 = vrot.lane.b32.xlu0 %v6490, 32
    %v6662 = vpop.permute.xlu0 %6661
    %6663 = vrot.lane.b32.xlu0 %v6491, 32
    %v6664 = vpop.permute.xlu0 %6663
    %6665 = vrot.lane.b32.xlu0 %v6492, 32
    %v6666 = vpop.permute.xlu0 %6665
    %6667 = vrot.lane.b32.xlu0 %v6493, 32
    %v6668 = vpop.permute.xlu0 %6667
    %6669 = vrot.lane.b32.xlu0 %v6494, 32
    %v6670 = vpop.permute.xlu0 %6669
    %6671 = vrot.lane.b32.xlu0 %v6495, 32
    %v6672 = vpop.permute.xlu0 %6671
    %6673 = vrot.lane.b32.xlu0 %v6496, 32
    %v6674 = vpop.permute.xlu0 %6673
    %6675 = vrot.lane.b32.xlu0 %v6497, 32
    %v6676 = vpop.permute.xlu0 %6675
    %6677 = vrot.lane.b32.xlu0 %v6498, 32
    %v6678 = vpop.permute.xlu0 %6677
    %6679 = vrot.lane.b32.xlu0 %v6499, 32
    %v6680 = vpop.permute.xlu0 %6679
    %6681 = vrot.lane.b32.xlu0 %v6500, 32
    %v6682 = vpop.permute.xlu0 %6681
    %6683 = vrot.lane.b32.xlu0 %v6501, 32
    %v6684 = vpop.permute.xlu0 %6683
    %6685 = vrot.lane.b32.xlu0 %v6502, 32
    %v6686 = vpop.permute.xlu0 %6685
    %6687 = vrot.lane.b32.xlu0 %v6503, 32
    %v6688 = vpop.permute.xlu0 %6687
    %6689 = vrot.lane.b32.xlu0 %v6504, 32
    %v6690 = vpop.permute.xlu0 %6689
    %6691 = vrot.lane.b32.xlu0 %v6505, 32
    %v6692 = vpop.permute.xlu0 %6691
    %6693 = vrot.lane.b32.xlu0 %v6506, 32
    %v6694 = vpop.permute.xlu0 %6693
    %6695 = vrot.lane.b32.xlu0 %v6507, 32
    %v6696 = vpop.permute.xlu0 %6695
    %6697 = vrot.lane.b32.xlu0 %v6508, 32
    %v6698 = vpop.permute.xlu0 %6697
    %6699 = vrot.lane.b32.xlu0 %v6509, 32
    %v6700 = vpop.permute.xlu0 %6699
    %6701 = vrot.lane.b32.xlu0 %v6510, 32
    %v6702 = vpop.permute.xlu0 %6701
    %vm6767 = vcmask 326912
    %6768 = vst.msk [vmem:[#allocation2] sm:$0xff] %vm6767, %v6576
    %6769 = vst.msk [vmem:[#allocation2 + $0x8] sm:$0xff] %vm6767, %v6578
    %6770 = vst.msk [vmem:[#allocation2 + $0x10] sm:$0xff] %vm6767, %v6580
    %6771 = vst.msk [vmem:[#allocation2 + $0x18] sm:$0xff] %vm6767, %v6582
    %6772 = vst.msk [vmem:[#allocation2 + $0x20] sm:$0xff] %vm6767, %v6584
    %6773 = vst.msk [vmem:[#allocation2 + $0x28] sm:$0xff] %vm6767, %v6586
    %6774 = vst.msk [vmem:[#allocation2 + $0x30] sm:$0xff] %vm6767, %v6588
    %6775 = vst.msk [vmem:[#allocation2 + $0x38] sm:$0xff] %vm6767, %v6590
    %6776 = vst.msk [vmem:[#allocation2 + $0x40] sm:$0xff] %vm6767, %v6592
    %6777 = vst.msk [vmem:[#allocation2 + $0x48] sm:$0xff] %vm6767, %v6594
    %6778 = vst.msk [vmem:[#allocation2 + $0x50] sm:$0xff] %vm6767, %v6596
    %6779 = vst.msk [vmem:[#allocation2 + $0x58] sm:$0xff] %vm6767, %v6598
    %6780 = vst.msk [vmem:[#allocation2 + $0x60] sm:$0xff] %vm6767, %v6600
    %6781 = vst.msk [vmem:[#allocation2 + $0x68] sm:$0xff] %vm6767, %v6602
    %6782 = vst.msk [vmem:[#allocation2 + $0x70] sm:$0xff] %vm6767, %v6604
    %6783 = vst.msk [vmem:[#allocation2 + $0x78] sm:$0xff] %vm6767, %v6606
    %6784 = vst.msk [vmem:[#allocation2 + $0x80] sm:$0xff] %vm6767, %v6608
    %6785 = vst.msk [vmem:[#allocation2 + $0x88] sm:$0xff] %vm6767, %v6610
    %6786 = vst.msk [vmem:[#allocation2 + $0x90] sm:$0xff] %vm6767, %v6612
    %6787 = vst.msk [vmem:[#allocation2 + $0x98] sm:$0xff] %vm6767, %v6614
    %6788 = vst.msk [vmem:[#allocation2 + $0xa0] sm:$0xff] %vm6767, %v6616
    %6789 = vst.msk [vmem:[#allocation2 + $0xa8] sm:$0xff] %vm6767, %v6618
    %6790 = vst.msk [vmem:[#allocation2 + $0xb0] sm:$0xff] %vm6767, %v6620
    %6791 = vst.msk [vmem:[#allocation2 + $0xb8] sm:$0xff] %vm6767, %v6622
    %6792 = vst.msk [vmem:[#allocation2 + $0xc0] sm:$0xff] %vm6767, %v6624
    %6793 = vst.msk [vmem:[#allocation2 + $0xc8] sm:$0xff] %vm6767, %v6626
    %6794 = vst.msk [vmem:[#allocation2 + $0xd0] sm:$0xff] %vm6767, %v6628
    %6795 = vst.msk [vmem:[#allocation2 + $0xd8] sm:$0xff] %vm6767, %v6630
    %6796 = vst.msk [vmem:[#allocation2 + $0xe0] sm:$0xff] %vm6767, %v6632
    %6797 = vst.msk [vmem:[#allocation2 + $0xe8] sm:$0xff] %vm6767, %v6634
    %6798 = vst.msk [vmem:[#allocation2 + $0xf0] sm:$0xff] %vm6767, %v6636
    %6799 = vst.msk [vmem:[#allocation2 + $0xf8] sm:$0xff] %vm6767, %v6638
    %6800 = vst.msk [vmem:[#allocation2 + $0x100] sm:$0xff] %vm6767, %v6640
    %6801 = vst.msk [vmem:[#allocation2 + $0x108] sm:$0xff] %vm6767, %v6642
    %6802 = vst.msk [vmem:[#allocation2 + $0x110] sm:$0xff] %vm6767, %v6644
    %6803 = vst.msk [vmem:[#allocation2 + $0x118] sm:$0xff] %vm6767, %v6646
    %6804 = vst.msk [vmem:[#allocation2 + $0x120] sm:$0xff] %vm6767, %v6648
    %6805 = vst.msk [vmem:[#allocation2 + $0x128] sm:$0xff] %vm6767, %v6650
    %6806 = vst.msk [vmem:[#allocation2 + $0x130] sm:$0xff] %vm6767, %v6652
    %6807 = vst.msk [vmem:[#allocation2 + $0x138] sm:$0xff] %vm6767, %v6654
    %6808 = vst.msk [vmem:[#allocation2 + $0x140] sm:$0xff] %vm6767, %v6656
    %6809 = vst.msk [vmem:[#allocation2 + $0x148] sm:$0xff] %vm6767, %v6658
    %6810 = vst.msk [vmem:[#allocation2 + $0x150] sm:$0xff] %vm6767, %v6660
    %6811 = vst.msk [vmem:[#allocation2 + $0x158] sm:$0xff] %vm6767, %v6662
    %6812 = vst.msk [vmem:[#allocation2 + $0x160] sm:$0xff] %vm6767, %v6664
    %6813 = vst.msk [vmem:[#allocation2 + $0x168] sm:$0xff] %vm6767, %v6666
    %6814 = vst.msk [vmem:[#allocation2 + $0x170] sm:$0xff] %vm6767, %v6668
    %6815 = vst.msk [vmem:[#allocation2 + $0x178] sm:$0xff] %vm6767, %v6670
    %6816 = vst.msk [vmem:[#allocation2 + $0x180] sm:$0xff] %vm6767, %v6672
    %6817 = vst.msk [vmem:[#allocation2 + $0x188] sm:$0xff] %vm6767, %v6674
    %6818 = vst.msk [vmem:[#allocation2 + $0x190] sm:$0xff] %vm6767, %v6676
    %6819 = vst.msk [vmem:[#allocation2 + $0x198] sm:$0xff] %vm6767, %v6678
    %6820 = vst.msk [vmem:[#allocation2 + $0x1a0] sm:$0xff] %vm6767, %v6680
    %6821 = vst.msk [vmem:[#allocation2 + $0x1a8] sm:$0xff] %vm6767, %v6682
    %6822 = vst.msk [vmem:[#allocation2 + $0x1b0] sm:$0xff] %vm6767, %v6684
    %6823 = vst.msk [vmem:[#allocation2 + $0x1b8] sm:$0xff] %vm6767, %v6686
    %6824 = vst.msk [vmem:[#allocation2 + $0x1c0] sm:$0xff] %vm6767, %v6688
    %6825 = vst.msk [vmem:[#allocation2 + $0x1c8] sm:$0xff] %vm6767, %v6690
    %6826 = vst.msk [vmem:[#allocation2 + $0x1d0] sm:$0xff] %vm6767, %v6692
    %6827 = vst.msk [vmem:[#allocation2 + $0x1d8] sm:$0xff] %vm6767, %v6694
    %6828 = vst.msk [vmem:[#allocation2 + $0x1e0] sm:$0xff] %vm6767, %v6696
    %6829 = vst.msk [vmem:[#allocation2 + $0x1e8] sm:$0xff] %vm6767, %v6698
    %6830 = vst.msk [vmem:[#allocation2 + $0x1f0] sm:$0xff] %vm6767, %v6700
    %6831 = vst.msk [vmem:[#allocation2 + $0x1f8] sm:$0xff] %vm6767, %v6702
    %v6832 = vld [vmem:[%s4327 + $0x2] sm:$0xff]
    %v6833 = vld [vmem:[%s4327 + $0xa] sm:$0xff]
    %v6834 = vld [vmem:[%s4327 + $0x1a] sm:$0xff]
    %v6835 = vld [vmem:[%s4327 + $0x22] sm:$0xff]
    %v6836 = vld [vmem:[%s4327 + $0x32] sm:$0xff]
    %v6837 = vld [vmem:[%s4327 + $0x3a] sm:$0xff]
    %v6838 = vld [vmem:[%s4327 + $0x4a] sm:$0xff]
    %v6839 = vld [vmem:[%s4327 + $0x52] sm:$0xff]
    %v6840 = vld [vmem:[%s4327 + $0x62] sm:$0xff]
    %v6841 = vld [vmem:[%s4327 + $0x6a] sm:$0xff]
    %v6842 = vld [vmem:[%s4327 + $0x7a] sm:$0xff]
    %v6843 = vld [vmem:[%s4327 + $0x82] sm:$0xff]
    %v6844 = vld [vmem:[%s4327 + $0x92] sm:$0xff]
    %v6845 = vld [vmem:[%s4327 + $0x9a] sm:$0xff]
    %v6846 = vld [vmem:[%s4327 + $0xaa] sm:$0xff]
    %v6847 = vld [vmem:[%s4327 + $0xb2] sm:$0xff]
    %v6848 = vld [vmem:[%s4327 + $0xc2] sm:$0xff]
    %v6849 = vld [vmem:[%s4327 + $0xca] sm:$0xff]
    %v6850 = vld [vmem:[%s4327 + $0xda] sm:$0xff]
    %v6851 = vld [vmem:[%s4327 + $0xe2] sm:$0xff]
    %v6852 = vld [vmem:[%s4327 + $0xf2] sm:$0xff]
    %v6853 = vld [vmem:[%s4327 + $0xfa] sm:$0xff]
    %v6854 = vld [vmem:[%s4327 + $0x10a] sm:$0xff]
    %v6855 = vld [vmem:[%s4327 + $0x112] sm:$0xff]
    %v6856 = vld [vmem:[%s4327 + $0x122] sm:$0xff]
    %v6857 = vld [vmem:[%s4327 + $0x12a] sm:$0xff]
    %v6858 = vld [vmem:[%s4327 + $0x13a] sm:$0xff]
    %v6859 = vld [vmem:[%s4327 + $0x142] sm:$0xff]
    %v6860 = vld [vmem:[%s4327 + $0x152] sm:$0xff]
    %v6861 = vld [vmem:[%s4327 + $0x15a] sm:$0xff]
    %v6862 = vld [vmem:[%s4327 + $0x16a] sm:$0xff]
    %v6863 = vld [vmem:[%s4327 + $0x172] sm:$0xff]
    %v6864 = vld [vmem:[%s4327 + $0x1b2] sm:$0xff]
    %v6865 = vld [vmem:[%s4327 + $0x1ba] sm:$0xff]
    %v6866 = vld [vmem:[%s4327 + $0x1ca] sm:$0xff]
    %v6867 = vld [vmem:[%s4327 + $0x1d2] sm:$0xff]
    %v6868 = vld [vmem:[%s4327 + $0x1e2] sm:$0xff]
    %v6869 = vld [vmem:[%s4327 + $0x1ea] sm:$0xff]
    %v6870 = vld [vmem:[%s4327 + $0x1fa] sm:$0xff]
    %v6871 = vld [vmem:[%s4327 + $0x202] sm:$0xff]
    %v6872 = vld [vmem:[%s4327 + $0x212] sm:$0xff]
    %v6873 = vld [vmem:[%s4327 + $0x21a] sm:$0xff]
    %v6874 = vld [vmem:[%s4327 + $0x22a] sm:$0xff]
    %v6875 = vld [vmem:[%s4327 + $0x232] sm:$0xff]
    %v6876 = vld [vmem:[%s4327 + $0x242] sm:$0xff]
    %v6877 = vld [vmem:[%s4327 + $0x24a] sm:$0xff]
    %v6878 = vld [vmem:[%s4327 + $0x25a] sm:$0xff]
    %v6879 = vld [vmem:[%s4327 + $0x262] sm:$0xff]
    %v6880 = vld [vmem:[%s4327 + $0x272] sm:$0xff]
    %v6881 = vld [vmem:[%s4327 + $0x27a] sm:$0xff]
    %v6882 = vld [vmem:[%s4327 + $0x28a] sm:$0xff]
    %v6883 = vld [vmem:[%s4327 + $0x292] sm:$0xff]
    %v6884 = vld [vmem:[%s4327 + $0x2a2] sm:$0xff]
    %v6885 = vld [vmem:[%s4327 + $0x2aa] sm:$0xff]
    %v6886 = vld [vmem:[%s4327 + $0x2ba] sm:$0xff]
    %v6887 = vld [vmem:[%s4327 + $0x2c2] sm:$0xff]
    %v6888 = vld [vmem:[%s4327 + $0x2d2] sm:$0xff]
    %v6889 = vld [vmem:[%s4327 + $0x2da] sm:$0xff]
    %v6890 = vld [vmem:[%s4327 + $0x2ea] sm:$0xff]
    %v6891 = vld [vmem:[%s4327 + $0x2f2] sm:$0xff]
    %v6892 = vld [vmem:[%s4327 + $0x302] sm:$0xff]
    %v6893 = vld [vmem:[%s4327 + $0x30a] sm:$0xff]
    %v6894 = vld [vmem:[%s4327 + $0x31a] sm:$0xff]
    %v6895 = vld [vmem:[%s4327 + $0x322] sm:$0xff]
    %6960 = vrot.lane.b32.xlu0 %v6832, 40
    %v6961 = vpop.permute.xlu0 %6960
    %6962 = vrot.lane.b32.xlu0 %v6833, 40
    %v6963 = vpop.permute.xlu0 %6962
    %6964 = vrot.lane.b32.xlu0 %v6834, 40
    %v6965 = vpop.permute.xlu0 %6964
    %6966 = vrot.lane.b32.xlu0 %v6835, 40
    %v6967 = vpop.permute.xlu0 %6966
    %6968 = vrot.lane.b32.xlu0 %v6836, 40
    %v6969 = vpop.permute.xlu0 %6968
    %6970 = vrot.lane.b32.xlu0 %v6837, 40
    %v6971 = vpop.permute.xlu0 %6970
    %6972 = vrot.lane.b32.xlu0 %v6838, 40
    %v6973 = vpop.permute.xlu0 %6972
    %6974 = vrot.lane.b32.xlu0 %v6839, 40
    %v6975 = vpop.permute.xlu0 %6974
    %6976 = vrot.lane.b32.xlu0 %v6840, 40
    %v6977 = vpop.permute.xlu0 %6976
    %6978 = vrot.lane.b32.xlu0 %v6841, 40
    %v6979 = vpop.permute.xlu0 %6978
    %6980 = vrot.lane.b32.xlu0 %v6842, 40
    %v6981 = vpop.permute.xlu0 %6980
    %6982 = vrot.lane.b32.xlu0 %v6843, 40
    %v6983 = vpop.permute.xlu0 %6982
    %6984 = vrot.lane.b32.xlu0 %v6844, 40
    %v6985 = vpop.permute.xlu0 %6984
    %6986 = vrot.lane.b32.xlu0 %v6845, 40
    %v6987 = vpop.permute.xlu0 %6986
    %6988 = vrot.lane.b32.xlu0 %v6846, 40
    %v6989 = vpop.permute.xlu0 %6988
    %6990 = vrot.lane.b32.xlu0 %v6847, 40
    %v6991 = vpop.permute.xlu0 %6990
    %6992 = vrot.lane.b32.xlu0 %v6848, 40
    %v6993 = vpop.permute.xlu0 %6992
    %6994 = vrot.lane.b32.xlu0 %v6849, 40
    %v6995 = vpop.permute.xlu0 %6994
    %6996 = vrot.lane.b32.xlu0 %v6850, 40
    %v6997 = vpop.permute.xlu0 %6996
    %6998 = vrot.lane.b32.xlu0 %v6851, 40
    %v6999 = vpop.permute.xlu0 %6998
    %7000 = vrot.lane.b32.xlu0 %v6852, 40
    %v7001 = vpop.permute.xlu0 %7000
    %7002 = vrot.lane.b32.xlu0 %v6853, 40
    %v7003 = vpop.permute.xlu0 %7002
    %7004 = vrot.lane.b32.xlu0 %v6854, 40
    %v7005 = vpop.permute.xlu0 %7004
    %7006 = vrot.lane.b32.xlu0 %v6855, 40
    %v7007 = vpop.permute.xlu0 %7006
    %7008 = vrot.lane.b32.xlu0 %v6856, 40
    %v7009 = vpop.permute.xlu0 %7008
    %7010 = vrot.lane.b32.xlu0 %v6857, 40
    %v7011 = vpop.permute.xlu0 %7010
    %7012 = vrot.lane.b32.xlu0 %v6858, 40
    %v7013 = vpop.permute.xlu0 %7012
    %7014 = vrot.lane.b32.xlu0 %v6859, 40
    %v7015 = vpop.permute.xlu0 %7014
    %7016 = vrot.lane.b32.xlu0 %v6860, 40
    %v7017 = vpop.permute.xlu0 %7016
    %7018 = vrot.lane.b32.xlu0 %v6861, 40
    %v7019 = vpop.permute.xlu0 %7018
    %7020 = vrot.lane.b32.xlu0 %v6862, 40
    %v7021 = vpop.permute.xlu0 %7020
    %7022 = vrot.lane.b32.xlu0 %v6863, 40
    %v7023 = vpop.permute.xlu0 %7022
    %7024 = vrot.lane.b32.xlu0 %v6864, 40
    %v7025 = vpop.permute.xlu0 %7024
    %7026 = vrot.lane.b32.xlu0 %v6865, 40
    %v7027 = vpop.permute.xlu0 %7026
    %7028 = vrot.lane.b32.xlu0 %v6866, 40
    %v7029 = vpop.permute.xlu0 %7028
    %7030 = vrot.lane.b32.xlu0 %v6867, 40
    %v7031 = vpop.permute.xlu0 %7030
    %7032 = vrot.lane.b32.xlu0 %v6868, 40
    %v7033 = vpop.permute.xlu0 %7032
    %7034 = vrot.lane.b32.xlu0 %v6869, 40
    %v7035 = vpop.permute.xlu0 %7034
    %7036 = vrot.lane.b32.xlu0 %v6870, 40
    %v7037 = vpop.permute.xlu0 %7036
    %7038 = vrot.lane.b32.xlu0 %v6871, 40
    %v7039 = vpop.permute.xlu0 %7038
    %7040 = vrot.lane.b32.xlu0 %v6872, 40
    %v7041 = vpop.permute.xlu0 %7040
    %7042 = vrot.lane.b32.xlu0 %v6873, 40
    %v7043 = vpop.permute.xlu0 %7042
    %7044 = vrot.lane.b32.xlu0 %v6874, 40
    %v7045 = vpop.permute.xlu0 %7044
    %7046 = vrot.lane.b32.xlu0 %v6875, 40
    %v7047 = vpop.permute.xlu0 %7046
    %7048 = vrot.lane.b32.xlu0 %v6876, 40
    %v7049 = vpop.permute.xlu0 %7048
    %7050 = vrot.lane.b32.xlu0 %v6877, 40
    %v7051 = vpop.permute.xlu0 %7050
    %7052 = vrot.lane.b32.xlu0 %v6878, 40
    %v7053 = vpop.permute.xlu0 %7052
    %7054 = vrot.lane.b32.xlu0 %v6879, 40
    %v7055 = vpop.permute.xlu0 %7054
    %7056 = vrot.lane.b32.xlu0 %v6880, 40
    %v7057 = vpop.permute.xlu0 %7056
    %7058 = vrot.lane.b32.xlu0 %v6881, 40
    %v7059 = vpop.permute.xlu0 %7058
    %7060 = vrot.lane.b32.xlu0 %v6882, 40
    %v7061 = vpop.permute.xlu0 %7060
    %7062 = vrot.lane.b32.xlu0 %v6883, 40
    %v7063 = vpop.permute.xlu0 %7062
    %7064 = vrot.lane.b32.xlu0 %v6884, 40
    %v7065 = vpop.permute.xlu0 %7064
    %7066 = vrot.lane.b32.xlu0 %v6885, 40
    %v7067 = vpop.permute.xlu0 %7066
    %7068 = vrot.lane.b32.xlu0 %v6886, 40
    %v7069 = vpop.permute.xlu0 %7068
    %7070 = vrot.lane.b32.xlu0 %v6887, 40
    %v7071 = vpop.permute.xlu0 %7070
    %7072 = vrot.lane.b32.xlu0 %v6888, 40
    %v7073 = vpop.permute.xlu0 %7072
    %7074 = vrot.lane.b32.xlu0 %v6889, 40
    %v7075 = vpop.permute.xlu0 %7074
    %7076 = vrot.lane.b32.xlu0 %v6890, 40
    %v7077 = vpop.permute.xlu0 %7076
    %7078 = vrot.lane.b32.xlu0 %v6891, 40
    %v7079 = vpop.permute.xlu0 %7078
    %7080 = vrot.lane.b32.xlu0 %v6892, 40
    %v7081 = vpop.permute.xlu0 %7080
    %7082 = vrot.lane.b32.xlu0 %v6893, 40
    %v7083 = vpop.permute.xlu0 %7082
    %7084 = vrot.lane.b32.xlu0 %v6894, 40
    %v7085 = vpop.permute.xlu0 %7084
    %7086 = vrot.lane.b32.xlu0 %v6895, 40
    %v7087 = vpop.permute.xlu0 %7086
    %vm7152 = vcmask 392512
    %7153 = vst.msk [vmem:[#allocation2] sm:$0xff] %vm7152, %v6961
    %7154 = vst.msk [vmem:[#allocation2 + $0x8] sm:$0xff] %vm7152, %v6963
    %7155 = vst.msk [vmem:[#allocation2 + $0x10] sm:$0xff] %vm7152, %v6965
    %7156 = vst.msk [vmem:[#allocation2 + $0x18] sm:$0xff] %vm7152, %v6967
    %7157 = vst.msk [vmem:[#allocation2 + $0x20] sm:$0xff] %vm7152, %v6969
    %7158 = vst.msk [vmem:[#allocation2 + $0x28] sm:$0xff] %vm7152, %v6971
    %7159 = vst.msk [vmem:[#allocation2 + $0x30] sm:$0xff] %vm7152, %v6973
    %7160 = vst.msk [vmem:[#allocation2 + $0x38] sm:$0xff] %vm7152, %v6975
    %7161 = vst.msk [vmem:[#allocation2 + $0x40] sm:$0xff] %vm7152, %v6977
    %7162 = vst.msk [vmem:[#allocation2 + $0x48] sm:$0xff] %vm7152, %v6979
    %7163 = vst.msk [vmem:[#allocation2 + $0x50] sm:$0xff] %vm7152, %v6981
    %7164 = vst.msk [vmem:[#allocation2 + $0x58] sm:$0xff] %vm7152, %v6983
    %7165 = vst.msk [vmem:[#allocation2 + $0x60] sm:$0xff] %vm7152, %v6985
    %7166 = vst.msk [vmem:[#allocation2 + $0x68] sm:$0xff] %vm7152, %v6987
    %7167 = vst.msk [vmem:[#allocation2 + $0x70] sm:$0xff] %vm7152, %v6989
    %7168 = vst.msk [vmem:[#allocation2 + $0x78] sm:$0xff] %vm7152, %v6991
    %7169 = vst.msk [vmem:[#allocation2 + $0x80] sm:$0xff] %vm7152, %v6993
    %7170 = vst.msk [vmem:[#allocation2 + $0x88] sm:$0xff] %vm7152, %v6995
    %7171 = vst.msk [vmem:[#allocation2 + $0x90] sm:$0xff] %vm7152, %v6997
    %7172 = vst.msk [vmem:[#allocation2 + $0x98] sm:$0xff] %vm7152, %v6999
    %7173 = vst.msk [vmem:[#allocation2 + $0xa0] sm:$0xff] %vm7152, %v7001
    %7174 = vst.msk [vmem:[#allocation2 + $0xa8] sm:$0xff] %vm7152, %v7003
    %7175 = vst.msk [vmem:[#allocation2 + $0xb0] sm:$0xff] %vm7152, %v7005
    %7176 = vst.msk [vmem:[#allocation2 + $0xb8] sm:$0xff] %vm7152, %v7007
    %7177 = vst.msk [vmem:[#allocation2 + $0xc0] sm:$0xff] %vm7152, %v7009
    %7178 = vst.msk [vmem:[#allocation2 + $0xc8] sm:$0xff] %vm7152, %v7011
    %7179 = vst.msk [vmem:[#allocation2 + $0xd0] sm:$0xff] %vm7152, %v7013
    %7180 = vst.msk [vmem:[#allocation2 + $0xd8] sm:$0xff] %vm7152, %v7015
    %7181 = vst.msk [vmem:[#allocation2 + $0xe0] sm:$0xff] %vm7152, %v7017
    %7182 = vst.msk [vmem:[#allocation2 + $0xe8] sm:$0xff] %vm7152, %v7019
    %7183 = vst.msk [vmem:[#allocation2 + $0xf0] sm:$0xff] %vm7152, %v7021
    %7184 = vst.msk [vmem:[#allocation2 + $0xf8] sm:$0xff] %vm7152, %v7023
    %7185 = vst.msk [vmem:[#allocation2 + $0x100] sm:$0xff] %vm7152, %v7025
    %7186 = vst.msk [vmem:[#allocation2 + $0x108] sm:$0xff] %vm7152, %v7027
    %7187 = vst.msk [vmem:[#allocation2 + $0x110] sm:$0xff] %vm7152, %v7029
    %7188 = vst.msk [vmem:[#allocation2 + $0x118] sm:$0xff] %vm7152, %v7031
    %7189 = vst.msk [vmem:[#allocation2 + $0x120] sm:$0xff] %vm7152, %v7033
    %7190 = vst.msk [vmem:[#allocation2 + $0x128] sm:$0xff] %vm7152, %v7035
    %7191 = vst.msk [vmem:[#allocation2 + $0x130] sm:$0xff] %vm7152, %v7037
    %7192 = vst.msk [vmem:[#allocation2 + $0x138] sm:$0xff] %vm7152, %v7039
    %7193 = vst.msk [vmem:[#allocation2 + $0x140] sm:$0xff] %vm7152, %v7041
    %7194 = vst.msk [vmem:[#allocation2 + $0x148] sm:$0xff] %vm7152, %v7043
    %7195 = vst.msk [vmem:[#allocation2 + $0x150] sm:$0xff] %vm7152, %v7045
    %7196 = vst.msk [vmem:[#allocation2 + $0x158] sm:$0xff] %vm7152, %v7047
    %7197 = vst.msk [vmem:[#allocation2 + $0x160] sm:$0xff] %vm7152, %v7049
    %7198 = vst.msk [vmem:[#allocation2 + $0x168] sm:$0xff] %vm7152, %v7051
    %7199 = vst.msk [vmem:[#allocation2 + $0x170] sm:$0xff] %vm7152, %v7053
    %7200 = vst.msk [vmem:[#allocation2 + $0x178] sm:$0xff] %vm7152, %v7055
    %7201 = vst.msk [vmem:[#allocation2 + $0x180] sm:$0xff] %vm7152, %v7057
    %7202 = vst.msk [vmem:[#allocation2 + $0x188] sm:$0xff] %vm7152, %v7059
    %7203 = vst.msk [vmem:[#allocation2 + $0x190] sm:$0xff] %vm7152, %v7061
    %7204 = vst.msk [vmem:[#allocation2 + $0x198] sm:$0xff] %vm7152, %v7063
    %7205 = vst.msk [vmem:[#allocation2 + $0x1a0] sm:$0xff] %vm7152, %v7065
    %7206 = vst.msk [vmem:[#allocation2 + $0x1a8] sm:$0xff] %vm7152, %v7067
    %7207 = vst.msk [vmem:[#allocation2 + $0x1b0] sm:$0xff] %vm7152, %v7069
    %7208 = vst.msk [vmem:[#allocation2 + $0x1b8] sm:$0xff] %vm7152, %v7071
    %7209 = vst.msk [vmem:[#allocation2 + $0x1c0] sm:$0xff] %vm7152, %v7073
    %7210 = vst.msk [vmem:[#allocation2 + $0x1c8] sm:$0xff] %vm7152, %v7075
    %7211 = vst.msk [vmem:[#allocation2 + $0x1d0] sm:$0xff] %vm7152, %v7077
    %7212 = vst.msk [vmem:[#allocation2 + $0x1d8] sm:$0xff] %vm7152, %v7079
    %7213 = vst.msk [vmem:[#allocation2 + $0x1e0] sm:$0xff] %vm7152, %v7081
    %7214 = vst.msk [vmem:[#allocation2 + $0x1e8] sm:$0xff] %vm7152, %v7083
    %7215 = vst.msk [vmem:[#allocation2 + $0x1f0] sm:$0xff] %vm7152, %v7085
    %7216 = vst.msk [vmem:[#allocation2 + $0x1f8] sm:$0xff] %vm7152, %v7087
    %s7217 = scalar_lea.vmem [#allocation3], 48
    %v7218 = vld [vmem:[%s7217] sm:$0xff]
    %v7219 = vld [vmem:[%s7217 + $0x8] sm:$0xff]
    %v7220 = vld [vmem:[%s7217 + $0x18] sm:$0xff]
    %v7221 = vld [vmem:[%s7217 + $0x20] sm:$0xff]
    %v7222 = vld [vmem:[%s7217 + $0x30] sm:$0xff]
    %v7223 = vld [vmem:[%s7217 + $0x38] sm:$0xff]
    %v7224 = vld [vmem:[%s7217 + $0x48] sm:$0xff]
    %v7225 = vld [vmem:[%s7217 + $0x50] sm:$0xff]
    %v7226 = vld [vmem:[%s7217 + $0x60] sm:$0xff]
    %v7227 = vld [vmem:[%s7217 + $0x68] sm:$0xff]
    %v7228 = vld [vmem:[%s7217 + $0x78] sm:$0xff]
    %v7229 = vld [vmem:[%s7217 + $0x80] sm:$0xff]
    %v7230 = vld [vmem:[%s7217 + $0x90] sm:$0xff]
    %v7231 = vld [vmem:[%s7217 + $0x98] sm:$0xff]
    %v7232 = vld [vmem:[%s7217 + $0xa8] sm:$0xff]
    %v7233 = vld [vmem:[%s7217 + $0xb0] sm:$0xff]
    %v7234 = vld [vmem:[%s7217 + $0xc0] sm:$0xff]
    %v7235 = vld [vmem:[%s7217 + $0xc8] sm:$0xff]
    %v7236 = vld [vmem:[%s7217 + $0xd8] sm:$0xff]
    %v7237 = vld [vmem:[%s7217 + $0xe0] sm:$0xff]
    %v7238 = vld [vmem:[%s7217 + $0xf0] sm:$0xff]
    %v7239 = vld [vmem:[%s7217 + $0xf8] sm:$0xff]
    %v7240 = vld [vmem:[%s7217 + $0x108] sm:$0xff]
    %v7241 = vld [vmem:[%s7217 + $0x110] sm:$0xff]
    %v7242 = vld [vmem:[%s7217 + $0x120] sm:$0xff]
    %v7243 = vld [vmem:[%s7217 + $0x128] sm:$0xff]
    %v7244 = vld [vmem:[%s7217 + $0x138] sm:$0xff]
    %v7245 = vld [vmem:[%s7217 + $0x140] sm:$0xff]
    %v7246 = vld [vmem:[%s7217 + $0x150] sm:$0xff]
    %v7247 = vld [vmem:[%s7217 + $0x158] sm:$0xff]
    %v7248 = vld [vmem:[%s7217 + $0x168] sm:$0xff]
    %v7249 = vld [vmem:[%s7217 + $0x170] sm:$0xff]
    %v7250 = vld [vmem:[%s7217 + $0x1b0] sm:$0xff]
    %v7251 = vld [vmem:[%s7217 + $0x1b8] sm:$0xff]
    %v7252 = vld [vmem:[%s7217 + $0x1c8] sm:$0xff]
    %v7253 = vld [vmem:[%s7217 + $0x1d0] sm:$0xff]
    %v7254 = vld [vmem:[%s7217 + $0x1e0] sm:$0xff]
    %v7255 = vld [vmem:[%s7217 + $0x1e8] sm:$0xff]
    %v7256 = vld [vmem:[%s7217 + $0x1f8] sm:$0xff]
    %v7257 = vld [vmem:[%s7217 + $0x200] sm:$0xff]
    %v7258 = vld [vmem:[%s7217 + $0x210] sm:$0xff]
    %v7259 = vld [vmem:[%s7217 + $0x218] sm:$0xff]
    %v7260 = vld [vmem:[%s7217 + $0x228] sm:$0xff]
    %v7261 = vld [vmem:[%s7217 + $0x230] sm:$0xff]
    %v7262 = vld [vmem:[%s7217 + $0x240] sm:$0xff]
    %v7263 = vld [vmem:[%s7217 + $0x248] sm:$0xff]
    %v7264 = vld [vmem:[%s7217 + $0x258] sm:$0xff]
    %v7265 = vld [vmem:[%s7217 + $0x260] sm:$0xff]
    %v7266 = vld [vmem:[%s7217 + $0x270] sm:$0xff]
    %v7267 = vld [vmem:[%s7217 + $0x278] sm:$0xff]
    %v7268 = vld [vmem:[%s7217 + $0x288] sm:$0xff]
    %v7269 = vld [vmem:[%s7217 + $0x290] sm:$0xff]
    %v7270 = vld [vmem:[%s7217 + $0x2a0] sm:$0xff]
    %v7271 = vld [vmem:[%s7217 + $0x2a8] sm:$0xff]
    %v7272 = vld [vmem:[%s7217 + $0x2b8] sm:$0xff]
    %v7273 = vld [vmem:[%s7217 + $0x2c0] sm:$0xff]
    %v7274 = vld [vmem:[%s7217 + $0x2d0] sm:$0xff]
    %v7275 = vld [vmem:[%s7217 + $0x2d8] sm:$0xff]
    %v7276 = vld [vmem:[%s7217 + $0x2e8] sm:$0xff]
    %v7277 = vld [vmem:[%s7217 + $0x2f0] sm:$0xff]
    %v7278 = vld [vmem:[%s7217 + $0x300] sm:$0xff]
    %v7279 = vld [vmem:[%s7217 + $0x308] sm:$0xff]
    %v7280 = vld [vmem:[%s7217 + $0x318] sm:$0xff]
    %v7281 = vld [vmem:[%s7217 + $0x320] sm:$0xff]
    %7346 = vrot.lane.b32.xlu0 %v7218, 48
    %v7347 = vpop.permute.xlu0 %7346
    %7348 = vrot.lane.b32.xlu0 %v7219, 48
    %v7349 = vpop.permute.xlu0 %7348
    %7350 = vrot.lane.b32.xlu0 %v7220, 48
    %v7351 = vpop.permute.xlu0 %7350
    %7352 = vrot.lane.b32.xlu0 %v7221, 48
    %v7353 = vpop.permute.xlu0 %7352
    %7354 = vrot.lane.b32.xlu0 %v7222, 48
    %v7355 = vpop.permute.xlu0 %7354
    %7356 = vrot.lane.b32.xlu0 %v7223, 48
    %v7357 = vpop.permute.xlu0 %7356
    %7358 = vrot.lane.b32.xlu0 %v7224, 48
    %v7359 = vpop.permute.xlu0 %7358
    %7360 = vrot.lane.b32.xlu0 %v7225, 48
    %v7361 = vpop.permute.xlu0 %7360
    %7362 = vrot.lane.b32.xlu0 %v7226, 48
    %v7363 = vpop.permute.xlu0 %7362
    %7364 = vrot.lane.b32.xlu0 %v7227, 48
    %v7365 = vpop.permute.xlu0 %7364
    %7366 = vrot.lane.b32.xlu0 %v7228, 48
    %v7367 = vpop.permute.xlu0 %7366
    %7368 = vrot.lane.b32.xlu0 %v7229, 48
    %v7369 = vpop.permute.xlu0 %7368
    %7370 = vrot.lane.b32.xlu0 %v7230, 48
    %v7371 = vpop.permute.xlu0 %7370
    %7372 = vrot.lane.b32.xlu0 %v7231, 48
    %v7373 = vpop.permute.xlu0 %7372
    %7374 = vrot.lane.b32.xlu0 %v7232, 48
    %v7375 = vpop.permute.xlu0 %7374
    %7376 = vrot.lane.b32.xlu0 %v7233, 48
    %v7377 = vpop.permute.xlu0 %7376
    %7378 = vrot.lane.b32.xlu0 %v7234, 48
    %v7379 = vpop.permute.xlu0 %7378
    %7380 = vrot.lane.b32.xlu0 %v7235, 48
    %v7381 = vpop.permute.xlu0 %7380
    %7382 = vrot.lane.b32.xlu0 %v7236, 48
    %v7383 = vpop.permute.xlu0 %7382
    %7384 = vrot.lane.b32.xlu0 %v7237, 48
    %v7385 = vpop.permute.xlu0 %7384
    %7386 = vrot.lane.b32.xlu0 %v7238, 48
    %v7387 = vpop.permute.xlu0 %7386
    %7388 = vrot.lane.b32.xlu0 %v7239, 48
    %v7389 = vpop.permute.xlu0 %7388
    %7390 = vrot.lane.b32.xlu0 %v7240, 48
    %v7391 = vpop.permute.xlu0 %7390
    %7392 = vrot.lane.b32.xlu0 %v7241, 48
    %v7393 = vpop.permute.xlu0 %7392
    %7394 = vrot.lane.b32.xlu0 %v7242, 48
    %v7395 = vpop.permute.xlu0 %7394
    %7396 = vrot.lane.b32.xlu0 %v7243, 48
    %v7397 = vpop.permute.xlu0 %7396
    %7398 = vrot.lane.b32.xlu0 %v7244, 48
    %v7399 = vpop.permute.xlu0 %7398
    %7400 = vrot.lane.b32.xlu0 %v7245, 48
    %v7401 = vpop.permute.xlu0 %7400
    %7402 = vrot.lane.b32.xlu0 %v7246, 48
    %v7403 = vpop.permute.xlu0 %7402
    %7404 = vrot.lane.b32.xlu0 %v7247, 48
    %v7405 = vpop.permute.xlu0 %7404
    %7406 = vrot.lane.b32.xlu0 %v7248, 48
    %v7407 = vpop.permute.xlu0 %7406
    %7408 = vrot.lane.b32.xlu0 %v7249, 48
    %v7409 = vpop.permute.xlu0 %7408
    %7410 = vrot.lane.b32.xlu0 %v7250, 48
    %v7411 = vpop.permute.xlu0 %7410
    %7412 = vrot.lane.b32.xlu0 %v7251, 48
    %v7413 = vpop.permute.xlu0 %7412
    %7414 = vrot.lane.b32.xlu0 %v7252, 48
    %v7415 = vpop.permute.xlu0 %7414
    %7416 = vrot.lane.b32.xlu0 %v7253, 48
    %v7417 = vpop.permute.xlu0 %7416
    %7418 = vrot.lane.b32.xlu0 %v7254, 48
    %v7419 = vpop.permute.xlu0 %7418
    %7420 = vrot.lane.b32.xlu0 %v7255, 48
    %v7421 = vpop.permute.xlu0 %7420
    %7422 = vrot.lane.b32.xlu0 %v7256, 48
    %v7423 = vpop.permute.xlu0 %7422
    %7424 = vrot.lane.b32.xlu0 %v7257, 48
    %v7425 = vpop.permute.xlu0 %7424
    %7426 = vrot.lane.b32.xlu0 %v7258, 48
    %v7427 = vpop.permute.xlu0 %7426
    %7428 = vrot.lane.b32.xlu0 %v7259, 48
    %v7429 = vpop.permute.xlu0 %7428
    %7430 = vrot.lane.b32.xlu0 %v7260, 48
    %v7431 = vpop.permute.xlu0 %7430
    %7432 = vrot.lane.b32.xlu0 %v7261, 48
    %v7433 = vpop.permute.xlu0 %7432
    %7434 = vrot.lane.b32.xlu0 %v7262, 48
    %v7435 = vpop.permute.xlu0 %7434
    %7436 = vrot.lane.b32.xlu0 %v7263, 48
    %v7437 = vpop.permute.xlu0 %7436
    %7438 = vrot.lane.b32.xlu0 %v7264, 48
    %v7439 = vpop.permute.xlu0 %7438
    %7440 = vrot.lane.b32.xlu0 %v7265, 48
    %v7441 = vpop.permute.xlu0 %7440
    %7442 = vrot.lane.b32.xlu0 %v7266, 48
    %v7443 = vpop.permute.xlu0 %7442
    %7444 = vrot.lane.b32.xlu0 %v7267, 48
    %v7445 = vpop.permute.xlu0 %7444
    %7446 = vrot.lane.b32.xlu0 %v7268, 48
    %v7447 = vpop.permute.xlu0 %7446
    %7448 = vrot.lane.b32.xlu0 %v7269, 48
    %v7449 = vpop.permute.xlu0 %7448
    %7450 = vrot.lane.b32.xlu0 %v7270, 48
    %v7451 = vpop.permute.xlu0 %7450
    %7452 = vrot.lane.b32.xlu0 %v7271, 48
    %v7453 = vpop.permute.xlu0 %7452
    %7454 = vrot.lane.b32.xlu0 %v7272, 48
    %v7455 = vpop.permute.xlu0 %7454
    %7456 = vrot.lane.b32.xlu0 %v7273, 48
    %v7457 = vpop.permute.xlu0 %7456
    %7458 = vrot.lane.b32.xlu0 %v7274, 48
    %v7459 = vpop.permute.xlu0 %7458
    %7460 = vrot.lane.b32.xlu0 %v7275, 48
    %v7461 = vpop.permute.xlu0 %7460
    %7462 = vrot.lane.b32.xlu0 %v7276, 48
    %v7463 = vpop.permute.xlu0 %7462
    %7464 = vrot.lane.b32.xlu0 %v7277, 48
    %v7465 = vpop.permute.xlu0 %7464
    %7466 = vrot.lane.b32.xlu0 %v7278, 48
    %v7467 = vpop.permute.xlu0 %7466
    %7468 = vrot.lane.b32.xlu0 %v7279, 48
    %v7469 = vpop.permute.xlu0 %7468
    %7470 = vrot.lane.b32.xlu0 %v7280, 48
    %v7471 = vpop.permute.xlu0 %7470
    %7472 = vrot.lane.b32.xlu0 %v7281, 48
    %v7473 = vpop.permute.xlu0 %7472
    %vm7538 = vcmask 458112
    %7539 = vst.msk [vmem:[#allocation2] sm:$0xff] %vm7538, %v7347
    %7540 = vst.msk [vmem:[#allocation2 + $0x8] sm:$0xff] %vm7538, %v7349
    %7541 = vst.msk [vmem:[#allocation2 + $0x10] sm:$0xff] %vm7538, %v7351
    %7542 = vst.msk [vmem:[#allocation2 + $0x18] sm:$0xff] %vm7538, %v7353
    %7543 = vst.msk [vmem:[#allocation2 + $0x20] sm:$0xff] %vm7538, %v7355
    %7544 = vst.msk [vmem:[#allocation2 + $0x28] sm:$0xff] %vm7538, %v7357
    %7545 = vst.msk [vmem:[#allocation2 + $0x30] sm:$0xff] %vm7538, %v7359
    %7546 = vst.msk [vmem:[#allocation2 + $0x38] sm:$0xff] %vm7538, %v7361
    %7547 = vst.msk [vmem:[#allocation2 + $0x40] sm:$0xff] %vm7538, %v7363
    %7548 = vst.msk [vmem:[#allocation2 + $0x48] sm:$0xff] %vm7538, %v7365
    %7549 = vst.msk [vmem:[#allocation2 + $0x50] sm:$0xff] %vm7538, %v7367
    %7550 = vst.msk [vmem:[#allocation2 + $0x58] sm:$0xff] %vm7538, %v7369
    %7551 = vst.msk [vmem:[#allocation2 + $0x60] sm:$0xff] %vm7538, %v7371
    %7552 = vst.msk [vmem:[#allocation2 + $0x68] sm:$0xff] %vm7538, %v7373
    %7553 = vst.msk [vmem:[#allocation2 + $0x70] sm:$0xff] %vm7538, %v7375
    %7554 = vst.msk [vmem:[#allocation2 + $0x78] sm:$0xff] %vm7538, %v7377
    %7555 = vst.msk [vmem:[#allocation2 + $0x80] sm:$0xff] %vm7538, %v7379
    %7556 = vst.msk [vmem:[#allocation2 + $0x88] sm:$0xff] %vm7538, %v7381
    %7557 = vst.msk [vmem:[#allocation2 + $0x90] sm:$0xff] %vm7538, %v7383
    %7558 = vst.msk [vmem:[#allocation2 + $0x98] sm:$0xff] %vm7538, %v7385
    %7559 = vst.msk [vmem:[#allocation2 + $0xa0] sm:$0xff] %vm7538, %v7387
    %7560 = vst.msk [vmem:[#allocation2 + $0xa8] sm:$0xff] %vm7538, %v7389
    %7561 = vst.msk [vmem:[#allocation2 + $0xb0] sm:$0xff] %vm7538, %v7391
    %7562 = vst.msk [vmem:[#allocation2 + $0xb8] sm:$0xff] %vm7538, %v7393
    %7563 = vst.msk [vmem:[#allocation2 + $0xc0] sm:$0xff] %vm7538, %v7395
    %7564 = vst.msk [vmem:[#allocation2 + $0xc8] sm:$0xff] %vm7538, %v7397
    %7565 = vst.msk [vmem:[#allocation2 + $0xd0] sm:$0xff] %vm7538, %v7399
    %7566 = vst.msk [vmem:[#allocation2 + $0xd8] sm:$0xff] %vm7538, %v7401
    %7567 = vst.msk [vmem:[#allocation2 + $0xe0] sm:$0xff] %vm7538, %v7403
    %7568 = vst.msk [vmem:[#allocation2 + $0xe8] sm:$0xff] %vm7538, %v7405
    %7569 = vst.msk [vmem:[#allocation2 + $0xf0] sm:$0xff] %vm7538, %v7407
    %7570 = vst.msk [vmem:[#allocation2 + $0xf8] sm:$0xff] %vm7538, %v7409
    %7571 = vst.msk [vmem:[#allocation2 + $0x100] sm:$0xff] %vm7538, %v7411
    %7572 = vst.msk [vmem:[#allocation2 + $0x108] sm:$0xff] %vm7538, %v7413
    %7573 = vst.msk [vmem:[#allocation2 + $0x110] sm:$0xff] %vm7538, %v7415
    %7574 = vst.msk [vmem:[#allocation2 + $0x118] sm:$0xff] %vm7538, %v7417
    %7575 = vst.msk [vmem:[#allocation2 + $0x120] sm:$0xff] %vm7538, %v7419
    %7576 = vst.msk [vmem:[#allocation2 + $0x128] sm:$0xff] %vm7538, %v7421
    %7577 = vst.msk [vmem:[#allocation2 + $0x130] sm:$0xff] %vm7538, %v7423
    %7578 = vst.msk [vmem:[#allocation2 + $0x138] sm:$0xff] %vm7538, %v7425
    %7579 = vst.msk [vmem:[#allocation2 + $0x140] sm:$0xff] %vm7538, %v7427
    %7580 = vst.msk [vmem:[#allocation2 + $0x148] sm:$0xff] %vm7538, %v7429
    %7581 = vst.msk [vmem:[#allocation2 + $0x150] sm:$0xff] %vm7538, %v7431
    %7582 = vst.msk [vmem:[#allocation2 + $0x158] sm:$0xff] %vm7538, %v7433
    %7583 = vst.msk [vmem:[#allocation2 + $0x160] sm:$0xff] %vm7538, %v7435
    %7584 = vst.msk [vmem:[#allocation2 + $0x168] sm:$0xff] %vm7538, %v7437
    %7585 = vst.msk [vmem:[#allocation2 + $0x170] sm:$0xff] %vm7538, %v7439
    %7586 = vst.msk [vmem:[#allocation2 + $0x178] sm:$0xff] %vm7538, %v7441
    %7587 = vst.msk [vmem:[#allocation2 + $0x180] sm:$0xff] %vm7538, %v7443
    %7588 = vst.msk [vmem:[#allocation2 + $0x188] sm:$0xff] %vm7538, %v7445
    %7589 = vst.msk [vmem:[#allocation2 + $0x190] sm:$0xff] %vm7538, %v7447
    %7590 = vst.msk [vmem:[#allocation2 + $0x198] sm:$0xff] %vm7538, %v7449
    %7591 = vst.msk [vmem:[#allocation2 + $0x1a0] sm:$0xff] %vm7538, %v7451
    %7592 = vst.msk [vmem:[#allocation2 + $0x1a8] sm:$0xff] %vm7538, %v7453
    %7593 = vst.msk [vmem:[#allocation2 + $0x1b0] sm:$0xff] %vm7538, %v7455
    %7594 = vst.msk [vmem:[#allocation2 + $0x1b8] sm:$0xff] %vm7538, %v7457
    %7595 = vst.msk [vmem:[#allocation2 + $0x1c0] sm:$0xff] %vm7538, %v7459
    %7596 = vst.msk [vmem:[#allocation2 + $0x1c8] sm:$0xff] %vm7538, %v7461
    %7597 = vst.msk [vmem:[#allocation2 + $0x1d0] sm:$0xff] %vm7538, %v7463
    %7598 = vst.msk [vmem:[#allocation2 + $0x1d8] sm:$0xff] %vm7538, %v7465
    %7599 = vst.msk [vmem:[#allocation2 + $0x1e0] sm:$0xff] %vm7538, %v7467
    %7600 = vst.msk [vmem:[#allocation2 + $0x1e8] sm:$0xff] %vm7538, %v7469
    %7601 = vst.msk [vmem:[#allocation2 + $0x1f0] sm:$0xff] %vm7538, %v7471
    %7602 = vst.msk [vmem:[#allocation2 + $0x1f8] sm:$0xff] %vm7538, %v7473
    %v7603 = vld [vmem:[%s7217 + $0x1] sm:$0xff]
    %v7604 = vld [vmem:[%s7217 + $0x9] sm:$0xff]
    %v7605 = vld [vmem:[%s7217 + $0x19] sm:$0xff]
    %v7606 = vld [vmem:[%s7217 + $0x21] sm:$0xff]
    %v7607 = vld [vmem:[%s7217 + $0x31] sm:$0xff]
    %v7608 = vld [vmem:[%s7217 + $0x39] sm:$0xff]
    %v7609 = vld [vmem:[%s7217 + $0x49] sm:$0xff]
    %v7610 = vld [vmem:[%s7217 + $0x51] sm:$0xff]
    %v7611 = vld [vmem:[%s7217 + $0x61] sm:$0xff]
    %v7612 = vld [vmem:[%s7217 + $0x69] sm:$0xff]
    %v7613 = vld [vmem:[%s7217 + $0x79] sm:$0xff]
    %v7614 = vld [vmem:[%s7217 + $0x81] sm:$0xff]
    %v7615 = vld [vmem:[%s7217 + $0x91] sm:$0xff]
    %v7616 = vld [vmem:[%s7217 + $0x99] sm:$0xff]
    %v7617 = vld [vmem:[%s7217 + $0xa9] sm:$0xff]
    %v7618 = vld [vmem:[%s7217 + $0xb1] sm:$0xff]
    %v7619 = vld [vmem:[%s7217 + $0xc1] sm:$0xff]
    %v7620 = vld [vmem:[%s7217 + $0xc9] sm:$0xff]
    %v7621 = vld [vmem:[%s7217 + $0xd9] sm:$0xff]
    %v7622 = vld [vmem:[%s7217 + $0xe1] sm:$0xff]
    %v7623 = vld [vmem:[%s7217 + $0xf1] sm:$0xff]
    %v7624 = vld [vmem:[%s7217 + $0xf9] sm:$0xff]
    %v7625 = vld [vmem:[%s7217 + $0x109] sm:$0xff]
    %v7626 = vld [vmem:[%s7217 + $0x111] sm:$0xff]
    %v7627 = vld [vmem:[%s7217 + $0x121] sm:$0xff]
    %v7628 = vld [vmem:[%s7217 + $0x129] sm:$0xff]
    %v7629 = vld [vmem:[%s7217 + $0x139] sm:$0xff]
    %v7630 = vld [vmem:[%s7217 + $0x141] sm:$0xff]
    %v7631 = vld [vmem:[%s7217 + $0x151] sm:$0xff]
    %v7632 = vld [vmem:[%s7217 + $0x159] sm:$0xff]
    %v7633 = vld [vmem:[%s7217 + $0x169] sm:$0xff]
    %v7634 = vld [vmem:[%s7217 + $0x171] sm:$0xff]
    %v7635 = vld [vmem:[%s7217 + $0x1b1] sm:$0xff]
    %v7636 = vld [vmem:[%s7217 + $0x1b9] sm:$0xff]
    %v7637 = vld [vmem:[%s7217 + $0x1c9] sm:$0xff]
    %v7638 = vld [vmem:[%s7217 + $0x1d1] sm:$0xff]
    %v7639 = vld [vmem:[%s7217 + $0x1e1] sm:$0xff]
    %v7640 = vld [vmem:[%s7217 + $0x1e9] sm:$0xff]
    %v7641 = vld [vmem:[%s7217 + $0x1f9] sm:$0xff]
    %v7642 = vld [vmem:[%s7217 + $0x201] sm:$0xff]
    %v7643 = vld [vmem:[%s7217 + $0x211] sm:$0xff]
    %v7644 = vld [vmem:[%s7217 + $0x219] sm:$0xff]
    %v7645 = vld [vmem:[%s7217 + $0x229] sm:$0xff]
    %v7646 = vld [vmem:[%s7217 + $0x231] sm:$0xff]
    %v7647 = vld [vmem:[%s7217 + $0x241] sm:$0xff]
    %v7648 = vld [vmem:[%s7217 + $0x249] sm:$0xff]
    %v7649 = vld [vmem:[%s7217 + $0x259] sm:$0xff]
    %v7650 = vld [vmem:[%s7217 + $0x261] sm:$0xff]
    %v7651 = vld [vmem:[%s7217 + $0x271] sm:$0xff]
    %v7652 = vld [vmem:[%s7217 + $0x279] sm:$0xff]
    %v7653 = vld [vmem:[%s7217 + $0x289] sm:$0xff]
    %v7654 = vld [vmem:[%s7217 + $0x291] sm:$0xff]
    %v7655 = vld [vmem:[%s7217 + $0x2a1] sm:$0xff]
    %v7656 = vld [vmem:[%s7217 + $0x2a9] sm:$0xff]
    %v7657 = vld [vmem:[%s7217 + $0x2b9] sm:$0xff]
    %v7658 = vld [vmem:[%s7217 + $0x2c1] sm:$0xff]
    %v7659 = vld [vmem:[%s7217 + $0x2d1] sm:$0xff]
    %v7660 = vld [vmem:[%s7217 + $0x2d9] sm:$0xff]
    %v7661 = vld [vmem:[%s7217 + $0x2e9] sm:$0xff]
    %v7662 = vld [vmem:[%s7217 + $0x2f1] sm:$0xff]
    %v7663 = vld [vmem:[%s7217 + $0x301] sm:$0xff]
    %v7664 = vld [vmem:[%s7217 + $0x309] sm:$0xff]
    %v7665 = vld [vmem:[%s7217 + $0x319] sm:$0xff]
    %v7666 = vld [vmem:[%s7217 + $0x321] sm:$0xff]
    %7731 = vrot.lane.b32.xlu0 %v7603, 56
    %v7732 = vpop.permute.xlu0 %7731
    %7733 = vrot.lane.b32.xlu0 %v7604, 56
    %v7734 = vpop.permute.xlu0 %7733
    %7735 = vrot.lane.b32.xlu0 %v7605, 56
    %v7736 = vpop.permute.xlu0 %7735
    %7737 = vrot.lane.b32.xlu0 %v7606, 56
    %v7738 = vpop.permute.xlu0 %7737
    %7739 = vrot.lane.b32.xlu0 %v7607, 56
    %v7740 = vpop.permute.xlu0 %7739
    %7741 = vrot.lane.b32.xlu0 %v7608, 56
    %v7742 = vpop.permute.xlu0 %7741
    %7743 = vrot.lane.b32.xlu0 %v7609, 56
    %v7744 = vpop.permute.xlu0 %7743
    %7745 = vrot.lane.b32.xlu0 %v7610, 56
    %v7746 = vpop.permute.xlu0 %7745
    %7747 = vrot.lane.b32.xlu0 %v7611, 56
    %v7748 = vpop.permute.xlu0 %7747
    %7749 = vrot.lane.b32.xlu0 %v7612, 56
    %v7750 = vpop.permute.xlu0 %7749
    %7751 = vrot.lane.b32.xlu0 %v7613, 56
    %v7752 = vpop.permute.xlu0 %7751
    %7753 = vrot.lane.b32.xlu0 %v7614, 56
    %v7754 = vpop.permute.xlu0 %7753
    %7755 = vrot.lane.b32.xlu0 %v7615, 56
    %v7756 = vpop.permute.xlu0 %7755
    %7757 = vrot.lane.b32.xlu0 %v7616, 56
    %v7758 = vpop.permute.xlu0 %7757
    %7759 = vrot.lane.b32.xlu0 %v7617, 56
    %v7760 = vpop.permute.xlu0 %7759
    %7761 = vrot.lane.b32.xlu0 %v7618, 56
    %v7762 = vpop.permute.xlu0 %7761
    %7763 = vrot.lane.b32.xlu0 %v7619, 56
    %v7764 = vpop.permute.xlu0 %7763
    %7765 = vrot.lane.b32.xlu0 %v7620, 56
    %v7766 = vpop.permute.xlu0 %7765
    %7767 = vrot.lane.b32.xlu0 %v7621, 56
    %v7768 = vpop.permute.xlu0 %7767
    %7769 = vrot.lane.b32.xlu0 %v7622, 56
    %v7770 = vpop.permute.xlu0 %7769
    %7771 = vrot.lane.b32.xlu0 %v7623, 56
    %v7772 = vpop.permute.xlu0 %7771
    %7773 = vrot.lane.b32.xlu0 %v7624, 56
    %v7774 = vpop.permute.xlu0 %7773
    %7775 = vrot.lane.b32.xlu0 %v7625, 56
    %v7776 = vpop.permute.xlu0 %7775
    %7777 = vrot.lane.b32.xlu0 %v7626, 56
    %v7778 = vpop.permute.xlu0 %7777
    %7779 = vrot.lane.b32.xlu0 %v7627, 56
    %v7780 = vpop.permute.xlu0 %7779
    %7781 = vrot.lane.b32.xlu0 %v7628, 56
    %v7782 = vpop.permute.xlu0 %7781
    %7783 = vrot.lane.b32.xlu0 %v7629, 56
    %v7784 = vpop.permute.xlu0 %7783
    %7785 = vrot.lane.b32.xlu0 %v7630, 56
    %v7786 = vpop.permute.xlu0 %7785
    %7787 = vrot.lane.b32.xlu0 %v7631, 56
    %v7788 = vpop.permute.xlu0 %7787
    %7789 = vrot.lane.b32.xlu0 %v7632, 56
    %v7790 = vpop.permute.xlu0 %7789
    %7791 = vrot.lane.b32.xlu0 %v7633, 56
    %v7792 = vpop.permute.xlu0 %7791
    %7793 = vrot.lane.b32.xlu0 %v7634, 56
    %v7794 = vpop.permute.xlu0 %7793
    %7795 = vrot.lane.b32.xlu0 %v7635, 56
    %v7796 = vpop.permute.xlu0 %7795
    %7797 = vrot.lane.b32.xlu0 %v7636, 56
    %v7798 = vpop.permute.xlu0 %7797
    %7799 = vrot.lane.b32.xlu0 %v7637, 56
    %v7800 = vpop.permute.xlu0 %7799
    %7801 = vrot.lane.b32.xlu0 %v7638, 56
    %v7802 = vpop.permute.xlu0 %7801
    %7803 = vrot.lane.b32.xlu0 %v7639, 56
    %v7804 = vpop.permute.xlu0 %7803
    %7805 = vrot.lane.b32.xlu0 %v7640, 56
    %v7806 = vpop.permute.xlu0 %7805
    %7807 = vrot.lane.b32.xlu0 %v7641, 56
    %v7808 = vpop.permute.xlu0 %7807
    %7809 = vrot.lane.b32.xlu0 %v7642, 56
    %v7810 = vpop.permute.xlu0 %7809
    %7811 = vrot.lane.b32.xlu0 %v7643, 56
    %v7812 = vpop.permute.xlu0 %7811
    %7813 = vrot.lane.b32.xlu0 %v7644, 56
    %v7814 = vpop.permute.xlu0 %7813
    %7815 = vrot.lane.b32.xlu0 %v7645, 56
    %v7816 = vpop.permute.xlu0 %7815
    %7817 = vrot.lane.b32.xlu0 %v7646, 56
    %v7818 = vpop.permute.xlu0 %7817
    %7819 = vrot.lane.b32.xlu0 %v7647, 56
    %v7820 = vpop.permute.xlu0 %7819
    %7821 = vrot.lane.b32.xlu0 %v7648, 56
    %v7822 = vpop.permute.xlu0 %7821
    %7823 = vrot.lane.b32.xlu0 %v7649, 56
    %v7824 = vpop.permute.xlu0 %7823
    %7825 = vrot.lane.b32.xlu0 %v7650, 56
    %v7826 = vpop.permute.xlu0 %7825
    %7827 = vrot.lane.b32.xlu0 %v7651, 56
    %v7828 = vpop.permute.xlu0 %7827
    %7829 = vrot.lane.b32.xlu0 %v7652, 56
    %v7830 = vpop.permute.xlu0 %7829
    %7831 = vrot.lane.b32.xlu0 %v7653, 56
    %v7832 = vpop.permute.xlu0 %7831
    %7833 = vrot.lane.b32.xlu0 %v7654, 56
    %v7834 = vpop.permute.xlu0 %7833
    %7835 = vrot.lane.b32.xlu0 %v7655, 56
    %v7836 = vpop.permute.xlu0 %7835
    %7837 = vrot.lane.b32.xlu0 %v7656, 56
    %v7838 = vpop.permute.xlu0 %7837
    %7839 = vrot.lane.b32.xlu0 %v7657, 56
    %v7840 = vpop.permute.xlu0 %7839
    %7841 = vrot.lane.b32.xlu0 %v7658, 56
    %v7842 = vpop.permute.xlu0 %7841
    %7843 = vrot.lane.b32.xlu0 %v7659, 56
    %v7844 = vpop.permute.xlu0 %7843
    %7845 = vrot.lane.b32.xlu0 %v7660, 56
    %v7846 = vpop.permute.xlu0 %7845
    %7847 = vrot.lane.b32.xlu0 %v7661, 56
    %v7848 = vpop.permute.xlu0 %7847
    %7849 = vrot.lane.b32.xlu0 %v7662, 56
    %v7850 = vpop.permute.xlu0 %7849
    %7851 = vrot.lane.b32.xlu0 %v7663, 56
    %v7852 = vpop.permute.xlu0 %7851
    %7853 = vrot.lane.b32.xlu0 %v7664, 56
    %v7854 = vpop.permute.xlu0 %7853
    %7855 = vrot.lane.b32.xlu0 %v7665, 56
    %v7856 = vpop.permute.xlu0 %7855
    %7857 = vrot.lane.b32.xlu0 %v7666, 56
    %v7858 = vpop.permute.xlu0 %7857
    %vm7923 = vcmask 523712
    %7924 = vst.msk [vmem:[#allocation2] sm:$0xff] %vm7923, %v7732
    %7925 = vst.msk [vmem:[#allocation2 + $0x8] sm:$0xff] %vm7923, %v7734
    %7926 = vst.msk [vmem:[#allocation2 + $0x10] sm:$0xff] %vm7923, %v7736
    %7927 = vst.msk [vmem:[#allocation2 + $0x18] sm:$0xff] %vm7923, %v7738
    %7928 = vst.msk [vmem:[#allocation2 + $0x20] sm:$0xff] %vm7923, %v7740
    %7929 = vst.msk [vmem:[#allocation2 + $0x28] sm:$0xff] %vm7923, %v7742
    %7930 = vst.msk [vmem:[#allocation2 + $0x30] sm:$0xff] %vm7923, %v7744
    %7931 = vst.msk [vmem:[#allocation2 + $0x38] sm:$0xff] %vm7923, %v7746
    %7932 = vst.msk [vmem:[#allocation2 + $0x40] sm:$0xff] %vm7923, %v7748
    %7933 = vst.msk [vmem:[#allocation2 + $0x48] sm:$0xff] %vm7923, %v7750
    %7934 = vst.msk [vmem:[#allocation2 + $0x50] sm:$0xff] %vm7923, %v7752
    %7935 = vst.msk [vmem:[#allocation2 + $0x58] sm:$0xff] %vm7923, %v7754
    %7936 = vst.msk [vmem:[#allocation2 + $0x60] sm:$0xff] %vm7923, %v7756
    %7937 = vst.msk [vmem:[#allocation2 + $0x68] sm:$0xff] %vm7923, %v7758
    %7938 = vst.msk [vmem:[#allocation2 + $0x70] sm:$0xff] %vm7923, %v7760
    %7939 = vst.msk [vmem:[#allocation2 + $0x78] sm:$0xff] %vm7923, %v7762
    %7940 = vst.msk [vmem:[#allocation2 + $0x80] sm:$0xff] %vm7923, %v7764
    %7941 = vst.msk [vmem:[#allocation2 + $0x88] sm:$0xff] %vm7923, %v7766
    %7942 = vst.msk [vmem:[#allocation2 + $0x90] sm:$0xff] %vm7923, %v7768
    %7943 = vst.msk [vmem:[#allocation2 + $0x98] sm:$0xff] %vm7923, %v7770
    %7944 = vst.msk [vmem:[#allocation2 + $0xa0] sm:$0xff] %vm7923, %v7772
    %7945 = vst.msk [vmem:[#allocation2 + $0xa8] sm:$0xff] %vm7923, %v7774
    %7946 = vst.msk [vmem:[#allocation2 + $0xb0] sm:$0xff] %vm7923, %v7776
    %7947 = vst.msk [vmem:[#allocation2 + $0xb8] sm:$0xff] %vm7923, %v7778
    %7948 = vst.msk [vmem:[#allocation2 + $0xc0] sm:$0xff] %vm7923, %v7780
    %7949 = vst.msk [vmem:[#allocation2 + $0xc8] sm:$0xff] %vm7923, %v7782
    %7950 = vst.msk [vmem:[#allocation2 + $0xd0] sm:$0xff] %vm7923, %v7784
    %7951 = vst.msk [vmem:[#allocation2 + $0xd8] sm:$0xff] %vm7923, %v7786
    %7952 = vst.msk [vmem:[#allocation2 + $0xe0] sm:$0xff] %vm7923, %v7788
    %7953 = vst.msk [vmem:[#allocation2 + $0xe8] sm:$0xff] %vm7923, %v7790
    %7954 = vst.msk [vmem:[#allocation2 + $0xf0] sm:$0xff] %vm7923, %v7792
    %7955 = vst.msk [vmem:[#allocation2 + $0xf8] sm:$0xff] %vm7923, %v7794
    %7956 = vst.msk [vmem:[#allocation2 + $0x100] sm:$0xff] %vm7923, %v7796
    %7957 = vst.msk [vmem:[#allocation2 + $0x108] sm:$0xff] %vm7923, %v7798
    %7958 = vst.msk [vmem:[#allocation2 + $0x110] sm:$0xff] %vm7923, %v7800
    %7959 = vst.msk [vmem:[#allocation2 + $0x118] sm:$0xff] %vm7923, %v7802
    %7960 = vst.msk [vmem:[#allocation2 + $0x120] sm:$0xff] %vm7923, %v7804
    %7961 = vst.msk [vmem:[#allocation2 + $0x128] sm:$0xff] %vm7923, %v7806
    %7962 = vst.msk [vmem:[#allocation2 + $0x130] sm:$0xff] %vm7923, %v7808
    %7963 = vst.msk [vmem:[#allocation2 + $0x138] sm:$0xff] %vm7923, %v7810
    %7964 = vst.msk [vmem:[#allocation2 + $0x140] sm:$0xff] %vm7923, %v7812
    %7965 = vst.msk [vmem:[#allocation2 + $0x148] sm:$0xff] %vm7923, %v7814
    %7966 = vst.msk [vmem:[#allocation2 + $0x150] sm:$0xff] %vm7923, %v7816
    %7967 = vst.msk [vmem:[#allocation2 + $0x158] sm:$0xff] %vm7923, %v7818
    %7968 = vst.msk [vmem:[#allocation2 + $0x160] sm:$0xff] %vm7923, %v7820
    %7969 = vst.msk [vmem:[#allocation2 + $0x168] sm:$0xff] %vm7923, %v7822
    %7970 = vst.msk [vmem:[#allocation2 + $0x170] sm:$0xff] %vm7923, %v7824
    %7971 = vst.msk [vmem:[#allocation2 + $0x178] sm:$0xff] %vm7923, %v7826
    %7972 = vst.msk [vmem:[#allocation2 + $0x180] sm:$0xff] %vm7923, %v7828
    %7973 = vst.msk [vmem:[#allocation2 + $0x188] sm:$0xff] %vm7923, %v7830
    %7974 = vst.msk [vmem:[#allocation2 + $0x190] sm:$0xff] %vm7923, %v7832
    %7975 = vst.msk [vmem:[#allocation2 + $0x198] sm:$0xff] %vm7923, %v7834
    %7976 = vst.msk [vmem:[#allocation2 + $0x1a0] sm:$0xff] %vm7923, %v7836
    %7977 = vst.msk [vmem:[#allocation2 + $0x1a8] sm:$0xff] %vm7923, %v7838
    %7978 = vst.msk [vmem:[#allocation2 + $0x1b0] sm:$0xff] %vm7923, %v7840
    %7979 = vst.msk [vmem:[#allocation2 + $0x1b8] sm:$0xff] %vm7923, %v7842
    %7980 = vst.msk [vmem:[#allocation2 + $0x1c0] sm:$0xff] %vm7923, %v7844
    %7981 = vst.msk [vmem:[#allocation2 + $0x1c8] sm:$0xff] %vm7923, %v7846
    %7982 = vst.msk [vmem:[#allocation2 + $0x1d0] sm:$0xff] %vm7923, %v7848
    %7983 = vst.msk [vmem:[#allocation2 + $0x1d8] sm:$0xff] %vm7923, %v7850
    %7984 = vst.msk [vmem:[#allocation2 + $0x1e0] sm:$0xff] %vm7923, %v7852
    %7985 = vst.msk [vmem:[#allocation2 + $0x1e8] sm:$0xff] %vm7923, %v7854
    %7986 = vst.msk [vmem:[#allocation2 + $0x1f0] sm:$0xff] %vm7923, %v7856
    %7987 = vst.msk [vmem:[#allocation2 + $0x1f8] sm:$0xff] %vm7923, %v7858
    %v7988 = vld [vmem:[%s7217 + $0x2] sm:$0xff]
    %v7989 = vld [vmem:[%s7217 + $0xa] sm:$0xff]
    %v7990 = vld [vmem:[%s7217 + $0x1a] sm:$0xff]
    %v7991 = vld [vmem:[%s7217 + $0x22] sm:$0xff]
    %v7992 = vld [vmem:[%s7217 + $0x32] sm:$0xff]
    %v7993 = vld [vmem:[%s7217 + $0x3a] sm:$0xff]
    %v7994 = vld [vmem:[%s7217 + $0x4a] sm:$0xff]
    %v7995 = vld [vmem:[%s7217 + $0x52] sm:$0xff]
    %v7996 = vld [vmem:[%s7217 + $0x62] sm:$0xff]
    %v7997 = vld [vmem:[%s7217 + $0x6a] sm:$0xff]
    %v7998 = vld [vmem:[%s7217 + $0x7a] sm:$0xff]
    %v7999 = vld [vmem:[%s7217 + $0x82] sm:$0xff]
    %v8000 = vld [vmem:[%s7217 + $0x92] sm:$0xff]
    %v8001 = vld [vmem:[%s7217 + $0x9a] sm:$0xff]
    %v8002 = vld [vmem:[%s7217 + $0xaa] sm:$0xff]
    %v8003 = vld [vmem:[%s7217 + $0xb2] sm:$0xff]
    %v8004 = vld [vmem:[%s7217 + $0xc2] sm:$0xff]
    %v8005 = vld [vmem:[%s7217 + $0xca] sm:$0xff]
    %v8006 = vld [vmem:[%s7217 + $0xda] sm:$0xff]
    %v8007 = vld [vmem:[%s7217 + $0xe2] sm:$0xff]
    %v8008 = vld [vmem:[%s7217 + $0xf2] sm:$0xff]
    %v8009 = vld [vmem:[%s7217 + $0xfa] sm:$0xff]
    %v8010 = vld [vmem:[%s7217 + $0x10a] sm:$0xff]
    %v8011 = vld [vmem:[%s7217 + $0x112] sm:$0xff]
    %v8012 = vld [vmem:[%s7217 + $0x122] sm:$0xff]
    %v8013 = vld [vmem:[%s7217 + $0x12a] sm:$0xff]
    %v8014 = vld [vmem:[%s7217 + $0x13a] sm:$0xff]
    %v8015 = vld [vmem:[%s7217 + $0x142] sm:$0xff]
    %v8016 = vld [vmem:[%s7217 + $0x152] sm:$0xff]
    %v8017 = vld [vmem:[%s7217 + $0x15a] sm:$0xff]
    %v8018 = vld [vmem:[%s7217 + $0x16a] sm:$0xff]
    %v8019 = vld [vmem:[%s7217 + $0x172] sm:$0xff]
    %v8020 = vld [vmem:[%s7217 + $0x1b2] sm:$0xff]
    %v8021 = vld [vmem:[%s7217 + $0x1ba] sm:$0xff]
    %v8022 = vld [vmem:[%s7217 + $0x1ca] sm:$0xff]
    %v8023 = vld [vmem:[%s7217 + $0x1d2] sm:$0xff]
    %v8024 = vld [vmem:[%s7217 + $0x1e2] sm:$0xff]
    %v8025 = vld [vmem:[%s7217 + $0x1ea] sm:$0xff]
    %v8026 = vld [vmem:[%s7217 + $0x1fa] sm:$0xff]
    %v8027 = vld [vmem:[%s7217 + $0x202] sm:$0xff]
    %v8028 = vld [vmem:[%s7217 + $0x212] sm:$0xff]
    %v8029 = vld [vmem:[%s7217 + $0x21a] sm:$0xff]
    %v8030 = vld [vmem:[%s7217 + $0x22a] sm:$0xff]
    %v8031 = vld [vmem:[%s7217 + $0x232] sm:$0xff]
    %v8032 = vld [vmem:[%s7217 + $0x242] sm:$0xff]
    %v8033 = vld [vmem:[%s7217 + $0x24a] sm:$0xff]
    %v8034 = vld [vmem:[%s7217 + $0x25a] sm:$0xff]
    %v8035 = vld [vmem:[%s7217 + $0x262] sm:$0xff]
    %v8036 = vld [vmem:[%s7217 + $0x272] sm:$0xff]
    %v8037 = vld [vmem:[%s7217 + $0x27a] sm:$0xff]
    %v8038 = vld [vmem:[%s7217 + $0x28a] sm:$0xff]
    %v8039 = vld [vmem:[%s7217 + $0x292] sm:$0xff]
    %v8040 = vld [vmem:[%s7217 + $0x2a2] sm:$0xff]
    %v8041 = vld [vmem:[%s7217 + $0x2aa] sm:$0xff]
    %v8042 = vld [vmem:[%s7217 + $0x2ba] sm:$0xff]
    %v8043 = vld [vmem:[%s7217 + $0x2c2] sm:$0xff]
    %v8044 = vld [vmem:[%s7217 + $0x2d2] sm:$0xff]
    %v8045 = vld [vmem:[%s7217 + $0x2da] sm:$0xff]
    %v8046 = vld [vmem:[%s7217 + $0x2ea] sm:$0xff]
    %v8047 = vld [vmem:[%s7217 + $0x2f2] sm:$0xff]
    %v8048 = vld [vmem:[%s7217 + $0x302] sm:$0xff]
    %v8049 = vld [vmem:[%s7217 + $0x30a] sm:$0xff]
    %v8050 = vld [vmem:[%s7217 + $0x31a] sm:$0xff]
    %v8051 = vld [vmem:[%s7217 + $0x322] sm:$0xff]
    %8116 = vrot.lane.b32.xlu0 %v7988, 64
    %v8117 = vpop.permute.xlu0 %8116
    %8118 = vrot.lane.b32.xlu0 %v7989, 64
    %v8119 = vpop.permute.xlu0 %8118
    %8120 = vrot.lane.b32.xlu0 %v7990, 64
    %v8121 = vpop.permute.xlu0 %8120
    %8122 = vrot.lane.b32.xlu0 %v7991, 64
    %v8123 = vpop.permute.xlu0 %8122
    %8124 = vrot.lane.b32.xlu0 %v7992, 64
    %v8125 = vpop.permute.xlu0 %8124
    %8126 = vrot.lane.b32.xlu0 %v7993, 64
    %v8127 = vpop.permute.xlu0 %8126
    %8128 = vrot.lane.b32.xlu0 %v7994, 64
    %v8129 = vpop.permute.xlu0 %8128
    %8130 = vrot.lane.b32.xlu0 %v7995, 64
    %v8131 = vpop.permute.xlu0 %8130
    %8132 = vrot.lane.b32.xlu0 %v7996, 64
    %v8133 = vpop.permute.xlu0 %8132
    %8134 = vrot.lane.b32.xlu0 %v7997, 64
    %v8135 = vpop.permute.xlu0 %8134
    %8136 = vrot.lane.b32.xlu0 %v7998, 64
    %v8137 = vpop.permute.xlu0 %8136
    %8138 = vrot.lane.b32.xlu0 %v7999, 64
    %v8139 = vpop.permute.xlu0 %8138
    %8140 = vrot.lane.b32.xlu0 %v8000, 64
    %v8141 = vpop.permute.xlu0 %8140
    %8142 = vrot.lane.b32.xlu0 %v8001, 64
    %v8143 = vpop.permute.xlu0 %8142
    %8144 = vrot.lane.b32.xlu0 %v8002, 64
    %v8145 = vpop.permute.xlu0 %8144
    %8146 = vrot.lane.b32.xlu0 %v8003, 64
    %v8147 = vpop.permute.xlu0 %8146
    %8148 = vrot.lane.b32.xlu0 %v8004, 64
    %v8149 = vpop.permute.xlu0 %8148
    %8150 = vrot.lane.b32.xlu0 %v8005, 64
    %v8151 = vpop.permute.xlu0 %8150
    %8152 = vrot.lane.b32.xlu0 %v8006, 64
    %v8153 = vpop.permute.xlu0 %8152
    %8154 = vrot.lane.b32.xlu0 %v8007, 64
    %v8155 = vpop.permute.xlu0 %8154
    %8156 = vrot.lane.b32.xlu0 %v8008, 64
    %v8157 = vpop.permute.xlu0 %8156
    %8158 = vrot.lane.b32.xlu0 %v8009, 64
    %v8159 = vpop.permute.xlu0 %8158
    %8160 = vrot.lane.b32.xlu0 %v8010, 64
    %v8161 = vpop.permute.xlu0 %8160
    %8162 = vrot.lane.b32.xlu0 %v8011, 64
    %v8163 = vpop.permute.xlu0 %8162
    %8164 = vrot.lane.b32.xlu0 %v8012, 64
    %v8165 = vpop.permute.xlu0 %8164
    %8166 = vrot.lane.b32.xlu0 %v8013, 64
    %v8167 = vpop.permute.xlu0 %8166
    %8168 = vrot.lane.b32.xlu0 %v8014, 64
    %v8169 = vpop.permute.xlu0 %8168
    %8170 = vrot.lane.b32.xlu0 %v8015, 64
    %v8171 = vpop.permute.xlu0 %8170
    %8172 = vrot.lane.b32.xlu0 %v8016, 64
    %v8173 = vpop.permute.xlu0 %8172
    %8174 = vrot.lane.b32.xlu0 %v8017, 64
    %v8175 = vpop.permute.xlu0 %8174
    %8176 = vrot.lane.b32.xlu0 %v8018, 64
    %v8177 = vpop.permute.xlu0 %8176
    %8178 = vrot.lane.b32.xlu0 %v8019, 64
    %v8179 = vpop.permute.xlu0 %8178
    %8180 = vrot.lane.b32.xlu0 %v8020, 64
    %v8181 = vpop.permute.xlu0 %8180
    %8182 = vrot.lane.b32.xlu0 %v8021, 64
    %v8183 = vpop.permute.xlu0 %8182
    %8184 = vrot.lane.b32.xlu0 %v8022, 64
    %v8185 = vpop.permute.xlu0 %8184
    %8186 = vrot.lane.b32.xlu0 %v8023, 64
    %v8187 = vpop.permute.xlu0 %8186
    %8188 = vrot.lane.b32.xlu0 %v8024, 64
    %v8189 = vpop.permute.xlu0 %8188
    %8190 = vrot.lane.b32.xlu0 %v8025, 64
    %v8191 = vpop.permute.xlu0 %8190
    %8192 = vrot.lane.b32.xlu0 %v8026, 64
    %v8193 = vpop.permute.xlu0 %8192
    %8194 = vrot.lane.b32.xlu0 %v8027, 64
    %v8195 = vpop.permute.xlu0 %8194
    %8196 = vrot.lane.b32.xlu0 %v8028, 64
    %v8197 = vpop.permute.xlu0 %8196
    %8198 = vrot.lane.b32.xlu0 %v8029, 64
    %v8199 = vpop.permute.xlu0 %8198
    %8200 = vrot.lane.b32.xlu0 %v8030, 64
    %v8201 = vpop.permute.xlu0 %8200
    %8202 = vrot.lane.b32.xlu0 %v8031, 64
    %v8203 = vpop.permute.xlu0 %8202
    %8204 = vrot.lane.b32.xlu0 %v8032, 64
    %v8205 = vpop.permute.xlu0 %8204
    %8206 = vrot.lane.b32.xlu0 %v8033, 64
    %v8207 = vpop.permute.xlu0 %8206
    %8208 = vrot.lane.b32.xlu0 %v8034, 64
    %v8209 = vpop.permute.xlu0 %8208
    %8210 = vrot.lane.b32.xlu0 %v8035, 64
    %v8211 = vpop.permute.xlu0 %8210
    %8212 = vrot.lane.b32.xlu0 %v8036, 64
    %v8213 = vpop.permute.xlu0 %8212
    %8214 = vrot.lane.b32.xlu0 %v8037, 64
    %v8215 = vpop.permute.xlu0 %8214
    %8216 = vrot.lane.b32.xlu0 %v8038, 64
    %v8217 = vpop.permute.xlu0 %8216
    %8218 = vrot.lane.b32.xlu0 %v8039, 64
    %v8219 = vpop.permute.xlu0 %8218
    %8220 = vrot.lane.b32.xlu0 %v8040, 64
    %v8221 = vpop.permute.xlu0 %8220
    %8222 = vrot.lane.b32.xlu0 %v8041, 64
    %v8223 = vpop.permute.xlu0 %8222
    %8224 = vrot.lane.b32.xlu0 %v8042, 64
    %v8225 = vpop.permute.xlu0 %8224
    %8226 = vrot.lane.b32.xlu0 %v8043, 64
    %v8227 = vpop.permute.xlu0 %8226
    %8228 = vrot.lane.b32.xlu0 %v8044, 64
    %v8229 = vpop.permute.xlu0 %8228
    %8230 = vrot.lane.b32.xlu0 %v8045, 64
    %v8231 = vpop.permute.xlu0 %8230
    %8232 = vrot.lane.b32.xlu0 %v8046, 64
    %v8233 = vpop.permute.xlu0 %8232
    %8234 = vrot.lane.b32.xlu0 %v8047, 64
    %v8235 = vpop.permute.xlu0 %8234
    %8236 = vrot.lane.b32.xlu0 %v8048, 64
    %v8237 = vpop.permute.xlu0 %8236
    %8238 = vrot.lane.b32.xlu0 %v8049, 64
    %v8239 = vpop.permute.xlu0 %8238
    %8240 = vrot.lane.b32.xlu0 %v8050, 64
    %v8241 = vpop.permute.xlu0 %8240
    %8242 = vrot.lane.b32.xlu0 %v8051, 64
    %v8243 = vpop.permute.xlu0 %8242
    %vm8308 = vcmask 589312
    %8309 = vst.msk [vmem:[#allocation2] sm:$0xff] %vm8308, %v8117
    %8310 = vst.msk [vmem:[#allocation2 + $0x8] sm:$0xff] %vm8308, %v8119
    %8311 = vst.msk [vmem:[#allocation2 + $0x10] sm:$0xff] %vm8308, %v8121
    %8312 = vst.msk [vmem:[#allocation2 + $0x18] sm:$0xff] %vm8308, %v8123
    %8313 = vst.msk [vmem:[#allocation2 + $0x20] sm:$0xff] %vm8308, %v8125
    %8314 = vst.msk [vmem:[#allocation2 + $0x28] sm:$0xff] %vm8308, %v8127
    %8315 = vst.msk [vmem:[#allocation2 + $0x30] sm:$0xff] %vm8308, %v8129
    %8316 = vst.msk [vmem:[#allocation2 + $0x38] sm:$0xff] %vm8308, %v8131
    %8317 = vst.msk [vmem:[#allocation2 + $0x40] sm:$0xff] %vm8308, %v8133
    %8318 = vst.msk [vmem:[#allocation2 + $0x48] sm:$0xff] %vm8308, %v8135
    %8319 = vst.msk [vmem:[#allocation2 + $0x50] sm:$0xff] %vm8308, %v8137
    %8320 = vst.msk [vmem:[#allocation2 + $0x58] sm:$0xff] %vm8308, %v8139
    %8321 = vst.msk [vmem:[#allocation2 + $0x60] sm:$0xff] %vm8308, %v8141
    %8322 = vst.msk [vmem:[#allocation2 + $0x68] sm:$0xff] %vm8308, %v8143
    %8323 = vst.msk [vmem:[#allocation2 + $0x70] sm:$0xff] %vm8308, %v8145
    %8324 = vst.msk [vmem:[#allocation2 + $0x78] sm:$0xff] %vm8308, %v8147
    %8325 = vst.msk [vmem:[#allocation2 + $0x80] sm:$0xff] %vm8308, %v8149
    %8326 = vst.msk [vmem:[#allocation2 + $0x88] sm:$0xff] %vm8308, %v8151
    %8327 = vst.msk [vmem:[#allocation2 + $0x90] sm:$0xff] %vm8308, %v8153
    %8328 = vst.msk [vmem:[#allocation2 + $0x98] sm:$0xff] %vm8308, %v8155
    %8329 = vst.msk [vmem:[#allocation2 + $0xa0] sm:$0xff] %vm8308, %v8157
    %8330 = vst.msk [vmem:[#allocation2 + $0xa8] sm:$0xff] %vm8308, %v8159
    %8331 = vst.msk [vmem:[#allocation2 + $0xb0] sm:$0xff] %vm8308, %v8161
    %8332 = vst.msk [vmem:[#allocation2 + $0xb8] sm:$0xff] %vm8308, %v8163
    %8333 = vst.msk [vmem:[#allocation2 + $0xc0] sm:$0xff] %vm8308, %v8165
    %8334 = vst.msk [vmem:[#allocation2 + $0xc8] sm:$0xff] %vm8308, %v8167
    %8335 = vst.msk [vmem:[#allocation2 + $0xd0] sm:$0xff] %vm8308, %v8169
    %8336 = vst.msk [vmem:[#allocation2 + $0xd8] sm:$0xff] %vm8308, %v8171
    %8337 = vst.msk [vmem:[#allocation2 + $0xe0] sm:$0xff] %vm8308, %v8173
    %8338 = vst.msk [vmem:[#allocation2 + $0xe8] sm:$0xff] %vm8308, %v8175
    %8339 = vst.msk [vmem:[#allocation2 + $0xf0] sm:$0xff] %vm8308, %v8177
    %8340 = vst.msk [vmem:[#allocation2 + $0xf8] sm:$0xff] %vm8308, %v8179
    %8341 = vst.msk [vmem:[#allocation2 + $0x100] sm:$0xff] %vm8308, %v8181
    %8342 = vst.msk [vmem:[#allocation2 + $0x108] sm:$0xff] %vm8308, %v8183
    %8343 = vst.msk [vmem:[#allocation2 + $0x110] sm:$0xff] %vm8308, %v8185
    %8344 = vst.msk [vmem:[#allocation2 + $0x118] sm:$0xff] %vm8308, %v8187
    %8345 = vst.msk [vmem:[#allocation2 + $0x120] sm:$0xff] %vm8308, %v8189
    %8346 = vst.msk [vmem:[#allocation2 + $0x128] sm:$0xff] %vm8308, %v8191
    %8347 = vst.msk [vmem:[#allocation2 + $0x130] sm:$0xff] %vm8308, %v8193
    %8348 = vst.msk [vmem:[#allocation2 + $0x138] sm:$0xff] %vm8308, %v8195
    %8349 = vst.msk [vmem:[#allocation2 + $0x140] sm:$0xff] %vm8308, %v8197
    %8350 = vst.msk [vmem:[#allocation2 + $0x148] sm:$0xff] %vm8308, %v8199
    %8351 = vst.msk [vmem:[#allocation2 + $0x150] sm:$0xff] %vm8308, %v8201
    %8352 = vst.msk [vmem:[#allocation2 + $0x158] sm:$0xff] %vm8308, %v8203
    %8353 = vst.msk [vmem:[#allocation2 + $0x160] sm:$0xff] %vm8308, %v8205
    %8354 = vst.msk [vmem:[#allocation2 + $0x168] sm:$0xff] %vm8308, %v8207
    %8355 = vst.msk [vmem:[#allocation2 + $0x170] sm:$0xff] %vm8308, %v8209
    %8356 = vst.msk [vmem:[#allocation2 + $0x178] sm:$0xff] %vm8308, %v8211
    %8357 = vst.msk [vmem:[#allocation2 + $0x180] sm:$0xff] %vm8308, %v8213
    %8358 = vst.msk [vmem:[#allocation2 + $0x188] sm:$0xff] %vm8308, %v8215
    %8359 = vst.msk [vmem:[#allocation2 + $0x190] sm:$0xff] %vm8308, %v8217
    %8360 = vst.msk [vmem:[#allocation2 + $0x198] sm:$0xff] %vm8308, %v8219
    %8361 = vst.msk [vmem:[#allocation2 + $0x1a0] sm:$0xff] %vm8308, %v8221
    %8362 = vst.msk [vmem:[#allocation2 + $0x1a8] sm:$0xff] %vm8308, %v8223
    %8363 = vst.msk [vmem:[#allocation2 + $0x1b0] sm:$0xff] %vm8308, %v8225
    %8364 = vst.msk [vmem:[#allocation2 + $0x1b8] sm:$0xff] %vm8308, %v8227
    %8365 = vst.msk [vmem:[#allocation2 + $0x1c0] sm:$0xff] %vm8308, %v8229
    %8366 = vst.msk [vmem:[#allocation2 + $0x1c8] sm:$0xff] %vm8308, %v8231
    %8367 = vst.msk [vmem:[#allocation2 + $0x1d0] sm:$0xff] %vm8308, %v8233
    %8368 = vst.msk [vmem:[#allocation2 + $0x1d8] sm:$0xff] %vm8308, %v8235
    %8369 = vst.msk [vmem:[#allocation2 + $0x1e0] sm:$0xff] %vm8308, %v8237
    %8370 = vst.msk [vmem:[#allocation2 + $0x1e8] sm:$0xff] %vm8308, %v8239
    %8371 = vst.msk [vmem:[#allocation2 + $0x1f0] sm:$0xff] %vm8308, %v8241
    %8372 = vst.msk [vmem:[#allocation2 + $0x1f8] sm:$0xff] %vm8308, %v8243
    %v8373 = vld [vmem:[#allocation2] sm:$0xff]
    %v8374 = vld [vmem:[#allocation2 + $0x8] sm:$0xff]
    %v8375 = vld [vmem:[#allocation2 + $0x10] sm:$0xff]
    %v8376 = vld [vmem:[#allocation2 + $0x18] sm:$0xff]
    %v8377 = vld [vmem:[#allocation2 + $0x20] sm:$0xff]
    %v8378 = vld [vmem:[#allocation2 + $0x28] sm:$0xff]
    %v8379 = vld [vmem:[#allocation2 + $0x30] sm:$0xff]
    %v8380 = vld [vmem:[#allocation2 + $0x38] sm:$0xff]
    %v8381 = vld [vmem:[#allocation2 + $0x40] sm:$0xff]
    %v8382 = vld [vmem:[#allocation2 + $0x48] sm:$0xff]
    %v8383 = vld [vmem:[#allocation2 + $0x50] sm:$0xff]
    %v8384 = vld [vmem:[#allocation2 + $0x58] sm:$0xff]
    %v8385 = vld [vmem:[#allocation2 + $0x60] sm:$0xff]
    %v8386 = vld [vmem:[#allocation2 + $0x68] sm:$0xff]
    %v8387 = vld [vmem:[#allocation2 + $0x70] sm:$0xff]
    %v8388 = vld [vmem:[#allocation2 + $0x78] sm:$0xff]
    %v8389 = vld [vmem:[#allocation2 + $0x80] sm:$0xff]
    %v8390 = vld [vmem:[#allocation2 + $0x88] sm:$0xff]
    %v8391 = vld [vmem:[#allocation2 + $0x90] sm:$0xff]
    %v8392 = vld [vmem:[#allocation2 + $0x98] sm:$0xff]
    %v8393 = vld [vmem:[#allocation2 + $0xa0] sm:$0xff]
    %v8394 = vld [vmem:[#allocation2 + $0xa8] sm:$0xff]
    %v8395 = vld [vmem:[#allocation2 + $0xb0] sm:$0xff]
    %v8396 = vld [vmem:[#allocation2 + $0xb8] sm:$0xff]
    %v8397 = vld [vmem:[#allocation2 + $0xc0] sm:$0xff]
    %v8398 = vld [vmem:[#allocation2 + $0xc8] sm:$0xff]
    %v8399 = vld [vmem:[#allocation2 + $0xd0] sm:$0xff]
    %v8400 = vld [vmem:[#allocation2 + $0xd8] sm:$0xff]
    %v8401 = vld [vmem:[#allocation2 + $0xe0] sm:$0xff]
    %v8402 = vld [vmem:[#allocation2 + $0xe8] sm:$0xff]
    %v8403 = vld [vmem:[#allocation2 + $0xf0] sm:$0xff]
    %v8404 = vld [vmem:[#allocation2 + $0xf8] sm:$0xff]
    %v8405 = vld [vmem:[#allocation2 + $0x100] sm:$0xff]
    %v8406 = vld [vmem:[#allocation2 + $0x108] sm:$0xff]
    %v8407 = vld [vmem:[#allocation2 + $0x110] sm:$0xff]
    %v8408 = vld [vmem:[#allocation2 + $0x118] sm:$0xff]
    %v8409 = vld [vmem:[#allocation2 + $0x120] sm:$0xff]
    %v8410 = vld [vmem:[#allocation2 + $0x128] sm:$0xff]
    %v8411 = vld [vmem:[#allocation2 + $0x130] sm:$0xff]
    %v8412 = vld [vmem:[#allocation2 + $0x138] sm:$0xff]
    %v8413 = vld [vmem:[#allocation2 + $0x140] sm:$0xff]
    %v8414 = vld [vmem:[#allocation2 + $0x148] sm:$0xff]
    %v8415 = vld [vmem:[#allocation2 + $0x150] sm:$0xff]
    %v8416 = vld [vmem:[#allocation2 + $0x158] sm:$0xff]
    %v8417 = vld [vmem:[#allocation2 + $0x160] sm:$0xff]
    %v8418 = vld [vmem:[#allocation2 + $0x168] sm:$0xff]
    %v8419 = vld [vmem:[#allocation2 + $0x170] sm:$0xff]
    %v8420 = vld [vmem:[#allocation2 + $0x178] sm:$0xff]
    %v8421 = vld [vmem:[#allocation2 + $0x180] sm:$0xff]
    %v8422 = vld [vmem:[#allocation2 + $0x188] sm:$0xff]
    %v8423 = vld [vmem:[#allocation2 + $0x190] sm:$0xff]
    %v8424 = vld [vmem:[#allocation2 + $0x198] sm:$0xff]
    %v8425 = vld [vmem:[#allocation2 + $0x1a0] sm:$0xff]
    %v8426 = vld [vmem:[#allocation2 + $0x1a8] sm:$0xff]
    %v8427 = vld [vmem:[#allocation2 + $0x1b0] sm:$0xff]
    %v8428 = vld [vmem:[#allocation2 + $0x1b8] sm:$0xff]
    %v8429 = vld [vmem:[#allocation2 + $0x1c0] sm:$0xff]
    %v8430 = vld [vmem:[#allocation2 + $0x1c8] sm:$0xff]
    %v8431 = vld [vmem:[#allocation2 + $0x1d0] sm:$0xff]
    %v8432 = vld [vmem:[#allocation2 + $0x1d8] sm:$0xff]
    %v8433 = vld [vmem:[#allocation2 + $0x1e0] sm:$0xff]
    %v8434 = vld [vmem:[#allocation2 + $0x1e8] sm:$0xff]
    %v8435 = vld [vmem:[#allocation2 + $0x1f0] sm:$0xff]
    %v8436 = vld [vmem:[#allocation2 + $0x1f8] sm:$0xff]
    %v8437 = vld [vmem:[%s5] sm:$0xff]
    %v8438 = vld [vmem:[%s5 + $0x8] sm:$0xff]
    %v8439 = vld [vmem:[%s5 + $0x10] sm:$0xff]
    %v8440 = vld [vmem:[%s5 + $0x18] sm:$0xff]
    %v8441 = vld [vmem:[%s5 + $0x20] sm:$0xff]
    %v8442 = vld [vmem:[%s5 + $0x28] sm:$0xff]
    %v8443 = vld [vmem:[%s5 + $0x30] sm:$0xff]
    %v8444 = vld [vmem:[%s5 + $0x38] sm:$0xff]
    %v8445 = vld [vmem:[%s5 + $0x40] sm:$0xff]
    %v8446 = vld [vmem:[%s5 + $0x48] sm:$0xff]
    %v8447 = vld [vmem:[%s5 + $0x50] sm:$0xff]
    %v8448 = vld [vmem:[%s5 + $0x58] sm:$0xff]
    %v8449 = vld [vmem:[%s5 + $0x60] sm:$0xff]
    %v8450 = vld [vmem:[%s5 + $0x68] sm:$0xff]
    %v8451 = vld [vmem:[%s5 + $0x70] sm:$0xff]
    %v8452 = vld [vmem:[%s5 + $0x78] sm:$0xff]
    %v8453 = vld [vmem:[%s6] sm:$0x1]
    %v8455 = vperm.slane %v8453, 0
    %8457 = vmatpush.msra.mxu0 %v8452
    %8458 = vmatpush.msra.mxu0 %v8451
    %8459 = vmatpush.msra.mxu0 %v8450
    %8460 = vmatpush.msra.mxu0 %v8449
    %8461 = vmatpush.msra.mxu0 %v8448
    %8462 = vmatpush.msra.mxu0 %v8447
    %8463 = vmatpush.msra.mxu0 %v8446
    %8464 = vmatpush.msra.mxu0 %v8445
    %8465 = vmatpush.msra.mxu0 %v8444
    %8466 = vmatpush.msra.mxu0 %v8443
    %8467 = vmatpush.msra.mxu0 %v8442
    %8468 = vmatpush.msra.mxu0 %v8441
    %8469 = vmatpush.msra.mxu0 %v8440
    %8470 = vmatpush.msra.mxu0 %v8439
    %8471 = vmatpush.msra.mxu0 %v8438
    %8472 = vmatpush.msra.mxu0 %v8437
    %8473 = vmatmul.f32.gmra.mxu0 %v8373
    %v8474 = vpop.f32.mrf.mxu0
    %v8475 = vadd.f32 %v8455, %v8474
    %8476 = vmatmul.f32.gmra.mxu0 %v8374
    %v8477 = vpop.f32.mrf.mxu0
    %v8478 = vadd.f32 %v8455, %v8477
    %8479 = vmatmul.f32.gmra.mxu0 %v8375
    %v8480 = vpop.f32.mrf.mxu0
    %v8481 = vadd.f32 %v8455, %v8480
    %8482 = vmatmul.f32.gmra.mxu0 %v8376
    %v8483 = vpop.f32.mrf.mxu0
    %v8484 = vadd.f32 %v8455, %v8483
    %8485 = vmatmul.f32.gmra.mxu0 %v8377
    %v8486 = vpop.f32.mrf.mxu0
    %v8487 = vadd.f32 %v8455, %v8486
    %8488 = vmatmul.f32.gmra.mxu0 %v8378
    %v8489 = vpop.f32.mrf.mxu0
    %v8490 = vadd.f32 %v8455, %v8489
    %8491 = vmatmul.f32.gmra.mxu0 %v8379
    %v8492 = vpop.f32.mrf.mxu0
    %v8493 = vadd.f32 %v8455, %v8492
    %8494 = vmatmul.f32.gmra.mxu0 %v8380
    %v8495 = vpop.f32.mrf.mxu0
    %v8496 = vadd.f32 %v8455, %v8495
    %8497 = vmatmul.f32.gmra.mxu0 %v8381
    %v8498 = vpop.f32.mrf.mxu0
    %v8499 = vadd.f32 %v8455, %v8498
    %8500 = vmatmul.f32.gmra.mxu0 %v8382
    %v8501 = vpop.f32.mrf.mxu0
    %v8502 = vadd.f32 %v8455, %v8501
    %8503 = vmatmul.f32.gmra.mxu0 %v8383
    %v8504 = vpop.f32.mrf.mxu0
    %v8505 = vadd.f32 %v8455, %v8504
    %8506 = vmatmul.f32.gmra.mxu0 %v8384
    %v8507 = vpop.f32.mrf.mxu0
    %v8508 = vadd.f32 %v8455, %v8507
    %8509 = vmatmul.f32.gmra.mxu0 %v8385
    %v8510 = vpop.f32.mrf.mxu0
    %v8511 = vadd.f32 %v8455, %v8510
    %8512 = vmatmul.f32.gmra.mxu0 %v8386
    %v8513 = vpop.f32.mrf.mxu0
    %v8514 = vadd.f32 %v8455, %v8513
    %8515 = vmatmul.f32.gmra.mxu0 %v8387
    %v8516 = vpop.f32.mrf.mxu0
    %v8517 = vadd.f32 %v8455, %v8516
    %8518 = vmatmul.f32.gmra.mxu0 %v8388
    %v8519 = vpop.f32.mrf.mxu0
    %v8520 = vadd.f32 %v8455, %v8519
    %8521 = vmatmul.f32.gmra.mxu0 %v8389
    %v8522 = vpop.f32.mrf.mxu0
    %v8523 = vadd.f32 %v8455, %v8522
    %8524 = vmatmul.f32.gmra.mxu0 %v8390
    %v8525 = vpop.f32.mrf.mxu0
    %v8526 = vadd.f32 %v8455, %v8525
    %8527 = vmatmul.f32.gmra.mxu0 %v8391
    %v8528 = vpop.f32.mrf.mxu0
    %v8529 = vadd.f32 %v8455, %v8528
    %8530 = vmatmul.f32.gmra.mxu0 %v8392
    %v8531 = vpop.f32.mrf.mxu0
    %v8532 = vadd.f32 %v8455, %v8531
    %8533 = vmatmul.f32.gmra.mxu0 %v8393
    %v8534 = vpop.f32.mrf.mxu0
    %v8535 = vadd.f32 %v8455, %v8534
    %8536 = vmatmul.f32.gmra.mxu0 %v8394
    %v8537 = vpop.f32.mrf.mxu0
    %v8538 = vadd.f32 %v8455, %v8537
    %8539 = vmatmul.f32.gmra.mxu0 %v8395
    %v8540 = vpop.f32.mrf.mxu0
    %v8541 = vadd.f32 %v8455, %v8540
    %8542 = vmatmul.f32.gmra.mxu0 %v8396
    %v8543 = vpop.f32.mrf.mxu0
    %v8544 = vadd.f32 %v8455, %v8543
    %8545 = vmatmul.f32.gmra.mxu0 %v8397
    %v8546 = vpop.f32.mrf.mxu0
    %v8547 = vadd.f32 %v8455, %v8546
    %8548 = vmatmul.f32.gmra.mxu0 %v8398
    %v8549 = vpop.f32.mrf.mxu0
    %v8550 = vadd.f32 %v8455, %v8549
    %8551 = vmatmul.f32.gmra.mxu0 %v8399
    %v8552 = vpop.f32.mrf.mxu0
    %v8553 = vadd.f32 %v8455, %v8552
    %8554 = vmatmul.f32.gmra.mxu0 %v8400
    %v8555 = vpop.f32.mrf.mxu0
    %v8556 = vadd.f32 %v8455, %v8555
    %8557 = vmatmul.f32.gmra.mxu0 %v8401
    %v8558 = vpop.f32.mrf.mxu0
    %v8559 = vadd.f32 %v8455, %v8558
    %8560 = vmatmul.f32.gmra.mxu0 %v8402
    %v8561 = vpop.f32.mrf.mxu0
    %v8562 = vadd.f32 %v8455, %v8561
    %8563 = vmatmul.f32.gmra.mxu0 %v8403
    %v8564 = vpop.f32.mrf.mxu0
    %v8565 = vadd.f32 %v8455, %v8564
    %8566 = vmatmul.f32.gmra.mxu0 %v8404
    %v8567 = vpop.f32.mrf.mxu0
    %v8568 = vadd.f32 %v8455, %v8567
    %8569 = vmatmul.f32.gmra.mxu0 %v8405
    %v8570 = vpop.f32.mrf.mxu0
    %v8571 = vadd.f32 %v8455, %v8570
    %8572 = vmatmul.f32.gmra.mxu0 %v8406
    %v8573 = vpop.f32.mrf.mxu0
    %v8574 = vadd.f32 %v8455, %v8573
    %8575 = vmatmul.f32.gmra.mxu0 %v8407
    %v8576 = vpop.f32.mrf.mxu0
    %v8577 = vadd.f32 %v8455, %v8576
    %8578 = vmatmul.f32.gmra.mxu0 %v8408
    %v8579 = vpop.f32.mrf.mxu0
    %v8580 = vadd.f32 %v8455, %v8579
    %8581 = vmatmul.f32.gmra.mxu0 %v8409
    %v8582 = vpop.f32.mrf.mxu0
    %v8583 = vadd.f32 %v8455, %v8582
    %8584 = vmatmul.f32.gmra.mxu0 %v8410
    %v8585 = vpop.f32.mrf.mxu0
    %v8586 = vadd.f32 %v8455, %v8585
    %8587 = vmatmul.f32.gmra.mxu0 %v8411
    %v8588 = vpop.f32.mrf.mxu0
    %v8589 = vadd.f32 %v8455, %v8588
    %8590 = vmatmul.f32.gmra.mxu0 %v8412
    %v8591 = vpop.f32.mrf.mxu0
    %v8592 = vadd.f32 %v8455, %v8591
    %8593 = vmatmul.f32.gmra.mxu0 %v8413
    %v8594 = vpop.f32.mrf.mxu0
    %v8595 = vadd.f32 %v8455, %v8594
    %8596 = vmatmul.f32.gmra.mxu0 %v8414
    %v8597 = vpop.f32.mrf.mxu0
    %v8598 = vadd.f32 %v8455, %v8597
    %8599 = vmatmul.f32.gmra.mxu0 %v8415
    %v8600 = vpop.f32.mrf.mxu0
    %v8601 = vadd.f32 %v8455, %v8600
    %8602 = vmatmul.f32.gmra.mxu0 %v8416
    %v8603 = vpop.f32.mrf.mxu0
    %v8604 = vadd.f32 %v8455, %v8603
    %8605 = vmatmul.f32.gmra.mxu0 %v8417
    %v8606 = vpop.f32.mrf.mxu0
    %v8607 = vadd.f32 %v8455, %v8606
    %8608 = vmatmul.f32.gmra.mxu0 %v8418
    %v8609 = vpop.f32.mrf.mxu0
    %v8610 = vadd.f32 %v8455, %v8609
    %8611 = vmatmul.f32.gmra.mxu0 %v8419
    %v8612 = vpop.f32.mrf.mxu0
    %v8613 = vadd.f32 %v8455, %v8612
    %8614 = vmatmul.f32.gmra.mxu0 %v8420
    %v8615 = vpop.f32.mrf.mxu0
    %v8616 = vadd.f32 %v8455, %v8615
    %8617 = vmatmul.f32.gmra.mxu0 %v8421
    %v8618 = vpop.f32.mrf.mxu0
    %v8619 = vadd.f32 %v8455, %v8618
    %8620 = vmatmul.f32.gmra.mxu0 %v8422
    %v8621 = vpop.f32.mrf.mxu0
    %v8622 = vadd.f32 %v8455, %v8621
    %8623 = vmatmul.f32.gmra.mxu0 %v8423
    %v8624 = vpop.f32.mrf.mxu0
    %v8625 = vadd.f32 %v8455, %v8624
    %8626 = vmatmul.f32.gmra.mxu0 %v8424
    %v8627 = vpop.f32.mrf.mxu0
    %v8628 = vadd.f32 %v8455, %v8627
    %8629 = vmatmul.f32.gmra.mxu0 %v8425
    %v8630 = vpop.f32.mrf.mxu0
    %v8631 = vadd.f32 %v8455, %v8630
    %8632 = vmatmul.f32.gmra.mxu0 %v8426
    %v8633 = vpop.f32.mrf.mxu0
    %v8634 = vadd.f32 %v8455, %v8633
    %8635 = vmatmul.f32.gmra.mxu0 %v8427
    %v8636 = vpop.f32.mrf.mxu0
    %v8637 = vadd.f32 %v8455, %v8636
    %8638 = vmatmul.f32.gmra.mxu0 %v8428
    %v8639 = vpop.f32.mrf.mxu0
    %v8640 = vadd.f32 %v8455, %v8639
    %8641 = vmatmul.f32.gmra.mxu0 %v8429
    %v8642 = vpop.f32.mrf.mxu0
    %v8643 = vadd.f32 %v8455, %v8642
    %8644 = vmatmul.f32.gmra.mxu0 %v8430
    %v8645 = vpop.f32.mrf.mxu0
    %v8646 = vadd.f32 %v8455, %v8645
    %8647 = vmatmul.f32.gmra.mxu0 %v8431
    %v8648 = vpop.f32.mrf.mxu0
    %v8649 = vadd.f32 %v8455, %v8648
    %8650 = vmatmul.f32.gmra.mxu0 %v8432
    %v8651 = vpop.f32.mrf.mxu0
    %v8652 = vadd.f32 %v8455, %v8651
    %8653 = vmatmul.f32.gmra.mxu0 %v8433
    %v8654 = vpop.f32.mrf.mxu0
    %v8655 = vadd.f32 %v8455, %v8654
    %8656 = vmatmul.f32.gmra.mxu0 %v8434
    %v8657 = vpop.f32.mrf.mxu0
    %v8658 = vadd.f32 %v8455, %v8657
    %8659 = vmatmul.f32.gmra.mxu0 %v8435
    %v8660 = vpop.f32.mrf.mxu0
    %v8661 = vadd.f32 %v8455, %v8660
    %8662 = vmatmul.f32.gmra.mxu0 %v8436
    %v8663 = vpop.f32.mrf.mxu0
    %v8664 = vadd.f32 %v8455, %v8663
    %8665 = vdwg.mxu0
    %v8666 = vld [vmem:[%s7] sm:$0x1]
    %v8667 = vld [vmem:[%s8] sm:$0x1]
    %v8668 = vadd.f32 %v8475, %v8478
    %v8669 = vadd.f32 %v8668, %v8481
    %v8670 = vadd.f32 %v8669, %v8484
    %v8671 = vadd.f32 %v8670, %v8487
    %v8672 = vadd.f32 %v8671, %v8490
    %v8673 = vadd.f32 %v8672, %v8493
    %v8674 = vadd.f32 %v8673, %v8496
    %v8675 = vadd.f32 %v8674, %v8499
    %v8676 = vadd.f32 %v8675, %v8502
    %v8677 = vadd.f32 %v8676, %v8505
    %v8678 = vadd.f32 %v8677, %v8508
    %v8679 = vadd.f32 %v8678, %v8511
    %v8680 = vadd.f32 %v8679, %v8514
    %v8681 = vadd.f32 %v8680, %v8517
    %v8682 = vadd.f32 %v8681, %v8520
    %v8683 = vadd.f32 %v8682, %v8523
    %v8684 = vadd.f32 %v8683, %v8526
    %v8685 = vadd.f32 %v8684, %v8529
    %v8686 = vadd.f32 %v8685, %v8532
    %v8687 = vadd.f32 %v8686, %v8535
    %v8688 = vadd.f32 %v8687, %v8538
    %v8689 = vadd.f32 %v8688, %v8541
    %v8690 = vadd.f32 %v8689, %v8544
    %v8691 = vadd.f32 %v8690, %v8547
    %v8692 = vadd.f32 %v8691, %v8550
    %v8693 = vadd.f32 %v8692, %v8553
    %v8694 = vadd.f32 %v8693, %v8556
    %v8695 = vadd.f32 %v8694, %v8559
    %v8696 = vadd.f32 %v8695, %v8562
    %v8697 = vadd.f32 %v8696, %v8565
    %v8698 = vadd.f32 %v8697, %v8568
    %v8699 = vadd.f32 %v8698, %v8571
    %v8700 = vadd.f32 %v8699, %v8574
    %v8701 = vadd.f32 %v8700, %v8577
    %v8702 = vadd.f32 %v8701, %v8580
    %v8703 = vadd.f32 %v8702, %v8583
    %v8704 = vadd.f32 %v8703, %v8586
    %v8705 = vadd.f32 %v8704, %v8589
    %v8706 = vadd.f32 %v8705, %v8592
    %v8707 = vadd.f32 %v8706, %v8595
    %v8708 = vadd.f32 %v8707, %v8598
    %v8709 = vadd.f32 %v8708, %v8601
    %v8710 = vadd.f32 %v8709, %v8604
    %v8711 = vadd.f32 %v8710, %v8607
    %v8712 = vadd.f32 %v8711, %v8610
    %v8713 = vadd.f32 %v8712, %v8613
    %v8714 = vadd.f32 %v8713, %v8616
    %v8715 = vadd.f32 %v8714, %v8619
    %v8716 = vadd.f32 %v8715, %v8622
    %v8717 = vadd.f32 %v8716, %v8625
    %v8718 = vadd.f32 %v8717, %v8628
    %v8719 = vadd.f32 %v8718, %v8631
    %v8720 = vadd.f32 %v8719, %v8634
    %v8721 = vadd.f32 %v8720, %v8637
    %v8722 = vadd.f32 %v8721, %v8640
    %v8723 = vadd.f32 %v8722, %v8643
    %v8724 = vadd.f32 %v8723, %v8646
    %v8725 = vadd.f32 %v8724, %v8649
    %v8726 = vadd.f32 %v8725, %v8652
    %v8727 = vadd.f32 %v8726, %v8655
    %v8728 = vadd.f32 %v8727, %v8658
    %v8729 = vadd.f32 %v8728, %v8661
    %v8730 = vadd.f32 %v8729, %v8664
    %v8731 = vrot.slane %v8730, 4
    %v8732 = vadd.f32 %v8730, %v8731
    %v8733 = vrot.slane %v8732, 2
    %v8734 = vadd.f32 %v8732, %v8733
    %v8735 = vrot.slane %v8734, 1
    %v8736 = vadd.f32 %v8734, %v8735
    %v8737 = vmul.f32 %v8736, 0.001953125
    %v8738 = vsub.f32 %v8475, %v8737
    %v8739 = vsub.f32 %v8478, %v8737
    %v8740 = vsub.f32 %v8481, %v8737
    %v8741 = vsub.f32 %v8484, %v8737
    %v8742 = vsub.f32 %v8487, %v8737
    %v8743 = vsub.f32 %v8490, %v8737
    %v8744 = vsub.f32 %v8493, %v8737
    %v8745 = vsub.f32 %v8496, %v8737
    %v8746 = vsub.f32 %v8499, %v8737
    %v8747 = vsub.f32 %v8502, %v8737
    %v8748 = vsub.f32 %v8505, %v8737
    %v8749 = vsub.f32 %v8508, %v8737
    %v8750 = vsub.f32 %v8511, %v8737
    %v8751 = vsub.f32 %v8514, %v8737
    %v8752 = vsub.f32 %v8517, %v8737
    %v8753 = vsub.f32 %v8520, %v8737
    %v8754 = vsub.f32 %v8523, %v8737
    %v8755 = vsub.f32 %v8526, %v8737
    %v8756 = vsub.f32 %v8529, %v8737
    %v8757 = vsub.f32 %v8532, %v8737
    %v8758 = vsub.f32 %v8535, %v8737
    %v8759 = vsub.f32 %v8538, %v8737
    %v8760 = vsub.f32 %v8541, %v8737
    %v8761 = vsub.f32 %v8544, %v8737
    %v8762 = vsub.f32 %v8547, %v8737
    %v8763 = vsub.f32 %v8550, %v8737
    %v8764 = vsub.f32 %v8553, %v8737
    %v8765 = vsub.f32 %v8556, %v8737
    %v8766 = vsub.f32 %v8559, %v8737
    %v8767 = vsub.f32 %v8562, %v8737
    %v8768 = vsub.f32 %v8565, %v8737
    %v8769 = vsub.f32 %v8568, %v8737
    %v8770 = vsub.f32 %v8571, %v8737
    %v8771 = vsub.f32 %v8574, %v8737
    %v8772 = vsub.f32 %v8577, %v8737
    %v8773 = vsub.f32 %v8580, %v8737
    %v8774 = vsub.f32 %v8583, %v8737
    %v8775 = vsub.f32 %v8586, %v8737
    %v8776 = vsub.f32 %v8589, %v8737
    %v8777 = vsub.f32 %v8592, %v8737
    %v8778 = vsub.f32 %v8595, %v8737
    %v8779 = vsub.f32 %v8598, %v8737
    %v8780 = vsub.f32 %v8601, %v8737
    %v8781 = vsub.f32 %v8604, %v8737
    %v8782 = vsub.f32 %v8607, %v8737
    %v8783 = vsub.f32 %v8610, %v8737
    %v8784 = vsub.f32 %v8613, %v8737
    %v8785 = vsub.f32 %v8616, %v8737
    %v8786 = vsub.f32 %v8619, %v8737
    %v8787 = vsub.f32 %v8622, %v8737
    %v8788 = vsub.f32 %v8625, %v8737
    %v8789 = vsub.f32 %v8628, %v8737
    %v8790 = vsub.f32 %v8631, %v8737
    %v8791 = vsub.f32 %v8634, %v8737
    %v8792 = vsub.f32 %v8637, %v8737
    %v8793 = vsub.f32 %v8640, %v8737
    %v8794 = vsub.f32 %v8643, %v8737
    %v8795 = vsub.f32 %v8646, %v8737
    %v8796 = vsub.f32 %v8649, %v8737
    %v8797 = vsub.f32 %v8652, %v8737
    %v8798 = vsub.f32 %v8655, %v8737
    %v8799 = vsub.f32 %v8658, %v8737
    %v8800 = vsub.f32 %v8661, %v8737
    %v8801 = vsub.f32 %v8664, %v8737
    %v8802 = vmul.f32 %v8738, %v8738
    %v8803 = vmul.f32 %v8739, %v8739
    %v8804 = vmul.f32 %v8740, %v8740
    %v8805 = vmul.f32 %v8741, %v8741
    %v8806 = vmul.f32 %v8742, %v8742
    %v8807 = vmul.f32 %v8743, %v8743
    %v8808 = vmul.f32 %v8744, %v8744
    %v8809 = vmul.f32 %v8745, %v8745
    %v8810 = vmul.f32 %v8746, %v8746
    %v8811 = vmul.f32 %v8747, %v8747
    %v8812 = vmul.f32 %v8748, %v8748
    %v8813 = vmul.f32 %v8749, %v8749
    %v8814 = vmul.f32 %v8750, %v8750
    %v8815 = vmul.f32 %v8751, %v8751
    %v8816 = vmul.f32 %v8752, %v8752
    %v8817 = vmul.f32 %v8753, %v8753
    %v8818 = vmul.f32 %v8754, %v8754
    %v8819 = vmul.f32 %v8755, %v8755
    %v8820 = vmul.f32 %v8756, %v8756
    %v8821 = vmul.f32 %v8757, %v8757
    %v8822 = vmul.f32 %v8758, %v8758
    %v8823 = vmul.f32 %v8759, %v8759
    %v8824 = vmul.f32 %v8760, %v8760
    %v8825 = vmul.f32 %v8761, %v8761
    %v8826 = vmul.f32 %v8762, %v8762
    %v8827 = vmul.f32 %v8763, %v8763
    %v8828 = vmul.f32 %v8764, %v8764
    %v8829 = vmul.f32 %v8765, %v8765
    %v8830 = vmul.f32 %v8766, %v8766
    %v8831 = vmul.f32 %v8767, %v8767
    %v8832 = vmul.f32 %v8768, %v8768
    %v8833 = vmul.f32 %v8769, %v8769
    %v8834 = vmul.f32 %v8770, %v8770
    %v8835 = vmul.f32 %v8771, %v8771
    %v8836 = vmul.f32 %v8772, %v8772
    %v8837 = vmul.f32 %v8773, %v8773
    %v8838 = vmul.f32 %v8774, %v8774
    %v8839 = vmul.f32 %v8775, %v8775
    %v8840 = vmul.f32 %v8776, %v8776
    %v8841 = vmul.f32 %v8777, %v8777
    %v8842 = vmul.f32 %v8778, %v8778
    %v8843 = vmul.f32 %v8779, %v8779
    %v8844 = vmul.f32 %v8780, %v8780
    %v8845 = vmul.f32 %v8781, %v8781
    %v8846 = vmul.f32 %v8782, %v8782
    %v8847 = vmul.f32 %v8783, %v8783
    %v8848 = vmul.f32 %v8784, %v8784
    %v8849 = vmul.f32 %v8785, %v8785
    %v8850 = vmul.f32 %v8786, %v8786
    %v8851 = vmul.f32 %v8787, %v8787
    %v8852 = vmul.f32 %v8788, %v8788
    %v8853 = vmul.f32 %v8789, %v8789
    %v8854 = vmul.f32 %v8790, %v8790
    %v8855 = vmul.f32 %v8791, %v8791
    %v8856 = vmul.f32 %v8792, %v8792
    %v8857 = vmul.f32 %v8793, %v8793
    %v8858 = vmul.f32 %v8794, %v8794
    %v8859 = vmul.f32 %v8795, %v8795
    %v8860 = vmul.f32 %v8796, %v8796
    %v8861 = vmul.f32 %v8797, %v8797
    %v8862 = vmul.f32 %v8798, %v8798
    %v8863 = vmul.f32 %v8799, %v8799
    %v8864 = vmul.f32 %v8800, %v8800
    %v8865 = vmul.f32 %v8801, %v8801
    %v8866 = vadd.f32 %v8802, %v8803
    %v8867 = vadd.f32 %v8866, %v8804
    %v8868 = vadd.f32 %v8867, %v8805
    %v8869 = vadd.f32 %v8868, %v8806
    %v8870 = vadd.f32 %v8869, %v8807
    %v8871 = vadd.f32 %v8870, %v8808
    %v8872 = vadd.f32 %v8871, %v8809
    %v8873 = vadd.f32 %v8872, %v8810
    %v8874 = vadd.f32 %v8873, %v8811
    %v8875 = vadd.f32 %v8874, %v8812
    %v8876 = vadd.f32 %v8875, %v8813
    %v8877 = vadd.f32 %v8876, %v8814
    %v8878 = vadd.f32 %v8877, %v8815
    %v8879 = vadd.f32 %v8878, %v8816
    %v8880 = vadd.f32 %v8879, %v8817
    %v8881 = vadd.f32 %v8880, %v8818
    %v8882 = vadd.f32 %v8881, %v8819
    %v8883 = vadd.f32 %v8882, %v8820
    %v8884 = vadd.f32 %v8883, %v8821
    %v8885 = vadd.f32 %v8884, %v8822
    %v8886 = vadd.f32 %v8885, %v8823
    %v8887 = vadd.f32 %v8886, %v8824
    %v8888 = vadd.f32 %v8887, %v8825
    %v8889 = vadd.f32 %v8888, %v8826
    %v8890 = vadd.f32 %v8889, %v8827
    %v8891 = vadd.f32 %v8890, %v8828
    %v8892 = vadd.f32 %v8891, %v8829
    %v8893 = vadd.f32 %v8892, %v8830
    %v8894 = vadd.f32 %v8893, %v8831
    %v8895 = vadd.f32 %v8894, %v8832
    %v8896 = vadd.f32 %v8895, %v8833
    %v8897 = vadd.f32 %v8896, %v8834
    %v8898 = vadd.f32 %v8897, %v8835
    %v8899 = vadd.f32 %v8898, %v8836
    %v8900 = vadd.f32 %v8899, %v8837
    %v8901 = vadd.f32 %v8900, %v8838
    %v8902 = vadd.f32 %v8901, %v8839
    %v8903 = vadd.f32 %v8902, %v8840
    %v8904 = vadd.f32 %v8903, %v8841
    %v8905 = vadd.f32 %v8904, %v8842
    %v8906 = vadd.f32 %v8905, %v8843
    %v8907 = vadd.f32 %v8906, %v8844
    %v8908 = vadd.f32 %v8907, %v8845
    %v8909 = vadd.f32 %v8908, %v8846
    %v8910 = vadd.f32 %v8909, %v8847
    %v8911 = vadd.f32 %v8910, %v8848
    %v8912 = vadd.f32 %v8911, %v8849
    %v8913 = vadd.f32 %v8912, %v8850
    %v8914 = vadd.f32 %v8913, %v8851
    %v8915 = vadd.f32 %v8914, %v8852
    %v8916 = vadd.f32 %v8915, %v8853
    %v8917 = vadd.f32 %v8916, %v8854
    %v8918 = vadd.f32 %v8917, %v8855
    %v8919 = vadd.f32 %v8918, %v8856
    %v8920 = vadd.f32 %v8919, %v8857
    %v8921 = vadd.f32 %v8920, %v8858
    %v8922 = vadd.f32 %v8921, %v8859
    %v8923 = vadd.f32 %v8922, %v8860
    %v8924 = vadd.f32 %v8923, %v8861
    %v8925 = vadd.f32 %v8924, %v8862
    %v8926 = vadd.f32 %v8925, %v8863
    %v8927 = vadd.f32 %v8926, %v8864
    %v8928 = vadd.f32 %v8927, %v8865
    %v8929 = vrot.slane %v8928, 4
    %v8930 = vadd.f32 %v8928, %v8929
    %v8931 = vrot.slane %v8930, 2
    %v8932 = vadd.f32 %v8930, %v8931
    %v8933 = vrot.slane %v8932, 1
    %v8934 = vadd.f32 %v8932, %v8933
    %v8935 = vmul.f32 %v8934, 0.001953125
    %v8936 = vadd.f32 %v8935, 1e-05
    %v8937 = vrsqrt.pop %v8936
    %v8938 = vmul.f32 %v8937, %v8936
    %v8939 = vmul.f32 %v8938, %v8937
    %v8940 = vmul.f32 0.5, %v8939
    %v8941 = vsub.f32 1.5, %v8940
    %v8942 = vmul.f32 %v8937, %v8941
    %vm8943 = vweird.f32 %v8936
    %vm8944 = vweird.f32 %v8937
    %vm8945 = vmor %vm8943, %vm8944
    %v8946 = vsel %vm8945, %v8937, %v8942
    %v8947 = vmul.f32 %v8946, %v8666
    %v8948 = vperm.slane %v8947, 0
    %v8949 = vmul.f32 %v8738, %v8948
    %v8950 = vmul.f32 %v8739, %v8948
    %v8951 = vmul.f32 %v8740, %v8948
    %v8952 = vmul.f32 %v8741, %v8948
    %v8953 = vmul.f32 %v8742, %v8948
    %v8954 = vmul.f32 %v8743, %v8948
    %v8955 = vmul.f32 %v8744, %v8948
    %v8956 = vmul.f32 %v8745, %v8948
    %v8957 = vmul.f32 %v8746, %v8948
    %v8958 = vmul.f32 %v8747, %v8948
    %v8959 = vmul.f32 %v8748, %v8948
    %v8960 = vmul.f32 %v8749, %v8948
    %v8961 = vmul.f32 %v8750, %v8948
    %v8962 = vmul.f32 %v8751, %v8948
    %v8963 = vmul.f32 %v8752, %v8948
    %v8964 = vmul.f32 %v8753, %v8948
    %v8965 = vmul.f32 %v8754, %v8948
    %v8966 = vmul.f32 %v8755, %v8948
    %v8967 = vmul.f32 %v8756, %v8948
    %v8968 = vmul.f32 %v8757, %v8948
    %v8969 = vmul.f32 %v8758, %v8948
    %v8970 = vmul.f32 %v8759, %v8948
    %v8971 = vmul.f32 %v8760, %v8948
    %v8972 = vmul.f32 %v8761, %v8948
    %v8973 = vmul.f32 %v8762, %v8948
    %v8974 = vmul.f32 %v8763, %v8948
    %v8975 = vmul.f32 %v8764, %v8948
    %v8976 = vmul.f32 %v8765, %v8948
    %v8977 = vmul.f32 %v8766, %v8948
    %v8978 = vmul.f32 %v8767, %v8948
    %v8979 = vmul.f32 %v8768, %v8948
    %v8980 = vmul.f32 %v8769, %v8948
    %v8981 = vmul.f32 %v8770, %v8948
    %v8982 = vmul.f32 %v8771, %v8948
    %v8983 = vmul.f32 %v8772, %v8948
    %v8984 = vmul.f32 %v8773, %v8948
    %v8985 = vmul.f32 %v8774, %v8948
    %v8986 = vmul.f32 %v8775, %v8948
    %v8987 = vmul.f32 %v8776, %v8948
    %v8988 = vmul.f32 %v8777, %v8948
    %v8989 = vmul.f32 %v8778, %v8948
    %v8990 = vmul.f32 %v8779, %v8948
    %v8991 = vmul.f32 %v8780, %v8948
    %v8992 = vmul.f32 %v8781, %v8948
    %v8993 = vmul.f32 %v8782, %v8948
    %v8994 = vmul.f32 %v8783, %v8948
    %v8995 = vmul.f32 %v8784, %v8948
    %v8996 = vmul.f32 %v8785, %v8948
    %v8997 = vmul.f32 %v8786, %v8948
    %v8998 = vmul.f32 %v8787, %v8948
    %v8999 = vmul.f32 %v8788, %v8948
    %v9000 = vmul.f32 %v8789, %v8948
    %v9001 = vmul.f32 %v8790, %v8948
    %v9002 = vmul.f32 %v8791, %v8948
    %v9003 = vmul.f32 %v8792, %v8948
    %v9004 = vmul.f32 %v8793, %v8948
    %v9005 = vmul.f32 %v8794, %v8948
    %v9006 = vmul.f32 %v8795, %v8948
    %v9007 = vmul.f32 %v8796, %v8948
    %v9008 = vmul.f32 %v8797, %v8948
    %v9009 = vmul.f32 %v8798, %v8948
    %v9010 = vmul.f32 %v8799, %v8948
    %v9011 = vmul.f32 %v8800, %v8948
    %v9012 = vmul.f32 %v8801, %v8948
    %v9014 = vperm.slane %v8667, 0
    %v9016 = vadd.f32 %v8949, %v9014
    %v9017 = vadd.f32 %v8950, %v9014
    %v9018 = vadd.f32 %v8951, %v9014
    %v9019 = vadd.f32 %v8952, %v9014
    %v9020 = vadd.f32 %v8953, %v9014
    %v9021 = vadd.f32 %v8954, %v9014
    %v9022 = vadd.f32 %v8955, %v9014
    %v9023 = vadd.f32 %v8956, %v9014
    %v9024 = vadd.f32 %v8957, %v9014
    %v9025 = vadd.f32 %v8958, %v9014
    %v9026 = vadd.f32 %v8959, %v9014
    %v9027 = vadd.f32 %v8960, %v9014
    %v9028 = vadd.f32 %v8961, %v9014
    %v9029 = vadd.f32 %v8962, %v9014
    %v9030 = vadd.f32 %v8963, %v9014
    %v9031 = vadd.f32 %v8964, %v9014
    %v9032 = vadd.f32 %v8965, %v9014
    %v9033 = vadd.f32 %v8966, %v9014
    %v9034 = vadd.f32 %v8967, %v9014
    %v9035 = vadd.f32 %v8968, %v9014
    %v9036 = vadd.f32 %v8969, %v9014
    %v9037 = vadd.f32 %v8970, %v9014
    %v9038 = vadd.f32 %v8971, %v9014
    %v9039 = vadd.f32 %v8972, %v9014
    %v9040 = vadd.f32 %v8973, %v9014
    %v9041 = vadd.f32 %v8974, %v9014
    %v9042 = vadd.f32 %v8975, %v9014
    %v9043 = vadd.f32 %v8976, %v9014
    %v9044 = vadd.f32 %v8977, %v9014
    %v9045 = vadd.f32 %v8978, %v9014
    %v9046 = vadd.f32 %v8979, %v9014
    %v9047 = vadd.f32 %v8980, %v9014
    %v9048 = vadd.f32 %v8981, %v9014
    %v9049 = vadd.f32 %v8982, %v9014
    %v9050 = vadd.f32 %v8983, %v9014
    %v9051 = vadd.f32 %v8984, %v9014
    %v9052 = vadd.f32 %v8985, %v9014
    %v9053 = vadd.f32 %v8986, %v9014
    %v9054 = vadd.f32 %v8987, %v9014
    %v9055 = vadd.f32 %v8988, %v9014
    %v9056 = vadd.f32 %v8989, %v9014
    %v9057 = vadd.f32 %v8990, %v9014
    %v9058 = vadd.f32 %v8991, %v9014
    %v9059 = vadd.f32 %v8992, %v9014
    %v9060 = vadd.f32 %v8993, %v9014
    %v9061 = vadd.f32 %v8994, %v9014
    %v9062 = vadd.f32 %v8995, %v9014
    %v9063 = vadd.f32 %v8996, %v9014
    %v9064 = vadd.f32 %v8997, %v9014
    %v9065 = vadd.f32 %v8998, %v9014
    %v9066 = vadd.f32 %v8999, %v9014
    %v9067 = vadd.f32 %v9000, %v9014
    %v9068 = vadd.f32 %v9001, %v9014
    %v9069 = vadd.f32 %v9002, %v9014
    %v9070 = vadd.f32 %v9003, %v9014
    %v9071 = vadd.f32 %v9004, %v9014
    %v9072 = vadd.f32 %v9005, %v9014
    %v9073 = vadd.f32 %v9006, %v9014
    %v9074 = vadd.f32 %v9007, %v9014
    %v9075 = vadd.f32 %v9008, %v9014
    %v9076 = vadd.f32 %v9009, %v9014
    %v9077 = vadd.f32 %v9010, %v9014
    %v9078 = vadd.f32 %v9011, %v9014
    %v9079 = vadd.f32 %v9012, %v9014
    %v9080 = vld [vmem:[#allocation4] sm:$0xff]
    %v9081 = vld [vmem:[#allocation4 + $0x8] sm:$0xff]
    %v9082 = vld [vmem:[#allocation4 + $0x10] sm:$0xff]
    %v9083 = vld [vmem:[#allocation4 + $0x18] sm:$0xff]
    %v9084 = vld [vmem:[#allocation4 + $0x20] sm:$0xff]
    %v9085 = vld [vmem:[#allocation4 + $0x28] sm:$0xff]
    %v9086 = vld [vmem:[#allocation4 + $0x30] sm:$0xff]
    %v9087 = vld [vmem:[#allocation4 + $0x38] sm:$0xff]
    %v9088 = vld [vmem:[#allocation4 + $0x40] sm:$0xff]
    %v9089 = vld [vmem:[#allocation4 + $0x48] sm:$0xff]
    %v9090 = vld [vmem:[#allocation4 + $0x50] sm:$0xff]
    %v9091 = vld [vmem:[#allocation4 + $0x58] sm:$0xff]
    %v9092 = vld [vmem:[#allocation4 + $0x60] sm:$0xff]
    %v9093 = vld [vmem:[#allocation4 + $0x68] sm:$0xff]
    %v9094 = vld [vmem:[#allocation4 + $0x70] sm:$0xff]
    %v9095 = vld [vmem:[#allocation4 + $0x78] sm:$0xff]
    %v9096 = vld [vmem:[#allocation4 + $0x80] sm:$0xff]
    %v9097 = vld [vmem:[#allocation4 + $0x88] sm:$0xff]
    %v9098 = vld [vmem:[#allocation4 + $0x90] sm:$0xff]
    %v9099 = vld [vmem:[#allocation4 + $0x98] sm:$0xff]
    %v9100 = vld [vmem:[#allocation4 + $0xa0] sm:$0xff]
    %v9101 = vld [vmem:[#allocation4 + $0xa8] sm:$0xff]
    %v9102 = vld [vmem:[#allocation4 + $0xb0] sm:$0xff]
    %v9103 = vld [vmem:[#allocation4 + $0xb8] sm:$0xff]
    %v9104 = vld [vmem:[#allocation4 + $0xc0] sm:$0xff]
    %v9105 = vld [vmem:[#allocation4 + $0xc8] sm:$0xff]
    %v9106 = vld [vmem:[#allocation4 + $0xd0] sm:$0xff]
    %v9107 = vld [vmem:[#allocation4 + $0xd8] sm:$0xff]
    %v9108 = vld [vmem:[#allocation4 + $0xe0] sm:$0xff]
    %v9109 = vld [vmem:[#allocation4 + $0xe8] sm:$0xff]
    %v9110 = vld [vmem:[#allocation4 + $0xf0] sm:$0xff]
    %v9111 = vld [vmem:[#allocation4 + $0xf8] sm:$0xff]
    %v9112 = vld [vmem:[#allocation4 + $0x100] sm:$0xff]
    %v9113 = vld [vmem:[#allocation4 + $0x108] sm:$0xff]
    %v9114 = vld [vmem:[#allocation4 + $0x110] sm:$0xff]
    %v9115 = vld [vmem:[#allocation4 + $0x118] sm:$0xff]
    %v9116 = vld [vmem:[#allocation4 + $0x120] sm:$0xff]
    %v9117 = vld [vmem:[#allocation4 + $0x128] sm:$0xff]
    %v9118 = vld [vmem:[#allocation4 + $0x130] sm:$0xff]
    %v9119 = vld [vmem:[#allocation4 + $0x138] sm:$0xff]
    %v9120 = vld [vmem:[#allocation4 + $0x140] sm:$0xff]
    %v9121 = vld [vmem:[#allocation4 + $0x148] sm:$0xff]
    %v9122 = vld [vmem:[#allocation4 + $0x150] sm:$0xff]
    %v9123 = vld [vmem:[#allocation4 + $0x158] sm:$0xff]
    %v9124 = vld [vmem:[#allocation4 + $0x160] sm:$0xff]
    %v9125 = vld [vmem:[#allocation4 + $0x168] sm:$0xff]
    %v9126 = vld [vmem:[#allocation4 + $0x170] sm:$0xff]
    %v9127 = vld [vmem:[#allocation4 + $0x178] sm:$0xff]
    %v9128 = vld [vmem:[#allocation4 + $0x180] sm:$0xff]
    %v9129 = vld [vmem:[#allocation4 + $0x188] sm:$0xff]
    %v9130 = vld [vmem:[#allocation4 + $0x190] sm:$0xff]
    %v9131 = vld [vmem:[#allocation4 + $0x198] sm:$0xff]
    %v9132 = vld [vmem:[#allocation4 + $0x1a0] sm:$0xff]
    %v9133 = vld [vmem:[#allocation4 + $0x1a8] sm:$0xff]
    %v9134 = vld [vmem:[#allocation4 + $0x1b0] sm:$0xff]
    %v9135 = vld [vmem:[#allocation4 + $0x1b8] sm:$0xff]
    %v9136 = vld [vmem:[#allocation4 + $0x1c0] sm:$0xff]
    %v9137 = vld [vmem:[#allocation4 + $0x1c8] sm:$0xff]
    %v9138 = vld [vmem:[#allocation4 + $0x1d0] sm:$0xff]
    %v9139 = vld [vmem:[#allocation4 + $0x1d8] sm:$0xff]
    %v9140 = vld [vmem:[#allocation4 + $0x1e0] sm:$0xff]
    %v9141 = vld [vmem:[#allocation4 + $0x1e8] sm:$0xff]
    %v9142 = vld [vmem:[#allocation4 + $0x1f0] sm:$0xff]
    %v9143 = vld [vmem:[#allocation4 + $0x1f8] sm:$0xff]
    %v9144 = vadd.f32 %v9016, %v9080
    %v9145 = vadd.f32 %v9017, %v9081
    %v9146 = vadd.f32 %v9018, %v9082
    %v9147 = vadd.f32 %v9019, %v9083
    %v9148 = vadd.f32 %v9020, %v9084
    %v9149 = vadd.f32 %v9021, %v9085
    %v9150 = vadd.f32 %v9022, %v9086
    %v9151 = vadd.f32 %v9023, %v9087
    %v9152 = vadd.f32 %v9024, %v9088
    %v9153 = vadd.f32 %v9025, %v9089
    %v9154 = vadd.f32 %v9026, %v9090
    %v9155 = vadd.f32 %v9027, %v9091
    %v9156 = vadd.f32 %v9028, %v9092
    %v9157 = vadd.f32 %v9029, %v9093
    %v9158 = vadd.f32 %v9030, %v9094
    %v9159 = vadd.f32 %v9031, %v9095
    %v9160 = vadd.f32 %v9032, %v9096
    %v9161 = vadd.f32 %v9033, %v9097
    %v9162 = vadd.f32 %v9034, %v9098
    %v9163 = vadd.f32 %v9035, %v9099
    %v9164 = vadd.f32 %v9036, %v9100
    %v9165 = vadd.f32 %v9037, %v9101
    %v9166 = vadd.f32 %v9038, %v9102
    %v9167 = vadd.f32 %v9039, %v9103
    %v9168 = vadd.f32 %v9040, %v9104
    %v9169 = vadd.f32 %v9041, %v9105
    %v9170 = vadd.f32 %v9042, %v9106
    %v9171 = vadd.f32 %v9043, %v9107
    %v9172 = vadd.f32 %v9044, %v9108
    %v9173 = vadd.f32 %v9045, %v9109
    %v9174 = vadd.f32 %v9046, %v9110
    %v9175 = vadd.f32 %v9047, %v9111
    %v9176 = vadd.f32 %v9048, %v9112
    %v9177 = vadd.f32 %v9049, %v9113
    %v9178 = vadd.f32 %v9050, %v9114
    %v9179 = vadd.f32 %v9051, %v9115
    %v9180 = vadd.f32 %v9052, %v9116
    %v9181 = vadd.f32 %v9053, %v9117
    %v9182 = vadd.f32 %v9054, %v9118
    %v9183 = vadd.f32 %v9055, %v9119
    %v9184 = vadd.f32 %v9056, %v9120
    %v9185 = vadd.f32 %v9057, %v9121
    %v9186 = vadd.f32 %v9058, %v9122
    %v9187 = vadd.f32 %v9059, %v9123
    %v9188 = vadd.f32 %v9060, %v9124
    %v9189 = vadd.f32 %v9061, %v9125
    %v9190 = vadd.f32 %v9062, %v9126
    %v9191 = vadd.f32 %v9063, %v9127
    %v9192 = vadd.f32 %v9064, %v9128
    %v9193 = vadd.f32 %v9065, %v9129
    %v9194 = vadd.f32 %v9066, %v9130
    %v9195 = vadd.f32 %v9067, %v9131
    %v9196 = vadd.f32 %v9068, %v9132
    %v9197 = vadd.f32 %v9069, %v9133
    %v9198 = vadd.f32 %v9070, %v9134
    %v9199 = vadd.f32 %v9071, %v9135
    %v9200 = vadd.f32 %v9072, %v9136
    %v9201 = vadd.f32 %v9073, %v9137
    %v9202 = vadd.f32 %v9074, %v9138
    %v9203 = vadd.f32 %v9075, %v9139
    %v9204 = vadd.f32 %v9076, %v9140
    %v9205 = vadd.f32 %v9077, %v9141
    %v9206 = vadd.f32 %v9078, %v9142
    %v9207 = vadd.f32 %v9079, %v9143
    %vm9208 = vcmp.gt.f32.partialorder %v9144, 0.0
    %vm9209 = vcmp.gt.f32.partialorder %v9145, 0.0
    %vm9210 = vcmp.gt.f32.partialorder %v9146, 0.0
    %vm9211 = vcmp.gt.f32.partialorder %v9147, 0.0
    %vm9212 = vcmp.gt.f32.partialorder %v9148, 0.0
    %vm9213 = vcmp.gt.f32.partialorder %v9149, 0.0
    %vm9214 = vcmp.gt.f32.partialorder %v9150, 0.0
    %vm9215 = vcmp.gt.f32.partialorder %v9151, 0.0
    %vm9216 = vcmp.gt.f32.partialorder %v9152, 0.0
    %vm9217 = vcmp.gt.f32.partialorder %v9153, 0.0
    %vm9218 = vcmp.gt.f32.partialorder %v9154, 0.0
    %vm9219 = vcmp.gt.f32.partialorder %v9155, 0.0
    %vm9220 = vcmp.gt.f32.partialorder %v9156, 0.0
    %vm9221 = vcmp.gt.f32.partialorder %v9157, 0.0
    %vm9222 = vcmp.gt.f32.partialorder %v9158, 0.0
    %vm9223 = vcmp.gt.f32.partialorder %v9159, 0.0
    %vm9224 = vcmp.gt.f32.partialorder %v9160, 0.0
    %vm9225 = vcmp.gt.f32.partialorder %v9161, 0.0
    %vm9226 = vcmp.gt.f32.partialorder %v9162, 0.0
    %vm9227 = vcmp.gt.f32.partialorder %v9163, 0.0
    %vm9228 = vcmp.gt.f32.partialorder %v9164, 0.0
    %vm9229 = vcmp.gt.f32.partialorder %v9165, 0.0
    %vm9230 = vcmp.gt.f32.partialorder %v9166, 0.0
    %vm9231 = vcmp.gt.f32.partialorder %v9167, 0.0
    %vm9232 = vcmp.gt.f32.partialorder %v9168, 0.0
    %vm9233 = vcmp.gt.f32.partialorder %v9169, 0.0
    %vm9234 = vcmp.gt.f32.partialorder %v9170, 0.0
    %vm9235 = vcmp.gt.f32.partialorder %v9171, 0.0
    %vm9236 = vcmp.gt.f32.partialorder %v9172, 0.0
    %vm9237 = vcmp.gt.f32.partialorder %v9173, 0.0
    %vm9238 = vcmp.gt.f32.partialorder %v9174, 0.0
    %vm9239 = vcmp.gt.f32.partialorder %v9175, 0.0
    %vm9240 = vcmp.gt.f32.partialorder %v9176, 0.0
    %vm9241 = vcmp.gt.f32.partialorder %v9177, 0.0
    %vm9242 = vcmp.gt.f32.partialorder %v9178, 0.0
    %vm9243 = vcmp.gt.f32.partialorder %v9179, 0.0
    %vm9244 = vcmp.gt.f32.partialorder %v9180, 0.0
    %vm9245 = vcmp.gt.f32.partialorder %v9181, 0.0
    %vm9246 = vcmp.gt.f32.partialorder %v9182, 0.0
    %vm9247 = vcmp.gt.f32.partialorder %v9183, 0.0
    %vm9248 = vcmp.gt.f32.partialorder %v9184, 0.0
    %vm9249 = vcmp.gt.f32.partialorder %v9185, 0.0
    %vm9250 = vcmp.gt.f32.partialorder %v9186, 0.0
    %vm9251 = vcmp.gt.f32.partialorder %v9187, 0.0
    %vm9252 = vcmp.gt.f32.partialorder %v9188, 0.0
    %vm9253 = vcmp.gt.f32.partialorder %v9189, 0.0
    %vm9254 = vcmp.gt.f32.partialorder %v9190, 0.0
    %vm9255 = vcmp.gt.f32.partialorder %v9191, 0.0
    %vm9256 = vcmp.gt.f32.partialorder %v9192, 0.0
    %vm9257 = vcmp.gt.f32.partialorder %v9193, 0.0
    %vm9258 = vcmp.gt.f32.partialorder %v9194, 0.0
    %vm9259 = vcmp.gt.f32.partialorder %v9195, 0.0
    %vm9260 = vcmp.gt.f32.partialorder %v9196, 0.0
    %vm9261 = vcmp.gt.f32.partialorder %v9197, 0.0
    %vm9262 = vcmp.gt.f32.partialorder %v9198, 0.0
    %vm9263 = vcmp.gt.f32.partialorder %v9199, 0.0
    %vm9264 = vcmp.gt.f32.partialorder %v9200, 0.0
    %vm9265 = vcmp.gt.f32.partialorder %v9201, 0.0
    %vm9266 = vcmp.gt.f32.partialorder %v9202, 0.0
    %vm9267 = vcmp.gt.f32.partialorder %v9203, 0.0
    %vm9268 = vcmp.gt.f32.partialorder %v9204, 0.0
    %vm9269 = vcmp.gt.f32.partialorder %v9205, 0.0
    %vm9270 = vcmp.gt.f32.partialorder %v9206, 0.0
    %vm9271 = vcmp.gt.f32.partialorder %v9207, 0.0
    %v9272 = vmul.f32 %v9144, 0.01
    %v9273 = vmul.f32 %v9145, 0.01
    %v9274 = vmul.f32 %v9146, 0.01
    %v9275 = vmul.f32 %v9147, 0.01
    %v9276 = vmul.f32 %v9148, 0.01
    %v9277 = vmul.f32 %v9149, 0.01
    %v9278 = vmul.f32 %v9150, 0.01
    %v9279 = vmul.f32 %v9151, 0.01
    %v9280 = vmul.f32 %v9152, 0.01
    %v9281 = vmul.f32 %v9153, 0.01
    %v9282 = vmul.f32 %v9154, 0.01
    %v9283 = vmul.f32 %v9155, 0.01
    %v9284 = vmul.f32 %v9156, 0.01
    %v9285 = vmul.f32 %v9157, 0.01
    %v9286 = vmul.f32 %v9158, 0.01
    %v9287 = vmul.f32 %v9159, 0.01
    %v9288 = vmul.f32 %v9160, 0.01
    %v9289 = vmul.f32 %v9161, 0.01
    %v9290 = vmul.f32 %v9162, 0.01
    %v9291 = vmul.f32 %v9163, 0.01
    %v9292 = vmul.f32 %v9164, 0.01
    %v9293 = vmul.f32 %v9165, 0.01
    %v9294 = vmul.f32 %v9166, 0.01
    %v9295 = vmul.f32 %v9167, 0.01
    %v9296 = vmul.f32 %v9168, 0.01
    %v9297 = vmul.f32 %v9169, 0.01
    %v9298 = vmul.f32 %v9170, 0.01
    %v9299 = vmul.f32 %v9171, 0.01
    %v9300 = vmul.f32 %v9172, 0.01
    %v9301 = vmul.f32 %v9173, 0.01
    %v9302 = vmul.f32 %v9174, 0.01
    %v9303 = vmul.f32 %v9175, 0.01
    %v9304 = vmul.f32 %v9176, 0.01
    %v9305 = vmul.f32 %v9177, 0.01
    %v9306 = vmul.f32 %v9178, 0.01
    %v9307 = vmul.f32 %v9179, 0.01
    %v9308 = vmul.f32 %v9180, 0.01
    %v9309 = vmul.f32 %v9181, 0.01
    %v9310 = vmul.f32 %v9182, 0.01
    %v9311 = vmul.f32 %v9183, 0.01
    %v9312 = vmul.f32 %v9184, 0.01
    %v9313 = vmul.f32 %v9185, 0.01
    %v9314 = vmul.f32 %v9186, 0.01
    %v9315 = vmul.f32 %v9187, 0.01
    %v9316 = vmul.f32 %v9188, 0.01
    %v9317 = vmul.f32 %v9189, 0.01
    %v9318 = vmul.f32 %v9190, 0.01
    %v9319 = vmul.f32 %v9191, 0.01
    %v9320 = vmul.f32 %v9192, 0.01
    %v9321 = vmul.f32 %v9193, 0.01
    %v9322 = vmul.f32 %v9194, 0.01
    %v9323 = vmul.f32 %v9195, 0.01
    %v9324 = vmul.f32 %v9196, 0.01
    %v9325 = vmul.f32 %v9197, 0.01
    %v9326 = vmul.f32 %v9198, 0.01
    %v9327 = vmul.f32 %v9199, 0.01
    %v9328 = vmul.f32 %v9200, 0.01
    %v9329 = vmul.f32 %v9201, 0.01
    %v9330 = vmul.f32 %v9202, 0.01
    %v9331 = vmul.f32 %v9203, 0.01
    %v9332 = vmul.f32 %v9204, 0.01
    %v9333 = vmul.f32 %v9205, 0.01
    %v9334 = vmul.f32 %v9206, 0.01
    %v9335 = vmul.f32 %v9207, 0.01
    %v9336 = vsel %vm9208, %v9144, %v9272
    %v9337 = vsel %vm9209, %v9145, %v9273
    %v9338 = vsel %vm9210, %v9146, %v9274
    %v9339 = vsel %vm9211, %v9147, %v9275
    %v9340 = vsel %vm9212, %v9148, %v9276
    %v9341 = vsel %vm9213, %v9149, %v9277
    %v9342 = vsel %vm9214, %v9150, %v9278
    %v9343 = vsel %vm9215, %v9151, %v9279
    %v9344 = vsel %vm9216, %v9152, %v9280
    %v9345 = vsel %vm9217, %v9153, %v9281
    %v9346 = vsel %vm9218, %v9154, %v9282
    %v9347 = vsel %vm9219, %v9155, %v9283
    %v9348 = vsel %vm9220, %v9156, %v9284
    %v9349 = vsel %vm9221, %v9157, %v9285
    %v9350 = vsel %vm9222, %v9158, %v9286
    %v9351 = vsel %vm9223, %v9159, %v9287
    %v9352 = vsel %vm9224, %v9160, %v9288
    %v9353 = vsel %vm9225, %v9161, %v9289
    %v9354 = vsel %vm9226, %v9162, %v9290
    %v9355 = vsel %vm9227, %v9163, %v9291
    %v9356 = vsel %vm9228, %v9164, %v9292
    %v9357 = vsel %vm9229, %v9165, %v9293
    %v9358 = vsel %vm9230, %v9166, %v9294
    %v9359 = vsel %vm9231, %v9167, %v9295
    %v9360 = vsel %vm9232, %v9168, %v9296
    %v9361 = vsel %vm9233, %v9169, %v9297
    %v9362 = vsel %vm9234, %v9170, %v9298
    %v9363 = vsel %vm9235, %v9171, %v9299
    %v9364 = vsel %vm9236, %v9172, %v9300
    %v9365 = vsel %vm9237, %v9173, %v9301
    %v9366 = vsel %vm9238, %v9174, %v9302
    %v9367 = vsel %vm9239, %v9175, %v9303
    %v9368 = vsel %vm9240, %v9176, %v9304
    %v9369 = vsel %vm9241, %v9177, %v9305
    %v9370 = vsel %vm9242, %v9178, %v9306
    %v9371 = vsel %vm9243, %v9179, %v9307
    %v9372 = vsel %vm9244, %v9180, %v9308
    %v9373 = vsel %vm9245, %v9181, %v9309
    %v9374 = vsel %vm9246, %v9182, %v9310
    %v9375 = vsel %vm9247, %v9183, %v9311
    %v9376 = vsel %vm9248, %v9184, %v9312
    %v9377 = vsel %vm9249, %v9185, %v9313
    %v9378 = vsel %vm9250, %v9186, %v9314
    %v9379 = vsel %vm9251, %v9187, %v9315
    %v9380 = vsel %vm9252, %v9188, %v9316
    %v9381 = vsel %vm9253, %v9189, %v9317
    %v9382 = vsel %vm9254, %v9190, %v9318
    %v9383 = vsel %vm9255, %v9191, %v9319
    %v9384 = vsel %vm9256, %v9192, %v9320
    %v9385 = vsel %vm9257, %v9193, %v9321
    %v9386 = vsel %vm9258, %v9194, %v9322
    %v9387 = vsel %vm9259, %v9195, %v9323
    %v9388 = vsel %vm9260, %v9196, %v9324
    %v9389 = vsel %vm9261, %v9197, %v9325
    %v9390 = vsel %vm9262, %v9198, %v9326
    %v9391 = vsel %vm9263, %v9199, %v9327
    %v9392 = vsel %vm9264, %v9200, %v9328
    %v9393 = vsel %vm9265, %v9201, %v9329
    %v9394 = vsel %vm9266, %v9202, %v9330
    %v9395 = vsel %vm9267, %v9203, %v9331
    %v9396 = vsel %vm9268, %v9204, %v9332
    %v9397 = vsel %vm9269, %v9205, %v9333
    %v9398 = vsel %vm9270, %v9206, %v9334
    %v9399 = vsel %vm9271, %v9207, %v9335
    %9400 = vst [vmem:[#allocation5] sm:$0xff] %v9336
    %9401 = vst [vmem:[#allocation5 + $0x8] sm:$0xff] %v9337
    %9402 = vst [vmem:[#allocation5 + $0x10] sm:$0xff] %v9338
    %9403 = vst [vmem:[#allocation5 + $0x18] sm:$0xff] %v9339
    %9404 = vst [vmem:[#allocation5 + $0x20] sm:$0xff] %v9340
    %9405 = vst [vmem:[#allocation5 + $0x28] sm:$0xff] %v9341
    %9406 = vst [vmem:[#allocation5 + $0x30] sm:$0xff] %v9342
    %9407 = vst [vmem:[#allocation5 + $0x38] sm:$0xff] %v9343
    %9408 = vst [vmem:[#allocation5 + $0x40] sm:$0xff] %v9344
    %9409 = vst [vmem:[#allocation5 + $0x48] sm:$0xff] %v9345
    %9410 = vst [vmem:[#allocation5 + $0x50] sm:$0xff] %v9346
    %9411 = vst [vmem:[#allocation5 + $0x58] sm:$0xff] %v9347
    %9412 = vst [vmem:[#allocation5 + $0x60] sm:$0xff] %v9348
    %9413 = vst [vmem:[#allocation5 + $0x68] sm:$0xff] %v9349
    %9414 = vst [vmem:[#allocation5 + $0x70] sm:$0xff] %v9350
    %9415 = vst [vmem:[#allocation5 + $0x78] sm:$0xff] %v9351
    %9416 = vst [vmem:[#allocation5 + $0x80] sm:$0xff] %v9352
    %9417 = vst [vmem:[#allocation5 + $0x88] sm:$0xff] %v9353
    %9418 = vst [vmem:[#allocation5 + $0x90] sm:$0xff] %v9354
    %9419 = vst [vmem:[#allocation5 + $0x98] sm:$0xff] %v9355
    %9420 = vst [vmem:[#allocation5 + $0xa0] sm:$0xff] %v9356
    %9421 = vst [vmem:[#allocation5 + $0xa8] sm:$0xff] %v9357
    %9422 = vst [vmem:[#allocation5 + $0xb0] sm:$0xff] %v9358
    %9423 = vst [vmem:[#allocation5 + $0xb8] sm:$0xff] %v9359
    %9424 = vst [vmem:[#allocation5 + $0xc0] sm:$0xff] %v9360
    %9425 = vst [vmem:[#allocation5 + $0xc8] sm:$0xff] %v9361
    %9426 = vst [vmem:[#allocation5 + $0xd0] sm:$0xff] %v9362
    %9427 = vst [vmem:[#allocation5 + $0xd8] sm:$0xff] %v9363
    %9428 = vst [vmem:[#allocation5 + $0xe0] sm:$0xff] %v9364
    %9429 = vst [vmem:[#allocation5 + $0xe8] sm:$0xff] %v9365
    %9430 = vst [vmem:[#allocation5 + $0xf0] sm:$0xff] %v9366
    %9431 = vst [vmem:[#allocation5 + $0xf8] sm:$0xff] %v9367
    %9432 = vst [vmem:[#allocation5 + $0x100] sm:$0xff] %v9368
    %9433 = vst [vmem:[#allocation5 + $0x108] sm:$0xff] %v9369
    %9434 = vst [vmem:[#allocation5 + $0x110] sm:$0xff] %v9370
    %9435 = vst [vmem:[#allocation5 + $0x118] sm:$0xff] %v9371
    %9436 = vst [vmem:[#allocation5 + $0x120] sm:$0xff] %v9372
    %9437 = vst [vmem:[#allocation5 + $0x128] sm:$0xff] %v9373
    %9438 = vst [vmem:[#allocation5 + $0x130] sm:$0xff] %v9374
    %9439 = vst [vmem:[#allocation5 + $0x138] sm:$0xff] %v9375
    %9440 = vst [vmem:[#allocation5 + $0x140] sm:$0xff] %v9376
    %9441 = vst [vmem:[#allocation5 + $0x148] sm:$0xff] %v9377
    %9442 = vst [vmem:[#allocation5 + $0x150] sm:$0xff] %v9378
    %9443 = vst [vmem:[#allocation5 + $0x158] sm:$0xff] %v9379
    %9444 = vst [vmem:[#allocation5 + $0x160] sm:$0xff] %v9380
    %9445 = vst [vmem:[#allocation5 + $0x168] sm:$0xff] %v9381
    %9446 = vst [vmem:[#allocation5 + $0x170] sm:$0xff] %v9382
    %9447 = vst [vmem:[#allocation5 + $0x178] sm:$0xff] %v9383
    %9448 = vst [vmem:[#allocation5 + $0x180] sm:$0xff] %v9384
    %9449 = vst [vmem:[#allocation5 + $0x188] sm:$0xff] %v9385
    %9450 = vst [vmem:[#allocation5 + $0x190] sm:$0xff] %v9386
    %9451 = vst [vmem:[#allocation5 + $0x198] sm:$0xff] %v9387
    %9452 = vst [vmem:[#allocation5 + $0x1a0] sm:$0xff] %v9388
    %9453 = vst [vmem:[#allocation5 + $0x1a8] sm:$0xff] %v9389
    %9454 = vst [vmem:[#allocation5 + $0x1b0] sm:$0xff] %v9390
    %9455 = vst [vmem:[#allocation5 + $0x1b8] sm:$0xff] %v9391
    %9456 = vst [vmem:[#allocation5 + $0x1c0] sm:$0xff] %v9392
    %9457 = vst [vmem:[#allocation5 + $0x1c8] sm:$0xff] %v9393
    %9458 = vst [vmem:[#allocation5 + $0x1d0] sm:$0xff] %v9394
    %9459 = vst [vmem:[#allocation5 + $0x1d8] sm:$0xff] %v9395
    %9460 = vst [vmem:[#allocation5 + $0x1e0] sm:$0xff] %v9396
    %9461 = vst [vmem:[#allocation5 + $0x1e8] sm:$0xff] %v9397
    %9462 = vst [vmem:[#allocation5 + $0x1f0] sm:$0xff] %v9398
    %9463 = vst [vmem:[#allocation5 + $0x1f8] sm:$0xff] %v9399
    // Predicated region
    $region54: #{tpu_custom_call.1} parent=1 // pred_check
      _
    $region55: #{tpu_custom_call.1} parent=1 // pred_check_branch
      %9465 = sbr.rel (0) target = $region57
    $region56: #{tpu_custom_call.1} parent=1 // pred_region
      %9467 = vsyncadd [#allocation6], 0
      %s9468 = sshll.u32 [#allocation5], 4
      %s9469 = int_to_ptr.vmem [resolvable:$true] %s9468
      %s9470 = sshll.u32 %s13, 4
      %s9471 = int_to_ptr.hbm [resolvable:$true] %s9470
      %9476 = dma.vmem_to_hbm [thread:$0]  %s9469, 8192, %s9471, [#allocation6], 128, 128, 8
    $region57: #{tpu_custom_call.1} parent=1 // pred_fallthru
      _
    // Predicated region
    $region58: #{tpu_custom_call.1} parent=1 // pred_check
      _
    $region59: #{tpu_custom_call.1} parent=1 // pred_check_branch
      %9478 = sbr.rel (0) target = $region61
    $region60: #{tpu_custom_call.1} parent=1 // pred_region
      %9480 = dma.done [#allocation6], 8192
    $region61: #{tpu_custom_call.1} parent=1 // pred_fallthru
      _
    %9481 = vsyncpa [#allocation6], 1

</llo_original>
